<compile_context>
chip_gen: v6e
topology: v6e:2x2x1
jax: 0.10.0
libtpu: 0.0.40
codegen_flags: <defaults>
</compile_context>

<pallas_src>
import jax
import jax.numpy as jnp
import numpy as np
from jax import lax
from jax.experimental import pallas as pl
from jax.experimental.pallas import tpu as pltpu

_MIB = 1024 * 1024


# ----------------------------------------------------------------------------
# Per-generation hardware queries (safe fallbacks).
# ----------------------------------------------------------------------------
def _vmem_capacity_bytes():
    """Physical VMEM per TensorCore; conservative 64 MiB (v7x) if unknown."""
    try:
        cap = int(pltpu.get_tpu_info().vmem_capacity_bytes)
        if cap > 0:
            return cap
    except Exception:
        pass
    return 64 * _MIB


def _num_tensorcores_per_chip():
    """2 on v7x (batch split across TCs pays off); 1 on v5e/v6e/unknown."""
    try:
        kind = jax.devices()[0].device_kind.lower()
        if "v7" in kind:
            return 2
    except Exception:
        pass
    return 1


def _pick_time_chunk(T, Bb, E, H, L, budget_bytes, t_chunk_max):
    """Largest Tc (<= t_chunk_max) whose per-chunk VMEM footprint fits budget."""
    weight_bytes = 0
    for l in range(L):
        in_dim = E if l == 0 else H
        weight_bytes += (in_dim + H) * 4 * H * 2 + 4 * H * 4  # bf16 wih+whh, f32 bias
    fixed = weight_bytes
    fixed += 2 * L * Bb * H * 4          # h_sc + c_sc scratch (f32)
    fixed += 2 * 2 * L * Bb * H * 4      # hN / cN output blocks (double-buffered)
    per_t = 2 * Bb * E * 2               # x input block (bf16, double-buffered)
    per_t += 2 * Bb * H * 4              # out block (f32, double-buffered)
    per_t += Bb * 4 * H * 2              # xw_sc (bf16)
    per_t += Bb * H * 2                  # act_sc (bf16)
    avail = budget_bytes - fixed
    tc = max(1, min(int(t_chunk_max), int(T), int(avail // per_t)))
    return tc


# ----------------------------------------------------------------------------
# Fused multi-layer LSTM kernel (one pallas_call for the whole stack).
# Gate order follows PyTorch: [i, f, g, o] stacked along the 4H axis.
# ----------------------------------------------------------------------------
def make_encoder_lstm_kernel(L, Tc, Bb, E, H, T_total):
    # H-aware unroll: at large H the live (Bb, 4H) f32 gates tile is ~4H/128
    # vregs per in-flight iteration; keep within the 64-vreg budget (no spills
    # on the serial critical path).
    if Tc <= 16:
        unroll = True
    elif H <= 256:
        unroll = 8
    elif H <= 512:
        unroll = 4
    else:
        unroll = 2

    needs_mask = (T_total % Tc) != 0  # padding only exists when T % Tc != 0

    def kernel(*refs):
        x_ref = refs[0]                                   # (Tc, Bb, E) bf16
        w_refs = refs[1:1 + 3 * L]                        # per layer: wih(bf16), whh(bf16), b(f32)
        h0_ref = refs[1 + 3 * L]                          # (L, Bb, H) f32
        c0_ref = refs[2 + 3 * L]
        out_ref, hN_ref, cN_ref = refs[3 + 3 * L:6 + 3 * L]
        act_sc, xw_sc, h_sc, c_sc = refs[6 + 3 * L:10 + 3 * L]

        tc = pl.program_id(1)

        @pl.when(tc == 0)
        def _init():
            h_sc[...] = h0_ref[...]
            c_sc[...] = c0_ref[...]

        if needs_mask:
            # Valid (non-padded) timesteps in this chunk (< Tc only on the last).
            valid = jnp.minimum(Tc, T_total - tc * Tc)

        for l in range(L):
            wih_ref, whh_ref, b_ref = w_refs[3 * l:3 * l + 3]
            last_layer = (l == L - 1)
            in_dim = E if l == 0 else H

            # Chunk-wide input projection: one large MXU matmul (bf16 in, f32
            # accumulate), bias folded in.  Off the serial h-chain.
            if l == 0:
                x_chunk = x_ref[...].reshape(Tc * Bb, in_dim)
            else:
                x_chunk = act_sc[...].reshape(Tc * Bb, in_dim)
            xw = jnp.dot(x_chunk, wih_ref[...],
                         preferred_element_type=jnp.float32) + b_ref[...]
            xw_sc[...] = xw.reshape(Tc, Bb, 4 * H).astype(jnp.bfloat16)

            whh = whh_ref[...]                            # bf16, loop-invariant
            # TODO(synk): hold W_hh resident in the MXU via pltpu.matmul_push_rhs /
            # matmul_acc_lhs / matmul_pop to drop the per-step RHS push from the
            # latency chain (fragile at small H; skipped here).

            def step(t, carry):
                h, c = carry                              # f32 (Bb, H)
                gates = (xw_sc[t].astype(jnp.float32)
                         + jnp.dot(h.astype(jnp.bfloat16), whh,
                                   preferred_element_type=jnp.float32))
                # Lane-dense activations on the full (Bb, 4H) tile.
                sg = jax.nn.sigmoid(gates)
                th = jnp.tanh(gates)
                i_g = sg[:, 0:H]
                f_g = sg[:, H:2 * H]
                g_g = th[:, 2 * H:3 * H]
                o_g = sg[:, 3 * H:4 * H]
                c_new = f_g * c + i_g * g_g
                h_new = o_g * jnp.tanh(c_new)
                if needs_mask:
                    keep = t < valid
                    h_new = jnp.where(keep, h_new, h)     # freeze carry on padded steps
                    c_new = jnp.where(keep, c_new, c)
                if last_layer:
                    out_ref[t] = h_new                    # staged in VMEM, one DMA per chunk
                else:
                    act_sc[t] = h_new.astype(jnp.bfloat16)
                return (h_new, c_new)

            h_fin, c_fin = lax.fori_loop(0, Tc, step, (h_sc[l], c_sc[l]),
                                         unroll=unroll)
            h_sc[l] = h_fin
            c_sc[l] = c_fin

        # Final-state writes only on the last time chunk (carry is frozen on
        # padded steps, so this is the state at the true last timestep).
        @pl.when(tc == pl.num_programs(1) - 1)
        def _finalize():
            hN_ref[...] = h_sc[...]
            cN_ref[...] = c_sc[...]

    return kernel


def encoder_lstm_pallas(x_seq, layers, h0, c0, *, t_chunk_max=128):
    """x_seq: (T, B, E); layers: [(wih_T (in,4H), whh_T (H,4H), b (1,4H))];
    h0/c0: (L, B, H) f32.  Returns (out (T,B,H) f32, hN (L,B,H), cN (L,B,H))."""
    T, B, E = x_seq.shape
    L, B2, H = h0.shape
    assert B2 == B

    # The x block is only ever consumed as bf16 MXU LHS: feed it bf16 (halves
    # HBM->VMEM DMA and the double-buffered input VMEM).
    x_seq = x_seq.astype(jnp.bfloat16)

    num_tc = _num_tensorcores_per_chip()
    vmem_cap = _vmem_capacity_bytes()
    vmem_limit = min(int(vmem_cap * 0.85), 110 * _MIB)
    scratch_budget = int(vmem_limit * 0.85)

    # v7x megacore: split the batch across the two TensorCores when large
    # enough (Bb stays a multiple of 8 for the (8,128) tiling rule).  On
    # v5e/v6e keep one block (larger per-matmul M, single TC anyway).
    # TODO(synk): for small-B on v7x, layer-pipeline across the two cores via
    # core_map + VMEM_SHARED handshake instead of batch splitting.
    if num_tc >= 2 and B >= 16 and B % 16 == 0:
        Bb = B // 2
    else:
        Bb = B
    b_blocks = B // Bb

    # VMEM-budget-driven time chunk (per-generation), then pad T to a multiple
    # of Tc instead of shrinking Tc for awkward T.
    Tc = _pick_time_chunk(T, Bb, E, H, L, scratch_budget, t_chunk_max)
    T_pad = ((T + Tc - 1) // Tc) * Tc
    if T_pad != T:
        x_seq = jnp.pad(x_seq, ((0, T_pad - T), (0, 0), (0, 0)))
    t_chunks = T_pad // Tc

    kernel = make_encoder_lstm_kernel(L, Tc, Bb, E, H, T)

    def build(single_buffer_weights):
        # Constant-index weight blocks are fetched once; single-buffer them so
        # the default 2x pipelining VMEM is not wasted on invariant operands.
        wkw = dict(pipeline_mode=pl.Buffered(1)) if single_buffer_weights else {}

        flat_args = [x_seq]
        in_specs = [pl.BlockSpec((Tc, Bb, E), lambda b, t: (t, b, 0))]
        for (wih_T, whh_T, b_row) in layers:
            in_dim = wih_T.shape[0]
            flat_args += [wih_T.astype(jnp.bfloat16),
                          whh_T.astype(jnp.bfloat16),
                          b_row.astype(jnp.float32)]
            in_specs += [
                pl.BlockSpec((in_dim, 4 * H), lambda b, t: (0, 0), **wkw),
                pl.BlockSpec((H, 4 * H), lambda b, t: (0, 0), **wkw),
                pl.BlockSpec((1, 4 * H), lambda b, t: (0, 0), **wkw),
            ]
        flat_args += [h0, c0]
        in_specs += [pl.BlockSpec((L, Bb, H), lambda b, t: (0, b, 0)),
                     pl.BlockSpec((L, Bb, H), lambda b, t: (0, b, 0))]

        call = pl.pallas_call(
            kernel,
            out_shape=(jax.ShapeDtypeStruct((T_pad, B, H), jnp.float32),
                       jax.ShapeDtypeStruct((L, B, H), jnp.float32),
                       jax.ShapeDtypeStruct((L, B, H), jnp.float32)),
            grid_spec=pltpu.PrefetchScalarGridSpec(
                num_scalar_prefetch=0,
                grid=(b_blocks, t_chunks),
                in_specs=in_specs,
                out_specs=(
                    pl.BlockSpec((Tc, Bb, H), lambda b, t: (t, b, 0)),
                    pl.BlockSpec((L, Bb, H), lambda b, t: (0, b, 0)),
                    pl.BlockSpec((L, Bb, H), lambda b, t: (0, b, 0)),
                ),
                scratch_shapes=[
                    pltpu.VMEM((Tc, Bb, H), jnp.bfloat16),       # inter-layer activations
                    pltpu.VMEM((Tc, Bb, 4 * H), jnp.bfloat16),   # x @ W_ih + b per chunk
                    pltpu.VMEM((L, Bb, H), jnp.float32),         # carried h per layer
                    pltpu.VMEM((L, Bb, H), jnp.float32),         # carried c per layer
                ],
            ),
            compiler_params=pltpu.CompilerParams(
                dimension_semantics=("parallel", "arbitrary"),   # time axis is serial
                vmem_limit_bytes=vmem_limit),
        )
        return call, flat_args

    try:
        call, flat_args = build(single_buffer_weights=True)
        out, hN, cN = call(*flat_args)
    except Exception:
        # Fallback for JAX builds without BlockSpec(pipeline_mode=...): default
        # double-buffered weights (correct, just 2x weight VMEM).
        call, flat_args = build(single_buffer_weights=False)
        out, hN, cN = call(*flat_args)

    if T_pad != T:
        out = out[:T]
    return out, hN, cN


# ----------------------------------------------------------------------------
# Encoder parameters & forward (embedding gather is glue, plain JAX).
# ----------------------------------------------------------------------------
def make_encoder_params(key, input_size, embedding_size, hidden_size, enc_layers):
    ks = jax.random.split(key, 1 + 4 * enc_layers)
    emb_table = jax.random.normal(ks[0], (input_size, embedding_size),
                                  dtype=jnp.float32)
    bound = 1.0 / np.sqrt(hidden_size)
    layers = []
    for l in range(enc_layers):
        in_dim = embedding_size if l == 0 else hidden_size
        k_wih, k_whh, k_bih, k_bhh = ks[1 + 4 * l:1 + 4 * (l + 1)]
        w_ih = jax.random.uniform(k_wih, (4 * hidden_size, in_dim),
                                  minval=-bound, maxval=bound, dtype=jnp.float32)
        w_hh = jax.random.uniform(k_whh, (4 * hidden_size, hidden_size),
                                  minval=-bound, maxval=bound, dtype=jnp.float32)
        b_ih = jax.random.uniform(k_bih, (4 * hidden_size,),
                                  minval=-bound, maxval=bound, dtype=jnp.float32)
        b_hh = jax.random.uniform(k_bhh, (4 * hidden_size,),
                                  minval=-bound, maxval=bound, dtype=jnp.float32)
        layers.append((w_ih.T, w_hh.T, (b_ih + b_hh)[None, :]))
    return emb_table, layers


def encoder_forward(params, x_ids, hidden0, cell0, batch_size, embedding_size,
                    t_chunk_max=128):
    """Matches Encoder.forward (LSTM branch): returns (output, hidden, cell)."""
    emb_table, layers = params
    embedding = emb_table[x_ids].reshape(-1, batch_size, embedding_size)
    return encoder_lstm_pallas(embedding, layers, hidden0, cell0,
                               t_chunk_max=t_chunk_max)


# Pure-JAX f32 reference (true module semantics) for correctness checking.
def encoder_forward_ref(params, x_ids, hidden0, cell0, batch_size, embedding_size):
    emb_table, layers = params
    embedding = emb_table[x_ids].reshape(-1, batch_size, embedding_size)
    layer_in = embedding
    h_finals, c_finals = [], []
    for l, (wih_T, whh_T, b_row) in enumerate(layers):
        H = hidden0.shape[-1]

        def step(carry, x_t):
            h, c = carry
            gates = x_t @ wih_T + h @ whh_T + b_row[0]
            i_g = jax.nn.sigmoid(gates[:, 0:H])
            f_g = jax.nn.sigmoid(gates[:, H:2 * H])
            g_g = jnp.tanh(gates[:, 2 * H:3 * H])
            o_g = jax.nn.sigmoid(gates[:, 3 * H:4 * H])
            c2 = f_g * c + i_g * g_g
            h2 = o_g * jnp.tanh(c2)
            return (h2, c2), h2

        (hN, cN), layer_in = lax.scan(step, (hidden0[l], cell0[l]), layer_in)
        h_finals.append(hN)
        c_finals.append(cN)
    return layer_in, jnp.stack(h_finals), jnp.stack(c_finals)


if __name__ == "__main__":
    # Small, TPU-friendly shapes.  seq_len=19 with t_chunk_max=8 exercises the
    # cross-chunk h/c carry (3 time chunks) AND the padded last chunk (3 valid
    # steps of 8), checking the masked-carry final-state path.
    input_size = 16        # vocab
    embedding_size = 32
    enc_layers = 2
    hidden_size = 32
    batch_size = 8
    seq_len = 19

    key = jax.random.PRNGKey(0)
    k_params, k_x = jax.random.split(key)
    params = make_encoder_params(k_params, input_size, embedding_size,
                                 hidden_size, enc_layers)

    x_ids = jax.random.randint(k_x, (seq_len, batch_size), 0, input_size,
                               dtype=jnp.int32)
    # initialize_hidden / initialize_cell (bi_directional_bit=False)
    hidden0 = jnp.zeros((enc_layers, batch_size, hidden_size), jnp.float32)
    cell0 = jnp.zeros((enc_layers, batch_size, hidden_size), jnp.float32)

    out, hN, cN = encoder_forward(params, x_ids, hidden0, cell0,
                                  batch_size, embedding_size, t_chunk_max=8)
    jax.block_until_ready((out, hN, cN))

    out_r, hN_r, cN_r = encoder_forward_ref(params, x_ids, hidden0, cell0,
                                            batch_size, embedding_size)
    # Accuracy contract: bf16 MXU operands + bf16 xw/act scratch (f32
    # accumulation / f32 state & gates) vs. the pure-f32 reference give
    # ~1e-3..1e-2 deviation; 3e-2 tolerance covers it.
    np.testing.assert_allclose(np.asarray(out), np.asarray(out_r),
                               rtol=3e-2, atol=3e-2)
    np.testing.assert_allclose(np.asarray(hN), np.asarray(hN_r),
                               rtol=3e-2, atol=3e-2)
    np.testing.assert_allclose(np.asarray(cN), np.asarray(cN_r),
                               rtol=3e-2, atol=3e-2)

    print("KERNEL_OK")
</pallas_src>

<mosaic_0001>
module attributes {stable_mosaic.version = 11 : i64} {
  func.func @kernel(%arg0: i32, %arg1: i32, %arg2: memref<8x8x32xbf16, #tpu.memory_space<vmem>>, %arg3: memref<32x128xbf16, #tpu.memory_space<vmem>>, %arg4: memref<32x128xbf16, #tpu.memory_space<vmem>>, %arg5: memref<1x128xf32, #tpu.memory_space<vmem>>, %arg6: memref<32x128xbf16, #tpu.memory_space<vmem>>, %arg7: memref<32x128xbf16, #tpu.memory_space<vmem>>, %arg8: memref<1x128xf32, #tpu.memory_space<vmem>>, %arg9: memref<2x8x32xf32, #tpu.memory_space<vmem>>, %arg10: memref<2x8x32xf32, #tpu.memory_space<vmem>>, %arg11: memref<8x8x32xf32, #tpu.memory_space<vmem>>, %arg12: memref<2x8x32xf32, #tpu.memory_space<vmem>>, %arg13: memref<2x8x32xf32, #tpu.memory_space<vmem>>, %arg14: memref<8x8x32xbf16, #tpu.memory_space<vmem>>, %arg15: memref<8x8x128xbf16, #tpu.memory_space<vmem>>, %arg16: memref<2x8x32xf32, #tpu.memory_space<vmem>>, %arg17: memref<2x8x32xf32, #tpu.memory_space<vmem>>) attributes {dimension_semantics = [#tpu.dimension_semantics<parallel>, #tpu.dimension_semantics<arbitrary>], iteration_bounds = array<i64: 1, 3>, scalar_prefetch = 0 : i64, scratch_operands = 4 : i64, tpu.core_type = #tpu.core_type<tc>, window_params = [{transform_indices = @transform_0, window_bounds = array<i64: 8, 8, 32>}, {pipeline_mode = #tpu.pipeline_mode<synchronous>, transform_indices = @transform_1, window_bounds = array<i64: 32, 128>}, {pipeline_mode = #tpu.pipeline_mode<synchronous>, transform_indices = @transform_2, window_bounds = array<i64: 32, 128>}, {pipeline_mode = #tpu.pipeline_mode<synchronous>, transform_indices = @transform_3, window_bounds = array<i64: 1, 128>}, {pipeline_mode = #tpu.pipeline_mode<synchronous>, transform_indices = @transform_4, window_bounds = array<i64: 32, 128>}, {pipeline_mode = #tpu.pipeline_mode<synchronous>, transform_indices = @transform_5, window_bounds = array<i64: 32, 128>}, {pipeline_mode = #tpu.pipeline_mode<synchronous>, transform_indices = @transform_6, window_bounds = array<i64: 1, 128>}, {transform_indices = @transform_7, window_bounds = array<i64: 2, 8, 32>}, {transform_indices = @transform_8, window_bounds = array<i64: 2, 8, 32>}, {transform_indices = @transform_9, window_bounds = array<i64: 8, 8, 32>}, {transform_indices = @transform_10, window_bounds = array<i64: 2, 8, 32>}, {transform_indices = @transform_11, window_bounds = array<i64: 2, 8, 32>}]} {
    %c0_i32 = arith.constant 0 : i32
    %0 = arith.cmpi eq, %arg1, %c0_i32 : i32
    %1 = arith.extui %0 : i1 to i32
    %c0_i32_0 = arith.constant 0 : i32
    %2 = arith.cmpi ne, %1, %c0_i32_0 : i32
    scf.if %2 {
      %c0_158 = arith.constant 0 : index
      %c0_159 = arith.constant 0 : index
      %c0_160 = arith.constant 0 : index
      %523 = vector.load %arg9[%c0_158, %c0_159, %c0_160] : memref<2x8x32xf32, #tpu.memory_space<vmem>>, vector<2x8x32xf32>
      %c0_161 = arith.constant 0 : index
      %c0_162 = arith.constant 0 : index
      %c0_163 = arith.constant 0 : index
      %524 = vector.load %arg16[%c0_161, %c0_162, %c0_163] : memref<2x8x32xf32, #tpu.memory_space<vmem>>, vector<2x8x32xf32>
      tpu.vector_store %arg16[%c0_161, %c0_162, %c0_163], %523 {strides = array<i32>} : memref<2x8x32xf32, #tpu.memory_space<vmem>>, vector<2x8x32xf32>,
      %c0_164 = arith.constant 0 : index
      %c0_165 = arith.constant 0 : index
      %c0_166 = arith.constant 0 : index
      %525 = vector.load %arg10[%c0_164, %c0_165, %c0_166] : memref<2x8x32xf32, #tpu.memory_space<vmem>>, vector<2x8x32xf32>
      %c0_167 = arith.constant 0 : index
      %c0_168 = arith.constant 0 : index
      %c0_169 = arith.constant 0 : index
      %526 = vector.load %arg17[%c0_167, %c0_168, %c0_169] : memref<2x8x32xf32, #tpu.memory_space<vmem>>, vector<2x8x32xf32>
      tpu.vector_store %arg17[%c0_167, %c0_168, %c0_169], %525 {strides = array<i32>} : memref<2x8x32xf32, #tpu.memory_space<vmem>>, vector<2x8x32xf32>,
    } else {
    }
    %c8_i32 = arith.constant 8 : i32
    %3 = arith.muli %arg1, %c8_i32 : i32
    %c19_i32 = arith.constant 19 : i32
    %4 = arith.subi %c19_i32, %3 : i32
    %c8_i32_1 = arith.constant 8 : i32
    %5 = arith.minsi %c8_i32_1, %4 : i32
    %c0 = arith.constant 0 : index
    %c0_2 = arith.constant 0 : index
    %c0_3 = arith.constant 0 : index
    %6 = vector.load %arg2[%c0, %c0_2, %c0_3] : memref<8x8x32xbf16, #tpu.memory_space<vmem>>, vector<8x8x32xbf16>
    %7 = vector.shape_cast %6 : vector<8x8x32xbf16> to vector<64x32xbf16>
    %c0_4 = arith.constant 0 : index
    %c0_5 = arith.constant 0 : index
    %8 = vector.load %arg3[%c0_4, %c0_5] : memref<32x128xbf16, #tpu.memory_space<vmem>>, vector<32x128xbf16>
    %cst = arith.constant dense<0.000000e+00> : vector<64x128xf32>
    %9 = tpu.matmul %7, %8, %cst {dimension_numbers = #tpu.dot_dimension_numbers<[1], [0], [0], [1], [0, 0, 1, 1], [], []>} : vector<64x32xbf16>, vector<32x128xbf16>, vector<64x128xf32> -> vector<64x128xf32>
    %c0_6 = arith.constant 0 : index
    %c0_7 = arith.constant 0 : index
    %10 = vector.load %arg5[%c0_6, %c0_7] : memref<1x128xf32, #tpu.memory_space<vmem>>, vector<1x128xf32>
    %11 = vector.broadcast %10 : vector<1x128xf32> to vector<64x128xf32>
    %12 = arith.addf %9, %11 : vector<64x128xf32>
    %13 = vector.shape_cast %12 : vector<64x128xf32> to vector<8x8x128xf32>
    %14 = arith.truncf %13 : vector<8x8x128xf32> to vector<8x8x128xbf16>
    %c0_8 = arith.constant 0 : index
    %c0_9 = arith.constant 0 : index
    %c0_10 = arith.constant 0 : index
    %15 = vector.load %arg15[%c0_8, %c0_9, %c0_10] : memref<8x8x128xbf16, #tpu.memory_space<vmem>>, vector<8x8x128xbf16>
    tpu.vector_store %arg15[%c0_8, %c0_9, %c0_10], %14 {strides = array<i32>} : memref<8x8x128xbf16, #tpu.memory_space<vmem>>, vector<8x8x128xbf16>,
    %c0_11 = arith.constant 0 : index
    %c0_12 = arith.constant 0 : index
    %16 = vector.load %arg4[%c0_11, %c0_12] : memref<32x128xbf16, #tpu.memory_space<vmem>>, vector<32x128xbf16>
    %c0_13 = arith.constant 0 : index
    %c0_14 = arith.constant 0 : index
    %c0_15 = arith.constant 0 : index
    %17 = vector.load %arg16[%c0_13, %c0_14, %c0_15] : memref<2x8x32xf32, #tpu.memory_space<vmem>>, vector<1x8x32xf32>
    %18 = vector.shape_cast %17 : vector<1x8x32xf32> to vector<8x32xf32>
    %c0_16 = arith.constant 0 : index
    %c0_17 = arith.constant 0 : index
    %c0_18 = arith.constant 0 : index
    %19 = vector.load %arg17[%c0_16, %c0_17, %c0_18] : memref<2x8x32xf32, #tpu.memory_space<vmem>>, vector<1x8x32xf32>
    %20 = vector.shape_cast %19 : vector<1x8x32xf32> to vector<8x32xf32>
    %c0_i32_19 = arith.constant 0 : i32
    %21 = arith.index_cast %c0_i32_19 : i32 to index
    %c0_20 = arith.constant 0 : index
    %c0_21 = arith.constant 0 : index
    %22 = vector.load %arg15[%21, %c0_20, %c0_21] : memref<8x8x128xbf16, #tpu.memory_space<vmem>>, vector<1x8x128xbf16>
    %23 = vector.shape_cast %22 : vector<1x8x128xbf16> to vector<8x128xbf16>
    %24 = arith.extf %23 : vector<8x128xbf16> to vector<8x128xf32>
    %25 = arith.truncf %18 : vector<8x32xf32> to vector<8x32xbf16>
    %cst_22 = arith.constant dense<0.000000e+00> : vector<8x128xf32>
    %26 = tpu.matmul %25, %16, %cst_22 {dimension_numbers = #tpu.dot_dimension_numbers<[1], [0], [0], [1], [0, 0, 1, 1], [], []>} : vector<8x32xbf16>, vector<32x128xbf16>, vector<8x128xf32> -> vector<8x128xf32>
    %27 = arith.addf %24, %26 : vector<8x128xf32>
    %28 = arith.negf %27 : vector<8x128xf32>
    %29 = math.exp %28 : vector<8x128xf32>
    %cst_23 = arith.constant 1.000000e+00 : f32
    %30 = vector.broadcast %cst_23 : f32 to vector<8x128xf32>
    %31 = arith.addf %30, %29 : vector<8x128xf32>
    %32 = arith.divf %30, %31 : vector<8x128xf32>
    %33 = math.tanh %27 : vector<8x128xf32>
    %34 = vector.extract_strided_slice %32 {offsets = [0, 0], sizes = [8, 32], strides = [1, 1]} : vector<8x128xf32> to vector<8x32xf32>
    %35 = vector.extract_strided_slice %32 {offsets = [0, 32], sizes = [8, 32], strides = [1, 1]} : vector<8x128xf32> to vector<8x32xf32>
    %36 = vector.extract_strided_slice %33 {offsets = [0, 64], sizes = [8, 32], strides = [1, 1]} : vector<8x128xf32> to vector<8x32xf32>
    %37 = vector.extract_strided_slice %32 {offsets = [0, 96], sizes = [8, 32], strides = [1, 1]} : vector<8x128xf32> to vector<8x32xf32>
    %38 = arith.mulf %35, %20 : vector<8x32xf32>
    %39 = arith.mulf %34, %36 : vector<8x32xf32>
    %40 = arith.addf %38, %39 : vector<8x32xf32>
    %41 = math.tanh %40 : vector<8x32xf32>
    %42 = arith.mulf %37, %41 : vector<8x32xf32>
    %43 = arith.cmpi slt, %c0_i32_19, %5 : i32
    %44 = arith.select %43, %42, %18 : vector<8x32xf32>
    %45 = arith.select %43, %40, %20 : vector<8x32xf32>
    %46 = arith.truncf %44 : vector<8x32xf32> to vector<8x32xbf16>
    %47 = arith.index_cast %c0_i32_19 : i32 to index
    %c0_24 = arith.constant 0 : index
    %c0_25 = arith.constant 0 : index
    %48 = vector.load %arg14[%47, %c0_24, %c0_25] : memref<8x8x32xbf16, #tpu.memory_space<vmem>>, vector<1x8x32xbf16>
    %49 = vector.shape_cast %48 : vector<1x8x32xbf16> to vector<8x32xbf16>
    %50 = vector.shape_cast %46 : vector<8x32xbf16> to vector<1x8x32xbf16>
    tpu.vector_store %arg14[%47, %c0_24, %c0_25], %50 {strides = array<i32>} : memref<8x8x32xbf16, #tpu.memory_space<vmem>>, vector<1x8x32xbf16>,
    %c1_i32 = arith.constant 1 : i32
    %51 = arith.index_cast %c1_i32 : i32 to index
    %c0_26 = arith.constant 0 : index
    %c0_27 = arith.constant 0 : index
    %52 = vector.load %arg15[%51, %c0_26, %c0_27] : memref<8x8x128xbf16, #tpu.memory_space<vmem>>, vector<1x8x128xbf16>
    %53 = vector.shape_cast %52 : vector<1x8x128xbf16> to vector<8x128xbf16>
    %54 = arith.extf %53 : vector<8x128xbf16> to vector<8x128xf32>
    %55 = arith.truncf %44 : vector<8x32xf32> to vector<8x32xbf16>
    %cst_28 = arith.constant dense<0.000000e+00> : vector<8x128xf32>
    %56 = tpu.matmul %55, %16, %cst_28 {dimension_numbers = #tpu.dot_dimension_numbers<[1], [0], [0], [1], [0, 0, 1, 1], [], []>} : vector<8x32xbf16>, vector<32x128xbf16>, vector<8x128xf32> -> vector<8x128xf32>
    %57 = arith.addf %54, %56 : vector<8x128xf32>
    %58 = arith.negf %57 : vector<8x128xf32>
    %59 = math.exp %58 : vector<8x128xf32>
    %cst_29 = arith.constant 1.000000e+00 : f32
    %60 = vector.broadcast %cst_29 : f32 to vector<8x128xf32>
    %61 = arith.addf %60, %59 : vector<8x128xf32>
    %62 = arith.divf %60, %61 : vector<8x128xf32>
    %63 = math.tanh %57 : vector<8x128xf32>
    %64 = vector.extract_strided_slice %62 {offsets = [0, 0], sizes = [8, 32], strides = [1, 1]} : vector<8x128xf32> to vector<8x32xf32>
    %65 = vector.extract_strided_slice %62 {offsets = [0, 32], sizes = [8, 32], strides = [1, 1]} : vector<8x128xf32> to vector<8x32xf32>
    %66 = vector.extract_strided_slice %63 {offsets = [0, 64], sizes = [8, 32], strides = [1, 1]} : vector<8x128xf32> to vector<8x32xf32>
    %67 = vector.extract_strided_slice %62 {offsets = [0, 96], sizes = [8, 32], strides = [1, 1]} : vector<8x128xf32> to vector<8x32xf32>
    %68 = arith.mulf %65, %45 : vector<8x32xf32>
    %69 = arith.mulf %64, %66 : vector<8x32xf32>
    %70 = arith.addf %68, %69 : vector<8x32xf32>
    %71 = math.tanh %70 : vector<8x32xf32>
    %72 = arith.mulf %67, %71 : vector<8x32xf32>
    %73 = arith.cmpi slt, %c1_i32, %5 : i32
    %74 = arith.select %73, %72, %44 : vector<8x32xf32>
    %75 = arith.select %73, %70, %45 : vector<8x32xf32>
    %76 = arith.truncf %74 : vector<8x32xf32> to vector<8x32xbf16>
    %77 = arith.index_cast %c1_i32 : i32 to index
    %c0_30 = arith.constant 0 : index
    %c0_31 = arith.constant 0 : index
    %78 = vector.load %arg14[%77, %c0_30, %c0_31] : memref<8x8x32xbf16, #tpu.memory_space<vmem>>, vector<1x8x32xbf16>
    %79 = vector.shape_cast %78 : vector<1x8x32xbf16> to vector<8x32xbf16>
    %80 = vector.shape_cast %76 : vector<8x32xbf16> to vector<1x8x32xbf16>
    tpu.vector_store %arg14[%77, %c0_30, %c0_31], %80 {strides = array<i32>} : memref<8x8x32xbf16, #tpu.memory_space<vmem>>, vector<1x8x32xbf16>,
    %c2_i32 = arith.constant 2 : i32
    %81 = arith.index_cast %c2_i32 : i32 to index
    %c0_32 = arith.constant 0 : index
    %c0_33 = arith.constant 0 : index
    %82 = vector.load %arg15[%81, %c0_32, %c0_33] : memref<8x8x128xbf16, #tpu.memory_space<vmem>>, vector<1x8x128xbf16>
    %83 = vector.shape_cast %82 : vector<1x8x128xbf16> to vector<8x128xbf16>
    %84 = arith.extf %83 : vector<8x128xbf16> to vector<8x128xf32>
    %85 = arith.truncf %74 : vector<8x32xf32> to vector<8x32xbf16>
    %cst_34 = arith.constant dense<0.000000e+00> : vector<8x128xf32>
    %86 = tpu.matmul %85, %16, %cst_34 {dimension_numbers = #tpu.dot_dimension_numbers<[1], [0], [0], [1], [0, 0, 1, 1], [], []>} : vector<8x32xbf16>, vector<32x128xbf16>, vector<8x128xf32> -> vector<8x128xf32>
    %87 = arith.addf %84, %86 : vector<8x128xf32>
    %88 = arith.negf %87 : vector<8x128xf32>
    %89 = math.exp %88 : vector<8x128xf32>
    %cst_35 = arith.constant 1.000000e+00 : f32
    %90 = vector.broadcast %cst_35 : f32 to vector<8x128xf32>
    %91 = arith.addf %90, %89 : vector<8x128xf32>
    %92 = arith.divf %90, %91 : vector<8x128xf32>
    %93 = math.tanh %87 : vector<8x128xf32>
    %94 = vector.extract_strided_slice %92 {offsets = [0, 0], sizes = [8, 32], strides = [1, 1]} : vector<8x128xf32> to vector<8x32xf32>
    %95 = vector.extract_strided_slice %92 {offsets = [0, 32], sizes = [8, 32], strides = [1, 1]} : vector<8x128xf32> to vector<8x32xf32>
    %96 = vector.extract_strided_slice %93 {offsets = [0, 64], sizes = [8, 32], strides = [1, 1]} : vector<8x128xf32> to vector<8x32xf32>
    %97 = vector.extract_strided_slice %92 {offsets = [0, 96], sizes = [8, 32], strides = [1, 1]} : vector<8x128xf32> to vector<8x32xf32>
    %98 = arith.mulf %95, %75 : vector<8x32xf32>
    %99 = arith.mulf %94, %96 : vector<8x32xf32>
    %100 = arith.addf %98, %99 : vector<8x32xf32>
    %101 = math.tanh %100 : vector<8x32xf32>
    %102 = arith.mulf %97, %101 : vector<8x32xf32>
    %103 = arith.cmpi slt, %c2_i32, %5 : i32
    %104 = arith.select %103, %102, %74 : vector<8x32xf32>
    %105 = arith.select %103, %100, %75 : vector<8x32xf32>
    %106 = arith.truncf %104 : vector<8x32xf32> to vector<8x32xbf16>
    %107 = arith.index_cast %c2_i32 : i32 to index
    %c0_36 = arith.constant 0 : index
    %c0_37 = arith.constant 0 : index
    %108 = vector.load %arg14[%107, %c0_36, %c0_37] : memref<8x8x32xbf16, #tpu.memory_space<vmem>>, vector<1x8x32xbf16>
    %109 = vector.shape_cast %108 : vector<1x8x32xbf16> to vector<8x32xbf16>
    %110 = vector.shape_cast %106 : vector<8x32xbf16> to vector<1x8x32xbf16>
    tpu.vector_store %arg14[%107, %c0_36, %c0_37], %110 {strides = array<i32>} : memref<8x8x32xbf16, #tpu.memory_space<vmem>>, vector<1x8x32xbf16>,
    %c3_i32 = arith.constant 3 : i32
    %111 = arith.index_cast %c3_i32 : i32 to index
    %c0_38 = arith.constant 0 : index
    %c0_39 = arith.constant 0 : index
    %112 = vector.load %arg15[%111, %c0_38, %c0_39] : memref<8x8x128xbf16, #tpu.memory_space<vmem>>, vector<1x8x128xbf16>
    %113 = vector.shape_cast %112 : vector<1x8x128xbf16> to vector<8x128xbf16>
    %114 = arith.extf %113 : vector<8x128xbf16> to vector<8x128xf32>
    %115 = arith.truncf %104 : vector<8x32xf32> to vector<8x32xbf16>
    %cst_40 = arith.constant dense<0.000000e+00> : vector<8x128xf32>
    %116 = tpu.matmul %115, %16, %cst_40 {dimension_numbers = #tpu.dot_dimension_numbers<[1], [0], [0], [1], [0, 0, 1, 1], [], []>} : vector<8x32xbf16>, vector<32x128xbf16>, vector<8x128xf32> -> vector<8x128xf32>
    %117 = arith.addf %114, %116 : vector<8x128xf32>
    %118 = arith.negf %117 : vector<8x128xf32>
    %119 = math.exp %118 : vector<8x128xf32>
    %cst_41 = arith.constant 1.000000e+00 : f32
    %120 = vector.broadcast %cst_41 : f32 to vector<8x128xf32>
    %121 = arith.addf %120, %119 : vector<8x128xf32>
    %122 = arith.divf %120, %121 : vector<8x128xf32>
    %123 = math.tanh %117 : vector<8x128xf32>
    %124 = vector.extract_strided_slice %122 {offsets = [0, 0], sizes = [8, 32], strides = [1, 1]} : vector<8x128xf32> to vector<8x32xf32>
    %125 = vector.extract_strided_slice %122 {offsets = [0, 32], sizes = [8, 32], strides = [1, 1]} : vector<8x128xf32> to vector<8x32xf32>
    %126 = vector.extract_strided_slice %123 {offsets = [0, 64], sizes = [8, 32], strides = [1, 1]} : vector<8x128xf32> to vector<8x32xf32>
    %127 = vector.extract_strided_slice %122 {offsets = [0, 96], sizes = [8, 32], strides = [1, 1]} : vector<8x128xf32> to vector<8x32xf32>
    %128 = arith.mulf %125, %105 : vector<8x32xf32>
    %129 = arith.mulf %124, %126 : vector<8x32xf32>
    %130 = arith.addf %128, %129 : vector<8x32xf32>
    %131 = math.tanh %130 : vector<8x32xf32>
    %132 = arith.mulf %127, %131 : vector<8x32xf32>
    %133 = arith.cmpi slt, %c3_i32, %5 : i32
    %134 = arith.select %133, %132, %104 : vector<8x32xf32>
    %135 = arith.select %133, %130, %105 : vector<8x32xf32>
    %136 = arith.truncf %134 : vector<8x32xf32> to vector<8x32xbf16>
    %137 = arith.index_cast %c3_i32 : i32 to index
    %c0_42 = arith.constant 0 : index
    %c0_43 = arith.constant 0 : index
    %138 = vector.load %arg14[%137, %c0_42, %c0_43] : memref<8x8x32xbf16, #tpu.memory_space<vmem>>, vector<1x8x32xbf16>
    %139 = vector.shape_cast %138 : vector<1x8x32xbf16> to vector<8x32xbf16>
    %140 = vector.shape_cast %136 : vector<8x32xbf16> to vector<1x8x32xbf16>
    tpu.vector_store %arg14[%137, %c0_42, %c0_43], %140 {strides = array<i32>} : memref<8x8x32xbf16, #tpu.memory_space<vmem>>, vector<1x8x32xbf16>,
    %c4_i32 = arith.constant 4 : i32
    %141 = arith.index_cast %c4_i32 : i32 to index
    %c0_44 = arith.constant 0 : index
    %c0_45 = arith.constant 0 : index
    %142 = vector.load %arg15[%141, %c0_44, %c0_45] : memref<8x8x128xbf16, #tpu.memory_space<vmem>>, vector<1x8x128xbf16>
    %143 = vector.shape_cast %142 : vector<1x8x128xbf16> to vector<8x128xbf16>
    %144 = arith.extf %143 : vector<8x128xbf16> to vector<8x128xf32>
    %145 = arith.truncf %134 : vector<8x32xf32> to vector<8x32xbf16>
    %cst_46 = arith.constant dense<0.000000e+00> : vector<8x128xf32>
    %146 = tpu.matmul %145, %16, %cst_46 {dimension_numbers = #tpu.dot_dimension_numbers<[1], [0], [0], [1], [0, 0, 1, 1], [], []>} : vector<8x32xbf16>, vector<32x128xbf16>, vector<8x128xf32> -> vector<8x128xf32>
    %147 = arith.addf %144, %146 : vector<8x128xf32>
    %148 = arith.negf %147 : vector<8x128xf32>
    %149 = math.exp %148 : vector<8x128xf32>
    %cst_47 = arith.constant 1.000000e+00 : f32
    %150 = vector.broadcast %cst_47 : f32 to vector<8x128xf32>
    %151 = arith.addf %150, %149 : vector<8x128xf32>
    %152 = arith.divf %150, %151 : vector<8x128xf32>
    %153 = math.tanh %147 : vector<8x128xf32>
    %154 = vector.extract_strided_slice %152 {offsets = [0, 0], sizes = [8, 32], strides = [1, 1]} : vector<8x128xf32> to vector<8x32xf32>
    %155 = vector.extract_strided_slice %152 {offsets = [0, 32], sizes = [8, 32], strides = [1, 1]} : vector<8x128xf32> to vector<8x32xf32>
    %156 = vector.extract_strided_slice %153 {offsets = [0, 64], sizes = [8, 32], strides = [1, 1]} : vector<8x128xf32> to vector<8x32xf32>
    %157 = vector.extract_strided_slice %152 {offsets = [0, 96], sizes = [8, 32], strides = [1, 1]} : vector<8x128xf32> to vector<8x32xf32>
    %158 = arith.mulf %155, %135 : vector<8x32xf32>
    %159 = arith.mulf %154, %156 : vector<8x32xf32>
    %160 = arith.addf %158, %159 : vector<8x32xf32>
    %161 = math.tanh %160 : vector<8x32xf32>
    %162 = arith.mulf %157, %161 : vector<8x32xf32>
    %163 = arith.cmpi slt, %c4_i32, %5 : i32
    %164 = arith.select %163, %162, %134 : vector<8x32xf32>
    %165 = arith.select %163, %160, %135 : vector<8x32xf32>
    %166 = arith.truncf %164 : vector<8x32xf32> to vector<8x32xbf16>
    %167 = arith.index_cast %c4_i32 : i32 to index
    %c0_48 = arith.constant 0 : index
    %c0_49 = arith.constant 0 : index
    %168 = vector.load %arg14[%167, %c0_48, %c0_49] : memref<8x8x32xbf16, #tpu.memory_space<vmem>>, vector<1x8x32xbf16>
    %169 = vector.shape_cast %168 : vector<1x8x32xbf16> to vector<8x32xbf16>
    %170 = vector.shape_cast %166 : vector<8x32xbf16> to vector<1x8x32xbf16>
    tpu.vector_store %arg14[%167, %c0_48, %c0_49], %170 {strides = array<i32>} : memref<8x8x32xbf16, #tpu.memory_space<vmem>>, vector<1x8x32xbf16>,
    %c5_i32 = arith.constant 5 : i32
    %171 = arith.index_cast %c5_i32 : i32 to index
    %c0_50 = arith.constant 0 : index
    %c0_51 = arith.constant 0 : index
    %172 = vector.load %arg15[%171, %c0_50, %c0_51] : memref<8x8x128xbf16, #tpu.memory_space<vmem>>, vector<1x8x128xbf16>
    %173 = vector.shape_cast %172 : vector<1x8x128xbf16> to vector<8x128xbf16>
    %174 = arith.extf %173 : vector<8x128xbf16> to vector<8x128xf32>
    %175 = arith.truncf %164 : vector<8x32xf32> to vector<8x32xbf16>
    %cst_52 = arith.constant dense<0.000000e+00> : vector<8x128xf32>
    %176 = tpu.matmul %175, %16, %cst_52 {dimension_numbers = #tpu.dot_dimension_numbers<[1], [0], [0], [1], [0, 0, 1, 1], [], []>} : vector<8x32xbf16>, vector<32x128xbf16>, vector<8x128xf32> -> vector<8x128xf32>
    %177 = arith.addf %174, %176 : vector<8x128xf32>
    %178 = arith.negf %177 : vector<8x128xf32>
    %179 = math.exp %178 : vector<8x128xf32>
    %cst_53 = arith.constant 1.000000e+00 : f32
    %180 = vector.broadcast %cst_53 : f32 to vector<8x128xf32>
    %181 = arith.addf %180, %179 : vector<8x128xf32>
    %182 = arith.divf %180, %181 : vector<8x128xf32>
    %183 = math.tanh %177 : vector<8x128xf32>
    %184 = vector.extract_strided_slice %182 {offsets = [0, 0], sizes = [8, 32], strides = [1, 1]} : vector<8x128xf32> to vector<8x32xf32>
    %185 = vector.extract_strided_slice %182 {offsets = [0, 32], sizes = [8, 32], strides = [1, 1]} : vector<8x128xf32> to vector<8x32xf32>
    %186 = vector.extract_strided_slice %183 {offsets = [0, 64], sizes = [8, 32], strides = [1, 1]} : vector<8x128xf32> to vector<8x32xf32>
    %187 = vector.extract_strided_slice %182 {offsets = [0, 96], sizes = [8, 32], strides = [1, 1]} : vector<8x128xf32> to vector<8x32xf32>
    %188 = arith.mulf %185, %165 : vector<8x32xf32>
    %189 = arith.mulf %184, %186 : vector<8x32xf32>
    %190 = arith.addf %188, %189 : vector<8x32xf32>
    %191 = math.tanh %190 : vector<8x32xf32>
    %192 = arith.mulf %187, %191 : vector<8x32xf32>
    %193 = arith.cmpi slt, %c5_i32, %5 : i32
    %194 = arith.select %193, %192, %164 : vector<8x32xf32>
    %195 = arith.select %193, %190, %165 : vector<8x32xf32>
    %196 = arith.truncf %194 : vector<8x32xf32> to vector<8x32xbf16>
    %197 = arith.index_cast %c5_i32 : i32 to index
    %c0_54 = arith.constant 0 : index
    %c0_55 = arith.constant 0 : index
    %198 = vector.load %arg14[%197, %c0_54, %c0_55] : memref<8x8x32xbf16, #tpu.memory_space<vmem>>, vector<1x8x32xbf16>
    %199 = vector.shape_cast %198 : vector<1x8x32xbf16> to vector<8x32xbf16>
    %200 = vector.shape_cast %196 : vector<8x32xbf16> to vector<1x8x32xbf16>
    tpu.vector_store %arg14[%197, %c0_54, %c0_55], %200 {strides = array<i32>} : memref<8x8x32xbf16, #tpu.memory_space<vmem>>, vector<1x8x32xbf16>,
    %c6_i32 = arith.constant 6 : i32
    %201 = arith.index_cast %c6_i32 : i32 to index
    %c0_56 = arith.constant 0 : index
    %c0_57 = arith.constant 0 : index
    %202 = vector.load %arg15[%201, %c0_56, %c0_57] : memref<8x8x128xbf16, #tpu.memory_space<vmem>>, vector<1x8x128xbf16>
    %203 = vector.shape_cast %202 : vector<1x8x128xbf16> to vector<8x128xbf16>
    %204 = arith.extf %203 : vector<8x128xbf16> to vector<8x128xf32>
    %205 = arith.truncf %194 : vector<8x32xf32> to vector<8x32xbf16>
    %cst_58 = arith.constant dense<0.000000e+00> : vector<8x128xf32>
    %206 = tpu.matmul %205, %16, %cst_58 {dimension_numbers = #tpu.dot_dimension_numbers<[1], [0], [0], [1], [0, 0, 1, 1], [], []>} : vector<8x32xbf16>, vector<32x128xbf16>, vector<8x128xf32> -> vector<8x128xf32>
    %207 = arith.addf %204, %206 : vector<8x128xf32>
    %208 = arith.negf %207 : vector<8x128xf32>
    %209 = math.exp %208 : vector<8x128xf32>
    %cst_59 = arith.constant 1.000000e+00 : f32
    %210 = vector.broadcast %cst_59 : f32 to vector<8x128xf32>
    %211 = arith.addf %210, %209 : vector<8x128xf32>
    %212 = arith.divf %210, %211 : vector<8x128xf32>
    %213 = math.tanh %207 : vector<8x128xf32>
    %214 = vector.extract_strided_slice %212 {offsets = [0, 0], sizes = [8, 32], strides = [1, 1]} : vector<8x128xf32> to vector<8x32xf32>
    %215 = vector.extract_strided_slice %212 {offsets = [0, 32], sizes = [8, 32], strides = [1, 1]} : vector<8x128xf32> to vector<8x32xf32>
    %216 = vector.extract_strided_slice %213 {offsets = [0, 64], sizes = [8, 32], strides = [1, 1]} : vector<8x128xf32> to vector<8x32xf32>
    %217 = vector.extract_strided_slice %212 {offsets = [0, 96], sizes = [8, 32], strides = [1, 1]} : vector<8x128xf32> to vector<8x32xf32>
    %218 = arith.mulf %215, %195 : vector<8x32xf32>
    %219 = arith.mulf %214, %216 : vector<8x32xf32>
    %220 = arith.addf %218, %219 : vector<8x32xf32>
    %221 = math.tanh %220 : vector<8x32xf32>
    %222 = arith.mulf %217, %221 : vector<8x32xf32>
    %223 = arith.cmpi slt, %c6_i32, %5 : i32
    %224 = arith.select %223, %222, %194 : vector<8x32xf32>
    %225 = arith.select %223, %220, %195 : vector<8x32xf32>
    %226 = arith.truncf %224 : vector<8x32xf32> to vector<8x32xbf16>
    %227 = arith.index_cast %c6_i32 : i32 to index
    %c0_60 = arith.constant 0 : index
    %c0_61 = arith.constant 0 : index
    %228 = vector.load %arg14[%227, %c0_60, %c0_61] : memref<8x8x32xbf16, #tpu.memory_space<vmem>>, vector<1x8x32xbf16>
    %229 = vector.shape_cast %228 : vector<1x8x32xbf16> to vector<8x32xbf16>
    %230 = vector.shape_cast %226 : vector<8x32xbf16> to vector<1x8x32xbf16>
    tpu.vector_store %arg14[%227, %c0_60, %c0_61], %230 {strides = array<i32>} : memref<8x8x32xbf16, #tpu.memory_space<vmem>>, vector<1x8x32xbf16>,
    %c7_i32 = arith.constant 7 : i32
    %231 = arith.index_cast %c7_i32 : i32 to index
    %c0_62 = arith.constant 0 : index
    %c0_63 = arith.constant 0 : index
    %232 = vector.load %arg15[%231, %c0_62, %c0_63] : memref<8x8x128xbf16, #tpu.memory_space<vmem>>, vector<1x8x128xbf16>
    %233 = vector.shape_cast %232 : vector<1x8x128xbf16> to vector<8x128xbf16>
    %234 = arith.extf %233 : vector<8x128xbf16> to vector<8x128xf32>
    %235 = arith.truncf %224 : vector<8x32xf32> to vector<8x32xbf16>
    %cst_64 = arith.constant dense<0.000000e+00> : vector<8x128xf32>
    %236 = tpu.matmul %235, %16, %cst_64 {dimension_numbers = #tpu.dot_dimension_numbers<[1], [0], [0], [1], [0, 0, 1, 1], [], []>} : vector<8x32xbf16>, vector<32x128xbf16>, vector<8x128xf32> -> vector<8x128xf32>
    %237 = arith.addf %234, %236 : vector<8x128xf32>
    %238 = arith.negf %237 : vector<8x128xf32>
    %239 = math.exp %238 : vector<8x128xf32>
    %cst_65 = arith.constant 1.000000e+00 : f32
    %240 = vector.broadcast %cst_65 : f32 to vector<8x128xf32>
    %241 = arith.addf %240, %239 : vector<8x128xf32>
    %242 = arith.divf %240, %241 : vector<8x128xf32>
    %243 = math.tanh %237 : vector<8x128xf32>
    %244 = vector.extract_strided_slice %242 {offsets = [0, 0], sizes = [8, 32], strides = [1, 1]} : vector<8x128xf32> to vector<8x32xf32>
    %245 = vector.extract_strided_slice %242 {offsets = [0, 32], sizes = [8, 32], strides = [1, 1]} : vector<8x128xf32> to vector<8x32xf32>
    %246 = vector.extract_strided_slice %243 {offsets = [0, 64], sizes = [8, 32], strides = [1, 1]} : vector<8x128xf32> to vector<8x32xf32>
    %247 = vector.extract_strided_slice %242 {offsets = [0, 96], sizes = [8, 32], strides = [1, 1]} : vector<8x128xf32> to vector<8x32xf32>
    %248 = arith.mulf %245, %225 : vector<8x32xf32>
    %249 = arith.mulf %244, %246 : vector<8x32xf32>
    %250 = arith.addf %248, %249 : vector<8x32xf32>
    %251 = math.tanh %250 : vector<8x32xf32>
    %252 = arith.mulf %247, %251 : vector<8x32xf32>
    %253 = arith.cmpi slt, %c7_i32, %5 : i32
    %254 = arith.select %253, %252, %224 : vector<8x32xf32>
    %255 = arith.select %253, %250, %225 : vector<8x32xf32>
    %256 = arith.truncf %254 : vector<8x32xf32> to vector<8x32xbf16>
    %257 = arith.index_cast %c7_i32 : i32 to index
    %c0_66 = arith.constant 0 : index
    %c0_67 = arith.constant 0 : index
    %258 = vector.load %arg14[%257, %c0_66, %c0_67] : memref<8x8x32xbf16, #tpu.memory_space<vmem>>, vector<1x8x32xbf16>
    %259 = vector.shape_cast %258 : vector<1x8x32xbf16> to vector<8x32xbf16>
    %260 = vector.shape_cast %256 : vector<8x32xbf16> to vector<1x8x32xbf16>
    tpu.vector_store %arg14[%257, %c0_66, %c0_67], %260 {strides = array<i32>} : memref<8x8x32xbf16, #tpu.memory_space<vmem>>, vector<1x8x32xbf16>,
    %c8_i32_68 = arith.constant 8 : i32
    %c0_69 = arith.constant 0 : index
    %c0_70 = arith.constant 0 : index
    %c0_71 = arith.constant 0 : index
    %261 = vector.load %arg16[%c0_69, %c0_70, %c0_71] : memref<2x8x32xf32, #tpu.memory_space<vmem>>, vector<1x8x32xf32>
    %262 = vector.shape_cast %261 : vector<1x8x32xf32> to vector<8x32xf32>
    %263 = vector.shape_cast %254 : vector<8x32xf32> to vector<1x8x32xf32>
    tpu.vector_store %arg16[%c0_69, %c0_70, %c0_71], %263 {strides = array<i32>} : memref<2x8x32xf32, #tpu.memory_space<vmem>>, vector<1x8x32xf32>,
    %c0_72 = arith.constant 0 : index
    %c0_73 = arith.constant 0 : index
    %c0_74 = arith.constant 0 : index
    %264 = vector.load %arg17[%c0_72, %c0_73, %c0_74] : memref<2x8x32xf32, #tpu.memory_space<vmem>>, vector<1x8x32xf32>
    %265 = vector.shape_cast %264 : vector<1x8x32xf32> to vector<8x32xf32>
    %266 = vector.shape_cast %255 : vector<8x32xf32> to vector<1x8x32xf32>
    tpu.vector_store %arg17[%c0_72, %c0_73, %c0_74], %266 {strides = array<i32>} : memref<2x8x32xf32, #tpu.memory_space<vmem>>, vector<1x8x32xf32>,
    %c0_75 = arith.constant 0 : index
    %c0_76 = arith.constant 0 : index
    %c0_77 = arith.constant 0 : index
    %267 = vector.load %arg14[%c0_75, %c0_76, %c0_77] : memref<8x8x32xbf16, #tpu.memory_space<vmem>>, vector<8x8x32xbf16>
    %268 = vector.shape_cast %267 : vector<8x8x32xbf16> to vector<64x32xbf16>
    %c0_78 = arith.constant 0 : index
    %c0_79 = arith.constant 0 : index
    %269 = vector.load %arg6[%c0_78, %c0_79] : memref<32x128xbf16, #tpu.memory_space<vmem>>, vector<32x128xbf16>
    %cst_80 = arith.constant dense<0.000000e+00> : vector<64x128xf32>
    %270 = tpu.matmul %268, %269, %cst_80 {dimension_numbers = #tpu.dot_dimension_numbers<[1], [0], [0], [1], [0, 0, 1, 1], [], []>} : vector<64x32xbf16>, vector<32x128xbf16>, vector<64x128xf32> -> vector<64x128xf32>
    %c0_81 = arith.constant 0 : index
    %c0_82 = arith.constant 0 : index
    %271 = vector.load %arg8[%c0_81, %c0_82] : memref<1x128xf32, #tpu.memory_space<vmem>>, vector<1x128xf32>
    %272 = vector.broadcast %271 : vector<1x128xf32> to vector<64x128xf32>
    %273 = arith.addf %270, %272 : vector<64x128xf32>
    %274 = vector.shape_cast %273 : vector<64x128xf32> to vector<8x8x128xf32>
    %275 = arith.truncf %274 : vector<8x8x128xf32> to vector<8x8x128xbf16>
    %c0_83 = arith.constant 0 : index
    %c0_84 = arith.constant 0 : index
    %c0_85 = arith.constant 0 : index
    %276 = vector.load %arg15[%c0_83, %c0_84, %c0_85] : memref<8x8x128xbf16, #tpu.memory_space<vmem>>, vector<8x8x128xbf16>
    tpu.vector_store %arg15[%c0_83, %c0_84, %c0_85], %275 {strides = array<i32>} : memref<8x8x128xbf16, #tpu.memory_space<vmem>>, vector<8x8x128xbf16>,
    %c0_86 = arith.constant 0 : index
    %c0_87 = arith.constant 0 : index
    %277 = vector.load %arg7[%c0_86, %c0_87] : memref<32x128xbf16, #tpu.memory_space<vmem>>, vector<32x128xbf16>
    %c1 = arith.constant 1 : index
    %c0_88 = arith.constant 0 : index
    %c0_89 = arith.constant 0 : index
    %278 = vector.load %arg16[%c1, %c0_88, %c0_89] : memref<2x8x32xf32, #tpu.memory_space<vmem>>, vector<1x8x32xf32>
    %279 = vector.shape_cast %278 : vector<1x8x32xf32> to vector<8x32xf32>
    %c1_90 = arith.constant 1 : index
    %c0_91 = arith.constant 0 : index
    %c0_92 = arith.constant 0 : index
    %280 = vector.load %arg17[%c1_90, %c0_91, %c0_92] : memref<2x8x32xf32, #tpu.memory_space<vmem>>, vector<1x8x32xf32>
    %281 = vector.shape_cast %280 : vector<1x8x32xf32> to vector<8x32xf32>
    %c0_i32_93 = arith.constant 0 : i32
    %282 = arith.index_cast %c0_i32_93 : i32 to index
    %c0_94 = arith.constant 0 : index
    %c0_95 = arith.constant 0 : index
    %283 = vector.load %arg15[%282, %c0_94, %c0_95] : memref<8x8x128xbf16, #tpu.memory_space<vmem>>, vector<1x8x128xbf16>
    %284 = vector.shape_cast %283 : vector<1x8x128xbf16> to vector<8x128xbf16>
    %285 = arith.extf %284 : vector<8x128xbf16> to vector<8x128xf32>
    %286 = arith.truncf %279 : vector<8x32xf32> to vector<8x32xbf16>
    %cst_96 = arith.constant dense<0.000000e+00> : vector<8x128xf32>
    %287 = tpu.matmul %286, %277, %cst_96 {dimension_numbers = #tpu.dot_dimension_numbers<[1], [0], [0], [1], [0, 0, 1, 1], [], []>} : vector<8x32xbf16>, vector<32x128xbf16>, vector<8x128xf32> -> vector<8x128xf32>
    %288 = arith.addf %285, %287 : vector<8x128xf32>
    %289 = arith.negf %288 : vector<8x128xf32>
    %290 = math.exp %289 : vector<8x128xf32>
    %cst_97 = arith.constant 1.000000e+00 : f32
    %291 = vector.broadcast %cst_97 : f32 to vector<8x128xf32>
    %292 = arith.addf %291, %290 : vector<8x128xf32>
    %293 = arith.divf %291, %292 : vector<8x128xf32>
    %294 = math.tanh %288 : vector<8x128xf32>
    %295 = vector.extract_strided_slice %293 {offsets = [0, 0], sizes = [8, 32], strides = [1, 1]} : vector<8x128xf32> to vector<8x32xf32>
    %296 = vector.extract_strided_slice %293 {offsets = [0, 32], sizes = [8, 32], strides = [1, 1]} : vector<8x128xf32> to vector<8x32xf32>
    %297 = vector.extract_strided_slice %294 {offsets = [0, 64], sizes = [8, 32], strides = [1, 1]} : vector<8x128xf32> to vector<8x32xf32>
    %298 = vector.extract_strided_slice %293 {offsets = [0, 96], sizes = [8, 32], strides = [1, 1]} : vector<8x128xf32> to vector<8x32xf32>
    %299 = arith.mulf %296, %281 : vector<8x32xf32>
    %300 = arith.mulf %295, %297 : vector<8x32xf32>
    %301 = arith.addf %299, %300 : vector<8x32xf32>
    %302 = math.tanh %301 : vector<8x32xf32>
    %303 = arith.mulf %298, %302 : vector<8x32xf32>
    %304 = arith.cmpi slt, %c0_i32_93, %5 : i32
    %305 = arith.select %304, %303, %279 : vector<8x32xf32>
    %306 = arith.select %304, %301, %281 : vector<8x32xf32>
    %307 = arith.index_cast %c0_i32_93 : i32 to index
    %c0_98 = arith.constant 0 : index
    %c0_99 = arith.constant 0 : index
    %308 = vector.load %arg11[%307, %c0_98, %c0_99] : memref<8x8x32xf32, #tpu.memory_space<vmem>>, vector<1x8x32xf32>
    %309 = vector.shape_cast %308 : vector<1x8x32xf32> to vector<8x32xf32>
    %310 = vector.shape_cast %305 : vector<8x32xf32> to vector<1x8x32xf32>
    tpu.vector_store %arg11[%307, %c0_98, %c0_99], %310 {strides = array<i32>} : memref<8x8x32xf32, #tpu.memory_space<vmem>>, vector<1x8x32xf32>,
    %c1_i32_100 = arith.constant 1 : i32
    %311 = arith.index_cast %c1_i32_100 : i32 to index
    %c0_101 = arith.constant 0 : index
    %c0_102 = arith.constant 0 : index
    %312 = vector.load %arg15[%311, %c0_101, %c0_102] : memref<8x8x128xbf16, #tpu.memory_space<vmem>>, vector<1x8x128xbf16>
    %313 = vector.shape_cast %312 : vector<1x8x128xbf16> to vector<8x128xbf16>
    %314 = arith.extf %313 : vector<8x128xbf16> to vector<8x128xf32>
    %315 = arith.truncf %305 : vector<8x32xf32> to vector<8x32xbf16>
    %cst_103 = arith.constant dense<0.000000e+00> : vector<8x128xf32>
    %316 = tpu.matmul %315, %277, %cst_103 {dimension_numbers = #tpu.dot_dimension_numbers<[1], [0], [0], [1], [0, 0, 1, 1], [], []>} : vector<8x32xbf16>, vector<32x128xbf16>, vector<8x128xf32> -> vector<8x128xf32>
    %317 = arith.addf %314, %316 : vector<8x128xf32>
    %318 = arith.negf %317 : vector<8x128xf32>
    %319 = math.exp %318 : vector<8x128xf32>
    %cst_104 = arith.constant 1.000000e+00 : f32
    %320 = vector.broadcast %cst_104 : f32 to vector<8x128xf32>
    %321 = arith.addf %320, %319 : vector<8x128xf32>
    %322 = arith.divf %320, %321 : vector<8x128xf32>
    %323 = math.tanh %317 : vector<8x128xf32>
    %324 = vector.extract_strided_slice %322 {offsets = [0, 0], sizes = [8, 32], strides = [1, 1]} : vector<8x128xf32> to vector<8x32xf32>
    %325 = vector.extract_strided_slice %322 {offsets = [0, 32], sizes = [8, 32], strides = [1, 1]} : vector<8x128xf32> to vector<8x32xf32>
    %326 = vector.extract_strided_slice %323 {offsets = [0, 64], sizes = [8, 32], strides = [1, 1]} : vector<8x128xf32> to vector<8x32xf32>
    %327 = vector.extract_strided_slice %322 {offsets = [0, 96], sizes = [8, 32], strides = [1, 1]} : vector<8x128xf32> to vector<8x32xf32>
    %328 = arith.mulf %325, %306 : vector<8x32xf32>
    %329 = arith.mulf %324, %326 : vector<8x32xf32>
    %330 = arith.addf %328, %329 : vector<8x32xf32>
    %331 = math.tanh %330 : vector<8x32xf32>
    %332 = arith.mulf %327, %331 : vector<8x32xf32>
    %333 = arith.cmpi slt, %c1_i32_100, %5 : i32
    %334 = arith.select %333, %332, %305 : vector<8x32xf32>
    %335 = arith.select %333, %330, %306 : vector<8x32xf32>
    %336 = arith.index_cast %c1_i32_100 : i32 to index
    %c0_105 = arith.constant 0 : index
    %c0_106 = arith.constant 0 : index
    %337 = vector.load %arg11[%336, %c0_105, %c0_106] : memref<8x8x32xf32, #tpu.memory_space<vmem>>, vector<1x8x32xf32>
    %338 = vector.shape_cast %337 : vector<1x8x32xf32> to vector<8x32xf32>
    %339 = vector.shape_cast %334 : vector<8x32xf32> to vector<1x8x32xf32>
    tpu.vector_store %arg11[%336, %c0_105, %c0_106], %339 {strides = array<i32>} : memref<8x8x32xf32, #tpu.memory_space<vmem>>, vector<1x8x32xf32>,
    %c2_i32_107 = arith.constant 2 : i32
    %340 = arith.index_cast %c2_i32_107 : i32 to index
    %c0_108 = arith.constant 0 : index
    %c0_109 = arith.constant 0 : index
    %341 = vector.load %arg15[%340, %c0_108, %c0_109] : memref<8x8x128xbf16, #tpu.memory_space<vmem>>, vector<1x8x128xbf16>
    %342 = vector.shape_cast %341 : vector<1x8x128xbf16> to vector<8x128xbf16>
    %343 = arith.extf %342 : vector<8x128xbf16> to vector<8x128xf32>
    %344 = arith.truncf %334 : vector<8x32xf32> to vector<8x32xbf16>
    %cst_110 = arith.constant dense<0.000000e+00> : vector<8x128xf32>
    %345 = tpu.matmul %344, %277, %cst_110 {dimension_numbers = #tpu.dot_dimension_numbers<[1], [0], [0], [1], [0, 0, 1, 1], [], []>} : vector<8x32xbf16>, vector<32x128xbf16>, vector<8x128xf32> -> vector<8x128xf32>
    %346 = arith.addf %343, %345 : vector<8x128xf32>
    %347 = arith.negf %346 : vector<8x128xf32>
    %348 = math.exp %347 : vector<8x128xf32>
    %cst_111 = arith.constant 1.000000e+00 : f32
    %349 = vector.broadcast %cst_111 : f32 to vector<8x128xf32>
    %350 = arith.addf %349, %348 : vector<8x128xf32>
    %351 = arith.divf %349, %350 : vector<8x128xf32>
    %352 = math.tanh %346 : vector<8x128xf32>
    %353 = vector.extract_strided_slice %351 {offsets = [0, 0], sizes = [8, 32], strides = [1, 1]} : vector<8x128xf32> to vector<8x32xf32>
    %354 = vector.extract_strided_slice %351 {offsets = [0, 32], sizes = [8, 32], strides = [1, 1]} : vector<8x128xf32> to vector<8x32xf32>
    %355 = vector.extract_strided_slice %352 {offsets = [0, 64], sizes = [8, 32], strides = [1, 1]} : vector<8x128xf32> to vector<8x32xf32>
    %356 = vector.extract_strided_slice %351 {offsets = [0, 96], sizes = [8, 32], strides = [1, 1]} : vector<8x128xf32> to vector<8x32xf32>
    %357 = arith.mulf %354, %335 : vector<8x32xf32>
    %358 = arith.mulf %353, %355 : vector<8x32xf32>
    %359 = arith.addf %357, %358 : vector<8x32xf32>
    %360 = math.tanh %359 : vector<8x32xf32>
    %361 = arith.mulf %356, %360 : vector<8x32xf32>
    %362 = arith.cmpi slt, %c2_i32_107, %5 : i32
    %363 = arith.select %362, %361, %334 : vector<8x32xf32>
    %364 = arith.select %362, %359, %335 : vector<8x32xf32>
    %365 = arith.index_cast %c2_i32_107 : i32 to index
    %c0_112 = arith.constant 0 : index
    %c0_113 = arith.constant 0 : index
    %366 = vector.load %arg11[%365, %c0_112, %c0_113] : memref<8x8x32xf32, #tpu.memory_space<vmem>>, vector<1x8x32xf32>
    %367 = vector.shape_cast %366 : vector<1x8x32xf32> to vector<8x32xf32>
    %368 = vector.shape_cast %363 : vector<8x32xf32> to vector<1x8x32xf32>
    tpu.vector_store %arg11[%365, %c0_112, %c0_113], %368 {strides = array<i32>} : memref<8x8x32xf32, #tpu.memory_space<vmem>>, vector<1x8x32xf32>,
    %c3_i32_114 = arith.constant 3 : i32
    %369 = arith.index_cast %c3_i32_114 : i32 to index
    %c0_115 = arith.constant 0 : index
    %c0_116 = arith.constant 0 : index
    %370 = vector.load %arg15[%369, %c0_115, %c0_116] : memref<8x8x128xbf16, #tpu.memory_space<vmem>>, vector<1x8x128xbf16>
    %371 = vector.shape_cast %370 : vector<1x8x128xbf16> to vector<8x128xbf16>
    %372 = arith.extf %371 : vector<8x128xbf16> to vector<8x128xf32>
    %373 = arith.truncf %363 : vector<8x32xf32> to vector<8x32xbf16>
    %cst_117 = arith.constant dense<0.000000e+00> : vector<8x128xf32>
    %374 = tpu.matmul %373, %277, %cst_117 {dimension_numbers = #tpu.dot_dimension_numbers<[1], [0], [0], [1], [0, 0, 1, 1], [], []>} : vector<8x32xbf16>, vector<32x128xbf16>, vector<8x128xf32> -> vector<8x128xf32>
    %375 = arith.addf %372, %374 : vector<8x128xf32>
    %376 = arith.negf %375 : vector<8x128xf32>
    %377 = math.exp %376 : vector<8x128xf32>
    %cst_118 = arith.constant 1.000000e+00 : f32
    %378 = vector.broadcast %cst_118 : f32 to vector<8x128xf32>
    %379 = arith.addf %378, %377 : vector<8x128xf32>
    %380 = arith.divf %378, %379 : vector<8x128xf32>
    %381 = math.tanh %375 : vector<8x128xf32>
    %382 = vector.extract_strided_slice %380 {offsets = [0, 0], sizes = [8, 32], strides = [1, 1]} : vector<8x128xf32> to vector<8x32xf32>
    %383 = vector.extract_strided_slice %380 {offsets = [0, 32], sizes = [8, 32], strides = [1, 1]} : vector<8x128xf32> to vector<8x32xf32>
    %384 = vector.extract_strided_slice %381 {offsets = [0, 64], sizes = [8, 32], strides = [1, 1]} : vector<8x128xf32> to vector<8x32xf32>
    %385 = vector.extract_strided_slice %380 {offsets = [0, 96], sizes = [8, 32], strides = [1, 1]} : vector<8x128xf32> to vector<8x32xf32>
    %386 = arith.mulf %383, %364 : vector<8x32xf32>
    %387 = arith.mulf %382, %384 : vector<8x32xf32>
    %388 = arith.addf %386, %387 : vector<8x32xf32>
    %389 = math.tanh %388 : vector<8x32xf32>
    %390 = arith.mulf %385, %389 : vector<8x32xf32>
    %391 = arith.cmpi slt, %c3_i32_114, %5 : i32
    %392 = arith.select %391, %390, %363 : vector<8x32xf32>
    %393 = arith.select %391, %388, %364 : vector<8x32xf32>
    %394 = arith.index_cast %c3_i32_114 : i32 to index
    %c0_119 = arith.constant 0 : index
    %c0_120 = arith.constant 0 : index
    %395 = vector.load %arg11[%394, %c0_119, %c0_120] : memref<8x8x32xf32, #tpu.memory_space<vmem>>, vector<1x8x32xf32>
    %396 = vector.shape_cast %395 : vector<1x8x32xf32> to vector<8x32xf32>
    %397 = vector.shape_cast %392 : vector<8x32xf32> to vector<1x8x32xf32>
    tpu.vector_store %arg11[%394, %c0_119, %c0_120], %397 {strides = array<i32>} : memref<8x8x32xf32, #tpu.memory_space<vmem>>, vector<1x8x32xf32>,
    %c4_i32_121 = arith.constant 4 : i32
    %398 = arith.index_cast %c4_i32_121 : i32 to index
    %c0_122 = arith.constant 0 : index
    %c0_123 = arith.constant 0 : index
    %399 = vector.load %arg15[%398, %c0_122, %c0_123] : memref<8x8x128xbf16, #tpu.memory_space<vmem>>, vector<1x8x128xbf16>
    %400 = vector.shape_cast %399 : vector<1x8x128xbf16> to vector<8x128xbf16>
    %401 = arith.extf %400 : vector<8x128xbf16> to vector<8x128xf32>
    %402 = arith.truncf %392 : vector<8x32xf32> to vector<8x32xbf16>
    %cst_124 = arith.constant dense<0.000000e+00> : vector<8x128xf32>
    %403 = tpu.matmul %402, %277, %cst_124 {dimension_numbers = #tpu.dot_dimension_numbers<[1], [0], [0], [1], [0, 0, 1, 1], [], []>} : vector<8x32xbf16>, vector<32x128xbf16>, vector<8x128xf32> -> vector<8x128xf32>
    %404 = arith.addf %401, %403 : vector<8x128xf32>
    %405 = arith.negf %404 : vector<8x128xf32>
    %406 = math.exp %405 : vector<8x128xf32>
    %cst_125 = arith.constant 1.000000e+00 : f32
    %407 = vector.broadcast %cst_125 : f32 to vector<8x128xf32>
    %408 = arith.addf %407, %406 : vector<8x128xf32>
    %409 = arith.divf %407, %408 : vector<8x128xf32>
    %410 = math.tanh %404 : vector<8x128xf32>
    %411 = vector.extract_strided_slice %409 {offsets = [0, 0], sizes = [8, 32], strides = [1, 1]} : vector<8x128xf32> to vector<8x32xf32>
    %412 = vector.extract_strided_slice %409 {offsets = [0, 32], sizes = [8, 32], strides = [1, 1]} : vector<8x128xf32> to vector<8x32xf32>
    %413 = vector.extract_strided_slice %410 {offsets = [0, 64], sizes = [8, 32], strides = [1, 1]} : vector<8x128xf32> to vector<8x32xf32>
    %414 = vector.extract_strided_slice %409 {offsets = [0, 96], sizes = [8, 32], strides = [1, 1]} : vector<8x128xf32> to vector<8x32xf32>
    %415 = arith.mulf %412, %393 : vector<8x32xf32>
    %416 = arith.mulf %411, %413 : vector<8x32xf32>
    %417 = arith.addf %415, %416 : vector<8x32xf32>
    %418 = math.tanh %417 : vector<8x32xf32>
    %419 = arith.mulf %414, %418 : vector<8x32xf32>
    %420 = arith.cmpi slt, %c4_i32_121, %5 : i32
    %421 = arith.select %420, %419, %392 : vector<8x32xf32>
    %422 = arith.select %420, %417, %393 : vector<8x32xf32>
    %423 = arith.index_cast %c4_i32_121 : i32 to index
    %c0_126 = arith.constant 0 : index
    %c0_127 = arith.constant 0 : index
    %424 = vector.load %arg11[%423, %c0_126, %c0_127] : memref<8x8x32xf32, #tpu.memory_space<vmem>>, vector<1x8x32xf32>
    %425 = vector.shape_cast %424 : vector<1x8x32xf32> to vector<8x32xf32>
    %426 = vector.shape_cast %421 : vector<8x32xf32> to vector<1x8x32xf32>
    tpu.vector_store %arg11[%423, %c0_126, %c0_127], %426 {strides = array<i32>} : memref<8x8x32xf32, #tpu.memory_space<vmem>>, vector<1x8x32xf32>,
    %c5_i32_128 = arith.constant 5 : i32
    %427 = arith.index_cast %c5_i32_128 : i32 to index
    %c0_129 = arith.constant 0 : index
    %c0_130 = arith.constant 0 : index
    %428 = vector.load %arg15[%427, %c0_129, %c0_130] : memref<8x8x128xbf16, #tpu.memory_space<vmem>>, vector<1x8x128xbf16>
    %429 = vector.shape_cast %428 : vector<1x8x128xbf16> to vector<8x128xbf16>
    %430 = arith.extf %429 : vector<8x128xbf16> to vector<8x128xf32>
    %431 = arith.truncf %421 : vector<8x32xf32> to vector<8x32xbf16>
    %cst_131 = arith.constant dense<0.000000e+00> : vector<8x128xf32>
    %432 = tpu.matmul %431, %277, %cst_131 {dimension_numbers = #tpu.dot_dimension_numbers<[1], [0], [0], [1], [0, 0, 1, 1], [], []>} : vector<8x32xbf16>, vector<32x128xbf16>, vector<8x128xf32> -> vector<8x128xf32>
    %433 = arith.addf %430, %432 : vector<8x128xf32>
    %434 = arith.negf %433 : vector<8x128xf32>
    %435 = math.exp %434 : vector<8x128xf32>
    %cst_132 = arith.constant 1.000000e+00 : f32
    %436 = vector.broadcast %cst_132 : f32 to vector<8x128xf32>
    %437 = arith.addf %436, %435 : vector<8x128xf32>
    %438 = arith.divf %436, %437 : vector<8x128xf32>
    %439 = math.tanh %433 : vector<8x128xf32>
    %440 = vector.extract_strided_slice %438 {offsets = [0, 0], sizes = [8, 32], strides = [1, 1]} : vector<8x128xf32> to vector<8x32xf32>
    %441 = vector.extract_strided_slice %438 {offsets = [0, 32], sizes = [8, 32], strides = [1, 1]} : vector<8x128xf32> to vector<8x32xf32>
    %442 = vector.extract_strided_slice %439 {offsets = [0, 64], sizes = [8, 32], strides = [1, 1]} : vector<8x128xf32> to vector<8x32xf32>
    %443 = vector.extract_strided_slice %438 {offsets = [0, 96], sizes = [8, 32], strides = [1, 1]} : vector<8x128xf32> to vector<8x32xf32>
    %444 = arith.mulf %441, %422 : vector<8x32xf32>
    %445 = arith.mulf %440, %442 : vector<8x32xf32>
    %446 = arith.addf %444, %445 : vector<8x32xf32>
    %447 = math.tanh %446 : vector<8x32xf32>
    %448 = arith.mulf %443, %447 : vector<8x32xf32>
    %449 = arith.cmpi slt, %c5_i32_128, %5 : i32
    %450 = arith.select %449, %448, %421 : vector<8x32xf32>
    %451 = arith.select %449, %446, %422 : vector<8x32xf32>
    %452 = arith.index_cast %c5_i32_128 : i32 to index
    %c0_133 = arith.constant 0 : index
    %c0_134 = arith.constant 0 : index
    %453 = vector.load %arg11[%452, %c0_133, %c0_134] : memref<8x8x32xf32, #tpu.memory_space<vmem>>, vector<1x8x32xf32>
    %454 = vector.shape_cast %453 : vector<1x8x32xf32> to vector<8x32xf32>
    %455 = vector.shape_cast %450 : vector<8x32xf32> to vector<1x8x32xf32>
    tpu.vector_store %arg11[%452, %c0_133, %c0_134], %455 {strides = array<i32>} : memref<8x8x32xf32, #tpu.memory_space<vmem>>, vector<1x8x32xf32>,
    %c6_i32_135 = arith.constant 6 : i32
    %456 = arith.index_cast %c6_i32_135 : i32 to index
    %c0_136 = arith.constant 0 : index
    %c0_137 = arith.constant 0 : index
    %457 = vector.load %arg15[%456, %c0_136, %c0_137] : memref<8x8x128xbf16, #tpu.memory_space<vmem>>, vector<1x8x128xbf16>
    %458 = vector.shape_cast %457 : vector<1x8x128xbf16> to vector<8x128xbf16>
    %459 = arith.extf %458 : vector<8x128xbf16> to vector<8x128xf32>
    %460 = arith.truncf %450 : vector<8x32xf32> to vector<8x32xbf16>
    %cst_138 = arith.constant dense<0.000000e+00> : vector<8x128xf32>
    %461 = tpu.matmul %460, %277, %cst_138 {dimension_numbers = #tpu.dot_dimension_numbers<[1], [0], [0], [1], [0, 0, 1, 1], [], []>} : vector<8x32xbf16>, vector<32x128xbf16>, vector<8x128xf32> -> vector<8x128xf32>
    %462 = arith.addf %459, %461 : vector<8x128xf32>
    %463 = arith.negf %462 : vector<8x128xf32>
    %464 = math.exp %463 : vector<8x128xf32>
    %cst_139 = arith.constant 1.000000e+00 : f32
    %465 = vector.broadcast %cst_139 : f32 to vector<8x128xf32>
    %466 = arith.addf %465, %464 : vector<8x128xf32>
    %467 = arith.divf %465, %466 : vector<8x128xf32>
    %468 = math.tanh %462 : vector<8x128xf32>
    %469 = vector.extract_strided_slice %467 {offsets = [0, 0], sizes = [8, 32], strides = [1, 1]} : vector<8x128xf32> to vector<8x32xf32>
    %470 = vector.extract_strided_slice %467 {offsets = [0, 32], sizes = [8, 32], strides = [1, 1]} : vector<8x128xf32> to vector<8x32xf32>
    %471 = vector.extract_strided_slice %468 {offsets = [0, 64], sizes = [8, 32], strides = [1, 1]} : vector<8x128xf32> to vector<8x32xf32>
    %472 = vector.extract_strided_slice %467 {offsets = [0, 96], sizes = [8, 32], strides = [1, 1]} : vector<8x128xf32> to vector<8x32xf32>
    %473 = arith.mulf %470, %451 : vector<8x32xf32>
    %474 = arith.mulf %469, %471 : vector<8x32xf32>
    %475 = arith.addf %473, %474 : vector<8x32xf32>
    %476 = math.tanh %475 : vector<8x32xf32>
    %477 = arith.mulf %472, %476 : vector<8x32xf32>
    %478 = arith.cmpi slt, %c6_i32_135, %5 : i32
    %479 = arith.select %478, %477, %450 : vector<8x32xf32>
    %480 = arith.select %478, %475, %451 : vector<8x32xf32>
    %481 = arith.index_cast %c6_i32_135 : i32 to index
    %c0_140 = arith.constant 0 : index
    %c0_141 = arith.constant 0 : index
    %482 = vector.load %arg11[%481, %c0_140, %c0_141] : memref<8x8x32xf32, #tpu.memory_space<vmem>>, vector<1x8x32xf32>
    %483 = vector.shape_cast %482 : vector<1x8x32xf32> to vector<8x32xf32>
    %484 = vector.shape_cast %479 : vector<8x32xf32> to vector<1x8x32xf32>
    tpu.vector_store %arg11[%481, %c0_140, %c0_141], %484 {strides = array<i32>} : memref<8x8x32xf32, #tpu.memory_space<vmem>>, vector<1x8x32xf32>,
    %c7_i32_142 = arith.constant 7 : i32
    %485 = arith.index_cast %c7_i32_142 : i32 to index
    %c0_143 = arith.constant 0 : index
    %c0_144 = arith.constant 0 : index
    %486 = vector.load %arg15[%485, %c0_143, %c0_144] : memref<8x8x128xbf16, #tpu.memory_space<vmem>>, vector<1x8x128xbf16>
    %487 = vector.shape_cast %486 : vector<1x8x128xbf16> to vector<8x128xbf16>
    %488 = arith.extf %487 : vector<8x128xbf16> to vector<8x128xf32>
    %489 = arith.truncf %479 : vector<8x32xf32> to vector<8x32xbf16>
    %cst_145 = arith.constant dense<0.000000e+00> : vector<8x128xf32>
    %490 = tpu.matmul %489, %277, %cst_145 {dimension_numbers = #tpu.dot_dimension_numbers<[1], [0], [0], [1], [0, 0, 1, 1], [], []>} : vector<8x32xbf16>, vector<32x128xbf16>, vector<8x128xf32> -> vector<8x128xf32>
    %491 = arith.addf %488, %490 : vector<8x128xf32>
    %492 = arith.negf %491 : vector<8x128xf32>
    %493 = math.exp %492 : vector<8x128xf32>
    %cst_146 = arith.constant 1.000000e+00 : f32
    %494 = vector.broadcast %cst_146 : f32 to vector<8x128xf32>
    %495 = arith.addf %494, %493 : vector<8x128xf32>
    %496 = arith.divf %494, %495 : vector<8x128xf32>
    %497 = math.tanh %491 : vector<8x128xf32>
    %498 = vector.extract_strided_slice %496 {offsets = [0, 0], sizes = [8, 32], strides = [1, 1]} : vector<8x128xf32> to vector<8x32xf32>
    %499 = vector.extract_strided_slice %496 {offsets = [0, 32], sizes = [8, 32], strides = [1, 1]} : vector<8x128xf32> to vector<8x32xf32>
    %500 = vector.extract_strided_slice %497 {offsets = [0, 64], sizes = [8, 32], strides = [1, 1]} : vector<8x128xf32> to vector<8x32xf32>
    %501 = vector.extract_strided_slice %496 {offsets = [0, 96], sizes = [8, 32], strides = [1, 1]} : vector<8x128xf32> to vector<8x32xf32>
    %502 = arith.mulf %499, %480 : vector<8x32xf32>
    %503 = arith.mulf %498, %500 : vector<8x32xf32>
    %504 = arith.addf %502, %503 : vector<8x32xf32>
    %505 = math.tanh %504 : vector<8x32xf32>
    %506 = arith.mulf %501, %505 : vector<8x32xf32>
    %507 = arith.cmpi slt, %c7_i32_142, %5 : i32
    %508 = arith.select %507, %506, %479 : vector<8x32xf32>
    %509 = arith.select %507, %504, %480 : vector<8x32xf32>
    %510 = arith.index_cast %c7_i32_142 : i32 to index
    %c0_147 = arith.constant 0 : index
    %c0_148 = arith.constant 0 : index
    %511 = vector.load %arg11[%510, %c0_147, %c0_148] : memref<8x8x32xf32, #tpu.memory_space<vmem>>, vector<1x8x32xf32>
    %512 = vector.shape_cast %511 : vector<1x8x32xf32> to vector<8x32xf32>
    %513 = vector.shape_cast %508 : vector<8x32xf32> to vector<1x8x32xf32>
    tpu.vector_store %arg11[%510, %c0_147, %c0_148], %513 {strides = array<i32>} : memref<8x8x32xf32, #tpu.memory_space<vmem>>, vector<1x8x32xf32>,
    %c8_i32_149 = arith.constant 8 : i32
    %c1_150 = arith.constant 1 : index
    %c0_151 = arith.constant 0 : index
    %c0_152 = arith.constant 0 : index
    %514 = vector.load %arg16[%c1_150, %c0_151, %c0_152] : memref<2x8x32xf32, #tpu.memory_space<vmem>>, vector<1x8x32xf32>
    %515 = vector.shape_cast %514 : vector<1x8x32xf32> to vector<8x32xf32>
    %516 = vector.shape_cast %508 : vector<8x32xf32> to vector<1x8x32xf32>
    tpu.vector_store %arg16[%c1_150, %c0_151, %c0_152], %516 {strides = array<i32>} : memref<2x8x32xf32, #tpu.memory_space<vmem>>, vector<1x8x32xf32>,
    %c1_153 = arith.constant 1 : index
    %c0_154 = arith.constant 0 : index
    %c0_155 = arith.constant 0 : index
    %517 = vector.load %arg17[%c1_153, %c0_154, %c0_155] : memref<2x8x32xf32, #tpu.memory_space<vmem>>, vector<1x8x32xf32>
    %518 = vector.shape_cast %517 : vector<1x8x32xf32> to vector<8x32xf32>
    %519 = vector.shape_cast %509 : vector<8x32xf32> to vector<1x8x32xf32>
    tpu.vector_store %arg17[%c1_153, %c0_154, %c0_155], %519 {strides = array<i32>} : memref<2x8x32xf32, #tpu.memory_space<vmem>>, vector<1x8x32xf32>,
    %c2_i32_156 = arith.constant 2 : i32
    %520 = arith.cmpi eq, %arg1, %c2_i32_156 : i32
    %521 = arith.extui %520 : i1 to i32
    %c0_i32_157 = arith.constant 0 : i32
    %522 = arith.cmpi ne, %521, %c0_i32_157 : i32
    scf.if %522 {
      %c0_158 = arith.constant 0 : index
      %c0_159 = arith.constant 0 : index
      %c0_160 = arith.constant 0 : index
      %523 = vector.load %arg16[%c0_158, %c0_159, %c0_160] : memref<2x8x32xf32, #tpu.memory_space<vmem>>, vector<2x8x32xf32>
      %c0_161 = arith.constant 0 : index
      %c0_162 = arith.constant 0 : index
      %c0_163 = arith.constant 0 : index
      %524 = vector.load %arg12[%c0_161, %c0_162, %c0_163] : memref<2x8x32xf32, #tpu.memory_space<vmem>>, vector<2x8x32xf32>
      tpu.vector_store %arg12[%c0_161, %c0_162, %c0_163], %523 {strides = array<i32>} : memref<2x8x32xf32, #tpu.memory_space<vmem>>, vector<2x8x32xf32>,
      %c0_164 = arith.constant 0 : index
      %c0_165 = arith.constant 0 : index
      %c0_166 = arith.constant 0 : index
      %525 = vector.load %arg17[%c0_164, %c0_165, %c0_166] : memref<2x8x32xf32, #tpu.memory_space<vmem>>, vector<2x8x32xf32>
      %c0_167 = arith.constant 0 : index
      %c0_168 = arith.constant 0 : index
      %c0_169 = arith.constant 0 : index
      %526 = vector.load %arg13[%c0_167, %c0_168, %c0_169] : memref<2x8x32xf32, #tpu.memory_space<vmem>>, vector<2x8x32xf32>
      tpu.vector_store %arg13[%c0_167, %c0_168, %c0_169], %525 {strides = array<i32>} : memref<2x8x32xf32, #tpu.memory_space<vmem>>, vector<2x8x32xf32>,
    } else {
    }
    return
  }
  func.func @transform_0(%arg0: i32, %arg1: i32) -> (i32, i32, i32) {
    %c0_i32 = arith.constant 0 : i32
    %c0_i32_0 = arith.constant 0 : i32
    return %arg1, %arg0, %c0_i32 : i32, i32, i32
  }
  func.func @transform_1(%arg0: i32, %arg1: i32) -> (i32, i32) {
    %c0_i32 = arith.constant 0 : i32
    %c0_i32_0 = arith.constant 0 : i32
    %c0_i32_1 = arith.constant 0 : i32
    return %c0_i32, %c0_i32_0 : i32, i32
  }
  func.func @transform_2(%arg0: i32, %arg1: i32) -> (i32, i32) {
    %c0_i32 = arith.constant 0 : i32
    %c0_i32_0 = arith.constant 0 : i32
    %c0_i32_1 = arith.constant 0 : i32
    return %c0_i32, %c0_i32_0 : i32, i32
  }
  func.func @transform_3(%arg0: i32, %arg1: i32) -> (i32, i32) {
    %c0_i32 = arith.constant 0 : i32
    %c0_i32_0 = arith.constant 0 : i32
    %c0_i32_1 = arith.constant 0 : i32
    return %c0_i32, %c0_i32_0 : i32, i32
  }
  func.func @transform_4(%arg0: i32, %arg1: i32) -> (i32, i32) {
    %c0_i32 = arith.constant 0 : i32
    %c0_i32_0 = arith.constant 0 : i32
    %c0_i32_1 = arith.constant 0 : i32
    return %c0_i32, %c0_i32_0 : i32, i32
  }
  func.func @transform_5(%arg0: i32, %arg1: i32) -> (i32, i32) {
    %c0_i32 = arith.constant 0 : i32
    %c0_i32_0 = arith.constant 0 : i32
    %c0_i32_1 = arith.constant 0 : i32
    return %c0_i32, %c0_i32_0 : i32, i32
  }
  func.func @transform_6(%arg0: i32, %arg1: i32) -> (i32, i32) {
    %c0_i32 = arith.constant 0 : i32
    %c0_i32_0 = arith.constant 0 : i32
    %c0_i32_1 = arith.constant 0 : i32
    return %c0_i32, %c0_i32_0 : i32, i32
  }
  func.func @transform_7(%arg0: i32, %arg1: i32) -> (i32, i32, i32) {
    %c0_i32 = arith.constant 0 : i32
    %c0_i32_0 = arith.constant 0 : i32
    %c0_i32_1 = arith.constant 0 : i32
    return %c0_i32, %arg0, %c0_i32_0 : i32, i32, i32
  }
  func.func @transform_8(%arg0: i32, %arg1: i32) -> (i32, i32, i32) {
    %c0_i32 = arith.constant 0 : i32
    %c0_i32_0 = arith.constant 0 : i32
    %c0_i32_1 = arith.constant 0 : i32
    return %c0_i32, %arg0, %c0_i32_0 : i32, i32, i32
  }
  func.func @transform_9(%arg0: i32, %arg1: i32) -> (i32, i32, i32) {
    %c0_i32 = arith.constant 0 : i32
    %c0_i32_0 = arith.constant 0 : i32
    return %arg1, %arg0, %c0_i32 : i32, i32, i32
  }
  func.func @transform_10(%arg0: i32, %arg1: i32) -> (i32, i32, i32) {
    %c0_i32 = arith.constant 0 : i32
    %c0_i32_0 = arith.constant 0 : i32
    %c0_i32_1 = arith.constant 0 : i32
    return %c0_i32, %arg0, %c0_i32_0 : i32, i32, i32
  }
  func.func @transform_11(%arg0: i32, %arg1: i32) -> (i32, i32, i32) {
    %c0_i32 = arith.constant 0 : i32
    %c0_i32_0 = arith.constant 0 : i32
    %c0_i32_1 = arith.constant 0 : i32
    return %c0_i32, %arg0, %c0_i32_0 : i32, i32, i32
  }
}

module attributes {stable_mosaic.version = 11 : i64} {
  func.func @kernel(%arg0: i32, %arg1: i32, %arg2: memref<8x8x32xbf16, #tpu.memory_space<vmem>>, %arg3: memref<32x128xbf16, #tpu.memory_space<vmem>>, %arg4: memref<32x128xbf16, #tpu.memory_space<vmem>>, %arg5: memref<1x128xf32, #tpu.memory_space<vmem>>, %arg6: memref<32x128xbf16, #tpu.memory_space<vmem>>, %arg7: memref<32x128xbf16, #tpu.memory_space<vmem>>, %arg8: memref<1x128xf32, #tpu.memory_space<vmem>>, %arg9: memref<2x8x32xf32, #tpu.memory_space<vmem>>, %arg10: memref<2x8x32xf32, #tpu.memory_space<vmem>>, %arg11: memref<8x8x32xf32, #tpu.memory_space<vmem>>, %arg12: memref<2x8x32xf32, #tpu.memory_space<vmem>>, %arg13: memref<2x8x32xf32, #tpu.memory_space<vmem>>, %arg14: memref<8x8x32xbf16, #tpu.memory_space<vmem>>, %arg15: memref<8x8x128xbf16, #tpu.memory_space<vmem>>, %arg16: memref<2x8x32xf32, #tpu.memory_space<vmem>>, %arg17: memref<2x8x32xf32, #tpu.memory_space<vmem>>) attributes {dimension_semantics = [#tpu.dimension_semantics<parallel>, #tpu.dimension_semantics<arbitrary>], iteration_bounds = array<i64: 1, 3>, scalar_prefetch = 0 : i64, scratch_operands = 4 : i64, tpu.core_type = #tpu.core_type<tc>, window_params = [{transform_indices = @transform_0, window_bounds = array<i64: 8, 8, 32>}, {pipeline_mode = #tpu.pipeline_mode<synchronous>, transform_indices = @transform_1, window_bounds = array<i64: 32, 128>}, {pipeline_mode = #tpu.pipeline_mode<synchronous>, transform_indices = @transform_2, window_bounds = array<i64: 32, 128>}, {pipeline_mode = #tpu.pipeline_mode<synchronous>, transform_indices = @transform_3, window_bounds = array<i64: 1, 128>}, {pipeline_mode = #tpu.pipeline_mode<synchronous>, transform_indices = @transform_4, window_bounds = array<i64: 32, 128>}, {pipeline_mode = #tpu.pipeline_mode<synchronous>, transform_indices = @transform_5, window_bounds = array<i64: 32, 128>}, {pipeline_mode = #tpu.pipeline_mode<synchronous>, transform_indices = @transform_6, window_bounds = array<i64: 1, 128>}, {transform_indices = @transform_7, window_bounds = array<i64: 2, 8, 32>}, {transform_indices = @transform_8, window_bounds = array<i64: 2, 8, 32>}, {transform_indices = @transform_9, window_bounds = array<i64: 8, 8, 32>}, {transform_indices = @transform_10, window_bounds = array<i64: 2, 8, 32>}, {transform_indices = @transform_11, window_bounds = array<i64: 2, 8, 32>}]} {
    %c0_i32 = arith.constant 0 : i32
    %0 = arith.cmpi eq, %arg1, %c0_i32 : i32
    %1 = arith.extui %0 : i1 to i32
    %c0_i32_0 = arith.constant 0 : i32
    %2 = arith.cmpi ne, %1, %c0_i32_0 : i32
    scf.if %2 {
      %c0_158 = arith.constant 0 : index
      %c0_159 = arith.constant 0 : index
      %c0_160 = arith.constant 0 : index
      %523 = vector.load %arg9[%c0_158, %c0_159, %c0_160] : memref<2x8x32xf32, #tpu.memory_space<vmem>>, vector<2x8x32xf32>
      %c0_161 = arith.constant 0 : index
      %c0_162 = arith.constant 0 : index
      %c0_163 = arith.constant 0 : index
      %524 = vector.load %arg16[%c0_161, %c0_162, %c0_163] : memref<2x8x32xf32, #tpu.memory_space<vmem>>, vector<2x8x32xf32>
      tpu.vector_store %arg16[%c0_161, %c0_162, %c0_163], %523 {strides = array<i32>} : memref<2x8x32xf32, #tpu.memory_space<vmem>>, vector<2x8x32xf32>,
      %c0_164 = arith.constant 0 : index
      %c0_165 = arith.constant 0 : index
      %c0_166 = arith.constant 0 : index
      %525 = vector.load %arg10[%c0_164, %c0_165, %c0_166] : memref<2x8x32xf32, #tpu.memory_space<vmem>>, vector<2x8x32xf32>
      %c0_167 = arith.constant 0 : index
      %c0_168 = arith.constant 0 : index
      %c0_169 = arith.constant 0 : index
      %526 = vector.load %arg17[%c0_167, %c0_168, %c0_169] : memref<2x8x32xf32, #tpu.memory_space<vmem>>, vector<2x8x32xf32>
      tpu.vector_store %arg17[%c0_167, %c0_168, %c0_169], %525 {strides = array<i32>} : memref<2x8x32xf32, #tpu.memory_space<vmem>>, vector<2x8x32xf32>,
    } else {
    }
    %c8_i32 = arith.constant 8 : i32
    %3 = arith.muli %arg1, %c8_i32 : i32
    %c19_i32 = arith.constant 19 : i32
    %4 = arith.subi %c19_i32, %3 : i32
    %c8_i32_1 = arith.constant 8 : i32
    %5 = arith.minsi %c8_i32_1, %4 : i32
    %c0 = arith.constant 0 : index
    %c0_2 = arith.constant 0 : index
    %c0_3 = arith.constant 0 : index
    %6 = vector.load %arg2[%c0, %c0_2, %c0_3] : memref<8x8x32xbf16, #tpu.memory_space<vmem>>, vector<8x8x32xbf16>
    %7 = vector.shape_cast %6 : vector<8x8x32xbf16> to vector<64x32xbf16>
    %c0_4 = arith.constant 0 : index
    %c0_5 = arith.constant 0 : index
    %8 = vector.load %arg3[%c0_4, %c0_5] : memref<32x128xbf16, #tpu.memory_space<vmem>>, vector<32x128xbf16>
    %cst = arith.constant dense<0.000000e+00> : vector<64x128xf32>
    %9 = tpu.matmul %7, %8, %cst {dimension_numbers = #tpu.dot_dimension_numbers<[1], [0], [0], [1], [0, 0, 1, 1], [], []>} : vector<64x32xbf16>, vector<32x128xbf16>, vector<64x128xf32> -> vector<64x128xf32>
    %c0_6 = arith.constant 0 : index
    %c0_7 = arith.constant 0 : index
    %10 = vector.load %arg5[%c0_6, %c0_7] : memref<1x128xf32, #tpu.memory_space<vmem>>, vector<1x128xf32>
    %11 = vector.broadcast %10 : vector<1x128xf32> to vector<64x128xf32>
    %12 = arith.addf %9, %11 : vector<64x128xf32>
    %13 = vector.shape_cast %12 : vector<64x128xf32> to vector<8x8x128xf32>
    %14 = arith.truncf %13 : vector<8x8x128xf32> to vector<8x8x128xbf16>
    %c0_8 = arith.constant 0 : index
    %c0_9 = arith.constant 0 : index
    %c0_10 = arith.constant 0 : index
    %15 = vector.load %arg15[%c0_8, %c0_9, %c0_10] : memref<8x8x128xbf16, #tpu.memory_space<vmem>>, vector<8x8x128xbf16>
    tpu.vector_store %arg15[%c0_8, %c0_9, %c0_10], %14 {strides = array<i32>} : memref<8x8x128xbf16, #tpu.memory_space<vmem>>, vector<8x8x128xbf16>,
    %c0_11 = arith.constant 0 : index
    %c0_12 = arith.constant 0 : index
    %16 = vector.load %arg4[%c0_11, %c0_12] : memref<32x128xbf16, #tpu.memory_space<vmem>>, vector<32x128xbf16>
    %c0_13 = arith.constant 0 : index
    %c0_14 = arith.constant 0 : index
    %c0_15 = arith.constant 0 : index
    %17 = vector.load %arg16[%c0_13, %c0_14, %c0_15] : memref<2x8x32xf32, #tpu.memory_space<vmem>>, vector<1x8x32xf32>
    %18 = vector.shape_cast %17 : vector<1x8x32xf32> to vector<8x32xf32>
    %c0_16 = arith.constant 0 : index
    %c0_17 = arith.constant 0 : index
    %c0_18 = arith.constant 0 : index
    %19 = vector.load %arg17[%c0_16, %c0_17, %c0_18] : memref<2x8x32xf32, #tpu.memory_space<vmem>>, vector<1x8x32xf32>
    %20 = vector.shape_cast %19 : vector<1x8x32xf32> to vector<8x32xf32>
    %c0_i32_19 = arith.constant 0 : i32
    %21 = arith.index_cast %c0_i32_19 : i32 to index
    %c0_20 = arith.constant 0 : index
    %c0_21 = arith.constant 0 : index
    %22 = vector.load %arg15[%21, %c0_20, %c0_21] : memref<8x8x128xbf16, #tpu.memory_space<vmem>>, vector<1x8x128xbf16>
    %23 = vector.shape_cast %22 : vector<1x8x128xbf16> to vector<8x128xbf16>
    %24 = arith.extf %23 : vector<8x128xbf16> to vector<8x128xf32>
    %25 = arith.truncf %18 : vector<8x32xf32> to vector<8x32xbf16>
    %cst_22 = arith.constant dense<0.000000e+00> : vector<8x128xf32>
    %26 = tpu.matmul %25, %16, %cst_22 {dimension_numbers = #tpu.dot_dimension_numbers<[1], [0], [0], [1], [0, 0, 1, 1], [], []>} : vector<8x32xbf16>, vector<32x128xbf16>, vector<8x128xf32> -> vector<8x128xf32>
    %27 = arith.addf %24, %26 : vector<8x128xf32>
    %28 = arith.negf %27 : vector<8x128xf32>
    %29 = math.exp %28 : vector<8x128xf32>
    %cst_23 = arith.constant 1.000000e+00 : f32
    %30 = vector.broadcast %cst_23 : f32 to vector<8x128xf32>
    %31 = arith.addf %30, %29 : vector<8x128xf32>
    %32 = arith.divf %30, %31 : vector<8x128xf32>
    %33 = math.tanh %27 : vector<8x128xf32>
    %34 = vector.extract_strided_slice %32 {offsets = [0, 0], sizes = [8, 32], strides = [1, 1]} : vector<8x128xf32> to vector<8x32xf32>
    %35 = vector.extract_strided_slice %32 {offsets = [0, 32], sizes = [8, 32], strides = [1, 1]} : vector<8x128xf32> to vector<8x32xf32>
    %36 = vector.extract_strided_slice %33 {offsets = [0, 64], sizes = [8, 32], strides = [1, 1]} : vector<8x128xf32> to vector<8x32xf32>
    %37 = vector.extract_strided_slice %32 {offsets = [0, 96], sizes = [8, 32], strides = [1, 1]} : vector<8x128xf32> to vector<8x32xf32>
    %38 = arith.mulf %35, %20 : vector<8x32xf32>
    %39 = arith.mulf %34, %36 : vector<8x32xf32>
    %40 = arith.addf %38, %39 : vector<8x32xf32>
    %41 = math.tanh %40 : vector<8x32xf32>
    %42 = arith.mulf %37, %41 : vector<8x32xf32>
    %43 = arith.cmpi slt, %c0_i32_19, %5 : i32
    %44 = arith.select %43, %42, %18 : vector<8x32xf32>
    %45 = arith.select %43, %40, %20 : vector<8x32xf32>
    %46 = arith.truncf %44 : vector<8x32xf32> to vector<8x32xbf16>
    %47 = arith.index_cast %c0_i32_19 : i32 to index
    %c0_24 = arith.constant 0 : index
    %c0_25 = arith.constant 0 : index
    %48 = vector.load %arg14[%47, %c0_24, %c0_25] : memref<8x8x32xbf16, #tpu.memory_space<vmem>>, vector<1x8x32xbf16>
    %49 = vector.shape_cast %48 : vector<1x8x32xbf16> to vector<8x32xbf16>
    %50 = vector.shape_cast %46 : vector<8x32xbf16> to vector<1x8x32xbf16>
    tpu.vector_store %arg14[%47, %c0_24, %c0_25], %50 {strides = array<i32>} : memref<8x8x32xbf16, #tpu.memory_space<vmem>>, vector<1x8x32xbf16>,
    %c1_i32 = arith.constant 1 : i32
    %51 = arith.index_cast %c1_i32 : i32 to index
    %c0_26 = arith.constant 0 : index
    %c0_27 = arith.constant 0 : index
    %52 = vector.load %arg15[%51, %c0_26, %c0_27] : memref<8x8x128xbf16, #tpu.memory_space<vmem>>, vector<1x8x128xbf16>
    %53 = vector.shape_cast %52 : vector<1x8x128xbf16> to vector<8x128xbf16>
    %54 = arith.extf %53 : vector<8x128xbf16> to vector<8x128xf32>
    %55 = arith.truncf %44 : vector<8x32xf32> to vector<8x32xbf16>
    %cst_28 = arith.constant dense<0.000000e+00> : vector<8x128xf32>
    %56 = tpu.matmul %55, %16, %cst_28 {dimension_numbers = #tpu.dot_dimension_numbers<[1], [0], [0], [1], [0, 0, 1, 1], [], []>} : vector<8x32xbf16>, vector<32x128xbf16>, vector<8x128xf32> -> vector<8x128xf32>
    %57 = arith.addf %54, %56 : vector<8x128xf32>
    %58 = arith.negf %57 : vector<8x128xf32>
    %59 = math.exp %58 : vector<8x128xf32>
    %cst_29 = arith.constant 1.000000e+00 : f32
    %60 = vector.broadcast %cst_29 : f32 to vector<8x128xf32>
    %61 = arith.addf %60, %59 : vector<8x128xf32>
    %62 = arith.divf %60, %61 : vector<8x128xf32>
    %63 = math.tanh %57 : vector<8x128xf32>
    %64 = vector.extract_strided_slice %62 {offsets = [0, 0], sizes = [8, 32], strides = [1, 1]} : vector<8x128xf32> to vector<8x32xf32>
    %65 = vector.extract_strided_slice %62 {offsets = [0, 32], sizes = [8, 32], strides = [1, 1]} : vector<8x128xf32> to vector<8x32xf32>
    %66 = vector.extract_strided_slice %63 {offsets = [0, 64], sizes = [8, 32], strides = [1, 1]} : vector<8x128xf32> to vector<8x32xf32>
    %67 = vector.extract_strided_slice %62 {offsets = [0, 96], sizes = [8, 32], strides = [1, 1]} : vector<8x128xf32> to vector<8x32xf32>
    %68 = arith.mulf %65, %45 : vector<8x32xf32>
    %69 = arith.mulf %64, %66 : vector<8x32xf32>
    %70 = arith.addf %68, %69 : vector<8x32xf32>
    %71 = math.tanh %70 : vector<8x32xf32>
    %72 = arith.mulf %67, %71 : vector<8x32xf32>
    %73 = arith.cmpi slt, %c1_i32, %5 : i32
    %74 = arith.select %73, %72, %44 : vector<8x32xf32>
    %75 = arith.select %73, %70, %45 : vector<8x32xf32>
    %76 = arith.truncf %74 : vector<8x32xf32> to vector<8x32xbf16>
    %77 = arith.index_cast %c1_i32 : i32 to index
    %c0_30 = arith.constant 0 : index
    %c0_31 = arith.constant 0 : index
    %78 = vector.load %arg14[%77, %c0_30, %c0_31] : memref<8x8x32xbf16, #tpu.memory_space<vmem>>, vector<1x8x32xbf16>
    %79 = vector.shape_cast %78 : vector<1x8x32xbf16> to vector<8x32xbf16>
    %80 = vector.shape_cast %76 : vector<8x32xbf16> to vector<1x8x32xbf16>
    tpu.vector_store %arg14[%77, %c0_30, %c0_31], %80 {strides = array<i32>} : memref<8x8x32xbf16, #tpu.memory_space<vmem>>, vector<1x8x32xbf16>,
    %c2_i32 = arith.constant 2 : i32
    %81 = arith.index_cast %c2_i32 : i32 to index
    %c0_32 = arith.constant 0 : index
    %c0_33 = arith.constant 0 : index
    %82 = vector.load %arg15[%81, %c0_32, %c0_33] : memref<8x8x128xbf16, #tpu.memory_space<vmem>>, vector<1x8x128xbf16>
    %83 = vector.shape_cast %82 : vector<1x8x128xbf16> to vector<8x128xbf16>
    %84 = arith.extf %83 : vector<8x128xbf16> to vector<8x128xf32>
    %85 = arith.truncf %74 : vector<8x32xf32> to vector<8x32xbf16>
    %cst_34 = arith.constant dense<0.000000e+00> : vector<8x128xf32>
    %86 = tpu.matmul %85, %16, %cst_34 {dimension_numbers = #tpu.dot_dimension_numbers<[1], [0], [0], [1], [0, 0, 1, 1], [], []>} : vector<8x32xbf16>, vector<32x128xbf16>, vector<8x128xf32> -> vector<8x128xf32>
    %87 = arith.addf %84, %86 : vector<8x128xf32>
    %88 = arith.negf %87 : vector<8x128xf32>
    %89 = math.exp %88 : vector<8x128xf32>
    %cst_35 = arith.constant 1.000000e+00 : f32
    %90 = vector.broadcast %cst_35 : f32 to vector<8x128xf32>
    %91 = arith.addf %90, %89 : vector<8x128xf32>
    %92 = arith.divf %90, %91 : vector<8x128xf32>
    %93 = math.tanh %87 : vector<8x128xf32>
    %94 = vector.extract_strided_slice %92 {offsets = [0, 0], sizes = [8, 32], strides = [1, 1]} : vector<8x128xf32> to vector<8x32xf32>
    %95 = vector.extract_strided_slice %92 {offsets = [0, 32], sizes = [8, 32], strides = [1, 1]} : vector<8x128xf32> to vector<8x32xf32>
    %96 = vector.extract_strided_slice %93 {offsets = [0, 64], sizes = [8, 32], strides = [1, 1]} : vector<8x128xf32> to vector<8x32xf32>
    %97 = vector.extract_strided_slice %92 {offsets = [0, 96], sizes = [8, 32], strides = [1, 1]} : vector<8x128xf32> to vector<8x32xf32>
    %98 = arith.mulf %95, %75 : vector<8x32xf32>
    %99 = arith.mulf %94, %96 : vector<8x32xf32>
    %100 = arith.addf %98, %99 : vector<8x32xf32>
    %101 = math.tanh %100 : vector<8x32xf32>
    %102 = arith.mulf %97, %101 : vector<8x32xf32>
    %103 = arith.cmpi slt, %c2_i32, %5 : i32
    %104 = arith.select %103, %102, %74 : vector<8x32xf32>
    %105 = arith.select %103, %100, %75 : vector<8x32xf32>
    %106 = arith.truncf %104 : vector<8x32xf32> to vector<8x32xbf16>
    %107 = arith.index_cast %c2_i32 : i32 to index
    %c0_36 = arith.constant 0 : index
    %c0_37 = arith.constant 0 : index
    %108 = vector.load %arg14[%107, %c0_36, %c0_37] : memref<8x8x32xbf16, #tpu.memory_space<vmem>>, vector<1x8x32xbf16>
    %109 = vector.shape_cast %108 : vector<1x8x32xbf16> to vector<8x32xbf16>
    %110 = vector.shape_cast %106 : vector<8x32xbf16> to vector<1x8x32xbf16>
    tpu.vector_store %arg14[%107, %c0_36, %c0_37], %110 {strides = array<i32>} : memref<8x8x32xbf16, #tpu.memory_space<vmem>>, vector<1x8x32xbf16>,
    %c3_i32 = arith.constant 3 : i32
    %111 = arith.index_cast %c3_i32 : i32 to index
    %c0_38 = arith.constant 0 : index
    %c0_39 = arith.constant 0 : index
    %112 = vector.load %arg15[%111, %c0_38, %c0_39] : memref<8x8x128xbf16, #tpu.memory_space<vmem>>, vector<1x8x128xbf16>
    %113 = vector.shape_cast %112 : vector<1x8x128xbf16> to vector<8x128xbf16>
    %114 = arith.extf %113 : vector<8x128xbf16> to vector<8x128xf32>
    %115 = arith.truncf %104 : vector<8x32xf32> to vector<8x32xbf16>
    %cst_40 = arith.constant dense<0.000000e+00> : vector<8x128xf32>
    %116 = tpu.matmul %115, %16, %cst_40 {dimension_numbers = #tpu.dot_dimension_numbers<[1], [0], [0], [1], [0, 0, 1, 1], [], []>} : vector<8x32xbf16>, vector<32x128xbf16>, vector<8x128xf32> -> vector<8x128xf32>
    %117 = arith.addf %114, %116 : vector<8x128xf32>
    %118 = arith.negf %117 : vector<8x128xf32>
    %119 = math.exp %118 : vector<8x128xf32>
    %cst_41 = arith.constant 1.000000e+00 : f32
    %120 = vector.broadcast %cst_41 : f32 to vector<8x128xf32>
    %121 = arith.addf %120, %119 : vector<8x128xf32>
    %122 = arith.divf %120, %121 : vector<8x128xf32>
    %123 = math.tanh %117 : vector<8x128xf32>
    %124 = vector.extract_strided_slice %122 {offsets = [0, 0], sizes = [8, 32], strides = [1, 1]} : vector<8x128xf32> to vector<8x32xf32>
    %125 = vector.extract_strided_slice %122 {offsets = [0, 32], sizes = [8, 32], strides = [1, 1]} : vector<8x128xf32> to vector<8x32xf32>
    %126 = vector.extract_strided_slice %123 {offsets = [0, 64], sizes = [8, 32], strides = [1, 1]} : vector<8x128xf32> to vector<8x32xf32>
    %127 = vector.extract_strided_slice %122 {offsets = [0, 96], sizes = [8, 32], strides = [1, 1]} : vector<8x128xf32> to vector<8x32xf32>
    %128 = arith.mulf %125, %105 : vector<8x32xf32>
    %129 = arith.mulf %124, %126 : vector<8x32xf32>
    %130 = arith.addf %128, %129 : vector<8x32xf32>
    %131 = math.tanh %130 : vector<8x32xf32>
    %132 = arith.mulf %127, %131 : vector<8x32xf32>
    %133 = arith.cmpi slt, %c3_i32, %5 : i32
    %134 = arith.select %133, %132, %104 : vector<8x32xf32>
    %135 = arith.select %133, %130, %105 : vector<8x32xf32>
    %136 = arith.truncf %134 : vector<8x32xf32> to vector<8x32xbf16>
    %137 = arith.index_cast %c3_i32 : i32 to index
    %c0_42 = arith.constant 0 : index
    %c0_43 = arith.constant 0 : index
    %138 = vector.load %arg14[%137, %c0_42, %c0_43] : memref<8x8x32xbf16, #tpu.memory_space<vmem>>, vector<1x8x32xbf16>
    %139 = vector.shape_cast %138 : vector<1x8x32xbf16> to vector<8x32xbf16>
    %140 = vector.shape_cast %136 : vector<8x32xbf16> to vector<1x8x32xbf16>
    tpu.vector_store %arg14[%137, %c0_42, %c0_43], %140 {strides = array<i32>} : memref<8x8x32xbf16, #tpu.memory_space<vmem>>, vector<1x8x32xbf16>,
    %c4_i32 = arith.constant 4 : i32
    %141 = arith.index_cast %c4_i32 : i32 to index
    %c0_44 = arith.constant 0 : index
    %c0_45 = arith.constant 0 : index
    %142 = vector.load %arg15[%141, %c0_44, %c0_45] : memref<8x8x128xbf16, #tpu.memory_space<vmem>>, vector<1x8x128xbf16>
    %143 = vector.shape_cast %142 : vector<1x8x128xbf16> to vector<8x128xbf16>
    %144 = arith.extf %143 : vector<8x128xbf16> to vector<8x128xf32>
    %145 = arith.truncf %134 : vector<8x32xf32> to vector<8x32xbf16>
    %cst_46 = arith.constant dense<0.000000e+00> : vector<8x128xf32>
    %146 = tpu.matmul %145, %16, %cst_46 {dimension_numbers = #tpu.dot_dimension_numbers<[1], [0], [0], [1], [0, 0, 1, 1], [], []>} : vector<8x32xbf16>, vector<32x128xbf16>, vector<8x128xf32> -> vector<8x128xf32>
    %147 = arith.addf %144, %146 : vector<8x128xf32>
    %148 = arith.negf %147 : vector<8x128xf32>
    %149 = math.exp %148 : vector<8x128xf32>
    %cst_47 = arith.constant 1.000000e+00 : f32
    %150 = vector.broadcast %cst_47 : f32 to vector<8x128xf32>
    %151 = arith.addf %150, %149 : vector<8x128xf32>
    %152 = arith.divf %150, %151 : vector<8x128xf32>
    %153 = math.tanh %147 : vector<8x128xf32>
    %154 = vector.extract_strided_slice %152 {offsets = [0, 0], sizes = [8, 32], strides = [1, 1]} : vector<8x128xf32> to vector<8x32xf32>
    %155 = vector.extract_strided_slice %152 {offsets = [0, 32], sizes = [8, 32], strides = [1, 1]} : vector<8x128xf32> to vector<8x32xf32>
    %156 = vector.extract_strided_slice %153 {offsets = [0, 64], sizes = [8, 32], strides = [1, 1]} : vector<8x128xf32> to vector<8x32xf32>
    %157 = vector.extract_strided_slice %152 {offsets = [0, 96], sizes = [8, 32], strides = [1, 1]} : vector<8x128xf32> to vector<8x32xf32>
    %158 = arith.mulf %155, %135 : vector<8x32xf32>
    %159 = arith.mulf %154, %156 : vector<8x32xf32>
    %160 = arith.addf %158, %159 : vector<8x32xf32>
    %161 = math.tanh %160 : vector<8x32xf32>
    %162 = arith.mulf %157, %161 : vector<8x32xf32>
    %163 = arith.cmpi slt, %c4_i32, %5 : i32
    %164 = arith.select %163, %162, %134 : vector<8x32xf32>
    %165 = arith.select %163, %160, %135 : vector<8x32xf32>
    %166 = arith.truncf %164 : vector<8x32xf32> to vector<8x32xbf16>
    %167 = arith.index_cast %c4_i32 : i32 to index
    %c0_48 = arith.constant 0 : index
    %c0_49 = arith.constant 0 : index
    %168 = vector.load %arg14[%167, %c0_48, %c0_49] : memref<8x8x32xbf16, #tpu.memory_space<vmem>>, vector<1x8x32xbf16>
    %169 = vector.shape_cast %168 : vector<1x8x32xbf16> to vector<8x32xbf16>
    %170 = vector.shape_cast %166 : vector<8x32xbf16> to vector<1x8x32xbf16>
    tpu.vector_store %arg14[%167, %c0_48, %c0_49], %170 {strides = array<i32>} : memref<8x8x32xbf16, #tpu.memory_space<vmem>>, vector<1x8x32xbf16>,
    %c5_i32 = arith.constant 5 : i32
    %171 = arith.index_cast %c5_i32 : i32 to index
    %c0_50 = arith.constant 0 : index
    %c0_51 = arith.constant 0 : index
    %172 = vector.load %arg15[%171, %c0_50, %c0_51] : memref<8x8x128xbf16, #tpu.memory_space<vmem>>, vector<1x8x128xbf16>
    %173 = vector.shape_cast %172 : vector<1x8x128xbf16> to vector<8x128xbf16>
    %174 = arith.extf %173 : vector<8x128xbf16> to vector<8x128xf32>
    %175 = arith.truncf %164 : vector<8x32xf32> to vector<8x32xbf16>
    %cst_52 = arith.constant dense<0.000000e+00> : vector<8x128xf32>
    %176 = tpu.matmul %175, %16, %cst_52 {dimension_numbers = #tpu.dot_dimension_numbers<[1], [0], [0], [1], [0, 0, 1, 1], [], []>} : vector<8x32xbf16>, vector<32x128xbf16>, vector<8x128xf32> -> vector<8x128xf32>
    %177 = arith.addf %174, %176 : vector<8x128xf32>
    %178 = arith.negf %177 : vector<8x128xf32>
    %179 = math.exp %178 : vector<8x128xf32>
    %cst_53 = arith.constant 1.000000e+00 : f32
    %180 = vector.broadcast %cst_53 : f32 to vector<8x128xf32>
    %181 = arith.addf %180, %179 : vector<8x128xf32>
    %182 = arith.divf %180, %181 : vector<8x128xf32>
    %183 = math.tanh %177 : vector<8x128xf32>
    %184 = vector.extract_strided_slice %182 {offsets = [0, 0], sizes = [8, 32], strides = [1, 1]} : vector<8x128xf32> to vector<8x32xf32>
    %185 = vector.extract_strided_slice %182 {offsets = [0, 32], sizes = [8, 32], strides = [1, 1]} : vector<8x128xf32> to vector<8x32xf32>
    %186 = vector.extract_strided_slice %183 {offsets = [0, 64], sizes = [8, 32], strides = [1, 1]} : vector<8x128xf32> to vector<8x32xf32>
    %187 = vector.extract_strided_slice %182 {offsets = [0, 96], sizes = [8, 32], strides = [1, 1]} : vector<8x128xf32> to vector<8x32xf32>
    %188 = arith.mulf %185, %165 : vector<8x32xf32>
    %189 = arith.mulf %184, %186 : vector<8x32xf32>
    %190 = arith.addf %188, %189 : vector<8x32xf32>
    %191 = math.tanh %190 : vector<8x32xf32>
    %192 = arith.mulf %187, %191 : vector<8x32xf32>
    %193 = arith.cmpi slt, %c5_i32, %5 : i32
    %194 = arith.select %193, %192, %164 : vector<8x32xf32>
    %195 = arith.select %193, %190, %165 : vector<8x32xf32>
    %196 = arith.truncf %194 : vector<8x32xf32> to vector<8x32xbf16>
    %197 = arith.index_cast %c5_i32 : i32 to index
    %c0_54 = arith.constant 0 : index
    %c0_55 = arith.constant 0 : index
    %198 = vector.load %arg14[%197, %c0_54, %c0_55] : memref<8x8x32xbf16, #tpu.memory_space<vmem>>, vector<1x8x32xbf16>
    %199 = vector.shape_cast %198 : vector<1x8x32xbf16> to vector<8x32xbf16>
    %200 = vector.shape_cast %196 : vector<8x32xbf16> to vector<1x8x32xbf16>
    tpu.vector_store %arg14[%197, %c0_54, %c0_55], %200 {strides = array<i32>} : memref<8x8x32xbf16, #tpu.memory_space<vmem>>, vector<1x8x32xbf16>,
    %c6_i32 = arith.constant 6 : i32
    %201 = arith.index_cast %c6_i32 : i32 to index
    %c0_56 = arith.constant 0 : index
    %c0_57 = arith.constant 0 : index
    %202 = vector.load %arg15[%201, %c0_56, %c0_57] : memref<8x8x128xbf16, #tpu.memory_space<vmem>>, vector<1x8x128xbf16>
    %203 = vector.shape_cast %202 : vector<1x8x128xbf16> to vector<8x128xbf16>
    %204 = arith.extf %203 : vector<8x128xbf16> to vector<8x128xf32>
    %205 = arith.truncf %194 : vector<8x32xf32> to vector<8x32xbf16>
    %cst_58 = arith.constant dense<0.000000e+00> : vector<8x128xf32>
    %206 = tpu.matmul %205, %16, %cst_58 {dimension_numbers = #tpu.dot_dimension_numbers<[1], [0], [0], [1], [0, 0, 1, 1], [], []>} : vector<8x32xbf16>, vector<32x128xbf16>, vector<8x128xf32> -> vector<8x128xf32>
    %207 = arith.addf %204, %206 : vector<8x128xf32>
    %208 = arith.negf %207 : vector<8x128xf32>
    %209 = math.exp %208 : vector<8x128xf32>
    %cst_59 = arith.constant 1.000000e+00 : f32
    %210 = vector.broadcast %cst_59 : f32 to vector<8x128xf32>
    %211 = arith.addf %210, %209 : vector<8x128xf32>
    %212 = arith.divf %210, %211 : vector<8x128xf32>
    %213 = math.tanh %207 : vector<8x128xf32>
    %214 = vector.extract_strided_slice %212 {offsets = [0, 0], sizes = [8, 32], strides = [1, 1]} : vector<8x128xf32> to vector<8x32xf32>
    %215 = vector.extract_strided_slice %212 {offsets = [0, 32], sizes = [8, 32], strides = [1, 1]} : vector<8x128xf32> to vector<8x32xf32>
    %216 = vector.extract_strided_slice %213 {offsets = [0, 64], sizes = [8, 32], strides = [1, 1]} : vector<8x128xf32> to vector<8x32xf32>
    %217 = vector.extract_strided_slice %212 {offsets = [0, 96], sizes = [8, 32], strides = [1, 1]} : vector<8x128xf32> to vector<8x32xf32>
    %218 = arith.mulf %215, %195 : vector<8x32xf32>
    %219 = arith.mulf %214, %216 : vector<8x32xf32>
    %220 = arith.addf %218, %219 : vector<8x32xf32>
    %221 = math.tanh %220 : vector<8x32xf32>
    %222 = arith.mulf %217, %221 : vector<8x32xf32>
    %223 = arith.cmpi slt, %c6_i32, %5 : i32
    %224 = arith.select %223, %222, %194 : vector<8x32xf32>
    %225 = arith.select %223, %220, %195 : vector<8x32xf32>
    %226 = arith.truncf %224 : vector<8x32xf32> to vector<8x32xbf16>
    %227 = arith.index_cast %c6_i32 : i32 to index
    %c0_60 = arith.constant 0 : index
    %c0_61 = arith.constant 0 : index
    %228 = vector.load %arg14[%227, %c0_60, %c0_61] : memref<8x8x32xbf16, #tpu.memory_space<vmem>>, vector<1x8x32xbf16>
    %229 = vector.shape_cast %228 : vector<1x8x32xbf16> to vector<8x32xbf16>
    %230 = vector.shape_cast %226 : vector<8x32xbf16> to vector<1x8x32xbf16>
    tpu.vector_store %arg14[%227, %c0_60, %c0_61], %230 {strides = array<i32>} : memref<8x8x32xbf16, #tpu.memory_space<vmem>>, vector<1x8x32xbf16>,
    %c7_i32 = arith.constant 7 : i32
    %231 = arith.index_cast %c7_i32 : i32 to index
    %c0_62 = arith.constant 0 : index
    %c0_63 = arith.constant 0 : index
    %232 = vector.load %arg15[%231, %c0_62, %c0_63] : memref<8x8x128xbf16, #tpu.memory_space<vmem>>, vector<1x8x128xbf16>
    %233 = vector.shape_cast %232 : vector<1x8x128xbf16> to vector<8x128xbf16>
    %234 = arith.extf %233 : vector<8x128xbf16> to vector<8x128xf32>
    %235 = arith.truncf %224 : vector<8x32xf32> to vector<8x32xbf16>
    %cst_64 = arith.constant dense<0.000000e+00> : vector<8x128xf32>
    %236 = tpu.matmul %235, %16, %cst_64 {dimension_numbers = #tpu.dot_dimension_numbers<[1], [0], [0], [1], [0, 0, 1, 1], [], []>} : vector<8x32xbf16>, vector<32x128xbf16>, vector<8x128xf32> -> vector<8x128xf32>
    %237 = arith.addf %234, %236 : vector<8x128xf32>
    %238 = arith.negf %237 : vector<8x128xf32>
    %239 = math.exp %238 : vector<8x128xf32>
    %cst_65 = arith.constant 1.000000e+00 : f32
    %240 = vector.broadcast %cst_65 : f32 to vector<8x128xf32>
    %241 = arith.addf %240, %239 : vector<8x128xf32>
    %242 = arith.divf %240, %241 : vector<8x128xf32>
    %243 = math.tanh %237 : vector<8x128xf32>
    %244 = vector.extract_strided_slice %242 {offsets = [0, 0], sizes = [8, 32], strides = [1, 1]} : vector<8x128xf32> to vector<8x32xf32>
    %245 = vector.extract_strided_slice %242 {offsets = [0, 32], sizes = [8, 32], strides = [1, 1]} : vector<8x128xf32> to vector<8x32xf32>
    %246 = vector.extract_strided_slice %243 {offsets = [0, 64], sizes = [8, 32], strides = [1, 1]} : vector<8x128xf32> to vector<8x32xf32>
    %247 = vector.extract_strided_slice %242 {offsets = [0, 96], sizes = [8, 32], strides = [1, 1]} : vector<8x128xf32> to vector<8x32xf32>
    %248 = arith.mulf %245, %225 : vector<8x32xf32>
    %249 = arith.mulf %244, %246 : vector<8x32xf32>
    %250 = arith.addf %248, %249 : vector<8x32xf32>
    %251 = math.tanh %250 : vector<8x32xf32>
    %252 = arith.mulf %247, %251 : vector<8x32xf32>
    %253 = arith.cmpi slt, %c7_i32, %5 : i32
    %254 = arith.select %253, %252, %224 : vector<8x32xf32>
    %255 = arith.select %253, %250, %225 : vector<8x32xf32>
    %256 = arith.truncf %254 : vector<8x32xf32> to vector<8x32xbf16>
    %257 = arith.index_cast %c7_i32 : i32 to index
    %c0_66 = arith.constant 0 : index
    %c0_67 = arith.constant 0 : index
    %258 = vector.load %arg14[%257, %c0_66, %c0_67] : memref<8x8x32xbf16, #tpu.memory_space<vmem>>, vector<1x8x32xbf16>
    %259 = vector.shape_cast %258 : vector<1x8x32xbf16> to vector<8x32xbf16>
    %260 = vector.shape_cast %256 : vector<8x32xbf16> to vector<1x8x32xbf16>
    tpu.vector_store %arg14[%257, %c0_66, %c0_67], %260 {strides = array<i32>} : memref<8x8x32xbf16, #tpu.memory_space<vmem>>, vector<1x8x32xbf16>,
    %c8_i32_68 = arith.constant 8 : i32
    %c0_69 = arith.constant 0 : index
    %c0_70 = arith.constant 0 : index
    %c0_71 = arith.constant 0 : index
    %261 = vector.load %arg16[%c0_69, %c0_70, %c0_71] : memref<2x8x32xf32, #tpu.memory_space<vmem>>, vector<1x8x32xf32>
    %262 = vector.shape_cast %261 : vector<1x8x32xf32> to vector<8x32xf32>
    %263 = vector.shape_cast %254 : vector<8x32xf32> to vector<1x8x32xf32>
    tpu.vector_store %arg16[%c0_69, %c0_70, %c0_71], %263 {strides = array<i32>} : memref<2x8x32xf32, #tpu.memory_space<vmem>>, vector<1x8x32xf32>,
    %c0_72 = arith.constant 0 : index
    %c0_73 = arith.constant 0 : index
    %c0_74 = arith.constant 0 : index
    %264 = vector.load %arg17[%c0_72, %c0_73, %c0_74] : memref<2x8x32xf32, #tpu.memory_space<vmem>>, vector<1x8x32xf32>
    %265 = vector.shape_cast %264 : vector<1x8x32xf32> to vector<8x32xf32>
    %266 = vector.shape_cast %255 : vector<8x32xf32> to vector<1x8x32xf32>
    tpu.vector_store %arg17[%c0_72, %c0_73, %c0_74], %266 {strides = array<i32>} : memref<2x8x32xf32, #tpu.memory_space<vmem>>, vector<1x8x32xf32>,
    %c0_75 = arith.constant 0 : index
    %c0_76 = arith.constant 0 : index
    %c0_77 = arith.constant 0 : index
    %267 = vector.load %arg14[%c0_75, %c0_76, %c0_77] : memref<8x8x32xbf16, #tpu.memory_space<vmem>>, vector<8x8x32xbf16>
    %268 = vector.shape_cast %267 : vector<8x8x32xbf16> to vector<64x32xbf16>
    %c0_78 = arith.constant 0 : index
    %c0_79 = arith.constant 0 : index
    %269 = vector.load %arg6[%c0_78, %c0_79] : memref<32x128xbf16, #tpu.memory_space<vmem>>, vector<32x128xbf16>
    %cst_80 = arith.constant dense<0.000000e+00> : vector<64x128xf32>
    %270 = tpu.matmul %268, %269, %cst_80 {dimension_numbers = #tpu.dot_dimension_numbers<[1], [0], [0], [1], [0, 0, 1, 1], [], []>} : vector<64x32xbf16>, vector<32x128xbf16>, vector<64x128xf32> -> vector<64x128xf32>
    %c0_81 = arith.constant 0 : index
    %c0_82 = arith.constant 0 : index
    %271 = vector.load %arg8[%c0_81, %c0_82] : memref<1x128xf32, #tpu.memory_space<vmem>>, vector<1x128xf32>
    %272 = vector.broadcast %271 : vector<1x128xf32> to vector<64x128xf32>
    %273 = arith.addf %270, %272 : vector<64x128xf32>
    %274 = vector.shape_cast %273 : vector<64x128xf32> to vector<8x8x128xf32>
    %275 = arith.truncf %274 : vector<8x8x128xf32> to vector<8x8x128xbf16>
    %c0_83 = arith.constant 0 : index
    %c0_84 = arith.constant 0 : index
    %c0_85 = arith.constant 0 : index
    %276 = vector.load %arg15[%c0_83, %c0_84, %c0_85] : memref<8x8x128xbf16, #tpu.memory_space<vmem>>, vector<8x8x128xbf16>
    tpu.vector_store %arg15[%c0_83, %c0_84, %c0_85], %275 {strides = array<i32>} : memref<8x8x128xbf16, #tpu.memory_space<vmem>>, vector<8x8x128xbf16>,
    %c0_86 = arith.constant 0 : index
    %c0_87 = arith.constant 0 : index
    %277 = vector.load %arg7[%c0_86, %c0_87] : memref<32x128xbf16, #tpu.memory_space<vmem>>, vector<32x128xbf16>
    %c1 = arith.constant 1 : index
    %c0_88 = arith.constant 0 : index
    %c0_89 = arith.constant 0 : index
    %278 = vector.load %arg16[%c1, %c0_88, %c0_89] : memref<2x8x32xf32, #tpu.memory_space<vmem>>, vector<1x8x32xf32>
    %279 = vector.shape_cast %278 : vector<1x8x32xf32> to vector<8x32xf32>
    %c1_90 = arith.constant 1 : index
    %c0_91 = arith.constant 0 : index
    %c0_92 = arith.constant 0 : index
    %280 = vector.load %arg17[%c1_90, %c0_91, %c0_92] : memref<2x8x32xf32, #tpu.memory_space<vmem>>, vector<1x8x32xf32>
    %281 = vector.shape_cast %280 : vector<1x8x32xf32> to vector<8x32xf32>
    %c0_i32_93 = arith.constant 0 : i32
    %282 = arith.index_cast %c0_i32_93 : i32 to index
    %c0_94 = arith.constant 0 : index
    %c0_95 = arith.constant 0 : index
    %283 = vector.load %arg15[%282, %c0_94, %c0_95] : memref<8x8x128xbf16, #tpu.memory_space<vmem>>, vector<1x8x128xbf16>
    %284 = vector.shape_cast %283 : vector<1x8x128xbf16> to vector<8x128xbf16>
    %285 = arith.extf %284 : vector<8x128xbf16> to vector<8x128xf32>
    %286 = arith.truncf %279 : vector<8x32xf32> to vector<8x32xbf16>
    %cst_96 = arith.constant dense<0.000000e+00> : vector<8x128xf32>
    %287 = tpu.matmul %286, %277, %cst_96 {dimension_numbers = #tpu.dot_dimension_numbers<[1], [0], [0], [1], [0, 0, 1, 1], [], []>} : vector<8x32xbf16>, vector<32x128xbf16>, vector<8x128xf32> -> vector<8x128xf32>
    %288 = arith.addf %285, %287 : vector<8x128xf32>
    %289 = arith.negf %288 : vector<8x128xf32>
    %290 = math.exp %289 : vector<8x128xf32>
    %cst_97 = arith.constant 1.000000e+00 : f32
    %291 = vector.broadcast %cst_97 : f32 to vector<8x128xf32>
    %292 = arith.addf %291, %290 : vector<8x128xf32>
    %293 = arith.divf %291, %292 : vector<8x128xf32>
    %294 = math.tanh %288 : vector<8x128xf32>
    %295 = vector.extract_strided_slice %293 {offsets = [0, 0], sizes = [8, 32], strides = [1, 1]} : vector<8x128xf32> to vector<8x32xf32>
    %296 = vector.extract_strided_slice %293 {offsets = [0, 32], sizes = [8, 32], strides = [1, 1]} : vector<8x128xf32> to vector<8x32xf32>
    %297 = vector.extract_strided_slice %294 {offsets = [0, 64], sizes = [8, 32], strides = [1, 1]} : vector<8x128xf32> to vector<8x32xf32>
    %298 = vector.extract_strided_slice %293 {offsets = [0, 96], sizes = [8, 32], strides = [1, 1]} : vector<8x128xf32> to vector<8x32xf32>
    %299 = arith.mulf %296, %281 : vector<8x32xf32>
    %300 = arith.mulf %295, %297 : vector<8x32xf32>
    %301 = arith.addf %299, %300 : vector<8x32xf32>
    %302 = math.tanh %301 : vector<8x32xf32>
    %303 = arith.mulf %298, %302 : vector<8x32xf32>
    %304 = arith.cmpi slt, %c0_i32_93, %5 : i32
    %305 = arith.select %304, %303, %279 : vector<8x32xf32>
    %306 = arith.select %304, %301, %281 : vector<8x32xf32>
    %307 = arith.index_cast %c0_i32_93 : i32 to index
    %c0_98 = arith.constant 0 : index
    %c0_99 = arith.constant 0 : index
    %308 = vector.load %arg11[%307, %c0_98, %c0_99] : memref<8x8x32xf32, #tpu.memory_space<vmem>>, vector<1x8x32xf32>
    %309 = vector.shape_cast %308 : vector<1x8x32xf32> to vector<8x32xf32>
    %310 = vector.shape_cast %305 : vector<8x32xf32> to vector<1x8x32xf32>
    tpu.vector_store %arg11[%307, %c0_98, %c0_99], %310 {strides = array<i32>} : memref<8x8x32xf32, #tpu.memory_space<vmem>>, vector<1x8x32xf32>,
    %c1_i32_100 = arith.constant 1 : i32
    %311 = arith.index_cast %c1_i32_100 : i32 to index
    %c0_101 = arith.constant 0 : index
    %c0_102 = arith.constant 0 : index
    %312 = vector.load %arg15[%311, %c0_101, %c0_102] : memref<8x8x128xbf16, #tpu.memory_space<vmem>>, vector<1x8x128xbf16>
    %313 = vector.shape_cast %312 : vector<1x8x128xbf16> to vector<8x128xbf16>
    %314 = arith.extf %313 : vector<8x128xbf16> to vector<8x128xf32>
    %315 = arith.truncf %305 : vector<8x32xf32> to vector<8x32xbf16>
    %cst_103 = arith.constant dense<0.000000e+00> : vector<8x128xf32>
    %316 = tpu.matmul %315, %277, %cst_103 {dimension_numbers = #tpu.dot_dimension_numbers<[1], [0], [0], [1], [0, 0, 1, 1], [], []>} : vector<8x32xbf16>, vector<32x128xbf16>, vector<8x128xf32> -> vector<8x128xf32>
    %317 = arith.addf %314, %316 : vector<8x128xf32>
    %318 = arith.negf %317 : vector<8x128xf32>
    %319 = math.exp %318 : vector<8x128xf32>
    %cst_104 = arith.constant 1.000000e+00 : f32
    %320 = vector.broadcast %cst_104 : f32 to vector<8x128xf32>
    %321 = arith.addf %320, %319 : vector<8x128xf32>
    %322 = arith.divf %320, %321 : vector<8x128xf32>
    %323 = math.tanh %317 : vector<8x128xf32>
    %324 = vector.extract_strided_slice %322 {offsets = [0, 0], sizes = [8, 32], strides = [1, 1]} : vector<8x128xf32> to vector<8x32xf32>
    %325 = vector.extract_strided_slice %322 {offsets = [0, 32], sizes = [8, 32], strides = [1, 1]} : vector<8x128xf32> to vector<8x32xf32>
    %326 = vector.extract_strided_slice %323 {offsets = [0, 64], sizes = [8, 32], strides = [1, 1]} : vector<8x128xf32> to vector<8x32xf32>
    %327 = vector.extract_strided_slice %322 {offsets = [0, 96], sizes = [8, 32], strides = [1, 1]} : vector<8x128xf32> to vector<8x32xf32>
    %328 = arith.mulf %325, %306 : vector<8x32xf32>
    %329 = arith.mulf %324, %326 : vector<8x32xf32>
    %330 = arith.addf %328, %329 : vector<8x32xf32>
    %331 = math.tanh %330 : vector<8x32xf32>
    %332 = arith.mulf %327, %331 : vector<8x32xf32>
    %333 = arith.cmpi slt, %c1_i32_100, %5 : i32
    %334 = arith.select %333, %332, %305 : vector<8x32xf32>
    %335 = arith.select %333, %330, %306 : vector<8x32xf32>
    %336 = arith.index_cast %c1_i32_100 : i32 to index
    %c0_105 = arith.constant 0 : index
    %c0_106 = arith.constant 0 : index
    %337 = vector.load %arg11[%336, %c0_105, %c0_106] : memref<8x8x32xf32, #tpu.memory_space<vmem>>, vector<1x8x32xf32>
    %338 = vector.shape_cast %337 : vector<1x8x32xf32> to vector<8x32xf32>
    %339 = vector.shape_cast %334 : vector<8x32xf32> to vector<1x8x32xf32>
    tpu.vector_store %arg11[%336, %c0_105, %c0_106], %339 {strides = array<i32>} : memref<8x8x32xf32, #tpu.memory_space<vmem>>, vector<1x8x32xf32>,
    %c2_i32_107 = arith.constant 2 : i32
    %340 = arith.index_cast %c2_i32_107 : i32 to index
    %c0_108 = arith.constant 0 : index
    %c0_109 = arith.constant 0 : index
    %341 = vector.load %arg15[%340, %c0_108, %c0_109] : memref<8x8x128xbf16, #tpu.memory_space<vmem>>, vector<1x8x128xbf16>
    %342 = vector.shape_cast %341 : vector<1x8x128xbf16> to vector<8x128xbf16>
    %343 = arith.extf %342 : vector<8x128xbf16> to vector<8x128xf32>
    %344 = arith.truncf %334 : vector<8x32xf32> to vector<8x32xbf16>
    %cst_110 = arith.constant dense<0.000000e+00> : vector<8x128xf32>
    %345 = tpu.matmul %344, %277, %cst_110 {dimension_numbers = #tpu.dot_dimension_numbers<[1], [0], [0], [1], [0, 0, 1, 1], [], []>} : vector<8x32xbf16>, vector<32x128xbf16>, vector<8x128xf32> -> vector<8x128xf32>
    %346 = arith.addf %343, %345 : vector<8x128xf32>
    %347 = arith.negf %346 : vector<8x128xf32>
    %348 = math.exp %347 : vector<8x128xf32>
    %cst_111 = arith.constant 1.000000e+00 : f32
    %349 = vector.broadcast %cst_111 : f32 to vector<8x128xf32>
    %350 = arith.addf %349, %348 : vector<8x128xf32>
    %351 = arith.divf %349, %350 : vector<8x128xf32>
    %352 = math.tanh %346 : vector<8x128xf32>
    %353 = vector.extract_strided_slice %351 {offsets = [0, 0], sizes = [8, 32], strides = [1, 1]} : vector<8x128xf32> to vector<8x32xf32>
    %354 = vector.extract_strided_slice %351 {offsets = [0, 32], sizes = [8, 32], strides = [1, 1]} : vector<8x128xf32> to vector<8x32xf32>
    %355 = vector.extract_strided_slice %352 {offsets = [0, 64], sizes = [8, 32], strides = [1, 1]} : vector<8x128xf32> to vector<8x32xf32>
    %356 = vector.extract_strided_slice %351 {offsets = [0, 96], sizes = [8, 32], strides = [1, 1]} : vector<8x128xf32> to vector<8x32xf32>
    %357 = arith.mulf %354, %335 : vector<8x32xf32>
    %358 = arith.mulf %353, %355 : vector<8x32xf32>
    %359 = arith.addf %357, %358 : vector<8x32xf32>
    %360 = math.tanh %359 : vector<8x32xf32>
    %361 = arith.mulf %356, %360 : vector<8x32xf32>
    %362 = arith.cmpi slt, %c2_i32_107, %5 : i32
    %363 = arith.select %362, %361, %334 : vector<8x32xf32>
    %364 = arith.select %362, %359, %335 : vector<8x32xf32>
    %365 = arith.index_cast %c2_i32_107 : i32 to index
    %c0_112 = arith.constant 0 : index
    %c0_113 = arith.constant 0 : index
    %366 = vector.load %arg11[%365, %c0_112, %c0_113] : memref<8x8x32xf32, #tpu.memory_space<vmem>>, vector<1x8x32xf32>
    %367 = vector.shape_cast %366 : vector<1x8x32xf32> to vector<8x32xf32>
    %368 = vector.shape_cast %363 : vector<8x32xf32> to vector<1x8x32xf32>
    tpu.vector_store %arg11[%365, %c0_112, %c0_113], %368 {strides = array<i32>} : memref<8x8x32xf32, #tpu.memory_space<vmem>>, vector<1x8x32xf32>,
    %c3_i32_114 = arith.constant 3 : i32
    %369 = arith.index_cast %c3_i32_114 : i32 to index
    %c0_115 = arith.constant 0 : index
    %c0_116 = arith.constant 0 : index
    %370 = vector.load %arg15[%369, %c0_115, %c0_116] : memref<8x8x128xbf16, #tpu.memory_space<vmem>>, vector<1x8x128xbf16>
    %371 = vector.shape_cast %370 : vector<1x8x128xbf16> to vector<8x128xbf16>
    %372 = arith.extf %371 : vector<8x128xbf16> to vector<8x128xf32>
    %373 = arith.truncf %363 : vector<8x32xf32> to vector<8x32xbf16>
    %cst_117 = arith.constant dense<0.000000e+00> : vector<8x128xf32>
    %374 = tpu.matmul %373, %277, %cst_117 {dimension_numbers = #tpu.dot_dimension_numbers<[1], [0], [0], [1], [0, 0, 1, 1], [], []>} : vector<8x32xbf16>, vector<32x128xbf16>, vector<8x128xf32> -> vector<8x128xf32>
    %375 = arith.addf %372, %374 : vector<8x128xf32>
    %376 = arith.negf %375 : vector<8x128xf32>
    %377 = math.exp %376 : vector<8x128xf32>
    %cst_118 = arith.constant 1.000000e+00 : f32
    %378 = vector.broadcast %cst_118 : f32 to vector<8x128xf32>
    %379 = arith.addf %378, %377 : vector<8x128xf32>
    %380 = arith.divf %378, %379 : vector<8x128xf32>
    %381 = math.tanh %375 : vector<8x128xf32>
    %382 = vector.extract_strided_slice %380 {offsets = [0, 0], sizes = [8, 32], strides = [1, 1]} : vector<8x128xf32> to vector<8x32xf32>
    %383 = vector.extract_strided_slice %380 {offsets = [0, 32], sizes = [8, 32], strides = [1, 1]} : vector<8x128xf32> to vector<8x32xf32>
    %384 = vector.extract_strided_slice %381 {offsets = [0, 64], sizes = [8, 32], strides = [1, 1]} : vector<8x128xf32> to vector<8x32xf32>
    %385 = vector.extract_strided_slice %380 {offsets = [0, 96], sizes = [8, 32], strides = [1, 1]} : vector<8x128xf32> to vector<8x32xf32>
    %386 = arith.mulf %383, %364 : vector<8x32xf32>
    %387 = arith.mulf %382, %384 : vector<8x32xf32>
    %388 = arith.addf %386, %387 : vector<8x32xf32>
    %389 = math.tanh %388 : vector<8x32xf32>
    %390 = arith.mulf %385, %389 : vector<8x32xf32>
    %391 = arith.cmpi slt, %c3_i32_114, %5 : i32
    %392 = arith.select %391, %390, %363 : vector<8x32xf32>
    %393 = arith.select %391, %388, %364 : vector<8x32xf32>
    %394 = arith.index_cast %c3_i32_114 : i32 to index
    %c0_119 = arith.constant 0 : index
    %c0_120 = arith.constant 0 : index
    %395 = vector.load %arg11[%394, %c0_119, %c0_120] : memref<8x8x32xf32, #tpu.memory_space<vmem>>, vector<1x8x32xf32>
    %396 = vector.shape_cast %395 : vector<1x8x32xf32> to vector<8x32xf32>
    %397 = vector.shape_cast %392 : vector<8x32xf32> to vector<1x8x32xf32>
    tpu.vector_store %arg11[%394, %c0_119, %c0_120], %397 {strides = array<i32>} : memref<8x8x32xf32, #tpu.memory_space<vmem>>, vector<1x8x32xf32>,
    %c4_i32_121 = arith.constant 4 : i32
    %398 = arith.index_cast %c4_i32_121 : i32 to index
    %c0_122 = arith.constant 0 : index
    %c0_123 = arith.constant 0 : index
    %399 = vector.load %arg15[%398, %c0_122, %c0_123] : memref<8x8x128xbf16, #tpu.memory_space<vmem>>, vector<1x8x128xbf16>
    %400 = vector.shape_cast %399 : vector<1x8x128xbf16> to vector<8x128xbf16>
    %401 = arith.extf %400 : vector<8x128xbf16> to vector<8x128xf32>
    %402 = arith.truncf %392 : vector<8x32xf32> to vector<8x32xbf16>
    %cst_124 = arith.constant dense<0.000000e+00> : vector<8x128xf32>
    %403 = tpu.matmul %402, %277, %cst_124 {dimension_numbers = #tpu.dot_dimension_numbers<[1], [0], [0], [1], [0, 0, 1, 1], [], []>} : vector<8x32xbf16>, vector<32x128xbf16>, vector<8x128xf32> -> vector<8x128xf32>
    %404 = arith.addf %401, %403 : vector<8x128xf32>
    %405 = arith.negf %404 : vector<8x128xf32>
    %406 = math.exp %405 : vector<8x128xf32>
    %cst_125 = arith.constant 1.000000e+00 : f32
    %407 = vector.broadcast %cst_125 : f32 to vector<8x128xf32>
    %408 = arith.addf %407, %406 : vector<8x128xf32>
    %409 = arith.divf %407, %408 : vector<8x128xf32>
    %410 = math.tanh %404 : vector<8x128xf32>
    %411 = vector.extract_strided_slice %409 {offsets = [0, 0], sizes = [8, 32], strides = [1, 1]} : vector<8x128xf32> to vector<8x32xf32>
    %412 = vector.extract_strided_slice %409 {offsets = [0, 32], sizes = [8, 32], strides = [1, 1]} : vector<8x128xf32> to vector<8x32xf32>
    %413 = vector.extract_strided_slice %410 {offsets = [0, 64], sizes = [8, 32], strides = [1, 1]} : vector<8x128xf32> to vector<8x32xf32>
    %414 = vector.extract_strided_slice %409 {offsets = [0, 96], sizes = [8, 32], strides = [1, 1]} : vector<8x128xf32> to vector<8x32xf32>
    %415 = arith.mulf %412, %393 : vector<8x32xf32>
    %416 = arith.mulf %411, %413 : vector<8x32xf32>
    %417 = arith.addf %415, %416 : vector<8x32xf32>
    %418 = math.tanh %417 : vector<8x32xf32>
    %419 = arith.mulf %414, %418 : vector<8x32xf32>
    %420 = arith.cmpi slt, %c4_i32_121, %5 : i32
    %421 = arith.select %420, %419, %392 : vector<8x32xf32>
    %422 = arith.select %420, %417, %393 : vector<8x32xf32>
    %423 = arith.index_cast %c4_i32_121 : i32 to index
    %c0_126 = arith.constant 0 : index
    %c0_127 = arith.constant 0 : index
    %424 = vector.load %arg11[%423, %c0_126, %c0_127] : memref<8x8x32xf32, #tpu.memory_space<vmem>>, vector<1x8x32xf32>
    %425 = vector.shape_cast %424 : vector<1x8x32xf32> to vector<8x32xf32>
    %426 = vector.shape_cast %421 : vector<8x32xf32> to vector<1x8x32xf32>
    tpu.vector_store %arg11[%423, %c0_126, %c0_127], %426 {strides = array<i32>} : memref<8x8x32xf32, #tpu.memory_space<vmem>>, vector<1x8x32xf32>,
    %c5_i32_128 = arith.constant 5 : i32
    %427 = arith.index_cast %c5_i32_128 : i32 to index
    %c0_129 = arith.constant 0 : index
    %c0_130 = arith.constant 0 : index
    %428 = vector.load %arg15[%427, %c0_129, %c0_130] : memref<8x8x128xbf16, #tpu.memory_space<vmem>>, vector<1x8x128xbf16>
    %429 = vector.shape_cast %428 : vector<1x8x128xbf16> to vector<8x128xbf16>
    %430 = arith.extf %429 : vector<8x128xbf16> to vector<8x128xf32>
    %431 = arith.truncf %421 : vector<8x32xf32> to vector<8x32xbf16>
    %cst_131 = arith.constant dense<0.000000e+00> : vector<8x128xf32>
    %432 = tpu.matmul %431, %277, %cst_131 {dimension_numbers = #tpu.dot_dimension_numbers<[1], [0], [0], [1], [0, 0, 1, 1], [], []>} : vector<8x32xbf16>, vector<32x128xbf16>, vector<8x128xf32> -> vector<8x128xf32>
    %433 = arith.addf %430, %432 : vector<8x128xf32>
    %434 = arith.negf %433 : vector<8x128xf32>
    %435 = math.exp %434 : vector<8x128xf32>
    %cst_132 = arith.constant 1.000000e+00 : f32
    %436 = vector.broadcast %cst_132 : f32 to vector<8x128xf32>
    %437 = arith.addf %436, %435 : vector<8x128xf32>
    %438 = arith.divf %436, %437 : vector<8x128xf32>
    %439 = math.tanh %433 : vector<8x128xf32>
    %440 = vector.extract_strided_slice %438 {offsets = [0, 0], sizes = [8, 32], strides = [1, 1]} : vector<8x128xf32> to vector<8x32xf32>
    %441 = vector.extract_strided_slice %438 {offsets = [0, 32], sizes = [8, 32], strides = [1, 1]} : vector<8x128xf32> to vector<8x32xf32>
    %442 = vector.extract_strided_slice %439 {offsets = [0, 64], sizes = [8, 32], strides = [1, 1]} : vector<8x128xf32> to vector<8x32xf32>
    %443 = vector.extract_strided_slice %438 {offsets = [0, 96], sizes = [8, 32], strides = [1, 1]} : vector<8x128xf32> to vector<8x32xf32>
    %444 = arith.mulf %441, %422 : vector<8x32xf32>
    %445 = arith.mulf %440, %442 : vector<8x32xf32>
    %446 = arith.addf %444, %445 : vector<8x32xf32>
    %447 = math.tanh %446 : vector<8x32xf32>
    %448 = arith.mulf %443, %447 : vector<8x32xf32>
    %449 = arith.cmpi slt, %c5_i32_128, %5 : i32
    %450 = arith.select %449, %448, %421 : vector<8x32xf32>
    %451 = arith.select %449, %446, %422 : vector<8x32xf32>
    %452 = arith.index_cast %c5_i32_128 : i32 to index
    %c0_133 = arith.constant 0 : index
    %c0_134 = arith.constant 0 : index
    %453 = vector.load %arg11[%452, %c0_133, %c0_134] : memref<8x8x32xf32, #tpu.memory_space<vmem>>, vector<1x8x32xf32>
    %454 = vector.shape_cast %453 : vector<1x8x32xf32> to vector<8x32xf32>
    %455 = vector.shape_cast %450 : vector<8x32xf32> to vector<1x8x32xf32>
    tpu.vector_store %arg11[%452, %c0_133, %c0_134], %455 {strides = array<i32>} : memref<8x8x32xf32, #tpu.memory_space<vmem>>, vector<1x8x32xf32>,
    %c6_i32_135 = arith.constant 6 : i32
    %456 = arith.index_cast %c6_i32_135 : i32 to index
    %c0_136 = arith.constant 0 : index
    %c0_137 = arith.constant 0 : index
    %457 = vector.load %arg15[%456, %c0_136, %c0_137] : memref<8x8x128xbf16, #tpu.memory_space<vmem>>, vector<1x8x128xbf16>
    %458 = vector.shape_cast %457 : vector<1x8x128xbf16> to vector<8x128xbf16>
    %459 = arith.extf %458 : vector<8x128xbf16> to vector<8x128xf32>
    %460 = arith.truncf %450 : vector<8x32xf32> to vector<8x32xbf16>
    %cst_138 = arith.constant dense<0.000000e+00> : vector<8x128xf32>
    %461 = tpu.matmul %460, %277, %cst_138 {dimension_numbers = #tpu.dot_dimension_numbers<[1], [0], [0], [1], [0, 0, 1, 1], [], []>} : vector<8x32xbf16>, vector<32x128xbf16>, vector<8x128xf32> -> vector<8x128xf32>
    %462 = arith.addf %459, %461 : vector<8x128xf32>
    %463 = arith.negf %462 : vector<8x128xf32>
    %464 = math.exp %463 : vector<8x128xf32>
    %cst_139 = arith.constant 1.000000e+00 : f32
    %465 = vector.broadcast %cst_139 : f32 to vector<8x128xf32>
    %466 = arith.addf %465, %464 : vector<8x128xf32>
    %467 = arith.divf %465, %466 : vector<8x128xf32>
    %468 = math.tanh %462 : vector<8x128xf32>
    %469 = vector.extract_strided_slice %467 {offsets = [0, 0], sizes = [8, 32], strides = [1, 1]} : vector<8x128xf32> to vector<8x32xf32>
    %470 = vector.extract_strided_slice %467 {offsets = [0, 32], sizes = [8, 32], strides = [1, 1]} : vector<8x128xf32> to vector<8x32xf32>
    %471 = vector.extract_strided_slice %468 {offsets = [0, 64], sizes = [8, 32], strides = [1, 1]} : vector<8x128xf32> to vector<8x32xf32>
    %472 = vector.extract_strided_slice %467 {offsets = [0, 96], sizes = [8, 32], strides = [1, 1]} : vector<8x128xf32> to vector<8x32xf32>
    %473 = arith.mulf %470, %451 : vector<8x32xf32>
    %474 = arith.mulf %469, %471 : vector<8x32xf32>
    %475 = arith.addf %473, %474 : vector<8x32xf32>
    %476 = math.tanh %475 : vector<8x32xf32>
    %477 = arith.mulf %472, %476 : vector<8x32xf32>
    %478 = arith.cmpi slt, %c6_i32_135, %5 : i32
    %479 = arith.select %478, %477, %450 : vector<8x32xf32>
    %480 = arith.select %478, %475, %451 : vector<8x32xf32>
    %481 = arith.index_cast %c6_i32_135 : i32 to index
    %c0_140 = arith.constant 0 : index
    %c0_141 = arith.constant 0 : index
    %482 = vector.load %arg11[%481, %c0_140, %c0_141] : memref<8x8x32xf32, #tpu.memory_space<vmem>>, vector<1x8x32xf32>
    %483 = vector.shape_cast %482 : vector<1x8x32xf32> to vector<8x32xf32>
    %484 = vector.shape_cast %479 : vector<8x32xf32> to vector<1x8x32xf32>
    tpu.vector_store %arg11[%481, %c0_140, %c0_141], %484 {strides = array<i32>} : memref<8x8x32xf32, #tpu.memory_space<vmem>>, vector<1x8x32xf32>,
    %c7_i32_142 = arith.constant 7 : i32
    %485 = arith.index_cast %c7_i32_142 : i32 to index
    %c0_143 = arith.constant 0 : index
    %c0_144 = arith.constant 0 : index
    %486 = vector.load %arg15[%485, %c0_143, %c0_144] : memref<8x8x128xbf16, #tpu.memory_space<vmem>>, vector<1x8x128xbf16>
    %487 = vector.shape_cast %486 : vector<1x8x128xbf16> to vector<8x128xbf16>
    %488 = arith.extf %487 : vector<8x128xbf16> to vector<8x128xf32>
    %489 = arith.truncf %479 : vector<8x32xf32> to vector<8x32xbf16>
    %cst_145 = arith.constant dense<0.000000e+00> : vector<8x128xf32>
    %490 = tpu.matmul %489, %277, %cst_145 {dimension_numbers = #tpu.dot_dimension_numbers<[1], [0], [0], [1], [0, 0, 1, 1], [], []>} : vector<8x32xbf16>, vector<32x128xbf16>, vector<8x128xf32> -> vector<8x128xf32>
    %491 = arith.addf %488, %490 : vector<8x128xf32>
    %492 = arith.negf %491 : vector<8x128xf32>
    %493 = math.exp %492 : vector<8x128xf32>
    %cst_146 = arith.constant 1.000000e+00 : f32
    %494 = vector.broadcast %cst_146 : f32 to vector<8x128xf32>
    %495 = arith.addf %494, %493 : vector<8x128xf32>
    %496 = arith.divf %494, %495 : vector<8x128xf32>
    %497 = math.tanh %491 : vector<8x128xf32>
    %498 = vector.extract_strided_slice %496 {offsets = [0, 0], sizes = [8, 32], strides = [1, 1]} : vector<8x128xf32> to vector<8x32xf32>
    %499 = vector.extract_strided_slice %496 {offsets = [0, 32], sizes = [8, 32], strides = [1, 1]} : vector<8x128xf32> to vector<8x32xf32>
    %500 = vector.extract_strided_slice %497 {offsets = [0, 64], sizes = [8, 32], strides = [1, 1]} : vector<8x128xf32> to vector<8x32xf32>
    %501 = vector.extract_strided_slice %496 {offsets = [0, 96], sizes = [8, 32], strides = [1, 1]} : vector<8x128xf32> to vector<8x32xf32>
    %502 = arith.mulf %499, %480 : vector<8x32xf32>
    %503 = arith.mulf %498, %500 : vector<8x32xf32>
    %504 = arith.addf %502, %503 : vector<8x32xf32>
    %505 = math.tanh %504 : vector<8x32xf32>
    %506 = arith.mulf %501, %505 : vector<8x32xf32>
    %507 = arith.cmpi slt, %c7_i32_142, %5 : i32
    %508 = arith.select %507, %506, %479 : vector<8x32xf32>
    %509 = arith.select %507, %504, %480 : vector<8x32xf32>
    %510 = arith.index_cast %c7_i32_142 : i32 to index
    %c0_147 = arith.constant 0 : index
    %c0_148 = arith.constant 0 : index
    %511 = vector.load %arg11[%510, %c0_147, %c0_148] : memref<8x8x32xf32, #tpu.memory_space<vmem>>, vector<1x8x32xf32>
    %512 = vector.shape_cast %511 : vector<1x8x32xf32> to vector<8x32xf32>
    %513 = vector.shape_cast %508 : vector<8x32xf32> to vector<1x8x32xf32>
    tpu.vector_store %arg11[%510, %c0_147, %c0_148], %513 {strides = array<i32>} : memref<8x8x32xf32, #tpu.memory_space<vmem>>, vector<1x8x32xf32>,
    %c8_i32_149 = arith.constant 8 : i32
    %c1_150 = arith.constant 1 : index
    %c0_151 = arith.constant 0 : index
    %c0_152 = arith.constant 0 : index
    %514 = vector.load %arg16[%c1_150, %c0_151, %c0_152] : memref<2x8x32xf32, #tpu.memory_space<vmem>>, vector<1x8x32xf32>
    %515 = vector.shape_cast %514 : vector<1x8x32xf32> to vector<8x32xf32>
    %516 = vector.shape_cast %508 : vector<8x32xf32> to vector<1x8x32xf32>
    tpu.vector_store %arg16[%c1_150, %c0_151, %c0_152], %516 {strides = array<i32>} : memref<2x8x32xf32, #tpu.memory_space<vmem>>, vector<1x8x32xf32>,
    %c1_153 = arith.constant 1 : index
    %c0_154 = arith.constant 0 : index
    %c0_155 = arith.constant 0 : index
    %517 = vector.load %arg17[%c1_153, %c0_154, %c0_155] : memref<2x8x32xf32, #tpu.memory_space<vmem>>, vector<1x8x32xf32>
    %518 = vector.shape_cast %517 : vector<1x8x32xf32> to vector<8x32xf32>
    %519 = vector.shape_cast %509 : vector<8x32xf32> to vector<1x8x32xf32>
    tpu.vector_store %arg17[%c1_153, %c0_154, %c0_155], %519 {strides = array<i32>} : memref<2x8x32xf32, #tpu.memory_space<vmem>>, vector<1x8x32xf32>,
    %c2_i32_156 = arith.constant 2 : i32
    %520 = arith.cmpi eq, %arg1, %c2_i32_156 : i32
    %521 = arith.extui %520 : i1 to i32
    %c0_i32_157 = arith.constant 0 : i32
    %522 = arith.cmpi ne, %521, %c0_i32_157 : i32
    scf.if %522 {
      %c0_158 = arith.constant 0 : index
      %c0_159 = arith.constant 0 : index
      %c0_160 = arith.constant 0 : index
      %523 = vector.load %arg16[%c0_158, %c0_159, %c0_160] : memref<2x8x32xf32, #tpu.memory_space<vmem>>, vector<2x8x32xf32>
      %c0_161 = arith.constant 0 : index
      %c0_162 = arith.constant 0 : index
      %c0_163 = arith.constant 0 : index
      %524 = vector.load %arg12[%c0_161, %c0_162, %c0_163] : memref<2x8x32xf32, #tpu.memory_space<vmem>>, vector<2x8x32xf32>
      tpu.vector_store %arg12[%c0_161, %c0_162, %c0_163], %523 {strides = array<i32>} : memref<2x8x32xf32, #tpu.memory_space<vmem>>, vector<2x8x32xf32>,
      %c0_164 = arith.constant 0 : index
      %c0_165 = arith.constant 0 : index
      %c0_166 = arith.constant 0 : index
      %525 = vector.load %arg17[%c0_164, %c0_165, %c0_166] : memref<2x8x32xf32, #tpu.memory_space<vmem>>, vector<2x8x32xf32>
      %c0_167 = arith.constant 0 : index
      %c0_168 = arith.constant 0 : index
      %c0_169 = arith.constant 0 : index
      %526 = vector.load %arg13[%c0_167, %c0_168, %c0_169] : memref<2x8x32xf32, #tpu.memory_space<vmem>>, vector<2x8x32xf32>
      tpu.vector_store %arg13[%c0_167, %c0_168, %c0_169], %525 {strides = array<i32>} : memref<2x8x32xf32, #tpu.memory_space<vmem>>, vector<2x8x32xf32>,
    } else {
    }
    return
  }
  func.func @transform_0(%arg0: i32, %arg1: i32) -> (i32, i32, i32) {
    %c0_i32 = arith.constant 0 : i32
    %c0_i32_0 = arith.constant 0 : i32
    return %arg1, %arg0, %c0_i32 : i32, i32, i32
  }
  func.func @transform_1(%arg0: i32, %arg1: i32) -> (i32, i32) {
    %c0_i32 = arith.constant 0 : i32
    %c0_i32_0 = arith.constant 0 : i32
    %c0_i32_1 = arith.constant 0 : i32
    return %c0_i32, %c0_i32_0 : i32, i32
  }
  func.func @transform_2(%arg0: i32, %arg1: i32) -> (i32, i32) {
    %c0_i32 = arith.constant 0 : i32
    %c0_i32_0 = arith.constant 0 : i32
    %c0_i32_1 = arith.constant 0 : i32
    return %c0_i32, %c0_i32_0 : i32, i32
  }
  func.func @transform_3(%arg0: i32, %arg1: i32) -> (i32, i32) {
    %c0_i32 = arith.constant 0 : i32
    %c0_i32_0 = arith.constant 0 : i32
    %c0_i32_1 = arith.constant 0 : i32
    return %c0_i32, %c0_i32_0 : i32, i32
  }
  func.func @transform_4(%arg0: i32, %arg1: i32) -> (i32, i32) {
    %c0_i32 = arith.constant 0 : i32
    %c0_i32_0 = arith.constant 0 : i32
    %c0_i32_1 = arith.constant 0 : i32
    return %c0_i32, %c0_i32_0 : i32, i32
  }
  func.func @transform_5(%arg0: i32, %arg1: i32) -> (i32, i32) {
    %c0_i32 = arith.constant 0 : i32
    %c0_i32_0 = arith.constant 0 : i32
    %c0_i32_1 = arith.constant 0 : i32
    return %c0_i32, %c0_i32_0 : i32, i32
  }
  func.func @transform_6(%arg0: i32, %arg1: i32) -> (i32, i32) {
    %c0_i32 = arith.constant 0 : i32
    %c0_i32_0 = arith.constant 0 : i32
    %c0_i32_1 = arith.constant 0 : i32
    return %c0_i32, %c0_i32_0 : i32, i32
  }
  func.func @transform_7(%arg0: i32, %arg1: i32) -> (i32, i32, i32) {
    %c0_i32 = arith.constant 0 : i32
    %c0_i32_0 = arith.constant 0 : i32
    %c0_i32_1 = arith.constant 0 : i32
    return %c0_i32, %arg0, %c0_i32_0 : i32, i32, i32
  }
  func.func @transform_8(%arg0: i32, %arg1: i32) -> (i32, i32, i32) {
    %c0_i32 = arith.constant 0 : i32
    %c0_i32_0 = arith.constant 0 : i32
    %c0_i32_1 = arith.constant 0 : i32
    return %c0_i32, %arg0, %c0_i32_0 : i32, i32, i32
  }
  func.func @transform_9(%arg0: i32, %arg1: i32) -> (i32, i32, i32) {
    %c0_i32 = arith.constant 0 : i32
    %c0_i32_0 = arith.constant 0 : i32
    return %arg1, %arg0, %c0_i32 : i32, i32, i32
  }
  func.func @transform_10(%arg0: i32, %arg1: i32) -> (i32, i32, i32) {
    %c0_i32 = arith.constant 0 : i32
    %c0_i32_0 = arith.constant 0 : i32
    %c0_i32_1 = arith.constant 0 : i32
    return %c0_i32, %arg0, %c0_i32_0 : i32, i32, i32
  }
  func.func @transform_11(%arg0: i32, %arg1: i32) -> (i32, i32, i32) {
    %c0_i32 = arith.constant 0 : i32
    %c0_i32_0 = arith.constant 0 : i32
    %c0_i32_1 = arith.constant 0 : i32
    return %c0_i32, %arg0, %c0_i32_0 : i32, i32, i32
  }
}

</mosaic_0001>

<llo_original>
// kernel: tpu_custom_call.1
$region0: #{tpu_custom_call.1}
  #allocation0 [shape = 'u32[]', space=smem, size = 0x4, offset = 0x4, fixed_abs, tag = 'smem constant byte address 0x4 - core index']
  #allocation1 [shape = 'u32[144,128]{1,0:T(1,128)}', space=vmem, size = 0x12000, scoped, tag = 'internal scratch']
  #allocation2 [shape = 'bf16[8,8,32]{2,1,0:T(8,128)(2,1)}', space=vmem, size = 0x4000, scoped, tag = 'scratch operand']
  #allocation3 [shape = 'bf16[8,8,128]{2,1,0:T(8,128)(2,1)}', space=vmem, size = 0x4000, scoped, tag = 'scratch operand']
  #allocation4 [shape = 'f32[2,8,32]{2,1,0:T(8,128)}', space=vmem, size = 0x2000, scoped, tag = 'scratch operand']
  #allocation5 [shape = 'f32[2,8,32]{2,1,0:T(8,128)}', space=vmem, size = 0x2000, scoped, tag = 'scratch operand']
  %s0 = inlined_call_operand.hbm [shape: bf16[24,8,32], index: 0, kind: input, shape index: {}]
  %s1 = inlined_call_operand.hbm [shape: bf16[32,128], index: 1, kind: input, shape index: {}]
  %s2 = inlined_call_operand.hbm [shape: bf16[32,128], index: 2, kind: input, shape index: {}]
  %s3 = inlined_call_operand.vmem [shape: f32[1,128], index: 3, kind: input, shape index: {}]
  %s4 = inlined_call_operand.hbm [shape: bf16[32,128], index: 4, kind: input, shape index: {}]
  %s5 = inlined_call_operand.hbm [shape: bf16[32,128], index: 5, kind: input, shape index: {}]
  %s6 = inlined_call_operand.vmem [shape: f32[1,128], index: 6, kind: input, shape index: {}]
  %s7 = inlined_call_operand.hbm [shape: f32[2,8,32], index: 7, kind: input, shape index: {}]
  %s8 = inlined_call_operand.hbm [shape: f32[2,8,32], index: 8, kind: input, shape index: {}]
  %s9 = inlined_call_operand.hbm [shape: f32[24,8,32], index: 9, kind: output, shape index: {0}]
  %s10 = inlined_call_operand.hbm [shape: f32[2,8,32], index: 10, kind: output, shape index: {1}]
  %s11 = inlined_call_operand.hbm [shape: f32[2,8,32], index: 11, kind: output, shape index: {2}]
  %12 = xla_tuple %s9, %s10, %s11
  %s13 = sld [smem:[#allocation0]]
  $region121: #{tpu_custom_call.1} parent=0
    _
  %s15 = ssub.s32 1, %s13
  %s16 = scalar_select 0, %s15, %s13
  $region1: #{tpu_custom_call.1} parent=0
    #allocation6 [shape = 'u8[32768]{0}', space=vmem, size = 0x8000, scoped, tag = 'input window, operand 0']
    #allocation7 [shape = 's32[2]{0}', space=sflag, size = 0x8, scoped, tag = 'scoped memory for tpu_custom_call.1']
    #allocation8 [shape = 's32[2]{0}', space=sflag, size = 0x8, scoped, tag = 'scoped memory for tpu_custom_call.1']
    #allocation9 [shape = 'u8[8192]{0}', space=vmem, size = 0x2000, scoped, tag = 'input window, operand 1, single buffered']
    #allocation10 [shape = 's32[1]{0}', space=sflag, size = 0x4, scoped, tag = 'scoped memory for tpu_custom_call.1']
    #allocation11 [shape = 'u8[8192]{0}', space=vmem, size = 0x2000, scoped, tag = 'input window, operand 2, single buffered']
    #allocation12 [shape = 'u8[8192]{0}', space=vmem, size = 0x2000, scoped, tag = 'input window, operand 4, single buffered']
    #allocation13 [shape = 's32[1]{0}', space=sflag, size = 0x4, scoped, tag = 'scoped memory for tpu_custom_call.1']
    #allocation14 [shape = 'u8[8192]{0}', space=vmem, size = 0x2000, scoped, tag = 'input window, operand 5, single buffered']
    #allocation15 [shape = 'u8[8192]{0}', space=vmem, size = 0x2000, scoped, tag = 'input window, operand 7, single buffered']
    #allocation16 [shape = 's32[1]{0}', space=sflag, size = 0x4, scoped, tag = 'scoped memory for tpu_custom_call.1']
    #allocation17 [shape = 'u8[8192]{0}', space=vmem, size = 0x2000, scoped, tag = 'input window, operand 8, single buffered']
    #allocation18 [shape = 'u8[65536]{0}', space=vmem, size = 0x10000, scoped, tag = 'output window, operand 0']
    #allocation19 [shape = 'u8[8192]{0}', space=vmem, size = 0x2000, scoped, tag = 'output window, operand 1, single buffered']
    #allocation20 [shape = 's32[1]{0}', space=sflag, size = 0x4, scoped, tag = 'scoped memory for tpu_custom_call.1']
    #allocation21 [shape = 'u8[8192]{0}', space=vmem, size = 0x2000, scoped, tag = 'output window, operand 2, single buffered']
    %17 = vsyncpa [#allocation7], 0
    %s18 = scalar_lea.sflag [#allocation7], 1
    %19 = vsyncpa %s18, 0
    %20 = vsyncpa [#allocation10], 0
    %21 = vsyncpa [#allocation13], 0
    %22 = vsyncpa [#allocation16], 0
    %23 = vsyncpa [#allocation8], 0
    %s24 = scalar_lea.sflag [#allocation8], 1
    %25 = vsyncpa %s24, 0
    %26 = vsyncpa [#allocation20], 0
    loop: start=0, step=1, limit=5
    $region2: #{tpu_custom_call.1} parent=1 // loop_pre_header
      _
    $region3: #{tpu_custom_call.1} parent=1 // loop_header
      %s28 = sphi 0, %s32
      %p29 = scmp.ge.s32.totalorder %s28, 5
      %s35 = sphi 0, %s47
      %s36 = sphi 0, %s43
      %s37 = sphi 0, %s35
      %s38 = sphi 0, %s36
      %s39 = sphi 0, %s37
      %s40 = sphi 0, %s38
      %s52 = sphi 0, %s54
      %s55 = sphi 0, %s52
      %s56 = sphi 0, %s55
      %s72 = sphi 0, %s56
      %s76 = sphi 0, %s76
      %s78 = sphi 0, %s76
      %s79 = sphi 0, %s78
      %s93 = sphi 0, %s79
      %s97 = sphi 0, %s97
      %s99 = sphi 0, %s97
      %s100 = sphi 0, %s99
      %s114 = sphi 0, %s100
      %s118 = sphi 0, %s118
      %s120 = sphi 0, %s118
      %s121 = sphi 0, %s120
      %s135 = sphi 0, %s121
      %s139 = sphi 0, %s139
      %s141 = sphi 0, %s139
      %s142 = sphi 0, %s141
      %s156 = sphi 0, %s142
      %s160 = sphi 0, %s160
      %s162 = sphi 0, %s160
      %s163 = sphi 0, %s162
      %s177 = sphi 0, %s163
      %s181 = sphi 0, %s181
      %s183 = sphi 0, %s181
      %s184 = sphi 0, %s183
      %s198 = sphi 0, %s184
      %s204 = sphi 0, %s206
      %s207 = sphi 0, %s204
      %s208 = sphi 0, %s207
      %s224 = sphi 0, %s208
      %s230 = sphi 0, %s232
      %s233 = sphi 0, %s230
      %s234 = sphi 0, %s233
      %s250 = sphi 0, %s234
      %s258 = sphi 0, %s260
      %s261 = sphi 0, %s258
      %s262 = sphi 0, %s261
      %s278 = sphi 0, %s262
      %s284 = sphi 0, %s286
      %s287 = sphi 0, %s284
      %s288 = sphi 0, %s287
      %s304 = sphi 0, %s288
      %s310 = sphi 0, %s312
      %s313 = sphi 0, %s310
      %s314 = sphi 0, %s313
      %s330 = sphi 0, %s314
    $region4: #{tpu_custom_call.1} parent=1 // loop_header_branch
      %31 = sbr.rel (%p29) target = $region8
    $region5: #{tpu_custom_call.1} parent=1 // loop_body
      %s33 = ssub.s32 %s28, 1
      %s34 = ssub.s32 %s28, 2
      %s41 = sadd.s32 1, %s36
      %p42 = scmp.ge.s32.totalorder %s41, 3
      %s43 = scalar_select %p42, 0, %s41
      %s44 = sadd.s32 1, %s35
      %s45 = scalar_select %p42, %s44, %s35
      %p46 = scmp.ge.s32.totalorder %s45, 1
      %s47 = scalar_select %p46, 0, %s45
      %s48 = ssub.s32 %s36, %s43
      %s49 = ssub.s32 %s35, %s47
      %s50 = sor.u32 %s48, %s49
      %p51 = scmp.eq.s32.totalorder %s50, 0
      %s53 = sadd.s32 %s52, 1
      %s54 = scalar_select %p51, %s52, %s53
      %p57 = pneg %p51
      %p58 = scmp.eq.s32.totalorder %s28, 2
      %p59 = por %p57, %p58
      %p60 = scmp.ne.s32.totalorder %s52, %s55
      %p61 = scmp.eq.s32.totalorder %s28, 0
      %p62 = por %p60, %p61
      %p63 = scmp.ne.s32.totalorder %s52, %s55
      %p64 = scmp.eq.s32.totalorder %s33, 2
      %p65 = por %p63, %p64
      %p66 = scmp.ne.s32.totalorder %s55, %s56
      %p67 = scmp.eq.s32.totalorder %s33, 0
      %p68 = por %p66, %p67
      %p69 = scmp.ne.s32.totalorder %s55, %s56
      %p70 = scmp.eq.s32.totalorder %s34, 2
      %p71 = por %p69, %p70
      %p73 = scmp.ne.s32.totalorder %s56, %s72
      %p74 = scmp.eq.s32.totalorder %s34, 0
      %p75 = por %p73, %p74
      %s77 = sadd.s32 %s76, 1
      %p80 = scmp.eq.s32.totalorder %s28, 2
      %p81 = scmp.ne.s32.totalorder %s76, %s78
      %p82 = scmp.eq.s32.totalorder %s28, 0
      %p83 = por %p81, %p82
      %p84 = scmp.ne.s32.totalorder %s76, %s78
      %p85 = scmp.eq.s32.totalorder %s33, 2
      %p86 = por %p84, %p85
      %p87 = scmp.ne.s32.totalorder %s78, %s79
      %p88 = scmp.eq.s32.totalorder %s33, 0
      %p89 = por %p87, %p88
      %p90 = scmp.ne.s32.totalorder %s78, %s79
      %p91 = scmp.eq.s32.totalorder %s34, 2
      %p92 = por %p90, %p91
      %p94 = scmp.ne.s32.totalorder %s79, %s93
      %p95 = scmp.eq.s32.totalorder %s34, 0
      %p96 = por %p94, %p95
      %s98 = sadd.s32 %s97, 1
      %p101 = scmp.eq.s32.totalorder %s28, 2
      %p102 = scmp.ne.s32.totalorder %s97, %s99
      %p103 = scmp.eq.s32.totalorder %s28, 0
      %p104 = por %p102, %p103
      %p105 = scmp.ne.s32.totalorder %s97, %s99
      %p106 = scmp.eq.s32.totalorder %s33, 2
      %p107 = por %p105, %p106
      %p108 = scmp.ne.s32.totalorder %s99, %s100
      %p109 = scmp.eq.s32.totalorder %s33, 0
      %p110 = por %p108, %p109
      %p111 = scmp.ne.s32.totalorder %s99, %s100
      %p112 = scmp.eq.s32.totalorder %s34, 2
      %p113 = por %p111, %p112
      %p115 = scmp.ne.s32.totalorder %s100, %s114
      %p116 = scmp.eq.s32.totalorder %s34, 0
      %p117 = por %p115, %p116
      %s119 = sadd.s32 %s118, 1
      %p122 = scmp.eq.s32.totalorder %s28, 2
      %p123 = scmp.ne.s32.totalorder %s118, %s120
      %p124 = scmp.eq.s32.totalorder %s28, 0
      %p125 = por %p123, %p124
      %p126 = scmp.ne.s32.totalorder %s118, %s120
      %p127 = scmp.eq.s32.totalorder %s33, 2
      %p128 = por %p126, %p127
      %p129 = scmp.ne.s32.totalorder %s120, %s121
      %p130 = scmp.eq.s32.totalorder %s33, 0
      %p131 = por %p129, %p130
      %p132 = scmp.ne.s32.totalorder %s120, %s121
      %p133 = scmp.eq.s32.totalorder %s34, 2
      %p134 = por %p132, %p133
      %p136 = scmp.ne.s32.totalorder %s121, %s135
      %p137 = scmp.eq.s32.totalorder %s34, 0
      %p138 = por %p136, %p137
      %s140 = sadd.s32 %s139, 1
      %p143 = scmp.eq.s32.totalorder %s28, 2
      %p144 = scmp.ne.s32.totalorder %s139, %s141
      %p145 = scmp.eq.s32.totalorder %s28, 0
      %p146 = por %p144, %p145
      %p147 = scmp.ne.s32.totalorder %s139, %s141
      %p148 = scmp.eq.s32.totalorder %s33, 2
      %p149 = por %p147, %p148
      %p150 = scmp.ne.s32.totalorder %s141, %s142
      %p151 = scmp.eq.s32.totalorder %s33, 0
      %p152 = por %p150, %p151
      %p153 = scmp.ne.s32.totalorder %s141, %s142
      %p154 = scmp.eq.s32.totalorder %s34, 2
      %p155 = por %p153, %p154
      %p157 = scmp.ne.s32.totalorder %s142, %s156
      %p158 = scmp.eq.s32.totalorder %s34, 0
      %p159 = por %p157, %p158
      %s161 = sadd.s32 %s160, 1
      %p164 = scmp.eq.s32.totalorder %s28, 2
      %p165 = scmp.ne.s32.totalorder %s160, %s162
      %p166 = scmp.eq.s32.totalorder %s28, 0
      %p167 = por %p165, %p166
      %p168 = scmp.ne.s32.totalorder %s160, %s162
      %p169 = scmp.eq.s32.totalorder %s33, 2
      %p170 = por %p168, %p169
      %p171 = scmp.ne.s32.totalorder %s162, %s163
      %p172 = scmp.eq.s32.totalorder %s33, 0
      %p173 = por %p171, %p172
      %p174 = scmp.ne.s32.totalorder %s162, %s163
      %p175 = scmp.eq.s32.totalorder %s34, 2
      %p176 = por %p174, %p175
      %p178 = scmp.ne.s32.totalorder %s163, %s177
      %p179 = scmp.eq.s32.totalorder %s34, 0
      %p180 = por %p178, %p179
      %s182 = sadd.s32 %s181, 1
      %p185 = scmp.eq.s32.totalorder %s28, 2
      %p186 = scmp.ne.s32.totalorder %s181, %s183
      %p187 = scmp.eq.s32.totalorder %s28, 0
      %p188 = por %p186, %p187
      %p189 = scmp.ne.s32.totalorder %s181, %s183
      %p190 = scmp.eq.s32.totalorder %s33, 2
      %p191 = por %p189, %p190
      %p192 = scmp.ne.s32.totalorder %s183, %s184
      %p193 = scmp.eq.s32.totalorder %s33, 0
      %p194 = por %p192, %p193
      %p195 = scmp.ne.s32.totalorder %s183, %s184
      %p196 = scmp.eq.s32.totalorder %s34, 2
      %p197 = por %p195, %p196
      %p199 = scmp.ne.s32.totalorder %s184, %s198
      %p200 = scmp.eq.s32.totalorder %s34, 0
      %p201 = por %p199, %p200
      %s202 = ssub.s32 %s35, %s47
      %p203 = scmp.eq.s32.totalorder %s202, 0
      %s205 = sadd.s32 %s204, 1
      %s206 = scalar_select %p203, %s204, %s205
      %p209 = pneg %p203
      %p210 = scmp.eq.s32.totalorder %s28, 2
      %p211 = por %p209, %p210
      %p212 = scmp.ne.s32.totalorder %s204, %s207
      %p213 = scmp.eq.s32.totalorder %s28, 0
      %p214 = por %p212, %p213
      %p215 = scmp.ne.s32.totalorder %s204, %s207
      %p216 = scmp.eq.s32.totalorder %s33, 2
      %p217 = por %p215, %p216
      %p218 = scmp.ne.s32.totalorder %s207, %s208
      %p219 = scmp.eq.s32.totalorder %s33, 0
      %p220 = por %p218, %p219
      %p221 = scmp.ne.s32.totalorder %s207, %s208
      %p222 = scmp.eq.s32.totalorder %s34, 2
      %p223 = por %p221, %p222
      %p225 = scmp.ne.s32.totalorder %s208, %s224
      %p226 = scmp.eq.s32.totalorder %s34, 0
      %p227 = por %p225, %p226
      %s228 = ssub.s32 %s35, %s47
      %p229 = scmp.eq.s32.totalorder %s228, 0
      %s231 = sadd.s32 %s230, 1
      %s232 = scalar_select %p229, %s230, %s231
      %p235 = pneg %p229
      %p236 = scmp.eq.s32.totalorder %s28, 2
      %p237 = por %p235, %p236
      %p238 = scmp.ne.s32.totalorder %s230, %s233
      %p239 = scmp.eq.s32.totalorder %s28, 0
      %p240 = por %p238, %p239
      %p241 = scmp.ne.s32.totalorder %s230, %s233
      %p242 = scmp.eq.s32.totalorder %s33, 2
      %p243 = por %p241, %p242
      %p244 = scmp.ne.s32.totalorder %s233, %s234
      %p245 = scmp.eq.s32.totalorder %s33, 0
      %p246 = por %p244, %p245
      %p247 = scmp.ne.s32.totalorder %s233, %s234
      %p248 = scmp.eq.s32.totalorder %s34, 2
      %p249 = por %p247, %p248
      %p251 = scmp.ne.s32.totalorder %s234, %s250
      %p252 = scmp.eq.s32.totalorder %s34, 0
      %p253 = por %p251, %p252
      %s254 = ssub.s32 %s36, %s43
      %s255 = ssub.s32 %s35, %s47
      %s256 = sor.u32 %s254, %s255
      %p257 = scmp.eq.s32.totalorder %s256, 0
      %s259 = sadd.s32 %s258, 1
      %s260 = scalar_select %p257, %s258, %s259
      %p263 = pneg %p257
      %p264 = scmp.eq.s32.totalorder %s28, 2
      %p265 = por %p263, %p264
      %p266 = scmp.ne.s32.totalorder %s258, %s261
      %p267 = scmp.eq.s32.totalorder %s28, 0
      %p268 = por %p266, %p267
      %p269 = scmp.ne.s32.totalorder %s258, %s261
      %p270 = scmp.eq.s32.totalorder %s33, 2
      %p271 = por %p269, %p270
      %p272 = scmp.ne.s32.totalorder %s261, %s262
      %p273 = scmp.eq.s32.totalorder %s33, 0
      %p274 = por %p272, %p273
      %p275 = scmp.ne.s32.totalorder %s261, %s262
      %p276 = scmp.eq.s32.totalorder %s34, 2
      %p277 = por %p275, %p276
      %p279 = scmp.ne.s32.totalorder %s262, %s278
      %p280 = scmp.eq.s32.totalorder %s34, 0
      %p281 = por %p279, %p280
      %s282 = ssub.s32 %s35, %s47
      %p283 = scmp.eq.s32.totalorder %s282, 0
      %s285 = sadd.s32 %s284, 1
      %s286 = scalar_select %p283, %s284, %s285
      %p289 = pneg %p283
      %p290 = scmp.eq.s32.totalorder %s28, 2
      %p291 = por %p289, %p290
      %p292 = scmp.ne.s32.totalorder %s284, %s287
      %p293 = scmp.eq.s32.totalorder %s28, 0
      %p294 = por %p292, %p293
      %p295 = scmp.ne.s32.totalorder %s284, %s287
      %p296 = scmp.eq.s32.totalorder %s33, 2
      %p297 = por %p295, %p296
      %p298 = scmp.ne.s32.totalorder %s287, %s288
      %p299 = scmp.eq.s32.totalorder %s33, 0
      %p300 = por %p298, %p299
      %p301 = scmp.ne.s32.totalorder %s287, %s288
      %p302 = scmp.eq.s32.totalorder %s34, 2
      %p303 = por %p301, %p302
      %p305 = scmp.ne.s32.totalorder %s288, %s304
      %p306 = scmp.eq.s32.totalorder %s34, 0
      %p307 = por %p305, %p306
      %s308 = ssub.s32 %s35, %s47
      %p309 = scmp.eq.s32.totalorder %s308, 0
      %s311 = sadd.s32 %s310, 1
      %s312 = scalar_select %p309, %s310, %s311
      %p315 = pneg %p309
      %p316 = scmp.eq.s32.totalorder %s28, 2
      %p317 = por %p315, %p316
      %p318 = scmp.ne.s32.totalorder %s310, %s313
      %p319 = scmp.eq.s32.totalorder %s28, 0
      %p320 = por %p318, %p319
      %p321 = scmp.ne.s32.totalorder %s310, %s313
      %p322 = scmp.eq.s32.totalorder %s33, 2
      %p323 = por %p321, %p322
      %p324 = scmp.ne.s32.totalorder %s313, %s314
      %p325 = scmp.eq.s32.totalorder %s33, 0
      %p326 = por %p324, %p325
      %p327 = scmp.ne.s32.totalorder %s313, %s314
      %p328 = scmp.eq.s32.totalorder %s34, 2
      %p329 = por %p327, %p328
      %p331 = scmp.ne.s32.totalorder %s314, %s330
      %p332 = scmp.eq.s32.totalorder %s34, 0
      %p333 = por %p331, %p332
      %p334 = scmp.le.s32.totalorder 1, %s28
      %p335 = scmp.lt.s32.totalorder %s28, 4
      %p336 = pnand %p334, %p335
      %p337 = pneg %p336
      // Predicated region
      $region9: #{tpu_custom_call.1} parent=5 // pred_check
        _
      $region10: #{tpu_custom_call.1} parent=5 // pred_check_branch
        %339 = sbr.rel (%p336) target = $region12
      $region11: #{tpu_custom_call.1} parent=5 // pred_region
        %s340 = ssub.s32 %s28, 1
        // Predicated region
        $region13: #{tpu_custom_call.1} parent=11 // pred_check
          %p341 = pneg %p89
        $region14: #{tpu_custom_call.1} parent=11 // pred_check_branch
          %343 = sbr.rel (%p341) target = $region16
        $region15: #{tpu_custom_call.1} parent=11 // pred_region
          %s345 = ssub.s32 256, 256
          %346 = vsyncadd [#allocation10], %s345
          %s347 = sshll.u32 [#allocation9], 4
          %s348 = int_to_ptr.vmem [resolvable:$true] %s347
          %353 = dma.hbm_to_vmem [thread:$0]  %s1, 256, %s348, [#allocation10], 64, 64, 4
        $region16: #{tpu_custom_call.1} parent=11 // pred_fallthru
          _
        // Predicated region
        $region17: #{tpu_custom_call.1} parent=11 // pred_check
          %p354 = pneg %p110
        $region18: #{tpu_custom_call.1} parent=11 // pred_check_branch
          %356 = sbr.rel (%p354) target = $region20
        $region19: #{tpu_custom_call.1} parent=11 // pred_region
          %s358 = ssub.s32 256, 256
          %359 = vsyncadd [#allocation10], %s358
          %s360 = sshll.u32 [#allocation11], 4
          %s361 = int_to_ptr.vmem [resolvable:$true] %s360
          %366 = dma.hbm_to_vmem [thread:$0]  %s2, 256, %s361, [#allocation10], 64, 64, 4
        $region20: #{tpu_custom_call.1} parent=11 // pred_fallthru
          _
        // Predicated region
        $region21: #{tpu_custom_call.1} parent=11 // pred_check
          %p367 = pneg %p131
        $region22: #{tpu_custom_call.1} parent=11 // pred_check_branch
          %369 = sbr.rel (%p367) target = $region24
        $region23: #{tpu_custom_call.1} parent=11 // pred_region
          _
        $region24: #{tpu_custom_call.1} parent=11 // pred_fallthru
          _
        // Predicated region
        $region25: #{tpu_custom_call.1} parent=11 // pred_check
          %p370 = pneg %p152
        $region26: #{tpu_custom_call.1} parent=11 // pred_check_branch
          %372 = sbr.rel (%p370) target = $region28
        $region27: #{tpu_custom_call.1} parent=11 // pred_region
          %s374 = ssub.s32 256, 256
          %375 = vsyncadd [#allocation13], %s374
          %s376 = sshll.u32 [#allocation12], 4
          %s377 = int_to_ptr.vmem [resolvable:$true] %s376
          %382 = dma.hbm_to_vmem [thread:$0]  %s4, 256, %s377, [#allocation13], 64, 64, 4
        $region28: #{tpu_custom_call.1} parent=11 // pred_fallthru
          _
        // Predicated region
        $region29: #{tpu_custom_call.1} parent=11 // pred_check
          %p383 = pneg %p173
        $region30: #{tpu_custom_call.1} parent=11 // pred_check_branch
          %385 = sbr.rel (%p383) target = $region32
        $region31: #{tpu_custom_call.1} parent=11 // pred_region
          %s387 = ssub.s32 256, 256
          %388 = vsyncadd [#allocation13], %s387
          %s389 = sshll.u32 [#allocation14], 4
          %s390 = int_to_ptr.vmem [resolvable:$true] %s389
          %395 = dma.hbm_to_vmem [thread:$0]  %s5, 256, %s390, [#allocation13], 64, 64, 4
        $region32: #{tpu_custom_call.1} parent=11 // pred_fallthru
          _
        // Predicated region
        $region33: #{tpu_custom_call.1} parent=11 // pred_check
          %p396 = pneg %p194
        $region34: #{tpu_custom_call.1} parent=11 // pred_check_branch
          %398 = sbr.rel (%p396) target = $region36
        $region35: #{tpu_custom_call.1} parent=11 // pred_region
          _
        $region36: #{tpu_custom_call.1} parent=11 // pred_fallthru
          _
        // Predicated region
        $region37: #{tpu_custom_call.1} parent=11 // pred_check
          %p399 = pneg %p220
        $region38: #{tpu_custom_call.1} parent=11 // pred_check_branch
          %401 = sbr.rel (%p399) target = $region40
        $region39: #{tpu_custom_call.1} parent=11 // pred_region
          %s403 = ssub.s32 256, 256
          %404 = vsyncadd [#allocation16], %s403
          %s405 = smul.addr %s37, 128
          %s406 = scalar_lea.hbm %s7, %s405
          %s407 = sshll.u32 [#allocation15], 4
          %s408 = int_to_ptr.vmem [resolvable:$true] %s407
          %413 = dma.hbm_to_vmem [thread:$0]  %s406, 256, %s408, [#allocation16], 128, 128, 8
        $region40: #{tpu_custom_call.1} parent=11 // pred_fallthru
          _
        // Predicated region
        $region41: #{tpu_custom_call.1} parent=11 // pred_check
          %p414 = pneg %p246
        $region42: #{tpu_custom_call.1} parent=11 // pred_check_branch
          %416 = sbr.rel (%p414) target = $region44
        $region43: #{tpu_custom_call.1} parent=11 // pred_region
          %s418 = ssub.s32 256, 256
          %419 = vsyncadd [#allocation16], %s418
          %s420 = smul.addr %s37, 128
          %s421 = scalar_lea.hbm %s8, %s420
          %s422 = sshll.u32 [#allocation17], 4
          %s423 = int_to_ptr.vmem [resolvable:$true] %s422
          %428 = dma.hbm_to_vmem [thread:$0]  %s421, 256, %s423, [#allocation16], 128, 128, 8
        $region44: #{tpu_custom_call.1} parent=11 // pred_fallthru
          _
      $region12: #{tpu_custom_call.1} parent=5 // pred_fallthru
        _
      %p429 = scmp.lt.s32.totalorder %s28, 3
      // Predicated region
      $region45: #{tpu_custom_call.1} parent=5 // pred_check
        %p430 = pneg %p429
      $region46: #{tpu_custom_call.1} parent=5 // pred_check_branch
        %432 = sbr.rel (%p430) target = $region48
      $region47: #{tpu_custom_call.1} parent=5 // pred_region
        // Predicated region
        $region49: #{tpu_custom_call.1} parent=47 // pred_check
          %p433 = pneg %p62
        $region50: #{tpu_custom_call.1} parent=47 // pred_check_branch
          %435 = sbr.rel (%p433) target = $region52
        $region51: #{tpu_custom_call.1} parent=47 // pred_region
          %s436 = sand.u32 %s52, 1
          %s437 = scalar_lea.sflag [#allocation7], %s436
          %s438 = sand.u32 %s52, 1
          %s439 = smul.addr %s438, 32
          %s440 = scalar_lea.vmem [#allocation6], %s439
          %s441 = smul.u32 8, %s36
          %s443 = ssub.s32 512, 512
          %444 = vsyncadd %s437, %s443
          %s445 = sadd.s32 %s35, %s441
          %s446 = smul.addr %s445, 64
          %s447 = scalar_lea.hbm %s0, %s446
          %s448 = sshll.u32 %s440, 4
          %s449 = int_to_ptr.vmem [resolvable:$true] %s448
          %454 = dma.hbm_to_vmem [thread:$0]  %s447, 512, %s449, %s437, 64, 64, 4
        $region52: #{tpu_custom_call.1} parent=47 // pred_fallthru
          _
      $region48: #{tpu_custom_call.1} parent=5 // pred_fallthru
        _
      %p455 = scmp.le.s32.totalorder 1, %s28
      %p456 = scmp.lt.s32.totalorder %s28, 4
      %p457 = pnand %p455, %p456
      %p458 = pneg %p457
      // Predicated region
      $region53: #{tpu_custom_call.1} parent=5 // pred_check
        _
      $region54: #{tpu_custom_call.1} parent=5 // pred_check_branch
        %460 = sbr.rel (%p457) target = $region56
      $region55: #{tpu_custom_call.1} parent=5 // pred_region
        %s461 = ssub.s32 %s28, 1
        %s462 = sand.u32 %s55, 1
        %s463 = scalar_lea.sflag [#allocation7], %s462
        %s464 = sand.u32 %s55, 1
        %s465 = smul.addr %s464, 32
        %s466 = scalar_lea.vmem [#allocation6], %s465
        // Predicated region
        $region57: #{tpu_custom_call.1} parent=55 // pred_check
          %p467 = pneg %p68
        $region58: #{tpu_custom_call.1} parent=55 // pred_check_branch
          %469 = sbr.rel (%p467) target = $region60
        $region59: #{tpu_custom_call.1} parent=55 // pred_region
          %470 = dma.done %s463, 512
        $region60: #{tpu_custom_call.1} parent=55 // pred_fallthru
          _
        // Predicated region
        $region61: #{tpu_custom_call.1} parent=55 // pred_check
          %p471 = pneg %p89
        $region62: #{tpu_custom_call.1} parent=55 // pred_check_branch
          %473 = sbr.rel (%p471) target = $region64
        $region63: #{tpu_custom_call.1} parent=55 // pred_region
          %474 = dma.done [#allocation10], 256
        $region64: #{tpu_custom_call.1} parent=55 // pred_fallthru
          _
        // Predicated region
        $region65: #{tpu_custom_call.1} parent=55 // pred_check
          %p475 = pneg %p110
        $region66: #{tpu_custom_call.1} parent=55 // pred_check_branch
          %477 = sbr.rel (%p475) target = $region68
        $region67: #{tpu_custom_call.1} parent=55 // pred_region
          %478 = dma.done [#allocation10], 256
        $region68: #{tpu_custom_call.1} parent=55 // pred_fallthru
          _
        // Predicated region
        $region69: #{tpu_custom_call.1} parent=55 // pred_check
          %p479 = pneg %p152
        $region70: #{tpu_custom_call.1} parent=55 // pred_check_branch
          %481 = sbr.rel (%p479) target = $region72
        $region71: #{tpu_custom_call.1} parent=55 // pred_region
          %482 = dma.done [#allocation13], 256
        $region72: #{tpu_custom_call.1} parent=55 // pred_fallthru
          _
        // Predicated region
        $region73: #{tpu_custom_call.1} parent=55 // pred_check
          %p483 = pneg %p173
        $region74: #{tpu_custom_call.1} parent=55 // pred_check_branch
          %485 = sbr.rel (%p483) target = $region76
        $region75: #{tpu_custom_call.1} parent=55 // pred_region
          %486 = dma.done [#allocation13], 256
        $region76: #{tpu_custom_call.1} parent=55 // pred_fallthru
          _
        // Predicated region
        $region77: #{tpu_custom_call.1} parent=55 // pred_check
          %p487 = pneg %p220
        $region78: #{tpu_custom_call.1} parent=55 // pred_check_branch
          %489 = sbr.rel (%p487) target = $region80
        $region79: #{tpu_custom_call.1} parent=55 // pred_region
          %490 = dma.done [#allocation16], 256
        $region80: #{tpu_custom_call.1} parent=55 // pred_fallthru
          _
        // Predicated region
        $region81: #{tpu_custom_call.1} parent=55 // pred_check
          %p491 = pneg %p246
        $region82: #{tpu_custom_call.1} parent=55 // pred_check_branch
          %493 = sbr.rel (%p491) target = $region84
        $region83: #{tpu_custom_call.1} parent=55 // pred_region
          %494 = dma.done [#allocation16], 256
        $region84: #{tpu_custom_call.1} parent=55 // pred_fallthru
          _
        %s495 = sand.u32 %s55, 1
        %s496 = scalar_lea.sflag [#allocation7], %s495
        %s497 = sand.u32 %s55, 1
        %s498 = smul.addr %s497, 32
        %s499 = scalar_lea.vmem [#allocation6], %s498
        %p500 = pneg %p68
        %p501 = pneg %p65
        %p502 = pneg %p89
        %p503 = pneg %p86
        %p504 = pneg %p110
        %p505 = pneg %p107
        %p506 = pneg %p131
        %p507 = pneg %p128
        %p508 = pneg %p152
        %p509 = pneg %p149
        %p510 = pneg %p173
        %p511 = pneg %p170
        %p512 = pneg %p194
        %p513 = pneg %p191
        %p514 = pneg %p220
        %p515 = pneg %p217
        %p516 = pneg %p246
        %p517 = pneg %p243
        %p518 = pneg %p274
        %p519 = pneg %p271
        %s520 = sand.u32 %s261, 1
        %s521 = scalar_lea.sflag [#allocation8], %s520
        %s522 = sand.u32 %s261, 1
        %s523 = smul.addr %s522, 64
        %s524 = scalar_lea.vmem [#allocation18], %s523
        %p525 = pneg %p300
        %p526 = pneg %p297
        %p527 = pneg %p326
        %p528 = pneg %p323
        %s529 = smul.u32 8, %s38
        %s530 = smul.u32 8, %s38
        %p532 = scmp.eq.s32.totalorder %s38, 0
        // Predicated region
        $region85: #{tpu_custom_call.1} parent=55 // pred_check
          %p533 = pneg %p532
        $region86: #{tpu_custom_call.1} parent=55 // pred_check_branch
          %535 = sbr.rel (%p533) target = $region88
        $region87: #{tpu_custom_call.1} parent=55 // pred_region
          %v536 = vld [vmem:[#allocation15] sm:$0xff]
          %v537 = vld [vmem:[#allocation15 + $0x8] sm:$0xff]
          %vm538 = vcmask 261120
          %539 = vst.msk [vmem:[#allocation4] sm:$0xff] %vm538, %v536
          %540 = vst.msk [vmem:[#allocation4 + $0x8] sm:$0xff] %vm538, %v537
          %v541 = vld [vmem:[#allocation17] sm:$0xff]
          %v542 = vld [vmem:[#allocation17 + $0x8] sm:$0xff]
          %543 = vst.msk [vmem:[#allocation5] sm:$0xff] %vm538, %v541
          %544 = vst.msk [vmem:[#allocation5 + $0x8] sm:$0xff] %vm538, %v542
        $region88: #{tpu_custom_call.1} parent=55 // pred_fallthru
          _
        %s545 = smul.u32 %s38, 8
        %s546 = ssub.s32 19, %s545
        %p547 = scmp.lt.s32.totalorder %s546, 8
        %s548 = scalar_select %p547, %s546, 8
        %v549 = vld [vmem:[%s466] sm:$0xf]
        %v550 = vld [vmem:[%s466 + $0x4] sm:$0xf]
        %v551 = vld [vmem:[%s466 + $0x8] sm:$0xf]
        %v552 = vld [vmem:[%s466 + $0xc] sm:$0xf]
        %v553 = vld [vmem:[%s466 + $0x10] sm:$0xf]
        %v554 = vld [vmem:[%s466 + $0x14] sm:$0xf]
        %v555 = vld [vmem:[%s466 + $0x18] sm:$0xf]
        %v556 = vld [vmem:[%s466 + $0x1c] sm:$0xf]
        %v557 = vld [vmem:[#allocation9] sm:$0xf]
        %v558 = vld [vmem:[#allocation9 + $0x4] sm:$0xf]
        %v559 = vld [vmem:[#allocation9 + $0x8] sm:$0xf]
        %v560 = vld [vmem:[#allocation9 + $0xc] sm:$0xf]
        %v561 = vld [vmem:[%s3] sm:$0x1]
        %v563 = vlaneseq
        %v564 = vshrl.u32 %v563, 7
        %v565 = vsub.s32 0, %v564
        %v566 = vrot.slane %v561, %v565
        %v576 = vunpack.c.l.b16 %v549
        %v577 = vunpack.c.l.b16 %v550
        %v578 = vunpack.c.l.b16 %v551
        %v579 = vunpack.c.l.b16 %v552
        %v580 = vunpack.c.l.b16 %v553
        %v581 = vunpack.c.l.b16 %v554
        %v582 = vunpack.c.l.b16 %v555
        %v583 = vunpack.c.l.b16 %v556
        %v584 = vpack.c.b16 %v577, %v576
        %v585 = vpack.c.b16 %v579, %v578
        %v586 = vpack.c.b16 %v581, %v580
        %v587 = vpack.c.b16 %v583, %v582
        %v592 = vunpack.c.l.b16 %v557
        %v593 = vunpack.c.l.b16 %v558
        %v594 = vunpack.c.l.b16 %v559
        %v595 = vunpack.c.l.b16 %v560
        %v596 = vpack.c.b16 %v593, %v592
        %v597 = vpack.c.b16 %v595, %v594
        %vm600 = vcmask 261120
        %v602 = vsel %vm600, %v584, 0
        %v605 = vsel %vm600, %v585, 0
        %v608 = vsel %vm600, %v586, 0
        %v611 = vsel %vm600, %v587, 0
        %613 = vmatprep.subr.bf16.mxu0 0
        %614 = vmatpush1.bf16.msra.mxu0 0
        %615 = vmatprep.subr.bf16.mxu0 0
        %616 = vmatpush1.bf16.msra.mxu0 0
        %617 = vmatprep.subr.bf16.mxu0 0
        %618 = vmatpush1.bf16.msra.mxu0 0
        %619 = vmatprep.subr.bf16.mxu0 0
        %620 = vmatpush1.bf16.msra.mxu0 0
        %621 = vmatprep.subr.bf16.mxu0 0
        %622 = vmatpush1.bf16.msra.mxu0 0
        %623 = vmatprep.subr.bf16.mxu0 0
        %624 = vmatpush1.bf16.msra.mxu0 0
        %625 = vmatprep.subr.bf16.mxu0 0
        %626 = vmatpush1.bf16.msra.mxu0 %v597
        %627 = vmatprep.subr.bf16.mxu0 0
        %628 = vmatpush1.bf16.msra.mxu0 %v596
        %629 = vmatprep.subr.bf16.mxu0 0
        %630 = vmatpush2.bf16.msra.mxu0 0
        %631 = vmatprep.subr.bf16.mxu0 0
        %632 = vmatpush2.bf16.msra.mxu0 0
        %633 = vmatprep.subr.bf16.mxu0 0
        %634 = vmatpush2.bf16.msra.mxu0 0
        %635 = vmatprep.subr.bf16.mxu0 0
        %636 = vmatpush2.bf16.msra.mxu0 0
        %637 = vmatprep.subr.bf16.mxu0 0
        %638 = vmatpush2.bf16.msra.mxu0 0
        %639 = vmatprep.subr.bf16.mxu0 0
        %640 = vmatpush2.bf16.msra.mxu0 0
        %641 = vmatprep.subr.bf16.mxu0 0
        %642 = vmatpush2.bf16.msra.mxu0 0
        %643 = vmatprep.subr.bf16.mxu0 0
        %644 = vmatpush2.bf16.msra.mxu0 0
        %645 = vmatprep.mubr.bf16.mxu0 0
        %646 = vmatmul.mubr.bf16.gmra.mxu0 %v602
        %v647 = vpop.f32.mrf.mxu0
        %v648 = vadd.f32 %v566, %v647
        %v649 = vpop.f32.mrf.mxu0
        %v650 = vpop.f32.mrf.mxu0
        %v651 = vadd.f32 %v566, %v650
        %v652 = vpop.f32.mrf.mxu0
        %653 = vmatprep.mubr.bf16.mxu0 0
        %654 = vmatmul.mubr.bf16.gmra.mxu0 %v605
        %v655 = vpop.f32.mrf.mxu0
        %v656 = vadd.f32 %v566, %v655
        %v657 = vpop.f32.mrf.mxu0
        %v658 = vpop.f32.mrf.mxu0
        %v659 = vadd.f32 %v566, %v658
        %v660 = vpop.f32.mrf.mxu0
        %661 = vmatprep.mubr.bf16.mxu0 0
        %662 = vmatmul.mubr.bf16.gmra.mxu0 %v608
        %v663 = vpop.f32.mrf.mxu0
        %v664 = vadd.f32 %v566, %v663
        %v665 = vpop.f32.mrf.mxu0
        %v666 = vpop.f32.mrf.mxu0
        %v667 = vadd.f32 %v566, %v666
        %v668 = vpop.f32.mrf.mxu0
        %669 = vmatprep.mubr.bf16.mxu0 0
        %670 = vmatmul.mubr.bf16.gmra.mxu0 %v611
        %v671 = vpop.f32.mrf.mxu0
        %v672 = vadd.f32 %v566, %v671
        %v673 = vpop.f32.mrf.mxu0
        %v674 = vpop.f32.mrf.mxu0
        %v675 = vadd.f32 %v566, %v674
        %v676 = vpop.f32.mrf.mxu0
        %677 = vdwg.mxu0
        %v678 = vpack.c.bf16 %v648, %v648
        %v679 = vpack.c.bf16 %v651, %v651
        %v680 = vpack.c.bf16 %v656, %v656
        %v681 = vpack.c.bf16 %v659, %v659
        %v682 = vpack.c.bf16 %v664, %v664
        %v683 = vpack.c.bf16 %v667, %v667
        %v684 = vpack.c.bf16 %v672, %v672
        %v685 = vpack.c.bf16 %v675, %v675
        %686 = vst [vmem:[#allocation3] sm:$0xf] %v678
        %687 = vst [vmem:[#allocation3 + $0x4] sm:$0xf] %v679
        %688 = vst [vmem:[#allocation3 + $0x8] sm:$0xf] %v680
        %689 = vst [vmem:[#allocation3 + $0xc] sm:$0xf] %v681
        %690 = vst [vmem:[#allocation3 + $0x10] sm:$0xf] %v682
        %691 = vst [vmem:[#allocation3 + $0x14] sm:$0xf] %v683
        %692 = vst [vmem:[#allocation3 + $0x18] sm:$0xf] %v684
        %693 = vst [vmem:[#allocation3 + $0x1c] sm:$0xf] %v685
        %v694 = vld [vmem:[#allocation11] sm:$0xf]
        %v695 = vld [vmem:[#allocation11 + $0x4] sm:$0xf]
        %v696 = vld [vmem:[#allocation11 + $0x8] sm:$0xf]
        %v697 = vld [vmem:[#allocation11 + $0xc] sm:$0xf]
        %v698 = vld [vmem:[#allocation4] sm:$0xff]
        %v699 = vld [vmem:[#allocation5] sm:$0xff]
        %v700 = vld [vmem:[#allocation3] sm:$0xf]
        %v701 = vunpack.c.l.bf16 %v700
        %v702 = vpack.c.bf16 %v698, %v698
        %v707 = vunpack.c.l.b16 %v694
        %v708 = vunpack.c.l.b16 %v695
        %v709 = vunpack.c.l.b16 %v696
        %v710 = vunpack.c.l.b16 %v697
        %v711 = vpack.c.b16 %v708, %v707
        %v712 = vpack.c.b16 %v710, %v709
        %v716 = vsel %vm600, %v702, 0
        %718 = vmatprep.subr.bf16.mxu0 0
        %719 = vmatpush1.bf16.msra.mxu0 0
        %720 = vmatprep.subr.bf16.mxu0 0
        %721 = vmatpush1.bf16.msra.mxu0 0
        %722 = vmatprep.subr.bf16.mxu0 0
        %723 = vmatpush1.bf16.msra.mxu0 0
        %724 = vmatprep.subr.bf16.mxu0 0
        %725 = vmatpush1.bf16.msra.mxu0 0
        %726 = vmatprep.subr.bf16.mxu0 0
        %727 = vmatpush1.bf16.msra.mxu0 0
        %728 = vmatprep.subr.bf16.mxu0 0
        %729 = vmatpush1.bf16.msra.mxu0 0
        %730 = vmatprep.subr.bf16.mxu0 0
        %731 = vmatpush1.bf16.msra.mxu0 %v712
        %732 = vmatprep.subr.bf16.mxu0 0
        %733 = vmatpush1.bf16.msra.mxu0 %v711
        %734 = vmatprep.subr.bf16.mxu0 0
        %735 = vmatpush2.bf16.msra.mxu0 0
        %736 = vmatprep.subr.bf16.mxu0 0
        %737 = vmatpush2.bf16.msra.mxu0 0
        %738 = vmatprep.subr.bf16.mxu0 0
        %739 = vmatpush2.bf16.msra.mxu0 0
        %740 = vmatprep.subr.bf16.mxu0 0
        %741 = vmatpush2.bf16.msra.mxu0 0
        %742 = vmatprep.subr.bf16.mxu0 0
        %743 = vmatpush2.bf16.msra.mxu0 0
        %744 = vmatprep.subr.bf16.mxu0 0
        %745 = vmatpush2.bf16.msra.mxu0 0
        %746 = vmatprep.subr.bf16.mxu0 0
        %747 = vmatpush2.bf16.msra.mxu0 0
        %748 = vmatprep.subr.bf16.mxu0 0
        %749 = vmatpush2.bf16.msra.mxu0 0
        %750 = vmatprep.mubr.bf16.mxu0 0
        %751 = vmatmul.mubr.bf16.gmra.mxu0 %v716
        %v752 = vpop.f32.mrf.mxu0
        %v753 = vadd.f32 0.0, %v752
        %v754 = vpop.f32.mrf.mxu0
        %v755 = vpop.f32.mrf.mxu0
        %v756 = vpop.f32.mrf.mxu0
        %757 = vdwg.mxu0
        %v758 = vadd.f32 %v701, %v753
        %v759 = vxor.u32 %v758, 2147483648
        %v760 = vmul.f32 %v759, 1.442695
        %v761 = vpow.pop %v760
        %v762 = vadd.f32 %v761, 1.0
        %v763 = vrcp.pop %v762
        %v764 = vmul.f32 1.0, %v763
        %v765 = vtanh.pop %v758
        %767 = vrot.lane.b32.xlu0 %v699, 32
        %v768 = vpop.permute.xlu0 %767
        %v770 = vmul.f32 %v764, %v768
        %772 = vrot.lane.b32.xlu0 %v765, 64
        %v773 = vpop.permute.xlu0 %772
        %v775 = vmul.f32 %v764, %v773
        %777 = vrot.lane.b32.xlu0 %v775, 32
        %v778 = vpop.permute.xlu0 %777
        %v780 = vadd.f32 %v770, %v778
        %v781 = vtanh.pop %v780
        %783 = vrot.lane.b32.xlu0 %v781, 64
        %v784 = vpop.permute.xlu0 %783
        %v786 = vmul.f32 %v764, %v784
        %p787 = scmp.gt.s32.totalorder %s548, 0
        %s788 = scalar_select %p787, 1, 0
        %v789 = vstv %s788
        %vm790 = vcmp.eq.s32.totalorder %v789, 1
        %792 = vrot.lane.b32.xlu0 %v698, 96
        %v793 = vpop.permute.xlu0 %792
        %v795 = vsel %vm790, %v786, %v793
        %v796 = vsel %vm790, %v780, %v768
        %v797 = vpack.c.bf16 %v795, %v795
        %v799 = vunpack.c.l.b16 %v797
        %v800 = vpack.c.b16 %v799, %v799
        %801 = vrot.lane.b32.xlu0 %v800, 32
        %v802 = vpop.permute.xlu0 %801
        %vm804 = vcmask 257024
        %805 = vst.msk [vmem:[#allocation2] sm:$0xf] %vm804, %v802
        %s806 = scalar_lea.vmem [#allocation3], 4
        %v807 = vld [vmem:[%s806] sm:$0xf]
        %v808 = vunpack.c.l.bf16 %v807
        %809 = vrot.lane.b32.xlu0 %v797, 32
        %v810 = vpop.permute.xlu0 %809
        %v812 = vsel %vm600, %v810, 0
        %814 = vmatprep.subr.bf16.mxu0 0
        %815 = vmatpush1.bf16.msra.mxu0 0
        %816 = vmatprep.subr.bf16.mxu0 0
        %817 = vmatpush1.bf16.msra.mxu0 0
        %818 = vmatprep.subr.bf16.mxu0 0
        %819 = vmatpush1.bf16.msra.mxu0 0
        %820 = vmatprep.subr.bf16.mxu0 0
        %821 = vmatpush1.bf16.msra.mxu0 0
        %822 = vmatprep.subr.bf16.mxu0 0
        %823 = vmatpush1.bf16.msra.mxu0 0
        %824 = vmatprep.subr.bf16.mxu0 0
        %825 = vmatpush1.bf16.msra.mxu0 0
        %826 = vmatprep.subr.bf16.mxu0 0
        %827 = vmatpush1.bf16.msra.mxu0 %v712
        %828 = vmatprep.subr.bf16.mxu0 0
        %829 = vmatpush1.bf16.msra.mxu0 %v711
        %830 = vmatprep.subr.bf16.mxu0 0
        %831 = vmatpush2.bf16.msra.mxu0 0
        %832 = vmatprep.subr.bf16.mxu0 0
        %833 = vmatpush2.bf16.msra.mxu0 0
        %834 = vmatprep.subr.bf16.mxu0 0
        %835 = vmatpush2.bf16.msra.mxu0 0
        %836 = vmatprep.subr.bf16.mxu0 0
        %837 = vmatpush2.bf16.msra.mxu0 0
        %838 = vmatprep.subr.bf16.mxu0 0
        %839 = vmatpush2.bf16.msra.mxu0 0
        %840 = vmatprep.subr.bf16.mxu0 0
        %841 = vmatpush2.bf16.msra.mxu0 0
        %842 = vmatprep.subr.bf16.mxu0 0
        %843 = vmatpush2.bf16.msra.mxu0 0
        %844 = vmatprep.subr.bf16.mxu0 0
        %845 = vmatpush2.bf16.msra.mxu0 0
        %846 = vmatprep.mubr.bf16.mxu0 0
        %847 = vmatmul.mubr.bf16.gmra.mxu0 %v812
        %v848 = vpop.f32.mrf.mxu0
        %v849 = vadd.f32 0.0, %v848
        %v850 = vpop.f32.mrf.mxu0
        %v851 = vpop.f32.mrf.mxu0
        %v852 = vpop.f32.mrf.mxu0
        %853 = vdwg.mxu0
        %v854 = vadd.f32 %v808, %v849
        %v855 = vxor.u32 %v854, 2147483648
        %v856 = vmul.f32 %v855, 1.442695
        %v857 = vpow.pop %v856
        %v858 = vadd.f32 %v857, 1.0
        %v859 = vrcp.pop %v858
        %v860 = vmul.f32 1.0, %v859
        %v861 = vtanh.pop %v854
        %v862 = vmul.f32 %v860, %v796
        %864 = vrot.lane.b32.xlu0 %v861, 64
        %v865 = vpop.permute.xlu0 %864
        %v867 = vmul.f32 %v860, %v865
        %869 = vrot.lane.b32.xlu0 %v867, 32
        %v870 = vpop.permute.xlu0 %869
        %v872 = vadd.f32 %v862, %v870
        %v873 = vtanh.pop %v872
        %875 = vrot.lane.b32.xlu0 %v873, 64
        %v876 = vpop.permute.xlu0 %875
        %v878 = vmul.f32 %v860, %v876
        %p879 = scmp.gt.s32.totalorder %s548, 1
        %s880 = scalar_select %p879, 1, 0
        %v881 = vstv %s880
        %vm882 = vcmp.eq.s32.totalorder %v881, 1
        %v883 = vsel %vm882, %v878, %v795
        %v884 = vsel %vm882, %v872, %v796
        %v885 = vpack.c.bf16 %v883, %v883
        %v887 = vunpack.c.l.b16 %v885
        %v888 = vpack.c.b16 %v887, %v887
        %889 = vrot.lane.b32.xlu0 %v888, 32
        %v890 = vpop.permute.xlu0 %889
        %s892 = scalar_lea.vmem [#allocation2], 4
        %893 = vst.msk [vmem:[%s892] sm:$0xf] %vm804, %v890
        %s894 = scalar_lea.vmem [#allocation3], 8
        %v895 = vld [vmem:[%s894] sm:$0xf]
        %v896 = vunpack.c.l.bf16 %v895
        %897 = vrot.lane.b32.xlu0 %v885, 32
        %v898 = vpop.permute.xlu0 %897
        %v900 = vsel %vm600, %v898, 0
        %902 = vmatprep.subr.bf16.mxu0 0
        %903 = vmatpush1.bf16.msra.mxu0 0
        %904 = vmatprep.subr.bf16.mxu0 0
        %905 = vmatpush1.bf16.msra.mxu0 0
        %906 = vmatprep.subr.bf16.mxu0 0
        %907 = vmatpush1.bf16.msra.mxu0 0
        %908 = vmatprep.subr.bf16.mxu0 0
        %909 = vmatpush1.bf16.msra.mxu0 0
        %910 = vmatprep.subr.bf16.mxu0 0
        %911 = vmatpush1.bf16.msra.mxu0 0
        %912 = vmatprep.subr.bf16.mxu0 0
        %913 = vmatpush1.bf16.msra.mxu0 0
        %914 = vmatprep.subr.bf16.mxu0 0
        %915 = vmatpush1.bf16.msra.mxu0 %v712
        %916 = vmatprep.subr.bf16.mxu0 0
        %917 = vmatpush1.bf16.msra.mxu0 %v711
        %918 = vmatprep.subr.bf16.mxu0 0
        %919 = vmatpush2.bf16.msra.mxu0 0
        %920 = vmatprep.subr.bf16.mxu0 0
        %921 = vmatpush2.bf16.msra.mxu0 0
        %922 = vmatprep.subr.bf16.mxu0 0
        %923 = vmatpush2.bf16.msra.mxu0 0
        %924 = vmatprep.subr.bf16.mxu0 0
        %925 = vmatpush2.bf16.msra.mxu0 0
        %926 = vmatprep.subr.bf16.mxu0 0
        %927 = vmatpush2.bf16.msra.mxu0 0
        %928 = vmatprep.subr.bf16.mxu0 0
        %929 = vmatpush2.bf16.msra.mxu0 0
        %930 = vmatprep.subr.bf16.mxu0 0
        %931 = vmatpush2.bf16.msra.mxu0 0
        %932 = vmatprep.subr.bf16.mxu0 0
        %933 = vmatpush2.bf16.msra.mxu0 0
        %934 = vmatprep.mubr.bf16.mxu0 0
        %935 = vmatmul.mubr.bf16.gmra.mxu0 %v900
        %v936 = vpop.f32.mrf.mxu0
        %v937 = vadd.f32 0.0, %v936
        %v938 = vpop.f32.mrf.mxu0
        %v939 = vpop.f32.mrf.mxu0
        %v940 = vpop.f32.mrf.mxu0
        %941 = vdwg.mxu0
        %v942 = vadd.f32 %v896, %v937
        %v943 = vxor.u32 %v942, 2147483648
        %v944 = vmul.f32 %v943, 1.442695
        %v945 = vpow.pop %v944
        %v946 = vadd.f32 %v945, 1.0
        %v947 = vrcp.pop %v946
        %v948 = vmul.f32 1.0, %v947
        %v949 = vtanh.pop %v942
        %v950 = vmul.f32 %v948, %v884
        %952 = vrot.lane.b32.xlu0 %v949, 64
        %v953 = vpop.permute.xlu0 %952
        %v955 = vmul.f32 %v948, %v953
        %957 = vrot.lane.b32.xlu0 %v955, 32
        %v958 = vpop.permute.xlu0 %957
        %v960 = vadd.f32 %v950, %v958
        %v961 = vtanh.pop %v960
        %963 = vrot.lane.b32.xlu0 %v961, 64
        %v964 = vpop.permute.xlu0 %963
        %v966 = vmul.f32 %v948, %v964
        %p967 = scmp.gt.s32.totalorder %s548, 2
        %s968 = scalar_select %p967, 1, 0
        %v969 = vstv %s968
        %vm970 = vcmp.eq.s32.totalorder %v969, 1
        %v971 = vsel %vm970, %v966, %v883
        %v972 = vsel %vm970, %v960, %v884
        %v973 = vpack.c.bf16 %v971, %v971
        %v975 = vunpack.c.l.b16 %v973
        %v976 = vpack.c.b16 %v975, %v975
        %977 = vrot.lane.b32.xlu0 %v976, 32
        %v978 = vpop.permute.xlu0 %977
        %s980 = scalar_lea.vmem [#allocation2], 8
        %981 = vst.msk [vmem:[%s980] sm:$0xf] %vm804, %v978
        %s982 = scalar_lea.vmem [#allocation3], 12
        %v983 = vld [vmem:[%s982] sm:$0xf]
        %v984 = vunpack.c.l.bf16 %v983
        %985 = vrot.lane.b32.xlu0 %v973, 32
        %v986 = vpop.permute.xlu0 %985
        %v988 = vsel %vm600, %v986, 0
        %990 = vmatprep.subr.bf16.mxu0 0
        %991 = vmatpush1.bf16.msra.mxu0 0
        %992 = vmatprep.subr.bf16.mxu0 0
        %993 = vmatpush1.bf16.msra.mxu0 0
        %994 = vmatprep.subr.bf16.mxu0 0
        %995 = vmatpush1.bf16.msra.mxu0 0
        %996 = vmatprep.subr.bf16.mxu0 0
        %997 = vmatpush1.bf16.msra.mxu0 0
        %998 = vmatprep.subr.bf16.mxu0 0
        %999 = vmatpush1.bf16.msra.mxu0 0
        %1000 = vmatprep.subr.bf16.mxu0 0
        %1001 = vmatpush1.bf16.msra.mxu0 0
        %1002 = vmatprep.subr.bf16.mxu0 0
        %1003 = vmatpush1.bf16.msra.mxu0 %v712
        %1004 = vmatprep.subr.bf16.mxu0 0
        %1005 = vmatpush1.bf16.msra.mxu0 %v711
        %1006 = vmatprep.subr.bf16.mxu0 0
        %1007 = vmatpush2.bf16.msra.mxu0 0
        %1008 = vmatprep.subr.bf16.mxu0 0
        %1009 = vmatpush2.bf16.msra.mxu0 0
        %1010 = vmatprep.subr.bf16.mxu0 0
        %1011 = vmatpush2.bf16.msra.mxu0 0
        %1012 = vmatprep.subr.bf16.mxu0 0
        %1013 = vmatpush2.bf16.msra.mxu0 0
        %1014 = vmatprep.subr.bf16.mxu0 0
        %1015 = vmatpush2.bf16.msra.mxu0 0
        %1016 = vmatprep.subr.bf16.mxu0 0
        %1017 = vmatpush2.bf16.msra.mxu0 0
        %1018 = vmatprep.subr.bf16.mxu0 0
        %1019 = vmatpush2.bf16.msra.mxu0 0
        %1020 = vmatprep.subr.bf16.mxu0 0
        %1021 = vmatpush2.bf16.msra.mxu0 0
        %1022 = vmatprep.mubr.bf16.mxu0 0
        %1023 = vmatmul.mubr.bf16.gmra.mxu0 %v988
        %v1024 = vpop.f32.mrf.mxu0
        %v1025 = vadd.f32 0.0, %v1024
        %v1026 = vpop.f32.mrf.mxu0
        %v1027 = vpop.f32.mrf.mxu0
        %v1028 = vpop.f32.mrf.mxu0
        %1029 = vdwg.mxu0
        %v1030 = vadd.f32 %v984, %v1025
        %v1031 = vxor.u32 %v1030, 2147483648
        %v1032 = vmul.f32 %v1031, 1.442695
        %v1033 = vpow.pop %v1032
        %v1034 = vadd.f32 %v1033, 1.0
        %v1035 = vrcp.pop %v1034
        %v1036 = vmul.f32 1.0, %v1035
        %v1037 = vtanh.pop %v1030
        %v1038 = vmul.f32 %v1036, %v972
        %1040 = vrot.lane.b32.xlu0 %v1037, 64
        %v1041 = vpop.permute.xlu0 %1040
        %v1043 = vmul.f32 %v1036, %v1041
        %1045 = vrot.lane.b32.xlu0 %v1043, 32
        %v1046 = vpop.permute.xlu0 %1045
        %v1048 = vadd.f32 %v1038, %v1046
        %v1049 = vtanh.pop %v1048
        %1051 = vrot.lane.b32.xlu0 %v1049, 64
        %v1052 = vpop.permute.xlu0 %1051
        %v1054 = vmul.f32 %v1036, %v1052
        %p1055 = scmp.gt.s32.totalorder %s548, 3
        %s1056 = scalar_select %p1055, 1, 0
        %v1057 = vstv %s1056
        %vm1058 = vcmp.eq.s32.totalorder %v1057, 1
        %v1059 = vsel %vm1058, %v1054, %v971
        %v1060 = vsel %vm1058, %v1048, %v972
        %v1061 = vpack.c.bf16 %v1059, %v1059
        %v1063 = vunpack.c.l.b16 %v1061
        %v1064 = vpack.c.b16 %v1063, %v1063
        %1065 = vrot.lane.b32.xlu0 %v1064, 32
        %v1066 = vpop.permute.xlu0 %1065
        %s1068 = scalar_lea.vmem [#allocation2], 12
        %1069 = vst.msk [vmem:[%s1068] sm:$0xf] %vm804, %v1066
        %s1070 = scalar_lea.vmem [#allocation3], 16
        %v1071 = vld [vmem:[%s1070] sm:$0xf]
        %v1072 = vunpack.c.l.bf16 %v1071
        %1073 = vrot.lane.b32.xlu0 %v1061, 32
        %v1074 = vpop.permute.xlu0 %1073
        %v1076 = vsel %vm600, %v1074, 0
        %1078 = vmatprep.subr.bf16.mxu0 0
        %1079 = vmatpush1.bf16.msra.mxu0 0
        %1080 = vmatprep.subr.bf16.mxu0 0
        %1081 = vmatpush1.bf16.msra.mxu0 0
        %1082 = vmatprep.subr.bf16.mxu0 0
        %1083 = vmatpush1.bf16.msra.mxu0 0
        %1084 = vmatprep.subr.bf16.mxu0 0
        %1085 = vmatpush1.bf16.msra.mxu0 0
        %1086 = vmatprep.subr.bf16.mxu0 0
        %1087 = vmatpush1.bf16.msra.mxu0 0
        %1088 = vmatprep.subr.bf16.mxu0 0
        %1089 = vmatpush1.bf16.msra.mxu0 0
        %1090 = vmatprep.subr.bf16.mxu0 0
        %1091 = vmatpush1.bf16.msra.mxu0 %v712
        %1092 = vmatprep.subr.bf16.mxu0 0
        %1093 = vmatpush1.bf16.msra.mxu0 %v711
        %1094 = vmatprep.subr.bf16.mxu0 0
        %1095 = vmatpush2.bf16.msra.mxu0 0
        %1096 = vmatprep.subr.bf16.mxu0 0
        %1097 = vmatpush2.bf16.msra.mxu0 0
        %1098 = vmatprep.subr.bf16.mxu0 0
        %1099 = vmatpush2.bf16.msra.mxu0 0
        %1100 = vmatprep.subr.bf16.mxu0 0
        %1101 = vmatpush2.bf16.msra.mxu0 0
        %1102 = vmatprep.subr.bf16.mxu0 0
        %1103 = vmatpush2.bf16.msra.mxu0 0
        %1104 = vmatprep.subr.bf16.mxu0 0
        %1105 = vmatpush2.bf16.msra.mxu0 0
        %1106 = vmatprep.subr.bf16.mxu0 0
        %1107 = vmatpush2.bf16.msra.mxu0 0
        %1108 = vmatprep.subr.bf16.mxu0 0
        %1109 = vmatpush2.bf16.msra.mxu0 0
        %1110 = vmatprep.mubr.bf16.mxu0 0
        %1111 = vmatmul.mubr.bf16.gmra.mxu0 %v1076
        %v1112 = vpop.f32.mrf.mxu0
        %v1113 = vadd.f32 0.0, %v1112
        %v1114 = vpop.f32.mrf.mxu0
        %v1115 = vpop.f32.mrf.mxu0
        %v1116 = vpop.f32.mrf.mxu0
        %1117 = vdwg.mxu0
        %v1118 = vadd.f32 %v1072, %v1113
        %v1119 = vxor.u32 %v1118, 2147483648
        %v1120 = vmul.f32 %v1119, 1.442695
        %v1121 = vpow.pop %v1120
        %v1122 = vadd.f32 %v1121, 1.0
        %v1123 = vrcp.pop %v1122
        %v1124 = vmul.f32 1.0, %v1123
        %v1125 = vtanh.pop %v1118
        %v1126 = vmul.f32 %v1124, %v1060
        %1128 = vrot.lane.b32.xlu0 %v1125, 64
        %v1129 = vpop.permute.xlu0 %1128
        %v1131 = vmul.f32 %v1124, %v1129
        %1133 = vrot.lane.b32.xlu0 %v1131, 32
        %v1134 = vpop.permute.xlu0 %1133
        %v1136 = vadd.f32 %v1126, %v1134
        %v1137 = vtanh.pop %v1136
        %1139 = vrot.lane.b32.xlu0 %v1137, 64
        %v1140 = vpop.permute.xlu0 %1139
        %v1142 = vmul.f32 %v1124, %v1140
        %p1143 = scmp.gt.s32.totalorder %s548, 4
        %s1144 = scalar_select %p1143, 1, 0
        %v1145 = vstv %s1144
        %vm1146 = vcmp.eq.s32.totalorder %v1145, 1
        %v1147 = vsel %vm1146, %v1142, %v1059
        %v1148 = vsel %vm1146, %v1136, %v1060
        %v1149 = vpack.c.bf16 %v1147, %v1147
        %v1151 = vunpack.c.l.b16 %v1149
        %v1152 = vpack.c.b16 %v1151, %v1151
        %1153 = vrot.lane.b32.xlu0 %v1152, 32
        %v1154 = vpop.permute.xlu0 %1153
        %s1156 = scalar_lea.vmem [#allocation2], 16
        %1157 = vst.msk [vmem:[%s1156] sm:$0xf] %vm804, %v1154
        %s1158 = scalar_lea.vmem [#allocation3], 20
        %v1159 = vld [vmem:[%s1158] sm:$0xf]
        %v1160 = vunpack.c.l.bf16 %v1159
        %1161 = vrot.lane.b32.xlu0 %v1149, 32
        %v1162 = vpop.permute.xlu0 %1161
        %v1164 = vsel %vm600, %v1162, 0
        %1166 = vmatprep.subr.bf16.mxu0 0
        %1167 = vmatpush1.bf16.msra.mxu0 0
        %1168 = vmatprep.subr.bf16.mxu0 0
        %1169 = vmatpush1.bf16.msra.mxu0 0
        %1170 = vmatprep.subr.bf16.mxu0 0
        %1171 = vmatpush1.bf16.msra.mxu0 0
        %1172 = vmatprep.subr.bf16.mxu0 0
        %1173 = vmatpush1.bf16.msra.mxu0 0
        %1174 = vmatprep.subr.bf16.mxu0 0
        %1175 = vmatpush1.bf16.msra.mxu0 0
        %1176 = vmatprep.subr.bf16.mxu0 0
        %1177 = vmatpush1.bf16.msra.mxu0 0
        %1178 = vmatprep.subr.bf16.mxu0 0
        %1179 = vmatpush1.bf16.msra.mxu0 %v712
        %1180 = vmatprep.subr.bf16.mxu0 0
        %1181 = vmatpush1.bf16.msra.mxu0 %v711
        %1182 = vmatprep.subr.bf16.mxu0 0
        %1183 = vmatpush2.bf16.msra.mxu0 0
        %1184 = vmatprep.subr.bf16.mxu0 0
        %1185 = vmatpush2.bf16.msra.mxu0 0
        %1186 = vmatprep.subr.bf16.mxu0 0
        %1187 = vmatpush2.bf16.msra.mxu0 0
        %1188 = vmatprep.subr.bf16.mxu0 0
        %1189 = vmatpush2.bf16.msra.mxu0 0
        %1190 = vmatprep.subr.bf16.mxu0 0
        %1191 = vmatpush2.bf16.msra.mxu0 0
        %1192 = vmatprep.subr.bf16.mxu0 0
        %1193 = vmatpush2.bf16.msra.mxu0 0
        %1194 = vmatprep.subr.bf16.mxu0 0
        %1195 = vmatpush2.bf16.msra.mxu0 0
        %1196 = vmatprep.subr.bf16.mxu0 0
        %1197 = vmatpush2.bf16.msra.mxu0 0
        %1198 = vmatprep.mubr.bf16.mxu0 0
        %1199 = vmatmul.mubr.bf16.gmra.mxu0 %v1164
        %v1200 = vpop.f32.mrf.mxu0
        %v1201 = vadd.f32 0.0, %v1200
        %v1202 = vpop.f32.mrf.mxu0
        %v1203 = vpop.f32.mrf.mxu0
        %v1204 = vpop.f32.mrf.mxu0
        %1205 = vdwg.mxu0
        %v1206 = vadd.f32 %v1160, %v1201
        %v1207 = vxor.u32 %v1206, 2147483648
        %v1208 = vmul.f32 %v1207, 1.442695
        %v1209 = vpow.pop %v1208
        %v1210 = vadd.f32 %v1209, 1.0
        %v1211 = vrcp.pop %v1210
        %v1212 = vmul.f32 1.0, %v1211
        %v1213 = vtanh.pop %v1206
        %v1214 = vmul.f32 %v1212, %v1148
        %1216 = vrot.lane.b32.xlu0 %v1213, 64
        %v1217 = vpop.permute.xlu0 %1216
        %v1219 = vmul.f32 %v1212, %v1217
        %1221 = vrot.lane.b32.xlu0 %v1219, 32
        %v1222 = vpop.permute.xlu0 %1221
        %v1224 = vadd.f32 %v1214, %v1222
        %v1225 = vtanh.pop %v1224
        %1227 = vrot.lane.b32.xlu0 %v1225, 64
        %v1228 = vpop.permute.xlu0 %1227
        %v1230 = vmul.f32 %v1212, %v1228
        %p1231 = scmp.gt.s32.totalorder %s548, 5
        %s1232 = scalar_select %p1231, 1, 0
        %v1233 = vstv %s1232
        %vm1234 = vcmp.eq.s32.totalorder %v1233, 1
        %v1235 = vsel %vm1234, %v1230, %v1147
        %v1236 = vsel %vm1234, %v1224, %v1148
        %v1237 = vpack.c.bf16 %v1235, %v1235
        %v1239 = vunpack.c.l.b16 %v1237
        %v1240 = vpack.c.b16 %v1239, %v1239
        %1241 = vrot.lane.b32.xlu0 %v1240, 32
        %v1242 = vpop.permute.xlu0 %1241
        %s1244 = scalar_lea.vmem [#allocation2], 20
        %1245 = vst.msk [vmem:[%s1244] sm:$0xf] %vm804, %v1242
        %s1246 = scalar_lea.vmem [#allocation3], 24
        %v1247 = vld [vmem:[%s1246] sm:$0xf]
        %v1248 = vunpack.c.l.bf16 %v1247
        %1249 = vrot.lane.b32.xlu0 %v1237, 32
        %v1250 = vpop.permute.xlu0 %1249
        %v1252 = vsel %vm600, %v1250, 0
        %1254 = vmatprep.subr.bf16.mxu0 0
        %1255 = vmatpush1.bf16.msra.mxu0 0
        %1256 = vmatprep.subr.bf16.mxu0 0
        %1257 = vmatpush1.bf16.msra.mxu0 0
        %1258 = vmatprep.subr.bf16.mxu0 0
        %1259 = vmatpush1.bf16.msra.mxu0 0
        %1260 = vmatprep.subr.bf16.mxu0 0
        %1261 = vmatpush1.bf16.msra.mxu0 0
        %1262 = vmatprep.subr.bf16.mxu0 0
        %1263 = vmatpush1.bf16.msra.mxu0 0
        %1264 = vmatprep.subr.bf16.mxu0 0
        %1265 = vmatpush1.bf16.msra.mxu0 0
        %1266 = vmatprep.subr.bf16.mxu0 0
        %1267 = vmatpush1.bf16.msra.mxu0 %v712
        %1268 = vmatprep.subr.bf16.mxu0 0
        %1269 = vmatpush1.bf16.msra.mxu0 %v711
        %1270 = vmatprep.subr.bf16.mxu0 0
        %1271 = vmatpush2.bf16.msra.mxu0 0
        %1272 = vmatprep.subr.bf16.mxu0 0
        %1273 = vmatpush2.bf16.msra.mxu0 0
        %1274 = vmatprep.subr.bf16.mxu0 0
        %1275 = vmatpush2.bf16.msra.mxu0 0
        %1276 = vmatprep.subr.bf16.mxu0 0
        %1277 = vmatpush2.bf16.msra.mxu0 0
        %1278 = vmatprep.subr.bf16.mxu0 0
        %1279 = vmatpush2.bf16.msra.mxu0 0
        %1280 = vmatprep.subr.bf16.mxu0 0
        %1281 = vmatpush2.bf16.msra.mxu0 0
        %1282 = vmatprep.subr.bf16.mxu0 0
        %1283 = vmatpush2.bf16.msra.mxu0 0
        %1284 = vmatprep.subr.bf16.mxu0 0
        %1285 = vmatpush2.bf16.msra.mxu0 0
        %1286 = vmatprep.mubr.bf16.mxu0 0
        %1287 = vmatmul.mubr.bf16.gmra.mxu0 %v1252
        %v1288 = vpop.f32.mrf.mxu0
        %v1289 = vadd.f32 0.0, %v1288
        %v1290 = vpop.f32.mrf.mxu0
        %v1291 = vpop.f32.mrf.mxu0
        %v1292 = vpop.f32.mrf.mxu0
        %1293 = vdwg.mxu0
        %v1294 = vadd.f32 %v1248, %v1289
        %v1295 = vxor.u32 %v1294, 2147483648
        %v1296 = vmul.f32 %v1295, 1.442695
        %v1297 = vpow.pop %v1296
        %v1298 = vadd.f32 %v1297, 1.0
        %v1299 = vrcp.pop %v1298
        %v1300 = vmul.f32 1.0, %v1299
        %v1301 = vtanh.pop %v1294
        %v1302 = vmul.f32 %v1300, %v1236
        %1304 = vrot.lane.b32.xlu0 %v1301, 64
        %v1305 = vpop.permute.xlu0 %1304
        %v1307 = vmul.f32 %v1300, %v1305
        %1309 = vrot.lane.b32.xlu0 %v1307, 32
        %v1310 = vpop.permute.xlu0 %1309
        %v1312 = vadd.f32 %v1302, %v1310
        %v1313 = vtanh.pop %v1312
        %1315 = vrot.lane.b32.xlu0 %v1313, 64
        %v1316 = vpop.permute.xlu0 %1315
        %v1318 = vmul.f32 %v1300, %v1316
        %p1319 = scmp.gt.s32.totalorder %s548, 6
        %s1320 = scalar_select %p1319, 1, 0
        %v1321 = vstv %s1320
        %vm1322 = vcmp.eq.s32.totalorder %v1321, 1
        %v1323 = vsel %vm1322, %v1318, %v1235
        %v1324 = vsel %vm1322, %v1312, %v1236
        %v1325 = vpack.c.bf16 %v1323, %v1323
        %v1327 = vunpack.c.l.b16 %v1325
        %v1328 = vpack.c.b16 %v1327, %v1327
        %1329 = vrot.lane.b32.xlu0 %v1328, 32
        %v1330 = vpop.permute.xlu0 %1329
        %s1332 = scalar_lea.vmem [#allocation2], 24
        %1333 = vst.msk [vmem:[%s1332] sm:$0xf] %vm804, %v1330
        %s1334 = scalar_lea.vmem [#allocation3], 28
        %v1335 = vld [vmem:[%s1334] sm:$0xf]
        %v1336 = vunpack.c.l.bf16 %v1335
        %1337 = vrot.lane.b32.xlu0 %v1325, 32
        %v1338 = vpop.permute.xlu0 %1337
        %v1340 = vsel %vm600, %v1338, 0
        %1342 = vmatprep.subr.bf16.mxu0 0
        %1343 = vmatpush1.bf16.msra.mxu0 0
        %1344 = vmatprep.subr.bf16.mxu0 0
        %1345 = vmatpush1.bf16.msra.mxu0 0
        %1346 = vmatprep.subr.bf16.mxu0 0
        %1347 = vmatpush1.bf16.msra.mxu0 0
        %1348 = vmatprep.subr.bf16.mxu0 0
        %1349 = vmatpush1.bf16.msra.mxu0 0
        %1350 = vmatprep.subr.bf16.mxu0 0
        %1351 = vmatpush1.bf16.msra.mxu0 0
        %1352 = vmatprep.subr.bf16.mxu0 0
        %1353 = vmatpush1.bf16.msra.mxu0 0
        %1354 = vmatprep.subr.bf16.mxu0 0
        %1355 = vmatpush1.bf16.msra.mxu0 %v712
        %1356 = vmatprep.subr.bf16.mxu0 0
        %1357 = vmatpush1.bf16.msra.mxu0 %v711
        %1358 = vmatprep.subr.bf16.mxu0 0
        %1359 = vmatpush2.bf16.msra.mxu0 0
        %1360 = vmatprep.subr.bf16.mxu0 0
        %1361 = vmatpush2.bf16.msra.mxu0 0
        %1362 = vmatprep.subr.bf16.mxu0 0
        %1363 = vmatpush2.bf16.msra.mxu0 0
        %1364 = vmatprep.subr.bf16.mxu0 0
        %1365 = vmatpush2.bf16.msra.mxu0 0
        %1366 = vmatprep.subr.bf16.mxu0 0
        %1367 = vmatpush2.bf16.msra.mxu0 0
        %1368 = vmatprep.subr.bf16.mxu0 0
        %1369 = vmatpush2.bf16.msra.mxu0 0
        %1370 = vmatprep.subr.bf16.mxu0 0
        %1371 = vmatpush2.bf16.msra.mxu0 0
        %1372 = vmatprep.subr.bf16.mxu0 0
        %1373 = vmatpush2.bf16.msra.mxu0 0
        %1374 = vmatprep.mubr.bf16.mxu0 0
        %1375 = vmatmul.mubr.bf16.gmra.mxu0 %v1340
        %v1376 = vpop.f32.mrf.mxu0
        %v1377 = vadd.f32 0.0, %v1376
        %v1378 = vpop.f32.mrf.mxu0
        %v1379 = vpop.f32.mrf.mxu0
        %v1380 = vpop.f32.mrf.mxu0
        %1381 = vdwg.mxu0
        %v1382 = vadd.f32 %v1336, %v1377
        %v1383 = vxor.u32 %v1382, 2147483648
        %v1384 = vmul.f32 %v1383, 1.442695
        %v1385 = vpow.pop %v1384
        %v1386 = vadd.f32 %v1385, 1.0
        %v1387 = vrcp.pop %v1386
        %v1388 = vmul.f32 1.0, %v1387
        %v1389 = vtanh.pop %v1382
        %v1390 = vmul.f32 %v1388, %v1324
        %1392 = vrot.lane.b32.xlu0 %v1389, 64
        %v1393 = vpop.permute.xlu0 %1392
        %v1395 = vmul.f32 %v1388, %v1393
        %1397 = vrot.lane.b32.xlu0 %v1395, 32
        %v1398 = vpop.permute.xlu0 %1397
        %v1400 = vadd.f32 %v1390, %v1398
        %v1401 = vtanh.pop %v1400
        %1403 = vrot.lane.b32.xlu0 %v1401, 64
        %v1404 = vpop.permute.xlu0 %1403
        %v1406 = vmul.f32 %v1388, %v1404
        %p1407 = scmp.gt.s32.totalorder %s548, 7
        %s1408 = scalar_select %p1407, 1, 0
        %v1409 = vstv %s1408
        %vm1410 = vcmp.eq.s32.totalorder %v1409, 1
        %v1411 = vsel %vm1410, %v1406, %v1323
        %v1412 = vsel %vm1410, %v1400, %v1324
        %v1413 = vpack.c.bf16 %v1411, %v1411
        %v1415 = vunpack.c.l.b16 %v1413
        %v1416 = vpack.c.b16 %v1415, %v1415
        %1417 = vrot.lane.b32.xlu0 %v1416, 32
        %v1418 = vpop.permute.xlu0 %1417
        %s1420 = scalar_lea.vmem [#allocation2], 28
        %1421 = vst.msk [vmem:[%s1420] sm:$0xf] %vm804, %v1418
        %1423 = vrot.lane.b32.xlu0 %v1411, 32
        %v1424 = vpop.permute.xlu0 %1423
        %1426 = vst.msk [vmem:[#allocation4] sm:$0xff] %vm600, %v1424
        %1428 = vrot.lane.b32.xlu0 %v1412, 96
        %v1429 = vpop.permute.xlu0 %1428
        %1431 = vst.msk [vmem:[#allocation5] sm:$0xff] %vm600, %v1429
        %v1432 = vld [vmem:[#allocation2] sm:$0xf]
        %v1433 = vld [vmem:[#allocation2 + $0x4] sm:$0xf]
        %v1434 = vld [vmem:[#allocation2 + $0x8] sm:$0xf]
        %v1435 = vld [vmem:[#allocation2 + $0xc] sm:$0xf]
        %v1436 = vld [vmem:[#allocation2 + $0x10] sm:$0xf]
        %v1437 = vld [vmem:[#allocation2 + $0x14] sm:$0xf]
        %v1438 = vld [vmem:[#allocation2 + $0x18] sm:$0xf]
        %v1439 = vld [vmem:[#allocation2 + $0x1c] sm:$0xf]
        %v1440 = vld [vmem:[#allocation12] sm:$0xf]
        %v1441 = vld [vmem:[#allocation12 + $0x4] sm:$0xf]
        %v1442 = vld [vmem:[#allocation12 + $0x8] sm:$0xf]
        %v1443 = vld [vmem:[#allocation12 + $0xc] sm:$0xf]
        %v1444 = vld [vmem:[%s6] sm:$0x1]
        %v1446 = vlaneseq
        %v1447 = vshrl.u32 %v1446, 7
        %v1448 = vsub.s32 0, %v1447
        %v1449 = vrot.slane %v1444, %v1448
        %v1459 = vunpack.c.l.b16 %v1432
        %v1460 = vunpack.c.l.b16 %v1433
        %v1461 = vunpack.c.l.b16 %v1434
        %v1462 = vunpack.c.l.b16 %v1435
        %v1463 = vunpack.c.l.b16 %v1436
        %v1464 = vunpack.c.l.b16 %v1437
        %v1465 = vunpack.c.l.b16 %v1438
        %v1466 = vunpack.c.l.b16 %v1439
        %v1467 = vpack.c.b16 %v1460, %v1459
        %v1468 = vpack.c.b16 %v1462, %v1461
        %v1469 = vpack.c.b16 %v1464, %v1463
        %v1470 = vpack.c.b16 %v1466, %v1465
        %v1475 = vunpack.c.l.b16 %v1440
        %v1476 = vunpack.c.l.b16 %v1441
        %v1477 = vunpack.c.l.b16 %v1442
        %v1478 = vunpack.c.l.b16 %v1443
        %v1479 = vpack.c.b16 %v1476, %v1475
        %v1480 = vpack.c.b16 %v1478, %v1477
        %v1484 = vsel %vm600, %v1467, 0
        %v1487 = vsel %vm600, %v1468, 0
        %v1490 = vsel %vm600, %v1469, 0
        %v1493 = vsel %vm600, %v1470, 0
        %1495 = vmatprep.subr.bf16.mxu0 0
        %1496 = vmatpush1.bf16.msra.mxu0 0
        %1497 = vmatprep.subr.bf16.mxu0 0
        %1498 = vmatpush1.bf16.msra.mxu0 0
        %1499 = vmatprep.subr.bf16.mxu0 0
        %1500 = vmatpush1.bf16.msra.mxu0 0
        %1501 = vmatprep.subr.bf16.mxu0 0
        %1502 = vmatpush1.bf16.msra.mxu0 0
        %1503 = vmatprep.subr.bf16.mxu0 0
        %1504 = vmatpush1.bf16.msra.mxu0 0
        %1505 = vmatprep.subr.bf16.mxu0 0
        %1506 = vmatpush1.bf16.msra.mxu0 0
        %1507 = vmatprep.subr.bf16.mxu0 0
        %1508 = vmatpush1.bf16.msra.mxu0 %v1480
        %1509 = vmatprep.subr.bf16.mxu0 0
        %1510 = vmatpush1.bf16.msra.mxu0 %v1479
        %1511 = vmatprep.subr.bf16.mxu0 0
        %1512 = vmatpush2.bf16.msra.mxu0 0
        %1513 = vmatprep.subr.bf16.mxu0 0
        %1514 = vmatpush2.bf16.msra.mxu0 0
        %1515 = vmatprep.subr.bf16.mxu0 0
        %1516 = vmatpush2.bf16.msra.mxu0 0
        %1517 = vmatprep.subr.bf16.mxu0 0
        %1518 = vmatpush2.bf16.msra.mxu0 0
        %1519 = vmatprep.subr.bf16.mxu0 0
        %1520 = vmatpush2.bf16.msra.mxu0 0
        %1521 = vmatprep.subr.bf16.mxu0 0
        %1522 = vmatpush2.bf16.msra.mxu0 0
        %1523 = vmatprep.subr.bf16.mxu0 0
        %1524 = vmatpush2.bf16.msra.mxu0 0
        %1525 = vmatprep.subr.bf16.mxu0 0
        %1526 = vmatpush2.bf16.msra.mxu0 0
        %1527 = vmatprep.mubr.bf16.mxu0 0
        %1528 = vmatmul.mubr.bf16.gmra.mxu0 %v1484
        %v1529 = vpop.f32.mrf.mxu0
        %v1530 = vadd.f32 %v1449, %v1529
        %v1531 = vpop.f32.mrf.mxu0
        %v1532 = vpop.f32.mrf.mxu0
        %v1533 = vadd.f32 %v1449, %v1532
        %v1534 = vpop.f32.mrf.mxu0
        %1535 = vmatprep.mubr.bf16.mxu0 0
        %1536 = vmatmul.mubr.bf16.gmra.mxu0 %v1487
        %v1537 = vpop.f32.mrf.mxu0
        %v1538 = vadd.f32 %v1449, %v1537
        %v1539 = vpop.f32.mrf.mxu0
        %v1540 = vpop.f32.mrf.mxu0
        %v1541 = vadd.f32 %v1449, %v1540
        %v1542 = vpop.f32.mrf.mxu0
        %1543 = vmatprep.mubr.bf16.mxu0 0
        %1544 = vmatmul.mubr.bf16.gmra.mxu0 %v1490
        %v1545 = vpop.f32.mrf.mxu0
        %v1546 = vadd.f32 %v1449, %v1545
        %v1547 = vpop.f32.mrf.mxu0
        %v1548 = vpop.f32.mrf.mxu0
        %v1549 = vadd.f32 %v1449, %v1548
        %v1550 = vpop.f32.mrf.mxu0
        %1551 = vmatprep.mubr.bf16.mxu0 0
        %1552 = vmatmul.mubr.bf16.gmra.mxu0 %v1493
        %v1553 = vpop.f32.mrf.mxu0
        %v1554 = vadd.f32 %v1449, %v1553
        %v1555 = vpop.f32.mrf.mxu0
        %v1556 = vpop.f32.mrf.mxu0
        %v1557 = vadd.f32 %v1449, %v1556
        %v1558 = vpop.f32.mrf.mxu0
        %1559 = vdwg.mxu0
        %v1560 = vpack.c.bf16 %v1530, %v1530
        %v1561 = vpack.c.bf16 %v1533, %v1533
        %v1562 = vpack.c.bf16 %v1538, %v1538
        %v1563 = vpack.c.bf16 %v1541, %v1541
        %v1564 = vpack.c.bf16 %v1546, %v1546
        %v1565 = vpack.c.bf16 %v1549, %v1549
        %v1566 = vpack.c.bf16 %v1554, %v1554
        %v1567 = vpack.c.bf16 %v1557, %v1557
        %1568 = vst [vmem:[#allocation3] sm:$0xf] %v1560
        %1569 = vst [vmem:[#allocation3 + $0x4] sm:$0xf] %v1561
        %1570 = vst [vmem:[#allocation3 + $0x8] sm:$0xf] %v1562
        %1571 = vst [vmem:[#allocation3 + $0xc] sm:$0xf] %v1563
        %1572 = vst [vmem:[#allocation3 + $0x10] sm:$0xf] %v1564
        %1573 = vst [vmem:[#allocation3 + $0x14] sm:$0xf] %v1565
        %1574 = vst [vmem:[#allocation3 + $0x18] sm:$0xf] %v1566
        %1575 = vst [vmem:[#allocation3 + $0x1c] sm:$0xf] %v1567
        %v1576 = vld [vmem:[#allocation14] sm:$0xf]
        %v1577 = vld [vmem:[#allocation14 + $0x4] sm:$0xf]
        %v1578 = vld [vmem:[#allocation14 + $0x8] sm:$0xf]
        %v1579 = vld [vmem:[#allocation14 + $0xc] sm:$0xf]
        %s1580 = scalar_lea.vmem [#allocation4], 8
        %v1581 = vld [vmem:[%s1580] sm:$0xff]
        %s1582 = scalar_lea.vmem [#allocation5], 8
        %v1583 = vld [vmem:[%s1582] sm:$0xff]
        %v1584 = vld [vmem:[#allocation3] sm:$0xf]
        %v1585 = vunpack.c.l.bf16 %v1584
        %v1586 = vpack.c.bf16 %v1581, %v1581
        %v1591 = vunpack.c.l.b16 %v1576
        %v1592 = vunpack.c.l.b16 %v1577
        %v1593 = vunpack.c.l.b16 %v1578
        %v1594 = vunpack.c.l.b16 %v1579
        %v1595 = vpack.c.b16 %v1592, %v1591
        %v1596 = vpack.c.b16 %v1594, %v1593
        %v1600 = vsel %vm600, %v1586, 0
        %1602 = vmatprep.subr.bf16.mxu0 0
        %1603 = vmatpush1.bf16.msra.mxu0 0
        %1604 = vmatprep.subr.bf16.mxu0 0
        %1605 = vmatpush1.bf16.msra.mxu0 0
        %1606 = vmatprep.subr.bf16.mxu0 0
        %1607 = vmatpush1.bf16.msra.mxu0 0
        %1608 = vmatprep.subr.bf16.mxu0 0
        %1609 = vmatpush1.bf16.msra.mxu0 0
        %1610 = vmatprep.subr.bf16.mxu0 0
        %1611 = vmatpush1.bf16.msra.mxu0 0
        %1612 = vmatprep.subr.bf16.mxu0 0
        %1613 = vmatpush1.bf16.msra.mxu0 0
        %1614 = vmatprep.subr.bf16.mxu0 0
        %1615 = vmatpush1.bf16.msra.mxu0 %v1596
        %1616 = vmatprep.subr.bf16.mxu0 0
        %1617 = vmatpush1.bf16.msra.mxu0 %v1595
        %1618 = vmatprep.subr.bf16.mxu0 0
        %1619 = vmatpush2.bf16.msra.mxu0 0
        %1620 = vmatprep.subr.bf16.mxu0 0
        %1621 = vmatpush2.bf16.msra.mxu0 0
        %1622 = vmatprep.subr.bf16.mxu0 0
        %1623 = vmatpush2.bf16.msra.mxu0 0
        %1624 = vmatprep.subr.bf16.mxu0 0
        %1625 = vmatpush2.bf16.msra.mxu0 0
        %1626 = vmatprep.subr.bf16.mxu0 0
        %1627 = vmatpush2.bf16.msra.mxu0 0
        %1628 = vmatprep.subr.bf16.mxu0 0
        %1629 = vmatpush2.bf16.msra.mxu0 0
        %1630 = vmatprep.subr.bf16.mxu0 0
        %1631 = vmatpush2.bf16.msra.mxu0 0
        %1632 = vmatprep.subr.bf16.mxu0 0
        %1633 = vmatpush2.bf16.msra.mxu0 0
        %1634 = vmatprep.mubr.bf16.mxu0 0
        %1635 = vmatmul.mubr.bf16.gmra.mxu0 %v1600
        %v1636 = vpop.f32.mrf.mxu0
        %v1637 = vadd.f32 0.0, %v1636
        %v1638 = vpop.f32.mrf.mxu0
        %v1639 = vpop.f32.mrf.mxu0
        %v1640 = vpop.f32.mrf.mxu0
        %1641 = vdwg.mxu0
        %v1642 = vadd.f32 %v1585, %v1637
        %v1643 = vxor.u32 %v1642, 2147483648
        %v1644 = vmul.f32 %v1643, 1.442695
        %v1645 = vpow.pop %v1644
        %v1646 = vadd.f32 %v1645, 1.0
        %v1647 = vrcp.pop %v1646
        %v1648 = vmul.f32 1.0, %v1647
        %v1649 = vtanh.pop %v1642
        %1651 = vrot.lane.b32.xlu0 %v1583, 32
        %v1652 = vpop.permute.xlu0 %1651
        %v1654 = vmul.f32 %v1648, %v1652
        %1656 = vrot.lane.b32.xlu0 %v1649, 64
        %v1657 = vpop.permute.xlu0 %1656
        %v1659 = vmul.f32 %v1648, %v1657
        %1661 = vrot.lane.b32.xlu0 %v1659, 32
        %v1662 = vpop.permute.xlu0 %1661
        %v1664 = vadd.f32 %v1654, %v1662
        %v1665 = vtanh.pop %v1664
        %1667 = vrot.lane.b32.xlu0 %v1665, 64
        %v1668 = vpop.permute.xlu0 %1667
        %v1670 = vmul.f32 %v1648, %v1668
        %1672 = vrot.lane.b32.xlu0 %v1581, 96
        %v1673 = vpop.permute.xlu0 %1672
        %v1675 = vsel %vm790, %v1670, %v1673
        %v1676 = vsel %vm790, %v1664, %v1652
        %1678 = vrot.lane.b32.xlu0 %v1675, 32
        %v1679 = vpop.permute.xlu0 %1678
        %1681 = vst.msk [vmem:[%s524] sm:$0xff] %vm600, %v1679
        %v1682 = vld [vmem:[%s806] sm:$0xf]
        %v1683 = vunpack.c.l.bf16 %v1682
        %v1684 = vpack.c.bf16 %v1675, %v1675
        %1686 = vrot.lane.b32.xlu0 %v1684, 32
        %v1687 = vpop.permute.xlu0 %1686
        %v1689 = vsel %vm600, %v1687, 0
        %1691 = vmatprep.subr.bf16.mxu0 0
        %1692 = vmatpush1.bf16.msra.mxu0 0
        %1693 = vmatprep.subr.bf16.mxu0 0
        %1694 = vmatpush1.bf16.msra.mxu0 0
        %1695 = vmatprep.subr.bf16.mxu0 0
        %1696 = vmatpush1.bf16.msra.mxu0 0
        %1697 = vmatprep.subr.bf16.mxu0 0
        %1698 = vmatpush1.bf16.msra.mxu0 0
        %1699 = vmatprep.subr.bf16.mxu0 0
        %1700 = vmatpush1.bf16.msra.mxu0 0
        %1701 = vmatprep.subr.bf16.mxu0 0
        %1702 = vmatpush1.bf16.msra.mxu0 0
        %1703 = vmatprep.subr.bf16.mxu0 0
        %1704 = vmatpush1.bf16.msra.mxu0 %v1596
        %1705 = vmatprep.subr.bf16.mxu0 0
        %1706 = vmatpush1.bf16.msra.mxu0 %v1595
        %1707 = vmatprep.subr.bf16.mxu0 0
        %1708 = vmatpush2.bf16.msra.mxu0 0
        %1709 = vmatprep.subr.bf16.mxu0 0
        %1710 = vmatpush2.bf16.msra.mxu0 0
        %1711 = vmatprep.subr.bf16.mxu0 0
        %1712 = vmatpush2.bf16.msra.mxu0 0
        %1713 = vmatprep.subr.bf16.mxu0 0
        %1714 = vmatpush2.bf16.msra.mxu0 0
        %1715 = vmatprep.subr.bf16.mxu0 0
        %1716 = vmatpush2.bf16.msra.mxu0 0
        %1717 = vmatprep.subr.bf16.mxu0 0
        %1718 = vmatpush2.bf16.msra.mxu0 0
        %1719 = vmatprep.subr.bf16.mxu0 0
        %1720 = vmatpush2.bf16.msra.mxu0 0
        %1721 = vmatprep.subr.bf16.mxu0 0
        %1722 = vmatpush2.bf16.msra.mxu0 0
        %1723 = vmatprep.mubr.bf16.mxu0 0
        %1724 = vmatmul.mubr.bf16.gmra.mxu0 %v1689
        %v1725 = vpop.f32.mrf.mxu0
        %v1726 = vadd.f32 0.0, %v1725
        %v1727 = vpop.f32.mrf.mxu0
        %v1728 = vpop.f32.mrf.mxu0
        %v1729 = vpop.f32.mrf.mxu0
        %1730 = vdwg.mxu0
        %v1731 = vadd.f32 %v1683, %v1726
        %v1732 = vxor.u32 %v1731, 2147483648
        %v1733 = vmul.f32 %v1732, 1.442695
        %v1734 = vpow.pop %v1733
        %v1735 = vadd.f32 %v1734, 1.0
        %v1736 = vrcp.pop %v1735
        %v1737 = vmul.f32 1.0, %v1736
        %v1738 = vtanh.pop %v1731
        %v1739 = vmul.f32 %v1737, %v1676
        %1741 = vrot.lane.b32.xlu0 %v1738, 64
        %v1742 = vpop.permute.xlu0 %1741
        %v1744 = vmul.f32 %v1737, %v1742
        %1746 = vrot.lane.b32.xlu0 %v1744, 32
        %v1747 = vpop.permute.xlu0 %1746
        %v1749 = vadd.f32 %v1739, %v1747
        %v1750 = vtanh.pop %v1749
        %1752 = vrot.lane.b32.xlu0 %v1750, 64
        %v1753 = vpop.permute.xlu0 %1752
        %v1755 = vmul.f32 %v1737, %v1753
        %v1756 = vsel %vm882, %v1755, %v1675
        %v1757 = vsel %vm882, %v1749, %v1676
        %1759 = vrot.lane.b32.xlu0 %v1756, 32
        %v1760 = vpop.permute.xlu0 %1759
        %s1762 = scalar_lea.vmem %s524, 8 [#allocation18]
        %1763 = vst.msk [vmem:[%s1762] sm:$0xff] %vm600, %v1760
        %v1764 = vld [vmem:[%s894] sm:$0xf]
        %v1765 = vunpack.c.l.bf16 %v1764
        %v1766 = vpack.c.bf16 %v1756, %v1756
        %1768 = vrot.lane.b32.xlu0 %v1766, 32
        %v1769 = vpop.permute.xlu0 %1768
        %v1771 = vsel %vm600, %v1769, 0
        %1773 = vmatprep.subr.bf16.mxu0 0
        %1774 = vmatpush1.bf16.msra.mxu0 0
        %1775 = vmatprep.subr.bf16.mxu0 0
        %1776 = vmatpush1.bf16.msra.mxu0 0
        %1777 = vmatprep.subr.bf16.mxu0 0
        %1778 = vmatpush1.bf16.msra.mxu0 0
        %1779 = vmatprep.subr.bf16.mxu0 0
        %1780 = vmatpush1.bf16.msra.mxu0 0
        %1781 = vmatprep.subr.bf16.mxu0 0
        %1782 = vmatpush1.bf16.msra.mxu0 0
        %1783 = vmatprep.subr.bf16.mxu0 0
        %1784 = vmatpush1.bf16.msra.mxu0 0
        %1785 = vmatprep.subr.bf16.mxu0 0
        %1786 = vmatpush1.bf16.msra.mxu0 %v1596
        %1787 = vmatprep.subr.bf16.mxu0 0
        %1788 = vmatpush1.bf16.msra.mxu0 %v1595
        %1789 = vmatprep.subr.bf16.mxu0 0
        %1790 = vmatpush2.bf16.msra.mxu0 0
        %1791 = vmatprep.subr.bf16.mxu0 0
        %1792 = vmatpush2.bf16.msra.mxu0 0
        %1793 = vmatprep.subr.bf16.mxu0 0
        %1794 = vmatpush2.bf16.msra.mxu0 0
        %1795 = vmatprep.subr.bf16.mxu0 0
        %1796 = vmatpush2.bf16.msra.mxu0 0
        %1797 = vmatprep.subr.bf16.mxu0 0
        %1798 = vmatpush2.bf16.msra.mxu0 0
        %1799 = vmatprep.subr.bf16.mxu0 0
        %1800 = vmatpush2.bf16.msra.mxu0 0
        %1801 = vmatprep.subr.bf16.mxu0 0
        %1802 = vmatpush2.bf16.msra.mxu0 0
        %1803 = vmatprep.subr.bf16.mxu0 0
        %1804 = vmatpush2.bf16.msra.mxu0 0
        %1805 = vmatprep.mubr.bf16.mxu0 0
        %1806 = vmatmul.mubr.bf16.gmra.mxu0 %v1771
        %v1807 = vpop.f32.mrf.mxu0
        %v1808 = vadd.f32 0.0, %v1807
        %v1809 = vpop.f32.mrf.mxu0
        %v1810 = vpop.f32.mrf.mxu0
        %v1811 = vpop.f32.mrf.mxu0
        %1812 = vdwg.mxu0
        %v1813 = vadd.f32 %v1765, %v1808
        %v1814 = vxor.u32 %v1813, 2147483648
        %v1815 = vmul.f32 %v1814, 1.442695
        %v1816 = vpow.pop %v1815
        %v1817 = vadd.f32 %v1816, 1.0
        %v1818 = vrcp.pop %v1817
        %v1819 = vmul.f32 1.0, %v1818
        %v1820 = vtanh.pop %v1813
        %v1821 = vmul.f32 %v1819, %v1757
        %1823 = vrot.lane.b32.xlu0 %v1820, 64
        %v1824 = vpop.permute.xlu0 %1823
        %v1826 = vmul.f32 %v1819, %v1824
        %1828 = vrot.lane.b32.xlu0 %v1826, 32
        %v1829 = vpop.permute.xlu0 %1828
        %v1831 = vadd.f32 %v1821, %v1829
        %v1832 = vtanh.pop %v1831
        %1834 = vrot.lane.b32.xlu0 %v1832, 64
        %v1835 = vpop.permute.xlu0 %1834
        %v1837 = vmul.f32 %v1819, %v1835
        %v1838 = vsel %vm970, %v1837, %v1756
        %v1839 = vsel %vm970, %v1831, %v1757
        %1841 = vrot.lane.b32.xlu0 %v1838, 32
        %v1842 = vpop.permute.xlu0 %1841
        %s1844 = scalar_lea.vmem %s524, 16 [#allocation18]
        %1845 = vst.msk [vmem:[%s1844] sm:$0xff] %vm600, %v1842
        %v1846 = vld [vmem:[%s982] sm:$0xf]
        %v1847 = vunpack.c.l.bf16 %v1846
        %v1848 = vpack.c.bf16 %v1838, %v1838
        %1850 = vrot.lane.b32.xlu0 %v1848, 32
        %v1851 = vpop.permute.xlu0 %1850
        %v1853 = vsel %vm600, %v1851, 0
        %1855 = vmatprep.subr.bf16.mxu0 0
        %1856 = vmatpush1.bf16.msra.mxu0 0
        %1857 = vmatprep.subr.bf16.mxu0 0
        %1858 = vmatpush1.bf16.msra.mxu0 0
        %1859 = vmatprep.subr.bf16.mxu0 0
        %1860 = vmatpush1.bf16.msra.mxu0 0
        %1861 = vmatprep.subr.bf16.mxu0 0
        %1862 = vmatpush1.bf16.msra.mxu0 0
        %1863 = vmatprep.subr.bf16.mxu0 0
        %1864 = vmatpush1.bf16.msra.mxu0 0
        %1865 = vmatprep.subr.bf16.mxu0 0
        %1866 = vmatpush1.bf16.msra.mxu0 0
        %1867 = vmatprep.subr.bf16.mxu0 0
        %1868 = vmatpush1.bf16.msra.mxu0 %v1596
        %1869 = vmatprep.subr.bf16.mxu0 0
        %1870 = vmatpush1.bf16.msra.mxu0 %v1595
        %1871 = vmatprep.subr.bf16.mxu0 0
        %1872 = vmatpush2.bf16.msra.mxu0 0
        %1873 = vmatprep.subr.bf16.mxu0 0
        %1874 = vmatpush2.bf16.msra.mxu0 0
        %1875 = vmatprep.subr.bf16.mxu0 0
        %1876 = vmatpush2.bf16.msra.mxu0 0
        %1877 = vmatprep.subr.bf16.mxu0 0
        %1878 = vmatpush2.bf16.msra.mxu0 0
        %1879 = vmatprep.subr.bf16.mxu0 0
        %1880 = vmatpush2.bf16.msra.mxu0 0
        %1881 = vmatprep.subr.bf16.mxu0 0
        %1882 = vmatpush2.bf16.msra.mxu0 0
        %1883 = vmatprep.subr.bf16.mxu0 0
        %1884 = vmatpush2.bf16.msra.mxu0 0
        %1885 = vmatprep.subr.bf16.mxu0 0
        %1886 = vmatpush2.bf16.msra.mxu0 0
        %1887 = vmatprep.mubr.bf16.mxu0 0
        %1888 = vmatmul.mubr.bf16.gmra.mxu0 %v1853
        %v1889 = vpop.f32.mrf.mxu0
        %v1890 = vadd.f32 0.0, %v1889
        %v1891 = vpop.f32.mrf.mxu0
        %v1892 = vpop.f32.mrf.mxu0
        %v1893 = vpop.f32.mrf.mxu0
        %1894 = vdwg.mxu0
        %v1895 = vadd.f32 %v1847, %v1890
        %v1896 = vxor.u32 %v1895, 2147483648
        %v1897 = vmul.f32 %v1896, 1.442695
        %v1898 = vpow.pop %v1897
        %v1899 = vadd.f32 %v1898, 1.0
        %v1900 = vrcp.pop %v1899
        %v1901 = vmul.f32 1.0, %v1900
        %v1902 = vtanh.pop %v1895
        %v1903 = vmul.f32 %v1901, %v1839
        %1905 = vrot.lane.b32.xlu0 %v1902, 64
        %v1906 = vpop.permute.xlu0 %1905
        %v1908 = vmul.f32 %v1901, %v1906
        %1910 = vrot.lane.b32.xlu0 %v1908, 32
        %v1911 = vpop.permute.xlu0 %1910
        %v1913 = vadd.f32 %v1903, %v1911
        %v1914 = vtanh.pop %v1913
        %1916 = vrot.lane.b32.xlu0 %v1914, 64
        %v1917 = vpop.permute.xlu0 %1916
        %v1919 = vmul.f32 %v1901, %v1917
        %v1920 = vsel %vm1058, %v1919, %v1838
        %v1921 = vsel %vm1058, %v1913, %v1839
        %1923 = vrot.lane.b32.xlu0 %v1920, 32
        %v1924 = vpop.permute.xlu0 %1923
        %s1926 = scalar_lea.vmem %s524, 24 [#allocation18]
        %1927 = vst.msk [vmem:[%s1926] sm:$0xff] %vm600, %v1924
        %v1928 = vld [vmem:[%s1070] sm:$0xf]
        %v1929 = vunpack.c.l.bf16 %v1928
        %v1930 = vpack.c.bf16 %v1920, %v1920
        %1932 = vrot.lane.b32.xlu0 %v1930, 32
        %v1933 = vpop.permute.xlu0 %1932
        %v1935 = vsel %vm600, %v1933, 0
        %1937 = vmatprep.subr.bf16.mxu0 0
        %1938 = vmatpush1.bf16.msra.mxu0 0
        %1939 = vmatprep.subr.bf16.mxu0 0
        %1940 = vmatpush1.bf16.msra.mxu0 0
        %1941 = vmatprep.subr.bf16.mxu0 0
        %1942 = vmatpush1.bf16.msra.mxu0 0
        %1943 = vmatprep.subr.bf16.mxu0 0
        %1944 = vmatpush1.bf16.msra.mxu0 0
        %1945 = vmatprep.subr.bf16.mxu0 0
        %1946 = vmatpush1.bf16.msra.mxu0 0
        %1947 = vmatprep.subr.bf16.mxu0 0
        %1948 = vmatpush1.bf16.msra.mxu0 0
        %1949 = vmatprep.subr.bf16.mxu0 0
        %1950 = vmatpush1.bf16.msra.mxu0 %v1596
        %1951 = vmatprep.subr.bf16.mxu0 0
        %1952 = vmatpush1.bf16.msra.mxu0 %v1595
        %1953 = vmatprep.subr.bf16.mxu0 0
        %1954 = vmatpush2.bf16.msra.mxu0 0
        %1955 = vmatprep.subr.bf16.mxu0 0
        %1956 = vmatpush2.bf16.msra.mxu0 0
        %1957 = vmatprep.subr.bf16.mxu0 0
        %1958 = vmatpush2.bf16.msra.mxu0 0
        %1959 = vmatprep.subr.bf16.mxu0 0
        %1960 = vmatpush2.bf16.msra.mxu0 0
        %1961 = vmatprep.subr.bf16.mxu0 0
        %1962 = vmatpush2.bf16.msra.mxu0 0
        %1963 = vmatprep.subr.bf16.mxu0 0
        %1964 = vmatpush2.bf16.msra.mxu0 0
        %1965 = vmatprep.subr.bf16.mxu0 0
        %1966 = vmatpush2.bf16.msra.mxu0 0
        %1967 = vmatprep.subr.bf16.mxu0 0
        %1968 = vmatpush2.bf16.msra.mxu0 0
        %1969 = vmatprep.mubr.bf16.mxu0 0
        %1970 = vmatmul.mubr.bf16.gmra.mxu0 %v1935
        %v1971 = vpop.f32.mrf.mxu0
        %v1972 = vadd.f32 0.0, %v1971
        %v1973 = vpop.f32.mrf.mxu0
        %v1974 = vpop.f32.mrf.mxu0
        %v1975 = vpop.f32.mrf.mxu0
        %1976 = vdwg.mxu0
        %v1977 = vadd.f32 %v1929, %v1972
        %v1978 = vxor.u32 %v1977, 2147483648
        %v1979 = vmul.f32 %v1978, 1.442695
        %v1980 = vpow.pop %v1979
        %v1981 = vadd.f32 %v1980, 1.0
        %v1982 = vrcp.pop %v1981
        %v1983 = vmul.f32 1.0, %v1982
        %v1984 = vtanh.pop %v1977
        %v1985 = vmul.f32 %v1983, %v1921
        %1987 = vrot.lane.b32.xlu0 %v1984, 64
        %v1988 = vpop.permute.xlu0 %1987
        %v1990 = vmul.f32 %v1983, %v1988
        %1992 = vrot.lane.b32.xlu0 %v1990, 32
        %v1993 = vpop.permute.xlu0 %1992
        %v1995 = vadd.f32 %v1985, %v1993
        %v1996 = vtanh.pop %v1995
        %1998 = vrot.lane.b32.xlu0 %v1996, 64
        %v1999 = vpop.permute.xlu0 %1998
        %v2001 = vmul.f32 %v1983, %v1999
        %v2002 = vsel %vm1146, %v2001, %v1920
        %v2003 = vsel %vm1146, %v1995, %v1921
        %2005 = vrot.lane.b32.xlu0 %v2002, 32
        %v2006 = vpop.permute.xlu0 %2005
        %s2008 = scalar_lea.vmem %s524, 32 [#allocation18]
        %2009 = vst.msk [vmem:[%s2008] sm:$0xff] %vm600, %v2006
        %v2010 = vld [vmem:[%s1158] sm:$0xf]
        %v2011 = vunpack.c.l.bf16 %v2010
        %v2012 = vpack.c.bf16 %v2002, %v2002
        %2014 = vrot.lane.b32.xlu0 %v2012, 32
        %v2015 = vpop.permute.xlu0 %2014
        %v2017 = vsel %vm600, %v2015, 0
        %2019 = vmatprep.subr.bf16.mxu0 0
        %2020 = vmatpush1.bf16.msra.mxu0 0
        %2021 = vmatprep.subr.bf16.mxu0 0
        %2022 = vmatpush1.bf16.msra.mxu0 0
        %2023 = vmatprep.subr.bf16.mxu0 0
        %2024 = vmatpush1.bf16.msra.mxu0 0
        %2025 = vmatprep.subr.bf16.mxu0 0
        %2026 = vmatpush1.bf16.msra.mxu0 0
        %2027 = vmatprep.subr.bf16.mxu0 0
        %2028 = vmatpush1.bf16.msra.mxu0 0
        %2029 = vmatprep.subr.bf16.mxu0 0
        %2030 = vmatpush1.bf16.msra.mxu0 0
        %2031 = vmatprep.subr.bf16.mxu0 0
        %2032 = vmatpush1.bf16.msra.mxu0 %v1596
        %2033 = vmatprep.subr.bf16.mxu0 0
        %2034 = vmatpush1.bf16.msra.mxu0 %v1595
        %2035 = vmatprep.subr.bf16.mxu0 0
        %2036 = vmatpush2.bf16.msra.mxu0 0
        %2037 = vmatprep.subr.bf16.mxu0 0
        %2038 = vmatpush2.bf16.msra.mxu0 0
        %2039 = vmatprep.subr.bf16.mxu0 0
        %2040 = vmatpush2.bf16.msra.mxu0 0
        %2041 = vmatprep.subr.bf16.mxu0 0
        %2042 = vmatpush2.bf16.msra.mxu0 0
        %2043 = vmatprep.subr.bf16.mxu0 0
        %2044 = vmatpush2.bf16.msra.mxu0 0
        %2045 = vmatprep.subr.bf16.mxu0 0
        %2046 = vmatpush2.bf16.msra.mxu0 0
        %2047 = vmatprep.subr.bf16.mxu0 0
        %2048 = vmatpush2.bf16.msra.mxu0 0
        %2049 = vmatprep.subr.bf16.mxu0 0
        %2050 = vmatpush2.bf16.msra.mxu0 0
        %2051 = vmatprep.mubr.bf16.mxu0 0
        %2052 = vmatmul.mubr.bf16.gmra.mxu0 %v2017
        %v2053 = vpop.f32.mrf.mxu0
        %v2054 = vadd.f32 0.0, %v2053
        %v2055 = vpop.f32.mrf.mxu0
        %v2056 = vpop.f32.mrf.mxu0
        %v2057 = vpop.f32.mrf.mxu0
        %2058 = vdwg.mxu0
        %v2059 = vadd.f32 %v2011, %v2054
        %v2060 = vxor.u32 %v2059, 2147483648
        %v2061 = vmul.f32 %v2060, 1.442695
        %v2062 = vpow.pop %v2061
        %v2063 = vadd.f32 %v2062, 1.0
        %v2064 = vrcp.pop %v2063
        %v2065 = vmul.f32 1.0, %v2064
        %v2066 = vtanh.pop %v2059
        %v2067 = vmul.f32 %v2065, %v2003
        %2069 = vrot.lane.b32.xlu0 %v2066, 64
        %v2070 = vpop.permute.xlu0 %2069
        %v2072 = vmul.f32 %v2065, %v2070
        %2074 = vrot.lane.b32.xlu0 %v2072, 32
        %v2075 = vpop.permute.xlu0 %2074
        %v2077 = vadd.f32 %v2067, %v2075
        %v2078 = vtanh.pop %v2077
        %2080 = vrot.lane.b32.xlu0 %v2078, 64
        %v2081 = vpop.permute.xlu0 %2080
        %v2083 = vmul.f32 %v2065, %v2081
        %v2084 = vsel %vm1234, %v2083, %v2002
        %v2085 = vsel %vm1234, %v2077, %v2003
        %2087 = vrot.lane.b32.xlu0 %v2084, 32
        %v2088 = vpop.permute.xlu0 %2087
        %s2090 = scalar_lea.vmem %s524, 40 [#allocation18]
        %2091 = vst.msk [vmem:[%s2090] sm:$0xff] %vm600, %v2088
        %v2092 = vld [vmem:[%s1246] sm:$0xf]
        %v2093 = vunpack.c.l.bf16 %v2092
        %v2094 = vpack.c.bf16 %v2084, %v2084
        %2096 = vrot.lane.b32.xlu0 %v2094, 32
        %v2097 = vpop.permute.xlu0 %2096
        %v2099 = vsel %vm600, %v2097, 0
        %2101 = vmatprep.subr.bf16.mxu0 0
        %2102 = vmatpush1.bf16.msra.mxu0 0
        %2103 = vmatprep.subr.bf16.mxu0 0
        %2104 = vmatpush1.bf16.msra.mxu0 0
        %2105 = vmatprep.subr.bf16.mxu0 0
        %2106 = vmatpush1.bf16.msra.mxu0 0
        %2107 = vmatprep.subr.bf16.mxu0 0
        %2108 = vmatpush1.bf16.msra.mxu0 0
        %2109 = vmatprep.subr.bf16.mxu0 0
        %2110 = vmatpush1.bf16.msra.mxu0 0
        %2111 = vmatprep.subr.bf16.mxu0 0
        %2112 = vmatpush1.bf16.msra.mxu0 0
        %2113 = vmatprep.subr.bf16.mxu0 0
        %2114 = vmatpush1.bf16.msra.mxu0 %v1596
        %2115 = vmatprep.subr.bf16.mxu0 0
        %2116 = vmatpush1.bf16.msra.mxu0 %v1595
        %2117 = vmatprep.subr.bf16.mxu0 0
        %2118 = vmatpush2.bf16.msra.mxu0 0
        %2119 = vmatprep.subr.bf16.mxu0 0
        %2120 = vmatpush2.bf16.msra.mxu0 0
        %2121 = vmatprep.subr.bf16.mxu0 0
        %2122 = vmatpush2.bf16.msra.mxu0 0
        %2123 = vmatprep.subr.bf16.mxu0 0
        %2124 = vmatpush2.bf16.msra.mxu0 0
        %2125 = vmatprep.subr.bf16.mxu0 0
        %2126 = vmatpush2.bf16.msra.mxu0 0
        %2127 = vmatprep.subr.bf16.mxu0 0
        %2128 = vmatpush2.bf16.msra.mxu0 0
        %2129 = vmatprep.subr.bf16.mxu0 0
        %2130 = vmatpush2.bf16.msra.mxu0 0
        %2131 = vmatprep.subr.bf16.mxu0 0
        %2132 = vmatpush2.bf16.msra.mxu0 0
        %2133 = vmatprep.mubr.bf16.mxu0 0
        %2134 = vmatmul.mubr.bf16.gmra.mxu0 %v2099
        %v2135 = vpop.f32.mrf.mxu0
        %v2136 = vadd.f32 0.0, %v2135
        %v2137 = vpop.f32.mrf.mxu0
        %v2138 = vpop.f32.mrf.mxu0
        %v2139 = vpop.f32.mrf.mxu0
        %2140 = vdwg.mxu0
        %v2141 = vadd.f32 %v2093, %v2136
        %v2142 = vxor.u32 %v2141, 2147483648
        %v2143 = vmul.f32 %v2142, 1.442695
        %v2144 = vpow.pop %v2143
        %v2145 = vadd.f32 %v2144, 1.0
        %v2146 = vrcp.pop %v2145
        %v2147 = vmul.f32 1.0, %v2146
        %v2148 = vtanh.pop %v2141
        %v2149 = vmul.f32 %v2147, %v2085
        %2151 = vrot.lane.b32.xlu0 %v2148, 64
        %v2152 = vpop.permute.xlu0 %2151
        %v2154 = vmul.f32 %v2147, %v2152
        %2156 = vrot.lane.b32.xlu0 %v2154, 32
        %v2157 = vpop.permute.xlu0 %2156
        %v2159 = vadd.f32 %v2149, %v2157
        %v2160 = vtanh.pop %v2159
        %2162 = vrot.lane.b32.xlu0 %v2160, 64
        %v2163 = vpop.permute.xlu0 %2162
        %v2165 = vmul.f32 %v2147, %v2163
        %v2166 = vsel %vm1322, %v2165, %v2084
        %v2167 = vsel %vm1322, %v2159, %v2085
        %2169 = vrot.lane.b32.xlu0 %v2166, 32
        %v2170 = vpop.permute.xlu0 %2169
        %s2172 = scalar_lea.vmem %s524, 48 [#allocation18]
        %2173 = vst.msk [vmem:[%s2172] sm:$0xff] %vm600, %v2170
        %v2174 = vld [vmem:[%s1334] sm:$0xf]
        %v2175 = vunpack.c.l.bf16 %v2174
        %v2176 = vpack.c.bf16 %v2166, %v2166
        %2178 = vrot.lane.b32.xlu0 %v2176, 32
        %v2179 = vpop.permute.xlu0 %2178
        %v2181 = vsel %vm600, %v2179, 0
        %2183 = vmatprep.subr.bf16.mxu0 0
        %2184 = vmatpush1.bf16.msra.mxu0 0
        %2185 = vmatprep.subr.bf16.mxu0 0
        %2186 = vmatpush1.bf16.msra.mxu0 0
        %2187 = vmatprep.subr.bf16.mxu0 0
        %2188 = vmatpush1.bf16.msra.mxu0 0
        %2189 = vmatprep.subr.bf16.mxu0 0
        %2190 = vmatpush1.bf16.msra.mxu0 0
        %2191 = vmatprep.subr.bf16.mxu0 0
        %2192 = vmatpush1.bf16.msra.mxu0 0
        %2193 = vmatprep.subr.bf16.mxu0 0
        %2194 = vmatpush1.bf16.msra.mxu0 0
        %2195 = vmatprep.subr.bf16.mxu0 0
        %2196 = vmatpush1.bf16.msra.mxu0 %v1596
        %2197 = vmatprep.subr.bf16.mxu0 0
        %2198 = vmatpush1.bf16.msra.mxu0 %v1595
        %2199 = vmatprep.subr.bf16.mxu0 0
        %2200 = vmatpush2.bf16.msra.mxu0 0
        %2201 = vmatprep.subr.bf16.mxu0 0
        %2202 = vmatpush2.bf16.msra.mxu0 0
        %2203 = vmatprep.subr.bf16.mxu0 0
        %2204 = vmatpush2.bf16.msra.mxu0 0
        %2205 = vmatprep.subr.bf16.mxu0 0
        %2206 = vmatpush2.bf16.msra.mxu0 0
        %2207 = vmatprep.subr.bf16.mxu0 0
        %2208 = vmatpush2.bf16.msra.mxu0 0
        %2209 = vmatprep.subr.bf16.mxu0 0
        %2210 = vmatpush2.bf16.msra.mxu0 0
        %2211 = vmatprep.subr.bf16.mxu0 0
        %2212 = vmatpush2.bf16.msra.mxu0 0
        %2213 = vmatprep.subr.bf16.mxu0 0
        %2214 = vmatpush2.bf16.msra.mxu0 0
        %2215 = vmatprep.mubr.bf16.mxu0 0
        %2216 = vmatmul.mubr.bf16.gmra.mxu0 %v2181
        %v2217 = vpop.f32.mrf.mxu0
        %v2218 = vadd.f32 0.0, %v2217
        %v2219 = vpop.f32.mrf.mxu0
        %v2220 = vpop.f32.mrf.mxu0
        %v2221 = vpop.f32.mrf.mxu0
        %2222 = vdwg.mxu0
        %v2223 = vadd.f32 %v2175, %v2218
        %v2224 = vxor.u32 %v2223, 2147483648
        %v2225 = vmul.f32 %v2224, 1.442695
        %v2226 = vpow.pop %v2225
        %v2227 = vadd.f32 %v2226, 1.0
        %v2228 = vrcp.pop %v2227
        %v2229 = vmul.f32 1.0, %v2228
        %v2230 = vtanh.pop %v2223
        %v2231 = vmul.f32 %v2229, %v2167
        %2233 = vrot.lane.b32.xlu0 %v2230, 64
        %v2234 = vpop.permute.xlu0 %2233
        %v2236 = vmul.f32 %v2229, %v2234
        %2238 = vrot.lane.b32.xlu0 %v2236, 32
        %v2239 = vpop.permute.xlu0 %2238
        %v2241 = vadd.f32 %v2231, %v2239
        %v2242 = vtanh.pop %v2241
        %2244 = vrot.lane.b32.xlu0 %v2242, 64
        %v2245 = vpop.permute.xlu0 %2244
        %v2247 = vmul.f32 %v2229, %v2245
        %v2248 = vsel %vm1410, %v2247, %v2166
        %v2249 = vsel %vm1410, %v2241, %v2167
        %2251 = vrot.lane.b32.xlu0 %v2248, 32
        %v2252 = vpop.permute.xlu0 %2251
        %s2254 = scalar_lea.vmem %s524, 56 [#allocation18]
        %2255 = vst.msk [vmem:[%s2254] sm:$0xff] %vm600, %v2252
        %2256 = vst.msk [vmem:[%s1580] sm:$0xff] %vm600, %v2252
        %2258 = vrot.lane.b32.xlu0 %v2249, 96
        %v2259 = vpop.permute.xlu0 %2258
        %2261 = vst.msk [vmem:[%s1582] sm:$0xff] %vm600, %v2259
        %p2262 = scmp.eq.s32.totalorder %s38, 2
        // Predicated region
        $region89: #{tpu_custom_call.1} parent=55 // pred_check
          %p2263 = pneg %p2262
        $region90: #{tpu_custom_call.1} parent=55 // pred_check_branch
          %2265 = sbr.rel (%p2263) target = $region92
        $region91: #{tpu_custom_call.1} parent=55 // pred_region
          %v2266 = vld [vmem:[#allocation4] sm:$0xff]
          %v2267 = vld [vmem:[#allocation4 + $0x8] sm:$0xff]
          %2268 = vst.msk [vmem:[#allocation19] sm:$0xff] %vm600, %v2266
          %2269 = vst.msk [vmem:[#allocation19 + $0x8] sm:$0xff] %vm600, %v2267
          %v2270 = vld [vmem:[#allocation5] sm:$0xff]
          %v2271 = vld [vmem:[#allocation5 + $0x8] sm:$0xff]
          %2272 = vst.msk [vmem:[#allocation21] sm:$0xff] %vm600, %v2270
          %2273 = vst.msk [vmem:[#allocation21 + $0x8] sm:$0xff] %vm600, %v2271
        $region92: #{tpu_custom_call.1} parent=55 // pred_fallthru
          _
        %s2274 = sand.u32 %s261, 1
        %s2275 = scalar_lea.sflag [#allocation8], %s2274
        %s2276 = sand.u32 %s261, 1
        %s2277 = smul.addr %s2276, 64
        %s2278 = scalar_lea.vmem [#allocation18], %s2277
        // Predicated region
        $region93: #{tpu_custom_call.1} parent=55 // pred_check
          %p2279 = pneg %p271
        $region94: #{tpu_custom_call.1} parent=55 // pred_check_branch
          %2281 = sbr.rel (%p2279) target = $region96
        $region95: #{tpu_custom_call.1} parent=55 // pred_region
          %s2282 = smul.u32 8, %s38
          %s2284 = ssub.s32 1024, 1024
          %2285 = vsyncadd %s2275, %s2284
          %s2286 = sadd.s32 %s37, %s2282
          %s2287 = smul.addr %s2286, 128
          %s2288 = scalar_lea.hbm %s9, %s2287
          %s2289 = sshll.u32 %s2278, 4
          %s2290 = int_to_ptr.vmem [resolvable:$true] %s2289
          %2295 = dma.vmem_to_hbm [thread:$0]  %s2290, 1024, %s2288, %s2275, 128, 128, 8
        $region96: #{tpu_custom_call.1} parent=55 // pred_fallthru
          _
        // Predicated region
        $region97: #{tpu_custom_call.1} parent=55 // pred_check
          %p2296 = pneg %p297
        $region98: #{tpu_custom_call.1} parent=55 // pred_check_branch
          %2298 = sbr.rel (%p2296) target = $region100
        $region99: #{tpu_custom_call.1} parent=55 // pred_region
          %s2300 = ssub.s32 256, 256
          %2301 = vsyncadd [#allocation20], %s2300
          %s2302 = smul.addr %s37, 128
          %s2303 = scalar_lea.hbm %s10, %s2302
          %s2304 = sshll.u32 [#allocation19], 4
          %s2305 = int_to_ptr.vmem [resolvable:$true] %s2304
          %2310 = dma.vmem_to_hbm [thread:$0]  %s2305, 256, %s2303, [#allocation20], 128, 128, 8
        $region100: #{tpu_custom_call.1} parent=55 // pred_fallthru
          _
        // Predicated region
        $region101: #{tpu_custom_call.1} parent=55 // pred_check
          %p2311 = pneg %p323
        $region102: #{tpu_custom_call.1} parent=55 // pred_check_branch
          %2313 = sbr.rel (%p2311) target = $region104
        $region103: #{tpu_custom_call.1} parent=55 // pred_region
          %s2315 = ssub.s32 256, 256
          %2316 = vsyncadd [#allocation20], %s2315
          %s2317 = smul.addr %s37, 128
          %s2318 = scalar_lea.hbm %s11, %s2317
          %s2319 = sshll.u32 [#allocation21], 4
          %s2320 = int_to_ptr.vmem [resolvable:$true] %s2319
          %2325 = dma.vmem_to_hbm [thread:$0]  %s2320, 256, %s2318, [#allocation20], 128, 128, 8
        $region104: #{tpu_custom_call.1} parent=55 // pred_fallthru
          _
        // Predicated region
        $region105: #{tpu_custom_call.1} parent=55 // pred_check
          %p2326 = pneg %p297
        $region106: #{tpu_custom_call.1} parent=55 // pred_check_branch
          %2328 = sbr.rel (%p2326) target = $region108
        $region107: #{tpu_custom_call.1} parent=55 // pred_region
          %2329 = dma.done [#allocation20], 256
        $region108: #{tpu_custom_call.1} parent=55 // pred_fallthru
          _
        // Predicated region
        $region109: #{tpu_custom_call.1} parent=55 // pred_check
          %p2330 = pneg %p323
        $region110: #{tpu_custom_call.1} parent=55 // pred_check_branch
          %2332 = sbr.rel (%p2330) target = $region112
        $region111: #{tpu_custom_call.1} parent=55 // pred_region
          %2333 = dma.done [#allocation20], 256
        $region112: #{tpu_custom_call.1} parent=55 // pred_fallthru
          _
      $region56: #{tpu_custom_call.1} parent=5 // pred_fallthru
        _
      %p2334 = scmp.le.s32.totalorder 2, %s28
      // Predicated region
      $region113: #{tpu_custom_call.1} parent=5 // pred_check
        %p2335 = pneg %p2334
      $region114: #{tpu_custom_call.1} parent=5 // pred_check_branch
        %2337 = sbr.rel (%p2335) target = $region116
      $region115: #{tpu_custom_call.1} parent=5 // pred_region
        %s2338 = ssub.s32 %s28, 2
        // Predicated region
        $region117: #{tpu_custom_call.1} parent=115 // pred_check
          %p2339 = pneg %p277
        $region118: #{tpu_custom_call.1} parent=115 // pred_check_branch
          %2341 = sbr.rel (%p2339) target = $region120
        $region119: #{tpu_custom_call.1} parent=115 // pred_region
          %s2342 = sand.u32 %s262, 1
          %s2343 = scalar_lea.sflag [#allocation8], %s2342
          %s2344 = sand.u32 %s262, 1
          %s2345 = smul.addr %s2344, 64
          %s2346 = scalar_lea.vmem [#allocation18], %s2345
          %2347 = dma.done %s2343, 1024
        $region120: #{tpu_custom_call.1} parent=115 // pred_fallthru
          _
      $region116: #{tpu_custom_call.1} parent=5 // pred_fallthru
        _
    $region6: #{tpu_custom_call.1} parent=1 // loop_footer
      %s32 = sadd.s32 1, %s28
    $region7: #{tpu_custom_call.1} parent=1 // loop_footer_branch
      %27 = sbr.rel target = $region3
    $region8: #{tpu_custom_call.1} parent=1 // loop_exit
      _
    %2348 = vsyncpa [#allocation7], 1
    %s2349 = scalar_lea.sflag [#allocation7], 1
    %2350 = vsyncpa %s2349, 1
    %2351 = vsyncpa [#allocation10], 1
    %2352 = vsyncpa [#allocation13], 1
    %2353 = vsyncpa [#allocation16], 1
    %2354 = vsyncpa [#allocation8], 1
    %s2355 = scalar_lea.sflag [#allocation8], 1
    %2356 = vsyncpa %s2355, 1
    %2357 = vsyncpa [#allocation20], 1

// kernel: tpu_custom_call.1
$region0: #{tpu_custom_call.1}
  #allocation0 [shape = 'u32[]', space=smem, size = 0x4, offset = 0x4, fixed_abs, tag = 'smem constant byte address 0x4 - core index']
  #allocation1 [shape = 'u32[144,128]{1,0:T(1,128)}', space=vmem, size = 0x12000, scoped, tag = 'internal scratch']
  #allocation2 [shape = 'bf16[8,8,32]{2,1,0:T(8,128)(2,1)}', space=vmem, size = 0x4000, scoped, tag = 'scratch operand']
  #allocation3 [shape = 'bf16[8,8,128]{2,1,0:T(8,128)(2,1)}', space=vmem, size = 0x4000, scoped, tag = 'scratch operand']
  #allocation4 [shape = 'f32[2,8,32]{2,1,0:T(8,128)}', space=vmem, size = 0x2000, scoped, tag = 'scratch operand']
  #allocation5 [shape = 'f32[2,8,32]{2,1,0:T(8,128)}', space=vmem, size = 0x2000, scoped, tag = 'scratch operand']
  %s0 = inlined_call_operand.hbm [shape: bf16[24,8,32], index: 0, kind: input, shape index: {}]
  %s1 = inlined_call_operand.hbm [shape: bf16[32,128], index: 1, kind: input, shape index: {}]
  %s2 = inlined_call_operand.hbm [shape: bf16[32,128], index: 2, kind: input, shape index: {}]
  %s3 = inlined_call_operand.vmem [shape: f32[1,128], index: 3, kind: input, shape index: {}]
  %s4 = inlined_call_operand.hbm [shape: bf16[32,128], index: 4, kind: input, shape index: {}]
  %s5 = inlined_call_operand.hbm [shape: bf16[32,128], index: 5, kind: input, shape index: {}]
  %s6 = inlined_call_operand.vmem [shape: f32[1,128], index: 6, kind: input, shape index: {}]
  %s7 = inlined_call_operand.hbm [shape: f32[2,8,32], index: 7, kind: input, shape index: {}]
  %s8 = inlined_call_operand.hbm [shape: f32[2,8,32], index: 8, kind: input, shape index: {}]
  %s9 = inlined_call_operand.hbm [shape: f32[24,8,32], index: 9, kind: output, shape index: {0}]
  %s10 = inlined_call_operand.hbm [shape: f32[2,8,32], index: 10, kind: output, shape index: {1}]
  %s11 = inlined_call_operand.hbm [shape: f32[2,8,32], index: 11, kind: output, shape index: {2}]
  %12 = xla_tuple %s9, %s10, %s11
  %s13 = sld [smem:[#allocation0]]
  $region121: #{tpu_custom_call.1} parent=0
    _
  %s15 = ssub.s32 1, %s13
  %s16 = scalar_select 0, %s15, %s13
  $region1: #{tpu_custom_call.1} parent=0
    #allocation6 [shape = 'u8[32768]{0}', space=vmem, size = 0x8000, scoped, tag = 'input window, operand 0']
    #allocation7 [shape = 's32[2]{0}', space=sflag, size = 0x8, scoped, tag = 'scoped memory for tpu_custom_call.1']
    #allocation8 [shape = 's32[2]{0}', space=sflag, size = 0x8, scoped, tag = 'scoped memory for tpu_custom_call.1']
    #allocation9 [shape = 'u8[8192]{0}', space=vmem, size = 0x2000, scoped, tag = 'input window, operand 1, single buffered']
    #allocation10 [shape = 's32[1]{0}', space=sflag, size = 0x4, scoped, tag = 'scoped memory for tpu_custom_call.1']
    #allocation11 [shape = 'u8[8192]{0}', space=vmem, size = 0x2000, scoped, tag = 'input window, operand 2, single buffered']
    #allocation12 [shape = 'u8[8192]{0}', space=vmem, size = 0x2000, scoped, tag = 'input window, operand 4, single buffered']
    #allocation13 [shape = 's32[1]{0}', space=sflag, size = 0x4, scoped, tag = 'scoped memory for tpu_custom_call.1']
    #allocation14 [shape = 'u8[8192]{0}', space=vmem, size = 0x2000, scoped, tag = 'input window, operand 5, single buffered']
    #allocation15 [shape = 'u8[8192]{0}', space=vmem, size = 0x2000, scoped, tag = 'input window, operand 7, single buffered']
    #allocation16 [shape = 's32[1]{0}', space=sflag, size = 0x4, scoped, tag = 'scoped memory for tpu_custom_call.1']
    #allocation17 [shape = 'u8[8192]{0}', space=vmem, size = 0x2000, scoped, tag = 'input window, operand 8, single buffered']
    #allocation18 [shape = 'u8[65536]{0}', space=vmem, size = 0x10000, scoped, tag = 'output window, operand 0']
    #allocation19 [shape = 'u8[8192]{0}', space=vmem, size = 0x2000, scoped, tag = 'output window, operand 1, single buffered']
    #allocation20 [shape = 's32[1]{0}', space=sflag, size = 0x4, scoped, tag = 'scoped memory for tpu_custom_call.1']
    #allocation21 [shape = 'u8[8192]{0}', space=vmem, size = 0x2000, scoped, tag = 'output window, operand 2, single buffered']
    %17 = vsyncpa [#allocation7], 0
    %s18 = scalar_lea.sflag [#allocation7], 1
    %19 = vsyncpa %s18, 0
    %20 = vsyncpa [#allocation10], 0
    %21 = vsyncpa [#allocation13], 0
    %22 = vsyncpa [#allocation16], 0
    %23 = vsyncpa [#allocation8], 0
    %s24 = scalar_lea.sflag [#allocation8], 1
    %25 = vsyncpa %s24, 0
    %26 = vsyncpa [#allocation20], 0
    loop: start=0, step=1, limit=5
    $region2: #{tpu_custom_call.1} parent=1 // loop_pre_header
      _
    $region3: #{tpu_custom_call.1} parent=1 // loop_header
      %s28 = sphi 0, %s32
      %p29 = scmp.ge.s32.totalorder %s28, 5
      %s35 = sphi 0, %s47
      %s36 = sphi 0, %s43
      %s37 = sphi 0, %s35
      %s38 = sphi 0, %s36
      %s39 = sphi 0, %s37
      %s40 = sphi 0, %s38
      %s52 = sphi 0, %s54
      %s55 = sphi 0, %s52
      %s56 = sphi 0, %s55
      %s72 = sphi 0, %s56
      %s76 = sphi 0, %s76
      %s78 = sphi 0, %s76
      %s79 = sphi 0, %s78
      %s93 = sphi 0, %s79
      %s97 = sphi 0, %s97
      %s99 = sphi 0, %s97
      %s100 = sphi 0, %s99
      %s114 = sphi 0, %s100
      %s118 = sphi 0, %s118
      %s120 = sphi 0, %s118
      %s121 = sphi 0, %s120
      %s135 = sphi 0, %s121
      %s139 = sphi 0, %s139
      %s141 = sphi 0, %s139
      %s142 = sphi 0, %s141
      %s156 = sphi 0, %s142
      %s160 = sphi 0, %s160
      %s162 = sphi 0, %s160
      %s163 = sphi 0, %s162
      %s177 = sphi 0, %s163
      %s181 = sphi 0, %s181
      %s183 = sphi 0, %s181
      %s184 = sphi 0, %s183
      %s198 = sphi 0, %s184
      %s204 = sphi 0, %s206
      %s207 = sphi 0, %s204
      %s208 = sphi 0, %s207
      %s224 = sphi 0, %s208
      %s230 = sphi 0, %s232
      %s233 = sphi 0, %s230
      %s234 = sphi 0, %s233
      %s250 = sphi 0, %s234
      %s258 = sphi 0, %s260
      %s261 = sphi 0, %s258
      %s262 = sphi 0, %s261
      %s278 = sphi 0, %s262
      %s284 = sphi 0, %s286
      %s287 = sphi 0, %s284
      %s288 = sphi 0, %s287
      %s304 = sphi 0, %s288
      %s310 = sphi 0, %s312
      %s313 = sphi 0, %s310
      %s314 = sphi 0, %s313
      %s330 = sphi 0, %s314
    $region4: #{tpu_custom_call.1} parent=1 // loop_header_branch
      %31 = sbr.rel (%p29) target = $region8
    $region5: #{tpu_custom_call.1} parent=1 // loop_body
      %s33 = ssub.s32 %s28, 1
      %s34 = ssub.s32 %s28, 2
      %s41 = sadd.s32 1, %s36
      %p42 = scmp.ge.s32.totalorder %s41, 3
      %s43 = scalar_select %p42, 0, %s41
      %s44 = sadd.s32 1, %s35
      %s45 = scalar_select %p42, %s44, %s35
      %p46 = scmp.ge.s32.totalorder %s45, 1
      %s47 = scalar_select %p46, 0, %s45
      %s48 = ssub.s32 %s36, %s43
      %s49 = ssub.s32 %s35, %s47
      %s50 = sor.u32 %s48, %s49
      %p51 = scmp.eq.s32.totalorder %s50, 0
      %s53 = sadd.s32 %s52, 1
      %s54 = scalar_select %p51, %s52, %s53
      %p57 = pneg %p51
      %p58 = scmp.eq.s32.totalorder %s28, 2
      %p59 = por %p57, %p58
      %p60 = scmp.ne.s32.totalorder %s52, %s55
      %p61 = scmp.eq.s32.totalorder %s28, 0
      %p62 = por %p60, %p61
      %p63 = scmp.ne.s32.totalorder %s52, %s55
      %p64 = scmp.eq.s32.totalorder %s33, 2
      %p65 = por %p63, %p64
      %p66 = scmp.ne.s32.totalorder %s55, %s56
      %p67 = scmp.eq.s32.totalorder %s33, 0
      %p68 = por %p66, %p67
      %p69 = scmp.ne.s32.totalorder %s55, %s56
      %p70 = scmp.eq.s32.totalorder %s34, 2
      %p71 = por %p69, %p70
      %p73 = scmp.ne.s32.totalorder %s56, %s72
      %p74 = scmp.eq.s32.totalorder %s34, 0
      %p75 = por %p73, %p74
      %s77 = sadd.s32 %s76, 1
      %p80 = scmp.eq.s32.totalorder %s28, 2
      %p81 = scmp.ne.s32.totalorder %s76, %s78
      %p82 = scmp.eq.s32.totalorder %s28, 0
      %p83 = por %p81, %p82
      %p84 = scmp.ne.s32.totalorder %s76, %s78
      %p85 = scmp.eq.s32.totalorder %s33, 2
      %p86 = por %p84, %p85
      %p87 = scmp.ne.s32.totalorder %s78, %s79
      %p88 = scmp.eq.s32.totalorder %s33, 0
      %p89 = por %p87, %p88
      %p90 = scmp.ne.s32.totalorder %s78, %s79
      %p91 = scmp.eq.s32.totalorder %s34, 2
      %p92 = por %p90, %p91
      %p94 = scmp.ne.s32.totalorder %s79, %s93
      %p95 = scmp.eq.s32.totalorder %s34, 0
      %p96 = por %p94, %p95
      %s98 = sadd.s32 %s97, 1
      %p101 = scmp.eq.s32.totalorder %s28, 2
      %p102 = scmp.ne.s32.totalorder %s97, %s99
      %p103 = scmp.eq.s32.totalorder %s28, 0
      %p104 = por %p102, %p103
      %p105 = scmp.ne.s32.totalorder %s97, %s99
      %p106 = scmp.eq.s32.totalorder %s33, 2
      %p107 = por %p105, %p106
      %p108 = scmp.ne.s32.totalorder %s99, %s100
      %p109 = scmp.eq.s32.totalorder %s33, 0
      %p110 = por %p108, %p109
      %p111 = scmp.ne.s32.totalorder %s99, %s100
      %p112 = scmp.eq.s32.totalorder %s34, 2
      %p113 = por %p111, %p112
      %p115 = scmp.ne.s32.totalorder %s100, %s114
      %p116 = scmp.eq.s32.totalorder %s34, 0
      %p117 = por %p115, %p116
      %s119 = sadd.s32 %s118, 1
      %p122 = scmp.eq.s32.totalorder %s28, 2
      %p123 = scmp.ne.s32.totalorder %s118, %s120
      %p124 = scmp.eq.s32.totalorder %s28, 0
      %p125 = por %p123, %p124
      %p126 = scmp.ne.s32.totalorder %s118, %s120
      %p127 = scmp.eq.s32.totalorder %s33, 2
      %p128 = por %p126, %p127
      %p129 = scmp.ne.s32.totalorder %s120, %s121
      %p130 = scmp.eq.s32.totalorder %s33, 0
      %p131 = por %p129, %p130
      %p132 = scmp.ne.s32.totalorder %s120, %s121
      %p133 = scmp.eq.s32.totalorder %s34, 2
      %p134 = por %p132, %p133
      %p136 = scmp.ne.s32.totalorder %s121, %s135
      %p137 = scmp.eq.s32.totalorder %s34, 0
      %p138 = por %p136, %p137
      %s140 = sadd.s32 %s139, 1
      %p143 = scmp.eq.s32.totalorder %s28, 2
      %p144 = scmp.ne.s32.totalorder %s139, %s141
      %p145 = scmp.eq.s32.totalorder %s28, 0
      %p146 = por %p144, %p145
      %p147 = scmp.ne.s32.totalorder %s139, %s141
      %p148 = scmp.eq.s32.totalorder %s33, 2
      %p149 = por %p147, %p148
      %p150 = scmp.ne.s32.totalorder %s141, %s142
      %p151 = scmp.eq.s32.totalorder %s33, 0
      %p152 = por %p150, %p151
      %p153 = scmp.ne.s32.totalorder %s141, %s142
      %p154 = scmp.eq.s32.totalorder %s34, 2
      %p155 = por %p153, %p154
      %p157 = scmp.ne.s32.totalorder %s142, %s156
      %p158 = scmp.eq.s32.totalorder %s34, 0
      %p159 = por %p157, %p158
      %s161 = sadd.s32 %s160, 1
      %p164 = scmp.eq.s32.totalorder %s28, 2
      %p165 = scmp.ne.s32.totalorder %s160, %s162
      %p166 = scmp.eq.s32.totalorder %s28, 0
      %p167 = por %p165, %p166
      %p168 = scmp.ne.s32.totalorder %s160, %s162
      %p169 = scmp.eq.s32.totalorder %s33, 2
      %p170 = por %p168, %p169
      %p171 = scmp.ne.s32.totalorder %s162, %s163
      %p172 = scmp.eq.s32.totalorder %s33, 0
      %p173 = por %p171, %p172
      %p174 = scmp.ne.s32.totalorder %s162, %s163
      %p175 = scmp.eq.s32.totalorder %s34, 2
      %p176 = por %p174, %p175
      %p178 = scmp.ne.s32.totalorder %s163, %s177
      %p179 = scmp.eq.s32.totalorder %s34, 0
      %p180 = por %p178, %p179
      %s182 = sadd.s32 %s181, 1
      %p185 = scmp.eq.s32.totalorder %s28, 2
      %p186 = scmp.ne.s32.totalorder %s181, %s183
      %p187 = scmp.eq.s32.totalorder %s28, 0
      %p188 = por %p186, %p187
      %p189 = scmp.ne.s32.totalorder %s181, %s183
      %p190 = scmp.eq.s32.totalorder %s33, 2
      %p191 = por %p189, %p190
      %p192 = scmp.ne.s32.totalorder %s183, %s184
      %p193 = scmp.eq.s32.totalorder %s33, 0
      %p194 = por %p192, %p193
      %p195 = scmp.ne.s32.totalorder %s183, %s184
      %p196 = scmp.eq.s32.totalorder %s34, 2
      %p197 = por %p195, %p196
      %p199 = scmp.ne.s32.totalorder %s184, %s198
      %p200 = scmp.eq.s32.totalorder %s34, 0
      %p201 = por %p199, %p200
      %s202 = ssub.s32 %s35, %s47
      %p203 = scmp.eq.s32.totalorder %s202, 0
      %s205 = sadd.s32 %s204, 1
      %s206 = scalar_select %p203, %s204, %s205
      %p209 = pneg %p203
      %p210 = scmp.eq.s32.totalorder %s28, 2
      %p211 = por %p209, %p210
      %p212 = scmp.ne.s32.totalorder %s204, %s207
      %p213 = scmp.eq.s32.totalorder %s28, 0
      %p214 = por %p212, %p213
      %p215 = scmp.ne.s32.totalorder %s204, %s207
      %p216 = scmp.eq.s32.totalorder %s33, 2
      %p217 = por %p215, %p216
      %p218 = scmp.ne.s32.totalorder %s207, %s208
      %p219 = scmp.eq.s32.totalorder %s33, 0
      %p220 = por %p218, %p219
      %p221 = scmp.ne.s32.totalorder %s207, %s208
      %p222 = scmp.eq.s32.totalorder %s34, 2
      %p223 = por %p221, %p222
      %p225 = scmp.ne.s32.totalorder %s208, %s224
      %p226 = scmp.eq.s32.totalorder %s34, 0
      %p227 = por %p225, %p226
      %s228 = ssub.s32 %s35, %s47
      %p229 = scmp.eq.s32.totalorder %s228, 0
      %s231 = sadd.s32 %s230, 1
      %s232 = scalar_select %p229, %s230, %s231
      %p235 = pneg %p229
      %p236 = scmp.eq.s32.totalorder %s28, 2
      %p237 = por %p235, %p236
      %p238 = scmp.ne.s32.totalorder %s230, %s233
      %p239 = scmp.eq.s32.totalorder %s28, 0
      %p240 = por %p238, %p239
      %p241 = scmp.ne.s32.totalorder %s230, %s233
      %p242 = scmp.eq.s32.totalorder %s33, 2
      %p243 = por %p241, %p242
      %p244 = scmp.ne.s32.totalorder %s233, %s234
      %p245 = scmp.eq.s32.totalorder %s33, 0
      %p246 = por %p244, %p245
      %p247 = scmp.ne.s32.totalorder %s233, %s234
      %p248 = scmp.eq.s32.totalorder %s34, 2
      %p249 = por %p247, %p248
      %p251 = scmp.ne.s32.totalorder %s234, %s250
      %p252 = scmp.eq.s32.totalorder %s34, 0
      %p253 = por %p251, %p252
      %s254 = ssub.s32 %s36, %s43
      %s255 = ssub.s32 %s35, %s47
      %s256 = sor.u32 %s254, %s255
      %p257 = scmp.eq.s32.totalorder %s256, 0
      %s259 = sadd.s32 %s258, 1
      %s260 = scalar_select %p257, %s258, %s259
      %p263 = pneg %p257
      %p264 = scmp.eq.s32.totalorder %s28, 2
      %p265 = por %p263, %p264
      %p266 = scmp.ne.s32.totalorder %s258, %s261
      %p267 = scmp.eq.s32.totalorder %s28, 0
      %p268 = por %p266, %p267
      %p269 = scmp.ne.s32.totalorder %s258, %s261
      %p270 = scmp.eq.s32.totalorder %s33, 2
      %p271 = por %p269, %p270
      %p272 = scmp.ne.s32.totalorder %s261, %s262
      %p273 = scmp.eq.s32.totalorder %s33, 0
      %p274 = por %p272, %p273
      %p275 = scmp.ne.s32.totalorder %s261, %s262
      %p276 = scmp.eq.s32.totalorder %s34, 2
      %p277 = por %p275, %p276
      %p279 = scmp.ne.s32.totalorder %s262, %s278
      %p280 = scmp.eq.s32.totalorder %s34, 0
      %p281 = por %p279, %p280
      %s282 = ssub.s32 %s35, %s47
      %p283 = scmp.eq.s32.totalorder %s282, 0
      %s285 = sadd.s32 %s284, 1
      %s286 = scalar_select %p283, %s284, %s285
      %p289 = pneg %p283
      %p290 = scmp.eq.s32.totalorder %s28, 2
      %p291 = por %p289, %p290
      %p292 = scmp.ne.s32.totalorder %s284, %s287
      %p293 = scmp.eq.s32.totalorder %s28, 0
      %p294 = por %p292, %p293
      %p295 = scmp.ne.s32.totalorder %s284, %s287
      %p296 = scmp.eq.s32.totalorder %s33, 2
      %p297 = por %p295, %p296
      %p298 = scmp.ne.s32.totalorder %s287, %s288
      %p299 = scmp.eq.s32.totalorder %s33, 0
      %p300 = por %p298, %p299
      %p301 = scmp.ne.s32.totalorder %s287, %s288
      %p302 = scmp.eq.s32.totalorder %s34, 2
      %p303 = por %p301, %p302
      %p305 = scmp.ne.s32.totalorder %s288, %s304
      %p306 = scmp.eq.s32.totalorder %s34, 0
      %p307 = por %p305, %p306
      %s308 = ssub.s32 %s35, %s47
      %p309 = scmp.eq.s32.totalorder %s308, 0
      %s311 = sadd.s32 %s310, 1
      %s312 = scalar_select %p309, %s310, %s311
      %p315 = pneg %p309
      %p316 = scmp.eq.s32.totalorder %s28, 2
      %p317 = por %p315, %p316
      %p318 = scmp.ne.s32.totalorder %s310, %s313
      %p319 = scmp.eq.s32.totalorder %s28, 0
      %p320 = por %p318, %p319
      %p321 = scmp.ne.s32.totalorder %s310, %s313
      %p322 = scmp.eq.s32.totalorder %s33, 2
      %p323 = por %p321, %p322
      %p324 = scmp.ne.s32.totalorder %s313, %s314
      %p325 = scmp.eq.s32.totalorder %s33, 0
      %p326 = por %p324, %p325
      %p327 = scmp.ne.s32.totalorder %s313, %s314
      %p328 = scmp.eq.s32.totalorder %s34, 2
      %p329 = por %p327, %p328
      %p331 = scmp.ne.s32.totalorder %s314, %s330
      %p332 = scmp.eq.s32.totalorder %s34, 0
      %p333 = por %p331, %p332
      %p334 = scmp.le.s32.totalorder 1, %s28
      %p335 = scmp.lt.s32.totalorder %s28, 4
      %p336 = pnand %p334, %p335
      %p337 = pneg %p336
      // Predicated region
      $region9: #{tpu_custom_call.1} parent=5 // pred_check
        _
      $region10: #{tpu_custom_call.1} parent=5 // pred_check_branch
        %339 = sbr.rel (%p336) target = $region12
      $region11: #{tpu_custom_call.1} parent=5 // pred_region
        %s340 = ssub.s32 %s28, 1
        // Predicated region
        $region13: #{tpu_custom_call.1} parent=11 // pred_check
          %p341 = pneg %p89
        $region14: #{tpu_custom_call.1} parent=11 // pred_check_branch
          %343 = sbr.rel (%p341) target = $region16
        $region15: #{tpu_custom_call.1} parent=11 // pred_region
          %s345 = ssub.s32 256, 256
          %346 = vsyncadd [#allocation10], %s345
          %s347 = sshll.u32 [#allocation9], 4
          %s348 = int_to_ptr.vmem [resolvable:$true] %s347
          %353 = dma.hbm_to_vmem [thread:$0]  %s1, 256, %s348, [#allocation10], 64, 64, 4
        $region16: #{tpu_custom_call.1} parent=11 // pred_fallthru
          _
        // Predicated region
        $region17: #{tpu_custom_call.1} parent=11 // pred_check
          %p354 = pneg %p110
        $region18: #{tpu_custom_call.1} parent=11 // pred_check_branch
          %356 = sbr.rel (%p354) target = $region20
        $region19: #{tpu_custom_call.1} parent=11 // pred_region
          %s358 = ssub.s32 256, 256
          %359 = vsyncadd [#allocation10], %s358
          %s360 = sshll.u32 [#allocation11], 4
          %s361 = int_to_ptr.vmem [resolvable:$true] %s360
          %366 = dma.hbm_to_vmem [thread:$0]  %s2, 256, %s361, [#allocation10], 64, 64, 4
        $region20: #{tpu_custom_call.1} parent=11 // pred_fallthru
          _
        // Predicated region
        $region21: #{tpu_custom_call.1} parent=11 // pred_check
          %p367 = pneg %p131
        $region22: #{tpu_custom_call.1} parent=11 // pred_check_branch
          %369 = sbr.rel (%p367) target = $region24
        $region23: #{tpu_custom_call.1} parent=11 // pred_region
          _
        $region24: #{tpu_custom_call.1} parent=11 // pred_fallthru
          _
        // Predicated region
        $region25: #{tpu_custom_call.1} parent=11 // pred_check
          %p370 = pneg %p152
        $region26: #{tpu_custom_call.1} parent=11 // pred_check_branch
          %372 = sbr.rel (%p370) target = $region28
        $region27: #{tpu_custom_call.1} parent=11 // pred_region
          %s374 = ssub.s32 256, 256
          %375 = vsyncadd [#allocation13], %s374
          %s376 = sshll.u32 [#allocation12], 4
          %s377 = int_to_ptr.vmem [resolvable:$true] %s376
          %382 = dma.hbm_to_vmem [thread:$0]  %s4, 256, %s377, [#allocation13], 64, 64, 4
        $region28: #{tpu_custom_call.1} parent=11 // pred_fallthru
          _
        // Predicated region
        $region29: #{tpu_custom_call.1} parent=11 // pred_check
          %p383 = pneg %p173
        $region30: #{tpu_custom_call.1} parent=11 // pred_check_branch
          %385 = sbr.rel (%p383) target = $region32
        $region31: #{tpu_custom_call.1} parent=11 // pred_region
          %s387 = ssub.s32 256, 256
          %388 = vsyncadd [#allocation13], %s387
          %s389 = sshll.u32 [#allocation14], 4
          %s390 = int_to_ptr.vmem [resolvable:$true] %s389
          %395 = dma.hbm_to_vmem [thread:$0]  %s5, 256, %s390, [#allocation13], 64, 64, 4
        $region32: #{tpu_custom_call.1} parent=11 // pred_fallthru
          _
        // Predicated region
        $region33: #{tpu_custom_call.1} parent=11 // pred_check
          %p396 = pneg %p194
        $region34: #{tpu_custom_call.1} parent=11 // pred_check_branch
          %398 = sbr.rel (%p396) target = $region36
        $region35: #{tpu_custom_call.1} parent=11 // pred_region
          _
        $region36: #{tpu_custom_call.1} parent=11 // pred_fallthru
          _
        // Predicated region
        $region37: #{tpu_custom_call.1} parent=11 // pred_check
          %p399 = pneg %p220
        $region38: #{tpu_custom_call.1} parent=11 // pred_check_branch
          %401 = sbr.rel (%p399) target = $region40
        $region39: #{tpu_custom_call.1} parent=11 // pred_region
          %s403 = ssub.s32 256, 256
          %404 = vsyncadd [#allocation16], %s403
          %s405 = smul.addr %s37, 128
          %s406 = scalar_lea.hbm %s7, %s405
          %s407 = sshll.u32 [#allocation15], 4
          %s408 = int_to_ptr.vmem [resolvable:$true] %s407
          %413 = dma.hbm_to_vmem [thread:$0]  %s406, 256, %s408, [#allocation16], 128, 128, 8
        $region40: #{tpu_custom_call.1} parent=11 // pred_fallthru
          _
        // Predicated region
        $region41: #{tpu_custom_call.1} parent=11 // pred_check
          %p414 = pneg %p246
        $region42: #{tpu_custom_call.1} parent=11 // pred_check_branch
          %416 = sbr.rel (%p414) target = $region44
        $region43: #{tpu_custom_call.1} parent=11 // pred_region
          %s418 = ssub.s32 256, 256
          %419 = vsyncadd [#allocation16], %s418
          %s420 = smul.addr %s37, 128
          %s421 = scalar_lea.hbm %s8, %s420
          %s422 = sshll.u32 [#allocation17], 4
          %s423 = int_to_ptr.vmem [resolvable:$true] %s422
          %428 = dma.hbm_to_vmem [thread:$0]  %s421, 256, %s423, [#allocation16], 128, 128, 8
        $region44: #{tpu_custom_call.1} parent=11 // pred_fallthru
          _
      $region12: #{tpu_custom_call.1} parent=5 // pred_fallthru
        _
      %p429 = scmp.lt.s32.totalorder %s28, 3
      // Predicated region
      $region45: #{tpu_custom_call.1} parent=5 // pred_check
        %p430 = pneg %p429
      $region46: #{tpu_custom_call.1} parent=5 // pred_check_branch
        %432 = sbr.rel (%p430) target = $region48
      $region47: #{tpu_custom_call.1} parent=5 // pred_region
        // Predicated region
        $region49: #{tpu_custom_call.1} parent=47 // pred_check
          %p433 = pneg %p62
        $region50: #{tpu_custom_call.1} parent=47 // pred_check_branch
          %435 = sbr.rel (%p433) target = $region52
        $region51: #{tpu_custom_call.1} parent=47 // pred_region
          %s436 = sand.u32 %s52, 1
          %s437 = scalar_lea.sflag [#allocation7], %s436
          %s438 = sand.u32 %s52, 1
          %s439 = smul.addr %s438, 32
          %s440 = scalar_lea.vmem [#allocation6], %s439
          %s441 = smul.u32 8, %s36
          %s443 = ssub.s32 512, 512
          %444 = vsyncadd %s437, %s443
          %s445 = sadd.s32 %s35, %s441
          %s446 = smul.addr %s445, 64
          %s447 = scalar_lea.hbm %s0, %s446
          %s448 = sshll.u32 %s440, 4
          %s449 = int_to_ptr.vmem [resolvable:$true] %s448
          %454 = dma.hbm_to_vmem [thread:$0]  %s447, 512, %s449, %s437, 64, 64, 4
        $region52: #{tpu_custom_call.1} parent=47 // pred_fallthru
          _
      $region48: #{tpu_custom_call.1} parent=5 // pred_fallthru
        _
      %p455 = scmp.le.s32.totalorder 1, %s28
      %p456 = scmp.lt.s32.totalorder %s28, 4
      %p457 = pnand %p455, %p456
      %p458 = pneg %p457
      // Predicated region
      $region53: #{tpu_custom_call.1} parent=5 // pred_check
        _
      $region54: #{tpu_custom_call.1} parent=5 // pred_check_branch
        %460 = sbr.rel (%p457) target = $region56
      $region55: #{tpu_custom_call.1} parent=5 // pred_region
        %s461 = ssub.s32 %s28, 1
        %s462 = sand.u32 %s55, 1
        %s463 = scalar_lea.sflag [#allocation7], %s462
        %s464 = sand.u32 %s55, 1
        %s465 = smul.addr %s464, 32
        %s466 = scalar_lea.vmem [#allocation6], %s465
        // Predicated region
        $region57: #{tpu_custom_call.1} parent=55 // pred_check
          %p467 = pneg %p68
        $region58: #{tpu_custom_call.1} parent=55 // pred_check_branch
          %469 = sbr.rel (%p467) target = $region60
        $region59: #{tpu_custom_call.1} parent=55 // pred_region
          %470 = dma.done %s463, 512
        $region60: #{tpu_custom_call.1} parent=55 // pred_fallthru
          _
        // Predicated region
        $region61: #{tpu_custom_call.1} parent=55 // pred_check
          %p471 = pneg %p89
        $region62: #{tpu_custom_call.1} parent=55 // pred_check_branch
          %473 = sbr.rel (%p471) target = $region64
        $region63: #{tpu_custom_call.1} parent=55 // pred_region
          %474 = dma.done [#allocation10], 256
        $region64: #{tpu_custom_call.1} parent=55 // pred_fallthru
          _
        // Predicated region
        $region65: #{tpu_custom_call.1} parent=55 // pred_check
          %p475 = pneg %p110
        $region66: #{tpu_custom_call.1} parent=55 // pred_check_branch
          %477 = sbr.rel (%p475) target = $region68
        $region67: #{tpu_custom_call.1} parent=55 // pred_region
          %478 = dma.done [#allocation10], 256
        $region68: #{tpu_custom_call.1} parent=55 // pred_fallthru
          _
        // Predicated region
        $region69: #{tpu_custom_call.1} parent=55 // pred_check
          %p479 = pneg %p152
        $region70: #{tpu_custom_call.1} parent=55 // pred_check_branch
          %481 = sbr.rel (%p479) target = $region72
        $region71: #{tpu_custom_call.1} parent=55 // pred_region
          %482 = dma.done [#allocation13], 256
        $region72: #{tpu_custom_call.1} parent=55 // pred_fallthru
          _
        // Predicated region
        $region73: #{tpu_custom_call.1} parent=55 // pred_check
          %p483 = pneg %p173
        $region74: #{tpu_custom_call.1} parent=55 // pred_check_branch
          %485 = sbr.rel (%p483) target = $region76
        $region75: #{tpu_custom_call.1} parent=55 // pred_region
          %486 = dma.done [#allocation13], 256
        $region76: #{tpu_custom_call.1} parent=55 // pred_fallthru
          _
        // Predicated region
        $region77: #{tpu_custom_call.1} parent=55 // pred_check
          %p487 = pneg %p220
        $region78: #{tpu_custom_call.1} parent=55 // pred_check_branch
          %489 = sbr.rel (%p487) target = $region80
        $region79: #{tpu_custom_call.1} parent=55 // pred_region
          %490 = dma.done [#allocation16], 256
        $region80: #{tpu_custom_call.1} parent=55 // pred_fallthru
          _
        // Predicated region
        $region81: #{tpu_custom_call.1} parent=55 // pred_check
          %p491 = pneg %p246
        $region82: #{tpu_custom_call.1} parent=55 // pred_check_branch
          %493 = sbr.rel (%p491) target = $region84
        $region83: #{tpu_custom_call.1} parent=55 // pred_region
          %494 = dma.done [#allocation16], 256
        $region84: #{tpu_custom_call.1} parent=55 // pred_fallthru
          _
        %s495 = sand.u32 %s55, 1
        %s496 = scalar_lea.sflag [#allocation7], %s495
        %s497 = sand.u32 %s55, 1
        %s498 = smul.addr %s497, 32
        %s499 = scalar_lea.vmem [#allocation6], %s498
        %p500 = pneg %p68
        %p501 = pneg %p65
        %p502 = pneg %p89
        %p503 = pneg %p86
        %p504 = pneg %p110
        %p505 = pneg %p107
        %p506 = pneg %p131
        %p507 = pneg %p128
        %p508 = pneg %p152
        %p509 = pneg %p149
        %p510 = pneg %p173
        %p511 = pneg %p170
        %p512 = pneg %p194
        %p513 = pneg %p191
        %p514 = pneg %p220
        %p515 = pneg %p217
        %p516 = pneg %p246
        %p517 = pneg %p243
        %p518 = pneg %p274
        %p519 = pneg %p271
        %s520 = sand.u32 %s261, 1
        %s521 = scalar_lea.sflag [#allocation8], %s520
        %s522 = sand.u32 %s261, 1
        %s523 = smul.addr %s522, 64
        %s524 = scalar_lea.vmem [#allocation18], %s523
        %p525 = pneg %p300
        %p526 = pneg %p297
        %p527 = pneg %p326
        %p528 = pneg %p323
        %s529 = smul.u32 8, %s38
        %s530 = smul.u32 8, %s38
        %p532 = scmp.eq.s32.totalorder %s38, 0
        // Predicated region
        $region85: #{tpu_custom_call.1} parent=55 // pred_check
          %p533 = pneg %p532
        $region86: #{tpu_custom_call.1} parent=55 // pred_check_branch
          %535 = sbr.rel (%p533) target = $region88
        $region87: #{tpu_custom_call.1} parent=55 // pred_region
          %v536 = vld [vmem:[#allocation15] sm:$0xff]
          %v537 = vld [vmem:[#allocation15 + $0x8] sm:$0xff]
          %vm538 = vcmask 261120
          %539 = vst.msk [vmem:[#allocation4] sm:$0xff] %vm538, %v536
          %540 = vst.msk [vmem:[#allocation4 + $0x8] sm:$0xff] %vm538, %v537
          %v541 = vld [vmem:[#allocation17] sm:$0xff]
          %v542 = vld [vmem:[#allocation17 + $0x8] sm:$0xff]
          %543 = vst.msk [vmem:[#allocation5] sm:$0xff] %vm538, %v541
          %544 = vst.msk [vmem:[#allocation5 + $0x8] sm:$0xff] %vm538, %v542
        $region88: #{tpu_custom_call.1} parent=55 // pred_fallthru
          _
        %s545 = smul.u32 %s38, 8
        %s546 = ssub.s32 19, %s545
        %p547 = scmp.lt.s32.totalorder %s546, 8
        %s548 = scalar_select %p547, %s546, 8
        %v549 = vld [vmem:[%s466] sm:$0xf]
        %v550 = vld [vmem:[%s466 + $0x4] sm:$0xf]
        %v551 = vld [vmem:[%s466 + $0x8] sm:$0xf]
        %v552 = vld [vmem:[%s466 + $0xc] sm:$0xf]
        %v553 = vld [vmem:[%s466 + $0x10] sm:$0xf]
        %v554 = vld [vmem:[%s466 + $0x14] sm:$0xf]
        %v555 = vld [vmem:[%s466 + $0x18] sm:$0xf]
        %v556 = vld [vmem:[%s466 + $0x1c] sm:$0xf]
        %v557 = vld [vmem:[#allocation9] sm:$0xf]
        %v558 = vld [vmem:[#allocation9 + $0x4] sm:$0xf]
        %v559 = vld [vmem:[#allocation9 + $0x8] sm:$0xf]
        %v560 = vld [vmem:[#allocation9 + $0xc] sm:$0xf]
        %v561 = vld [vmem:[%s3] sm:$0x1]
        %v563 = vlaneseq
        %v564 = vshrl.u32 %v563, 7
        %v565 = vsub.s32 0, %v564
        %v566 = vrot.slane %v561, %v565
        %v576 = vunpack.c.l.b16 %v549
        %v577 = vunpack.c.l.b16 %v550
        %v578 = vunpack.c.l.b16 %v551
        %v579 = vunpack.c.l.b16 %v552
        %v580 = vunpack.c.l.b16 %v553
        %v581 = vunpack.c.l.b16 %v554
        %v582 = vunpack.c.l.b16 %v555
        %v583 = vunpack.c.l.b16 %v556
        %v584 = vpack.c.b16 %v577, %v576
        %v585 = vpack.c.b16 %v579, %v578
        %v586 = vpack.c.b16 %v581, %v580
        %v587 = vpack.c.b16 %v583, %v582
        %v592 = vunpack.c.l.b16 %v557
        %v593 = vunpack.c.l.b16 %v558
        %v594 = vunpack.c.l.b16 %v559
        %v595 = vunpack.c.l.b16 %v560
        %v596 = vpack.c.b16 %v593, %v592
        %v597 = vpack.c.b16 %v595, %v594
        %vm600 = vcmask 261120
        %v602 = vsel %vm600, %v584, 0
        %v605 = vsel %vm600, %v585, 0
        %v608 = vsel %vm600, %v586, 0
        %v611 = vsel %vm600, %v587, 0
        %613 = vmatprep.subr.bf16.mxu0 0
        %614 = vmatpush1.bf16.msra.mxu0 0
        %615 = vmatprep.subr.bf16.mxu0 0
        %616 = vmatpush1.bf16.msra.mxu0 0
        %617 = vmatprep.subr.bf16.mxu0 0
        %618 = vmatpush1.bf16.msra.mxu0 0
        %619 = vmatprep.subr.bf16.mxu0 0
        %620 = vmatpush1.bf16.msra.mxu0 0
        %621 = vmatprep.subr.bf16.mxu0 0
        %622 = vmatpush1.bf16.msra.mxu0 0
        %623 = vmatprep.subr.bf16.mxu0 0
        %624 = vmatpush1.bf16.msra.mxu0 0
        %625 = vmatprep.subr.bf16.mxu0 0
        %626 = vmatpush1.bf16.msra.mxu0 %v597
        %627 = vmatprep.subr.bf16.mxu0 0
        %628 = vmatpush1.bf16.msra.mxu0 %v596
        %629 = vmatprep.subr.bf16.mxu0 0
        %630 = vmatpush2.bf16.msra.mxu0 0
        %631 = vmatprep.subr.bf16.mxu0 0
        %632 = vmatpush2.bf16.msra.mxu0 0
        %633 = vmatprep.subr.bf16.mxu0 0
        %634 = vmatpush2.bf16.msra.mxu0 0
        %635 = vmatprep.subr.bf16.mxu0 0
        %636 = vmatpush2.bf16.msra.mxu0 0
        %637 = vmatprep.subr.bf16.mxu0 0
        %638 = vmatpush2.bf16.msra.mxu0 0
        %639 = vmatprep.subr.bf16.mxu0 0
        %640 = vmatpush2.bf16.msra.mxu0 0
        %641 = vmatprep.subr.bf16.mxu0 0
        %642 = vmatpush2.bf16.msra.mxu0 0
        %643 = vmatprep.subr.bf16.mxu0 0
        %644 = vmatpush2.bf16.msra.mxu0 0
        %645 = vmatprep.mubr.bf16.mxu0 0
        %646 = vmatmul.mubr.bf16.gmra.mxu0 %v602
        %v647 = vpop.f32.mrf.mxu0
        %v648 = vadd.f32 %v566, %v647
        %v649 = vpop.f32.mrf.mxu0
        %v650 = vpop.f32.mrf.mxu0
        %v651 = vadd.f32 %v566, %v650
        %v652 = vpop.f32.mrf.mxu0
        %653 = vmatprep.mubr.bf16.mxu0 0
        %654 = vmatmul.mubr.bf16.gmra.mxu0 %v605
        %v655 = vpop.f32.mrf.mxu0
        %v656 = vadd.f32 %v566, %v655
        %v657 = vpop.f32.mrf.mxu0
        %v658 = vpop.f32.mrf.mxu0
        %v659 = vadd.f32 %v566, %v658
        %v660 = vpop.f32.mrf.mxu0
        %661 = vmatprep.mubr.bf16.mxu0 0
        %662 = vmatmul.mubr.bf16.gmra.mxu0 %v608
        %v663 = vpop.f32.mrf.mxu0
        %v664 = vadd.f32 %v566, %v663
        %v665 = vpop.f32.mrf.mxu0
        %v666 = vpop.f32.mrf.mxu0
        %v667 = vadd.f32 %v566, %v666
        %v668 = vpop.f32.mrf.mxu0
        %669 = vmatprep.mubr.bf16.mxu0 0
        %670 = vmatmul.mubr.bf16.gmra.mxu0 %v611
        %v671 = vpop.f32.mrf.mxu0
        %v672 = vadd.f32 %v566, %v671
        %v673 = vpop.f32.mrf.mxu0
        %v674 = vpop.f32.mrf.mxu0
        %v675 = vadd.f32 %v566, %v674
        %v676 = vpop.f32.mrf.mxu0
        %677 = vdwg.mxu0
        %v678 = vpack.c.bf16 %v648, %v648
        %v679 = vpack.c.bf16 %v651, %v651
        %v680 = vpack.c.bf16 %v656, %v656
        %v681 = vpack.c.bf16 %v659, %v659
        %v682 = vpack.c.bf16 %v664, %v664
        %v683 = vpack.c.bf16 %v667, %v667
        %v684 = vpack.c.bf16 %v672, %v672
        %v685 = vpack.c.bf16 %v675, %v675
        %686 = vst [vmem:[#allocation3] sm:$0xf] %v678
        %687 = vst [vmem:[#allocation3 + $0x4] sm:$0xf] %v679
        %688 = vst [vmem:[#allocation3 + $0x8] sm:$0xf] %v680
        %689 = vst [vmem:[#allocation3 + $0xc] sm:$0xf] %v681
        %690 = vst [vmem:[#allocation3 + $0x10] sm:$0xf] %v682
        %691 = vst [vmem:[#allocation3 + $0x14] sm:$0xf] %v683
        %692 = vst [vmem:[#allocation3 + $0x18] sm:$0xf] %v684
        %693 = vst [vmem:[#allocation3 + $0x1c] sm:$0xf] %v685
        %v694 = vld [vmem:[#allocation11] sm:$0xf]
        %v695 = vld [vmem:[#allocation11 + $0x4] sm:$0xf]
        %v696 = vld [vmem:[#allocation11 + $0x8] sm:$0xf]
        %v697 = vld [vmem:[#allocation11 + $0xc] sm:$0xf]
        %v698 = vld [vmem:[#allocation4] sm:$0xff]
        %v699 = vld [vmem:[#allocation5] sm:$0xff]
        %v700 = vld [vmem:[#allocation3] sm:$0xf]
        %v701 = vunpack.c.l.bf16 %v700
        %v702 = vpack.c.bf16 %v698, %v698
        %v707 = vunpack.c.l.b16 %v694
        %v708 = vunpack.c.l.b16 %v695
        %v709 = vunpack.c.l.b16 %v696
        %v710 = vunpack.c.l.b16 %v697
        %v711 = vpack.c.b16 %v708, %v707
        %v712 = vpack.c.b16 %v710, %v709
        %v716 = vsel %vm600, %v702, 0
        %718 = vmatprep.subr.bf16.mxu0 0
        %719 = vmatpush1.bf16.msra.mxu0 0
        %720 = vmatprep.subr.bf16.mxu0 0
        %721 = vmatpush1.bf16.msra.mxu0 0
        %722 = vmatprep.subr.bf16.mxu0 0
        %723 = vmatpush1.bf16.msra.mxu0 0
        %724 = vmatprep.subr.bf16.mxu0 0
        %725 = vmatpush1.bf16.msra.mxu0 0
        %726 = vmatprep.subr.bf16.mxu0 0
        %727 = vmatpush1.bf16.msra.mxu0 0
        %728 = vmatprep.subr.bf16.mxu0 0
        %729 = vmatpush1.bf16.msra.mxu0 0
        %730 = vmatprep.subr.bf16.mxu0 0
        %731 = vmatpush1.bf16.msra.mxu0 %v712
        %732 = vmatprep.subr.bf16.mxu0 0
        %733 = vmatpush1.bf16.msra.mxu0 %v711
        %734 = vmatprep.subr.bf16.mxu0 0
        %735 = vmatpush2.bf16.msra.mxu0 0
        %736 = vmatprep.subr.bf16.mxu0 0
        %737 = vmatpush2.bf16.msra.mxu0 0
        %738 = vmatprep.subr.bf16.mxu0 0
        %739 = vmatpush2.bf16.msra.mxu0 0
        %740 = vmatprep.subr.bf16.mxu0 0
        %741 = vmatpush2.bf16.msra.mxu0 0
        %742 = vmatprep.subr.bf16.mxu0 0
        %743 = vmatpush2.bf16.msra.mxu0 0
        %744 = vmatprep.subr.bf16.mxu0 0
        %745 = vmatpush2.bf16.msra.mxu0 0
        %746 = vmatprep.subr.bf16.mxu0 0
        %747 = vmatpush2.bf16.msra.mxu0 0
        %748 = vmatprep.subr.bf16.mxu0 0
        %749 = vmatpush2.bf16.msra.mxu0 0
        %750 = vmatprep.mubr.bf16.mxu0 0
        %751 = vmatmul.mubr.bf16.gmra.mxu0 %v716
        %v752 = vpop.f32.mrf.mxu0
        %v753 = vadd.f32 0.0, %v752
        %v754 = vpop.f32.mrf.mxu0
        %v755 = vpop.f32.mrf.mxu0
        %v756 = vpop.f32.mrf.mxu0
        %757 = vdwg.mxu0
        %v758 = vadd.f32 %v701, %v753
        %v759 = vxor.u32 %v758, 2147483648
        %v760 = vmul.f32 %v759, 1.442695
        %v761 = vpow.pop %v760
        %v762 = vadd.f32 %v761, 1.0
        %v763 = vrcp.pop %v762
        %v764 = vmul.f32 1.0, %v763
        %v765 = vtanh.pop %v758
        %767 = vrot.lane.b32.xlu0 %v699, 32
        %v768 = vpop.permute.xlu0 %767
        %v770 = vmul.f32 %v764, %v768
        %772 = vrot.lane.b32.xlu0 %v765, 64
        %v773 = vpop.permute.xlu0 %772
        %v775 = vmul.f32 %v764, %v773
        %777 = vrot.lane.b32.xlu0 %v775, 32
        %v778 = vpop.permute.xlu0 %777
        %v780 = vadd.f32 %v770, %v778
        %v781 = vtanh.pop %v780
        %783 = vrot.lane.b32.xlu0 %v781, 64
        %v784 = vpop.permute.xlu0 %783
        %v786 = vmul.f32 %v764, %v784
        %p787 = scmp.gt.s32.totalorder %s548, 0
        %s788 = scalar_select %p787, 1, 0
        %v789 = vstv %s788
        %vm790 = vcmp.eq.s32.totalorder %v789, 1
        %792 = vrot.lane.b32.xlu0 %v698, 96
        %v793 = vpop.permute.xlu0 %792
        %v795 = vsel %vm790, %v786, %v793
        %v796 = vsel %vm790, %v780, %v768
        %v797 = vpack.c.bf16 %v795, %v795
        %v799 = vunpack.c.l.b16 %v797
        %v800 = vpack.c.b16 %v799, %v799
        %801 = vrot.lane.b32.xlu0 %v800, 32
        %v802 = vpop.permute.xlu0 %801
        %vm804 = vcmask 257024
        %805 = vst.msk [vmem:[#allocation2] sm:$0xf] %vm804, %v802
        %s806 = scalar_lea.vmem [#allocation3], 4
        %v807 = vld [vmem:[%s806] sm:$0xf]
        %v808 = vunpack.c.l.bf16 %v807
        %809 = vrot.lane.b32.xlu0 %v797, 32
        %v810 = vpop.permute.xlu0 %809
        %v812 = vsel %vm600, %v810, 0
        %814 = vmatprep.subr.bf16.mxu0 0
        %815 = vmatpush1.bf16.msra.mxu0 0
        %816 = vmatprep.subr.bf16.mxu0 0
        %817 = vmatpush1.bf16.msra.mxu0 0
        %818 = vmatprep.subr.bf16.mxu0 0
        %819 = vmatpush1.bf16.msra.mxu0 0
        %820 = vmatprep.subr.bf16.mxu0 0
        %821 = vmatpush1.bf16.msra.mxu0 0
        %822 = vmatprep.subr.bf16.mxu0 0
        %823 = vmatpush1.bf16.msra.mxu0 0
        %824 = vmatprep.subr.bf16.mxu0 0
        %825 = vmatpush1.bf16.msra.mxu0 0
        %826 = vmatprep.subr.bf16.mxu0 0
        %827 = vmatpush1.bf16.msra.mxu0 %v712
        %828 = vmatprep.subr.bf16.mxu0 0
        %829 = vmatpush1.bf16.msra.mxu0 %v711
        %830 = vmatprep.subr.bf16.mxu0 0
        %831 = vmatpush2.bf16.msra.mxu0 0
        %832 = vmatprep.subr.bf16.mxu0 0
        %833 = vmatpush2.bf16.msra.mxu0 0
        %834 = vmatprep.subr.bf16.mxu0 0
        %835 = vmatpush2.bf16.msra.mxu0 0
        %836 = vmatprep.subr.bf16.mxu0 0
        %837 = vmatpush2.bf16.msra.mxu0 0
        %838 = vmatprep.subr.bf16.mxu0 0
        %839 = vmatpush2.bf16.msra.mxu0 0
        %840 = vmatprep.subr.bf16.mxu0 0
        %841 = vmatpush2.bf16.msra.mxu0 0
        %842 = vmatprep.subr.bf16.mxu0 0
        %843 = vmatpush2.bf16.msra.mxu0 0
        %844 = vmatprep.subr.bf16.mxu0 0
        %845 = vmatpush2.bf16.msra.mxu0 0
        %846 = vmatprep.mubr.bf16.mxu0 0
        %847 = vmatmul.mubr.bf16.gmra.mxu0 %v812
        %v848 = vpop.f32.mrf.mxu0
        %v849 = vadd.f32 0.0, %v848
        %v850 = vpop.f32.mrf.mxu0
        %v851 = vpop.f32.mrf.mxu0
        %v852 = vpop.f32.mrf.mxu0
        %853 = vdwg.mxu0
        %v854 = vadd.f32 %v808, %v849
        %v855 = vxor.u32 %v854, 2147483648
        %v856 = vmul.f32 %v855, 1.442695
        %v857 = vpow.pop %v856
        %v858 = vadd.f32 %v857, 1.0
        %v859 = vrcp.pop %v858
        %v860 = vmul.f32 1.0, %v859
        %v861 = vtanh.pop %v854
        %v862 = vmul.f32 %v860, %v796
        %864 = vrot.lane.b32.xlu0 %v861, 64
        %v865 = vpop.permute.xlu0 %864
        %v867 = vmul.f32 %v860, %v865
        %869 = vrot.lane.b32.xlu0 %v867, 32
        %v870 = vpop.permute.xlu0 %869
        %v872 = vadd.f32 %v862, %v870
        %v873 = vtanh.pop %v872
        %875 = vrot.lane.b32.xlu0 %v873, 64
        %v876 = vpop.permute.xlu0 %875
        %v878 = vmul.f32 %v860, %v876
        %p879 = scmp.gt.s32.totalorder %s548, 1
        %s880 = scalar_select %p879, 1, 0
        %v881 = vstv %s880
        %vm882 = vcmp.eq.s32.totalorder %v881, 1
        %v883 = vsel %vm882, %v878, %v795
        %v884 = vsel %vm882, %v872, %v796
        %v885 = vpack.c.bf16 %v883, %v883
        %v887 = vunpack.c.l.b16 %v885
        %v888 = vpack.c.b16 %v887, %v887
        %889 = vrot.lane.b32.xlu0 %v888, 32
        %v890 = vpop.permute.xlu0 %889
        %s892 = scalar_lea.vmem [#allocation2], 4
        %893 = vst.msk [vmem:[%s892] sm:$0xf] %vm804, %v890
        %s894 = scalar_lea.vmem [#allocation3], 8
        %v895 = vld [vmem:[%s894] sm:$0xf]
        %v896 = vunpack.c.l.bf16 %v895
        %897 = vrot.lane.b32.xlu0 %v885, 32
        %v898 = vpop.permute.xlu0 %897
        %v900 = vsel %vm600, %v898, 0
        %902 = vmatprep.subr.bf16.mxu0 0
        %903 = vmatpush1.bf16.msra.mxu0 0
        %904 = vmatprep.subr.bf16.mxu0 0
        %905 = vmatpush1.bf16.msra.mxu0 0
        %906 = vmatprep.subr.bf16.mxu0 0
        %907 = vmatpush1.bf16.msra.mxu0 0
        %908 = vmatprep.subr.bf16.mxu0 0
        %909 = vmatpush1.bf16.msra.mxu0 0
        %910 = vmatprep.subr.bf16.mxu0 0
        %911 = vmatpush1.bf16.msra.mxu0 0
        %912 = vmatprep.subr.bf16.mxu0 0
        %913 = vmatpush1.bf16.msra.mxu0 0
        %914 = vmatprep.subr.bf16.mxu0 0
        %915 = vmatpush1.bf16.msra.mxu0 %v712
        %916 = vmatprep.subr.bf16.mxu0 0
        %917 = vmatpush1.bf16.msra.mxu0 %v711
        %918 = vmatprep.subr.bf16.mxu0 0
        %919 = vmatpush2.bf16.msra.mxu0 0
        %920 = vmatprep.subr.bf16.mxu0 0
        %921 = vmatpush2.bf16.msra.mxu0 0
        %922 = vmatprep.subr.bf16.mxu0 0
        %923 = vmatpush2.bf16.msra.mxu0 0
        %924 = vmatprep.subr.bf16.mxu0 0
        %925 = vmatpush2.bf16.msra.mxu0 0
        %926 = vmatprep.subr.bf16.mxu0 0
        %927 = vmatpush2.bf16.msra.mxu0 0
        %928 = vmatprep.subr.bf16.mxu0 0
        %929 = vmatpush2.bf16.msra.mxu0 0
        %930 = vmatprep.subr.bf16.mxu0 0
        %931 = vmatpush2.bf16.msra.mxu0 0
        %932 = vmatprep.subr.bf16.mxu0 0
        %933 = vmatpush2.bf16.msra.mxu0 0
        %934 = vmatprep.mubr.bf16.mxu0 0
        %935 = vmatmul.mubr.bf16.gmra.mxu0 %v900
        %v936 = vpop.f32.mrf.mxu0
        %v937 = vadd.f32 0.0, %v936
        %v938 = vpop.f32.mrf.mxu0
        %v939 = vpop.f32.mrf.mxu0
        %v940 = vpop.f32.mrf.mxu0
        %941 = vdwg.mxu0
        %v942 = vadd.f32 %v896, %v937
        %v943 = vxor.u32 %v942, 2147483648
        %v944 = vmul.f32 %v943, 1.442695
        %v945 = vpow.pop %v944
        %v946 = vadd.f32 %v945, 1.0
        %v947 = vrcp.pop %v946
        %v948 = vmul.f32 1.0, %v947
        %v949 = vtanh.pop %v942
        %v950 = vmul.f32 %v948, %v884
        %952 = vrot.lane.b32.xlu0 %v949, 64
        %v953 = vpop.permute.xlu0 %952
        %v955 = vmul.f32 %v948, %v953
        %957 = vrot.lane.b32.xlu0 %v955, 32
        %v958 = vpop.permute.xlu0 %957
        %v960 = vadd.f32 %v950, %v958
        %v961 = vtanh.pop %v960
        %963 = vrot.lane.b32.xlu0 %v961, 64
        %v964 = vpop.permute.xlu0 %963
        %v966 = vmul.f32 %v948, %v964
        %p967 = scmp.gt.s32.totalorder %s548, 2
        %s968 = scalar_select %p967, 1, 0
        %v969 = vstv %s968
        %vm970 = vcmp.eq.s32.totalorder %v969, 1
        %v971 = vsel %vm970, %v966, %v883
        %v972 = vsel %vm970, %v960, %v884
        %v973 = vpack.c.bf16 %v971, %v971
        %v975 = vunpack.c.l.b16 %v973
        %v976 = vpack.c.b16 %v975, %v975
        %977 = vrot.lane.b32.xlu0 %v976, 32
        %v978 = vpop.permute.xlu0 %977
        %s980 = scalar_lea.vmem [#allocation2], 8
        %981 = vst.msk [vmem:[%s980] sm:$0xf] %vm804, %v978
        %s982 = scalar_lea.vmem [#allocation3], 12
        %v983 = vld [vmem:[%s982] sm:$0xf]
        %v984 = vunpack.c.l.bf16 %v983
        %985 = vrot.lane.b32.xlu0 %v973, 32
        %v986 = vpop.permute.xlu0 %985
        %v988 = vsel %vm600, %v986, 0
        %990 = vmatprep.subr.bf16.mxu0 0
        %991 = vmatpush1.bf16.msra.mxu0 0
        %992 = vmatprep.subr.bf16.mxu0 0
        %993 = vmatpush1.bf16.msra.mxu0 0
        %994 = vmatprep.subr.bf16.mxu0 0
        %995 = vmatpush1.bf16.msra.mxu0 0
        %996 = vmatprep.subr.bf16.mxu0 0
        %997 = vmatpush1.bf16.msra.mxu0 0
        %998 = vmatprep.subr.bf16.mxu0 0
        %999 = vmatpush1.bf16.msra.mxu0 0
        %1000 = vmatprep.subr.bf16.mxu0 0
        %1001 = vmatpush1.bf16.msra.mxu0 0
        %1002 = vmatprep.subr.bf16.mxu0 0
        %1003 = vmatpush1.bf16.msra.mxu0 %v712
        %1004 = vmatprep.subr.bf16.mxu0 0
        %1005 = vmatpush1.bf16.msra.mxu0 %v711
        %1006 = vmatprep.subr.bf16.mxu0 0
        %1007 = vmatpush2.bf16.msra.mxu0 0
        %1008 = vmatprep.subr.bf16.mxu0 0
        %1009 = vmatpush2.bf16.msra.mxu0 0
        %1010 = vmatprep.subr.bf16.mxu0 0
        %1011 = vmatpush2.bf16.msra.mxu0 0
        %1012 = vmatprep.subr.bf16.mxu0 0
        %1013 = vmatpush2.bf16.msra.mxu0 0
        %1014 = vmatprep.subr.bf16.mxu0 0
        %1015 = vmatpush2.bf16.msra.mxu0 0
        %1016 = vmatprep.subr.bf16.mxu0 0
        %1017 = vmatpush2.bf16.msra.mxu0 0
        %1018 = vmatprep.subr.bf16.mxu0 0
        %1019 = vmatpush2.bf16.msra.mxu0 0
        %1020 = vmatprep.subr.bf16.mxu0 0
        %1021 = vmatpush2.bf16.msra.mxu0 0
        %1022 = vmatprep.mubr.bf16.mxu0 0
        %1023 = vmatmul.mubr.bf16.gmra.mxu0 %v988
        %v1024 = vpop.f32.mrf.mxu0
        %v1025 = vadd.f32 0.0, %v1024
        %v1026 = vpop.f32.mrf.mxu0
        %v1027 = vpop.f32.mrf.mxu0
        %v1028 = vpop.f32.mrf.mxu0
        %1029 = vdwg.mxu0
        %v1030 = vadd.f32 %v984, %v1025
        %v1031 = vxor.u32 %v1030, 2147483648
        %v1032 = vmul.f32 %v1031, 1.442695
        %v1033 = vpow.pop %v1032
        %v1034 = vadd.f32 %v1033, 1.0
        %v1035 = vrcp.pop %v1034
        %v1036 = vmul.f32 1.0, %v1035
        %v1037 = vtanh.pop %v1030
        %v1038 = vmul.f32 %v1036, %v972
        %1040 = vrot.lane.b32.xlu0 %v1037, 64
        %v1041 = vpop.permute.xlu0 %1040
        %v1043 = vmul.f32 %v1036, %v1041
        %1045 = vrot.lane.b32.xlu0 %v1043, 32
        %v1046 = vpop.permute.xlu0 %1045
        %v1048 = vadd.f32 %v1038, %v1046
        %v1049 = vtanh.pop %v1048
        %1051 = vrot.lane.b32.xlu0 %v1049, 64
        %v1052 = vpop.permute.xlu0 %1051
        %v1054 = vmul.f32 %v1036, %v1052
        %p1055 = scmp.gt.s32.totalorder %s548, 3
        %s1056 = scalar_select %p1055, 1, 0
        %v1057 = vstv %s1056
        %vm1058 = vcmp.eq.s32.totalorder %v1057, 1
        %v1059 = vsel %vm1058, %v1054, %v971
        %v1060 = vsel %vm1058, %v1048, %v972
        %v1061 = vpack.c.bf16 %v1059, %v1059
        %v1063 = vunpack.c.l.b16 %v1061
        %v1064 = vpack.c.b16 %v1063, %v1063
        %1065 = vrot.lane.b32.xlu0 %v1064, 32
        %v1066 = vpop.permute.xlu0 %1065
        %s1068 = scalar_lea.vmem [#allocation2], 12
        %1069 = vst.msk [vmem:[%s1068] sm:$0xf] %vm804, %v1066
        %s1070 = scalar_lea.vmem [#allocation3], 16
        %v1071 = vld [vmem:[%s1070] sm:$0xf]
        %v1072 = vunpack.c.l.bf16 %v1071
        %1073 = vrot.lane.b32.xlu0 %v1061, 32
        %v1074 = vpop.permute.xlu0 %1073
        %v1076 = vsel %vm600, %v1074, 0
        %1078 = vmatprep.subr.bf16.mxu0 0
        %1079 = vmatpush1.bf16.msra.mxu0 0
        %1080 = vmatprep.subr.bf16.mxu0 0
        %1081 = vmatpush1.bf16.msra.mxu0 0
        %1082 = vmatprep.subr.bf16.mxu0 0
        %1083 = vmatpush1.bf16.msra.mxu0 0
        %1084 = vmatprep.subr.bf16.mxu0 0
        %1085 = vmatpush1.bf16.msra.mxu0 0
        %1086 = vmatprep.subr.bf16.mxu0 0
        %1087 = vmatpush1.bf16.msra.mxu0 0
        %1088 = vmatprep.subr.bf16.mxu0 0
        %1089 = vmatpush1.bf16.msra.mxu0 0
        %1090 = vmatprep.subr.bf16.mxu0 0
        %1091 = vmatpush1.bf16.msra.mxu0 %v712
        %1092 = vmatprep.subr.bf16.mxu0 0
        %1093 = vmatpush1.bf16.msra.mxu0 %v711
        %1094 = vmatprep.subr.bf16.mxu0 0
        %1095 = vmatpush2.bf16.msra.mxu0 0
        %1096 = vmatprep.subr.bf16.mxu0 0
        %1097 = vmatpush2.bf16.msra.mxu0 0
        %1098 = vmatprep.subr.bf16.mxu0 0
        %1099 = vmatpush2.bf16.msra.mxu0 0
        %1100 = vmatprep.subr.bf16.mxu0 0
        %1101 = vmatpush2.bf16.msra.mxu0 0
        %1102 = vmatprep.subr.bf16.mxu0 0
        %1103 = vmatpush2.bf16.msra.mxu0 0
        %1104 = vmatprep.subr.bf16.mxu0 0
        %1105 = vmatpush2.bf16.msra.mxu0 0
        %1106 = vmatprep.subr.bf16.mxu0 0
        %1107 = vmatpush2.bf16.msra.mxu0 0
        %1108 = vmatprep.subr.bf16.mxu0 0
        %1109 = vmatpush2.bf16.msra.mxu0 0
        %1110 = vmatprep.mubr.bf16.mxu0 0
        %1111 = vmatmul.mubr.bf16.gmra.mxu0 %v1076
        %v1112 = vpop.f32.mrf.mxu0
        %v1113 = vadd.f32 0.0, %v1112
        %v1114 = vpop.f32.mrf.mxu0
        %v1115 = vpop.f32.mrf.mxu0
        %v1116 = vpop.f32.mrf.mxu0
        %1117 = vdwg.mxu0
        %v1118 = vadd.f32 %v1072, %v1113
        %v1119 = vxor.u32 %v1118, 2147483648
        %v1120 = vmul.f32 %v1119, 1.442695
        %v1121 = vpow.pop %v1120
        %v1122 = vadd.f32 %v1121, 1.0
        %v1123 = vrcp.pop %v1122
        %v1124 = vmul.f32 1.0, %v1123
        %v1125 = vtanh.pop %v1118
        %v1126 = vmul.f32 %v1124, %v1060
        %1128 = vrot.lane.b32.xlu0 %v1125, 64
        %v1129 = vpop.permute.xlu0 %1128
        %v1131 = vmul.f32 %v1124, %v1129
        %1133 = vrot.lane.b32.xlu0 %v1131, 32
        %v1134 = vpop.permute.xlu0 %1133
        %v1136 = vadd.f32 %v1126, %v1134
        %v1137 = vtanh.pop %v1136
        %1139 = vrot.lane.b32.xlu0 %v1137, 64
        %v1140 = vpop.permute.xlu0 %1139
        %v1142 = vmul.f32 %v1124, %v1140
        %p1143 = scmp.gt.s32.totalorder %s548, 4
        %s1144 = scalar_select %p1143, 1, 0
        %v1145 = vstv %s1144
        %vm1146 = vcmp.eq.s32.totalorder %v1145, 1
        %v1147 = vsel %vm1146, %v1142, %v1059
        %v1148 = vsel %vm1146, %v1136, %v1060
        %v1149 = vpack.c.bf16 %v1147, %v1147
        %v1151 = vunpack.c.l.b16 %v1149
        %v1152 = vpack.c.b16 %v1151, %v1151
        %1153 = vrot.lane.b32.xlu0 %v1152, 32
        %v1154 = vpop.permute.xlu0 %1153
        %s1156 = scalar_lea.vmem [#allocation2], 16
        %1157 = vst.msk [vmem:[%s1156] sm:$0xf] %vm804, %v1154
        %s1158 = scalar_lea.vmem [#allocation3], 20
        %v1159 = vld [vmem:[%s1158] sm:$0xf]
        %v1160 = vunpack.c.l.bf16 %v1159
        %1161 = vrot.lane.b32.xlu0 %v1149, 32
        %v1162 = vpop.permute.xlu0 %1161
        %v1164 = vsel %vm600, %v1162, 0
        %1166 = vmatprep.subr.bf16.mxu0 0
        %1167 = vmatpush1.bf16.msra.mxu0 0
        %1168 = vmatprep.subr.bf16.mxu0 0
        %1169 = vmatpush1.bf16.msra.mxu0 0
        %1170 = vmatprep.subr.bf16.mxu0 0
        %1171 = vmatpush1.bf16.msra.mxu0 0
        %1172 = vmatprep.subr.bf16.mxu0 0
        %1173 = vmatpush1.bf16.msra.mxu0 0
        %1174 = vmatprep.subr.bf16.mxu0 0
        %1175 = vmatpush1.bf16.msra.mxu0 0
        %1176 = vmatprep.subr.bf16.mxu0 0
        %1177 = vmatpush1.bf16.msra.mxu0 0
        %1178 = vmatprep.subr.bf16.mxu0 0
        %1179 = vmatpush1.bf16.msra.mxu0 %v712
        %1180 = vmatprep.subr.bf16.mxu0 0
        %1181 = vmatpush1.bf16.msra.mxu0 %v711
        %1182 = vmatprep.subr.bf16.mxu0 0
        %1183 = vmatpush2.bf16.msra.mxu0 0
        %1184 = vmatprep.subr.bf16.mxu0 0
        %1185 = vmatpush2.bf16.msra.mxu0 0
        %1186 = vmatprep.subr.bf16.mxu0 0
        %1187 = vmatpush2.bf16.msra.mxu0 0
        %1188 = vmatprep.subr.bf16.mxu0 0
        %1189 = vmatpush2.bf16.msra.mxu0 0
        %1190 = vmatprep.subr.bf16.mxu0 0
        %1191 = vmatpush2.bf16.msra.mxu0 0
        %1192 = vmatprep.subr.bf16.mxu0 0
        %1193 = vmatpush2.bf16.msra.mxu0 0
        %1194 = vmatprep.subr.bf16.mxu0 0
        %1195 = vmatpush2.bf16.msra.mxu0 0
        %1196 = vmatprep.subr.bf16.mxu0 0
        %1197 = vmatpush2.bf16.msra.mxu0 0
        %1198 = vmatprep.mubr.bf16.mxu0 0
        %1199 = vmatmul.mubr.bf16.gmra.mxu0 %v1164
        %v1200 = vpop.f32.mrf.mxu0
        %v1201 = vadd.f32 0.0, %v1200
        %v1202 = vpop.f32.mrf.mxu0
        %v1203 = vpop.f32.mrf.mxu0
        %v1204 = vpop.f32.mrf.mxu0
        %1205 = vdwg.mxu0
        %v1206 = vadd.f32 %v1160, %v1201
        %v1207 = vxor.u32 %v1206, 2147483648
        %v1208 = vmul.f32 %v1207, 1.442695
        %v1209 = vpow.pop %v1208
        %v1210 = vadd.f32 %v1209, 1.0
        %v1211 = vrcp.pop %v1210
        %v1212 = vmul.f32 1.0, %v1211
        %v1213 = vtanh.pop %v1206
        %v1214 = vmul.f32 %v1212, %v1148
        %1216 = vrot.lane.b32.xlu0 %v1213, 64
        %v1217 = vpop.permute.xlu0 %1216
        %v1219 = vmul.f32 %v1212, %v1217
        %1221 = vrot.lane.b32.xlu0 %v1219, 32
        %v1222 = vpop.permute.xlu0 %1221
        %v1224 = vadd.f32 %v1214, %v1222
        %v1225 = vtanh.pop %v1224
        %1227 = vrot.lane.b32.xlu0 %v1225, 64
        %v1228 = vpop.permute.xlu0 %1227
        %v1230 = vmul.f32 %v1212, %v1228
        %p1231 = scmp.gt.s32.totalorder %s548, 5
        %s1232 = scalar_select %p1231, 1, 0
        %v1233 = vstv %s1232
        %vm1234 = vcmp.eq.s32.totalorder %v1233, 1
        %v1235 = vsel %vm1234, %v1230, %v1147
        %v1236 = vsel %vm1234, %v1224, %v1148
        %v1237 = vpack.c.bf16 %v1235, %v1235
        %v1239 = vunpack.c.l.b16 %v1237
        %v1240 = vpack.c.b16 %v1239, %v1239
        %1241 = vrot.lane.b32.xlu0 %v1240, 32
        %v1242 = vpop.permute.xlu0 %1241
        %s1244 = scalar_lea.vmem [#allocation2], 20
        %1245 = vst.msk [vmem:[%s1244] sm:$0xf] %vm804, %v1242
        %s1246 = scalar_lea.vmem [#allocation3], 24
        %v1247 = vld [vmem:[%s1246] sm:$0xf]
        %v1248 = vunpack.c.l.bf16 %v1247
        %1249 = vrot.lane.b32.xlu0 %v1237, 32
        %v1250 = vpop.permute.xlu0 %1249
        %v1252 = vsel %vm600, %v1250, 0
        %1254 = vmatprep.subr.bf16.mxu0 0
        %1255 = vmatpush1.bf16.msra.mxu0 0
        %1256 = vmatprep.subr.bf16.mxu0 0
        %1257 = vmatpush1.bf16.msra.mxu0 0
        %1258 = vmatprep.subr.bf16.mxu0 0
        %1259 = vmatpush1.bf16.msra.mxu0 0
        %1260 = vmatprep.subr.bf16.mxu0 0
        %1261 = vmatpush1.bf16.msra.mxu0 0
        %1262 = vmatprep.subr.bf16.mxu0 0
        %1263 = vmatpush1.bf16.msra.mxu0 0
        %1264 = vmatprep.subr.bf16.mxu0 0
        %1265 = vmatpush1.bf16.msra.mxu0 0
        %1266 = vmatprep.subr.bf16.mxu0 0
        %1267 = vmatpush1.bf16.msra.mxu0 %v712
        %1268 = vmatprep.subr.bf16.mxu0 0
        %1269 = vmatpush1.bf16.msra.mxu0 %v711
        %1270 = vmatprep.subr.bf16.mxu0 0
        %1271 = vmatpush2.bf16.msra.mxu0 0
        %1272 = vmatprep.subr.bf16.mxu0 0
        %1273 = vmatpush2.bf16.msra.mxu0 0
        %1274 = vmatprep.subr.bf16.mxu0 0
        %1275 = vmatpush2.bf16.msra.mxu0 0
        %1276 = vmatprep.subr.bf16.mxu0 0
        %1277 = vmatpush2.bf16.msra.mxu0 0
        %1278 = vmatprep.subr.bf16.mxu0 0
        %1279 = vmatpush2.bf16.msra.mxu0 0
        %1280 = vmatprep.subr.bf16.mxu0 0
        %1281 = vmatpush2.bf16.msra.mxu0 0
        %1282 = vmatprep.subr.bf16.mxu0 0
        %1283 = vmatpush2.bf16.msra.mxu0 0
        %1284 = vmatprep.subr.bf16.mxu0 0
        %1285 = vmatpush2.bf16.msra.mxu0 0
        %1286 = vmatprep.mubr.bf16.mxu0 0
        %1287 = vmatmul.mubr.bf16.gmra.mxu0 %v1252
        %v1288 = vpop.f32.mrf.mxu0
        %v1289 = vadd.f32 0.0, %v1288
        %v1290 = vpop.f32.mrf.mxu0
        %v1291 = vpop.f32.mrf.mxu0
        %v1292 = vpop.f32.mrf.mxu0
        %1293 = vdwg.mxu0
        %v1294 = vadd.f32 %v1248, %v1289
        %v1295 = vxor.u32 %v1294, 2147483648
        %v1296 = vmul.f32 %v1295, 1.442695
        %v1297 = vpow.pop %v1296
        %v1298 = vadd.f32 %v1297, 1.0
        %v1299 = vrcp.pop %v1298
        %v1300 = vmul.f32 1.0, %v1299
        %v1301 = vtanh.pop %v1294
        %v1302 = vmul.f32 %v1300, %v1236
        %1304 = vrot.lane.b32.xlu0 %v1301, 64
        %v1305 = vpop.permute.xlu0 %1304
        %v1307 = vmul.f32 %v1300, %v1305
        %1309 = vrot.lane.b32.xlu0 %v1307, 32
        %v1310 = vpop.permute.xlu0 %1309
        %v1312 = vadd.f32 %v1302, %v1310
        %v1313 = vtanh.pop %v1312
        %1315 = vrot.lane.b32.xlu0 %v1313, 64
        %v1316 = vpop.permute.xlu0 %1315
        %v1318 = vmul.f32 %v1300, %v1316
        %p1319 = scmp.gt.s32.totalorder %s548, 6
        %s1320 = scalar_select %p1319, 1, 0
        %v1321 = vstv %s1320
        %vm1322 = vcmp.eq.s32.totalorder %v1321, 1
        %v1323 = vsel %vm1322, %v1318, %v1235
        %v1324 = vsel %vm1322, %v1312, %v1236
        %v1325 = vpack.c.bf16 %v1323, %v1323
        %v1327 = vunpack.c.l.b16 %v1325
        %v1328 = vpack.c.b16 %v1327, %v1327
        %1329 = vrot.lane.b32.xlu0 %v1328, 32
        %v1330 = vpop.permute.xlu0 %1329
        %s1332 = scalar_lea.vmem [#allocation2], 24
        %1333 = vst.msk [vmem:[%s1332] sm:$0xf] %vm804, %v1330
        %s1334 = scalar_lea.vmem [#allocation3], 28
        %v1335 = vld [vmem:[%s1334] sm:$0xf]
        %v1336 = vunpack.c.l.bf16 %v1335
        %1337 = vrot.lane.b32.xlu0 %v1325, 32
        %v1338 = vpop.permute.xlu0 %1337
        %v1340 = vsel %vm600, %v1338, 0
        %1342 = vmatprep.subr.bf16.mxu0 0
        %1343 = vmatpush1.bf16.msra.mxu0 0
        %1344 = vmatprep.subr.bf16.mxu0 0
        %1345 = vmatpush1.bf16.msra.mxu0 0
        %1346 = vmatprep.subr.bf16.mxu0 0
        %1347 = vmatpush1.bf16.msra.mxu0 0
        %1348 = vmatprep.subr.bf16.mxu0 0
        %1349 = vmatpush1.bf16.msra.mxu0 0
        %1350 = vmatprep.subr.bf16.mxu0 0
        %1351 = vmatpush1.bf16.msra.mxu0 0
        %1352 = vmatprep.subr.bf16.mxu0 0
        %1353 = vmatpush1.bf16.msra.mxu0 0
        %1354 = vmatprep.subr.bf16.mxu0 0
        %1355 = vmatpush1.bf16.msra.mxu0 %v712
        %1356 = vmatprep.subr.bf16.mxu0 0
        %1357 = vmatpush1.bf16.msra.mxu0 %v711
        %1358 = vmatprep.subr.bf16.mxu0 0
        %1359 = vmatpush2.bf16.msra.mxu0 0
        %1360 = vmatprep.subr.bf16.mxu0 0
        %1361 = vmatpush2.bf16.msra.mxu0 0
        %1362 = vmatprep.subr.bf16.mxu0 0
        %1363 = vmatpush2.bf16.msra.mxu0 0
        %1364 = vmatprep.subr.bf16.mxu0 0
        %1365 = vmatpush2.bf16.msra.mxu0 0
        %1366 = vmatprep.subr.bf16.mxu0 0
        %1367 = vmatpush2.bf16.msra.mxu0 0
        %1368 = vmatprep.subr.bf16.mxu0 0
        %1369 = vmatpush2.bf16.msra.mxu0 0
        %1370 = vmatprep.subr.bf16.mxu0 0
        %1371 = vmatpush2.bf16.msra.mxu0 0
        %1372 = vmatprep.subr.bf16.mxu0 0
        %1373 = vmatpush2.bf16.msra.mxu0 0
        %1374 = vmatprep.mubr.bf16.mxu0 0
        %1375 = vmatmul.mubr.bf16.gmra.mxu0 %v1340
        %v1376 = vpop.f32.mrf.mxu0
        %v1377 = vadd.f32 0.0, %v1376
        %v1378 = vpop.f32.mrf.mxu0
        %v1379 = vpop.f32.mrf.mxu0
        %v1380 = vpop.f32.mrf.mxu0
        %1381 = vdwg.mxu0
        %v1382 = vadd.f32 %v1336, %v1377
        %v1383 = vxor.u32 %v1382, 2147483648
        %v1384 = vmul.f32 %v1383, 1.442695
        %v1385 = vpow.pop %v1384
        %v1386 = vadd.f32 %v1385, 1.0
        %v1387 = vrcp.pop %v1386
        %v1388 = vmul.f32 1.0, %v1387
        %v1389 = vtanh.pop %v1382
        %v1390 = vmul.f32 %v1388, %v1324
        %1392 = vrot.lane.b32.xlu0 %v1389, 64
        %v1393 = vpop.permute.xlu0 %1392
        %v1395 = vmul.f32 %v1388, %v1393
        %1397 = vrot.lane.b32.xlu0 %v1395, 32
        %v1398 = vpop.permute.xlu0 %1397
        %v1400 = vadd.f32 %v1390, %v1398
        %v1401 = vtanh.pop %v1400
        %1403 = vrot.lane.b32.xlu0 %v1401, 64
        %v1404 = vpop.permute.xlu0 %1403
        %v1406 = vmul.f32 %v1388, %v1404
        %p1407 = scmp.gt.s32.totalorder %s548, 7
        %s1408 = scalar_select %p1407, 1, 0
        %v1409 = vstv %s1408
        %vm1410 = vcmp.eq.s32.totalorder %v1409, 1
        %v1411 = vsel %vm1410, %v1406, %v1323
        %v1412 = vsel %vm1410, %v1400, %v1324
        %v1413 = vpack.c.bf16 %v1411, %v1411
        %v1415 = vunpack.c.l.b16 %v1413
        %v1416 = vpack.c.b16 %v1415, %v1415
        %1417 = vrot.lane.b32.xlu0 %v1416, 32
        %v1418 = vpop.permute.xlu0 %1417
        %s1420 = scalar_lea.vmem [#allocation2], 28
        %1421 = vst.msk [vmem:[%s1420] sm:$0xf] %vm804, %v1418
        %1423 = vrot.lane.b32.xlu0 %v1411, 32
        %v1424 = vpop.permute.xlu0 %1423
        %1426 = vst.msk [vmem:[#allocation4] sm:$0xff] %vm600, %v1424
        %1428 = vrot.lane.b32.xlu0 %v1412, 96
        %v1429 = vpop.permute.xlu0 %1428
        %1431 = vst.msk [vmem:[#allocation5] sm:$0xff] %vm600, %v1429
        %v1432 = vld [vmem:[#allocation2] sm:$0xf]
        %v1433 = vld [vmem:[#allocation2 + $0x4] sm:$0xf]
        %v1434 = vld [vmem:[#allocation2 + $0x8] sm:$0xf]
        %v1435 = vld [vmem:[#allocation2 + $0xc] sm:$0xf]
        %v1436 = vld [vmem:[#allocation2 + $0x10] sm:$0xf]
        %v1437 = vld [vmem:[#allocation2 + $0x14] sm:$0xf]
        %v1438 = vld [vmem:[#allocation2 + $0x18] sm:$0xf]
        %v1439 = vld [vmem:[#allocation2 + $0x1c] sm:$0xf]
        %v1440 = vld [vmem:[#allocation12] sm:$0xf]
        %v1441 = vld [vmem:[#allocation12 + $0x4] sm:$0xf]
        %v1442 = vld [vmem:[#allocation12 + $0x8] sm:$0xf]
        %v1443 = vld [vmem:[#allocation12 + $0xc] sm:$0xf]
        %v1444 = vld [vmem:[%s6] sm:$0x1]
        %v1446 = vlaneseq
        %v1447 = vshrl.u32 %v1446, 7
        %v1448 = vsub.s32 0, %v1447
        %v1449 = vrot.slane %v1444, %v1448
        %v1459 = vunpack.c.l.b16 %v1432
        %v1460 = vunpack.c.l.b16 %v1433
        %v1461 = vunpack.c.l.b16 %v1434
        %v1462 = vunpack.c.l.b16 %v1435
        %v1463 = vunpack.c.l.b16 %v1436
        %v1464 = vunpack.c.l.b16 %v1437
        %v1465 = vunpack.c.l.b16 %v1438
        %v1466 = vunpack.c.l.b16 %v1439
        %v1467 = vpack.c.b16 %v1460, %v1459
        %v1468 = vpack.c.b16 %v1462, %v1461
        %v1469 = vpack.c.b16 %v1464, %v1463
        %v1470 = vpack.c.b16 %v1466, %v1465
        %v1475 = vunpack.c.l.b16 %v1440
        %v1476 = vunpack.c.l.b16 %v1441
        %v1477 = vunpack.c.l.b16 %v1442
        %v1478 = vunpack.c.l.b16 %v1443
        %v1479 = vpack.c.b16 %v1476, %v1475
        %v1480 = vpack.c.b16 %v1478, %v1477
        %v1484 = vsel %vm600, %v1467, 0
        %v1487 = vsel %vm600, %v1468, 0
        %v1490 = vsel %vm600, %v1469, 0
        %v1493 = vsel %vm600, %v1470, 0
        %1495 = vmatprep.subr.bf16.mxu0 0
        %1496 = vmatpush1.bf16.msra.mxu0 0
        %1497 = vmatprep.subr.bf16.mxu0 0
        %1498 = vmatpush1.bf16.msra.mxu0 0
        %1499 = vmatprep.subr.bf16.mxu0 0
        %1500 = vmatpush1.bf16.msra.mxu0 0
        %1501 = vmatprep.subr.bf16.mxu0 0
        %1502 = vmatpush1.bf16.msra.mxu0 0
        %1503 = vmatprep.subr.bf16.mxu0 0
        %1504 = vmatpush1.bf16.msra.mxu0 0
        %1505 = vmatprep.subr.bf16.mxu0 0
        %1506 = vmatpush1.bf16.msra.mxu0 0
        %1507 = vmatprep.subr.bf16.mxu0 0
        %1508 = vmatpush1.bf16.msra.mxu0 %v1480
        %1509 = vmatprep.subr.bf16.mxu0 0
        %1510 = vmatpush1.bf16.msra.mxu0 %v1479
        %1511 = vmatprep.subr.bf16.mxu0 0
        %1512 = vmatpush2.bf16.msra.mxu0 0
        %1513 = vmatprep.subr.bf16.mxu0 0
        %1514 = vmatpush2.bf16.msra.mxu0 0
        %1515 = vmatprep.subr.bf16.mxu0 0
        %1516 = vmatpush2.bf16.msra.mxu0 0
        %1517 = vmatprep.subr.bf16.mxu0 0
        %1518 = vmatpush2.bf16.msra.mxu0 0
        %1519 = vmatprep.subr.bf16.mxu0 0
        %1520 = vmatpush2.bf16.msra.mxu0 0
        %1521 = vmatprep.subr.bf16.mxu0 0
        %1522 = vmatpush2.bf16.msra.mxu0 0
        %1523 = vmatprep.subr.bf16.mxu0 0
        %1524 = vmatpush2.bf16.msra.mxu0 0
        %1525 = vmatprep.subr.bf16.mxu0 0
        %1526 = vmatpush2.bf16.msra.mxu0 0
        %1527 = vmatprep.mubr.bf16.mxu0 0
        %1528 = vmatmul.mubr.bf16.gmra.mxu0 %v1484
        %v1529 = vpop.f32.mrf.mxu0
        %v1530 = vadd.f32 %v1449, %v1529
        %v1531 = vpop.f32.mrf.mxu0
        %v1532 = vpop.f32.mrf.mxu0
        %v1533 = vadd.f32 %v1449, %v1532
        %v1534 = vpop.f32.mrf.mxu0
        %1535 = vmatprep.mubr.bf16.mxu0 0
        %1536 = vmatmul.mubr.bf16.gmra.mxu0 %v1487
        %v1537 = vpop.f32.mrf.mxu0
        %v1538 = vadd.f32 %v1449, %v1537
        %v1539 = vpop.f32.mrf.mxu0
        %v1540 = vpop.f32.mrf.mxu0
        %v1541 = vadd.f32 %v1449, %v1540
        %v1542 = vpop.f32.mrf.mxu0
        %1543 = vmatprep.mubr.bf16.mxu0 0
        %1544 = vmatmul.mubr.bf16.gmra.mxu0 %v1490
        %v1545 = vpop.f32.mrf.mxu0
        %v1546 = vadd.f32 %v1449, %v1545
        %v1547 = vpop.f32.mrf.mxu0
        %v1548 = vpop.f32.mrf.mxu0
        %v1549 = vadd.f32 %v1449, %v1548
        %v1550 = vpop.f32.mrf.mxu0
        %1551 = vmatprep.mubr.bf16.mxu0 0
        %1552 = vmatmul.mubr.bf16.gmra.mxu0 %v1493
        %v1553 = vpop.f32.mrf.mxu0
        %v1554 = vadd.f32 %v1449, %v1553
        %v1555 = vpop.f32.mrf.mxu0
        %v1556 = vpop.f32.mrf.mxu0
        %v1557 = vadd.f32 %v1449, %v1556
        %v1558 = vpop.f32.mrf.mxu0
        %1559 = vdwg.mxu0
        %v1560 = vpack.c.bf16 %v1530, %v1530
        %v1561 = vpack.c.bf16 %v1533, %v1533
        %v1562 = vpack.c.bf16 %v1538, %v1538
        %v1563 = vpack.c.bf16 %v1541, %v1541
        %v1564 = vpack.c.bf16 %v1546, %v1546
        %v1565 = vpack.c.bf16 %v1549, %v1549
        %v1566 = vpack.c.bf16 %v1554, %v1554
        %v1567 = vpack.c.bf16 %v1557, %v1557
        %1568 = vst [vmem:[#allocation3] sm:$0xf] %v1560
        %1569 = vst [vmem:[#allocation3 + $0x4] sm:$0xf] %v1561
        %1570 = vst [vmem:[#allocation3 + $0x8] sm:$0xf] %v1562
        %1571 = vst [vmem:[#allocation3 + $0xc] sm:$0xf] %v1563
        %1572 = vst [vmem:[#allocation3 + $0x10] sm:$0xf] %v1564
        %1573 = vst [vmem:[#allocation3 + $0x14] sm:$0xf] %v1565
        %1574 = vst [vmem:[#allocation3 + $0x18] sm:$0xf] %v1566
        %1575 = vst [vmem:[#allocation3 + $0x1c] sm:$0xf] %v1567
        %v1576 = vld [vmem:[#allocation14] sm:$0xf]
        %v1577 = vld [vmem:[#allocation14 + $0x4] sm:$0xf]
        %v1578 = vld [vmem:[#allocation14 + $0x8] sm:$0xf]
        %v1579 = vld [vmem:[#allocation14 + $0xc] sm:$0xf]
        %s1580 = scalar_lea.vmem [#allocation4], 8
        %v1581 = vld [vmem:[%s1580] sm:$0xff]
        %s1582 = scalar_lea.vmem [#allocation5], 8
        %v1583 = vld [vmem:[%s1582] sm:$0xff]
        %v1584 = vld [vmem:[#allocation3] sm:$0xf]
        %v1585 = vunpack.c.l.bf16 %v1584
        %v1586 = vpack.c.bf16 %v1581, %v1581
        %v1591 = vunpack.c.l.b16 %v1576
        %v1592 = vunpack.c.l.b16 %v1577
        %v1593 = vunpack.c.l.b16 %v1578
        %v1594 = vunpack.c.l.b16 %v1579
        %v1595 = vpack.c.b16 %v1592, %v1591
        %v1596 = vpack.c.b16 %v1594, %v1593
        %v1600 = vsel %vm600, %v1586, 0
        %1602 = vmatprep.subr.bf16.mxu0 0
        %1603 = vmatpush1.bf16.msra.mxu0 0
        %1604 = vmatprep.subr.bf16.mxu0 0
        %1605 = vmatpush1.bf16.msra.mxu0 0
        %1606 = vmatprep.subr.bf16.mxu0 0
        %1607 = vmatpush1.bf16.msra.mxu0 0
        %1608 = vmatprep.subr.bf16.mxu0 0
        %1609 = vmatpush1.bf16.msra.mxu0 0
        %1610 = vmatprep.subr.bf16.mxu0 0
        %1611 = vmatpush1.bf16.msra.mxu0 0
        %1612 = vmatprep.subr.bf16.mxu0 0
        %1613 = vmatpush1.bf16.msra.mxu0 0
        %1614 = vmatprep.subr.bf16.mxu0 0
        %1615 = vmatpush1.bf16.msra.mxu0 %v1596
        %1616 = vmatprep.subr.bf16.mxu0 0
        %1617 = vmatpush1.bf16.msra.mxu0 %v1595
        %1618 = vmatprep.subr.bf16.mxu0 0
        %1619 = vmatpush2.bf16.msra.mxu0 0
        %1620 = vmatprep.subr.bf16.mxu0 0
        %1621 = vmatpush2.bf16.msra.mxu0 0
        %1622 = vmatprep.subr.bf16.mxu0 0
        %1623 = vmatpush2.bf16.msra.mxu0 0
        %1624 = vmatprep.subr.bf16.mxu0 0
        %1625 = vmatpush2.bf16.msra.mxu0 0
        %1626 = vmatprep.subr.bf16.mxu0 0
        %1627 = vmatpush2.bf16.msra.mxu0 0
        %1628 = vmatprep.subr.bf16.mxu0 0
        %1629 = vmatpush2.bf16.msra.mxu0 0
        %1630 = vmatprep.subr.bf16.mxu0 0
        %1631 = vmatpush2.bf16.msra.mxu0 0
        %1632 = vmatprep.subr.bf16.mxu0 0
        %1633 = vmatpush2.bf16.msra.mxu0 0
        %1634 = vmatprep.mubr.bf16.mxu0 0
        %1635 = vmatmul.mubr.bf16.gmra.mxu0 %v1600
        %v1636 = vpop.f32.mrf.mxu0
        %v1637 = vadd.f32 0.0, %v1636
        %v1638 = vpop.f32.mrf.mxu0
        %v1639 = vpop.f32.mrf.mxu0
        %v1640 = vpop.f32.mrf.mxu0
        %1641 = vdwg.mxu0
        %v1642 = vadd.f32 %v1585, %v1637
        %v1643 = vxor.u32 %v1642, 2147483648
        %v1644 = vmul.f32 %v1643, 1.442695
        %v1645 = vpow.pop %v1644
        %v1646 = vadd.f32 %v1645, 1.0
        %v1647 = vrcp.pop %v1646
        %v1648 = vmul.f32 1.0, %v1647
        %v1649 = vtanh.pop %v1642
        %1651 = vrot.lane.b32.xlu0 %v1583, 32
        %v1652 = vpop.permute.xlu0 %1651
        %v1654 = vmul.f32 %v1648, %v1652
        %1656 = vrot.lane.b32.xlu0 %v1649, 64
        %v1657 = vpop.permute.xlu0 %1656
        %v1659 = vmul.f32 %v1648, %v1657
        %1661 = vrot.lane.b32.xlu0 %v1659, 32
        %v1662 = vpop.permute.xlu0 %1661
        %v1664 = vadd.f32 %v1654, %v1662
        %v1665 = vtanh.pop %v1664
        %1667 = vrot.lane.b32.xlu0 %v1665, 64
        %v1668 = vpop.permute.xlu0 %1667
        %v1670 = vmul.f32 %v1648, %v1668
        %1672 = vrot.lane.b32.xlu0 %v1581, 96
        %v1673 = vpop.permute.xlu0 %1672
        %v1675 = vsel %vm790, %v1670, %v1673
        %v1676 = vsel %vm790, %v1664, %v1652
        %1678 = vrot.lane.b32.xlu0 %v1675, 32
        %v1679 = vpop.permute.xlu0 %1678
        %1681 = vst.msk [vmem:[%s524] sm:$0xff] %vm600, %v1679
        %v1682 = vld [vmem:[%s806] sm:$0xf]
        %v1683 = vunpack.c.l.bf16 %v1682
        %v1684 = vpack.c.bf16 %v1675, %v1675
        %1686 = vrot.lane.b32.xlu0 %v1684, 32
        %v1687 = vpop.permute.xlu0 %1686
        %v1689 = vsel %vm600, %v1687, 0
        %1691 = vmatprep.subr.bf16.mxu0 0
        %1692 = vmatpush1.bf16.msra.mxu0 0
        %1693 = vmatprep.subr.bf16.mxu0 0
        %1694 = vmatpush1.bf16.msra.mxu0 0
        %1695 = vmatprep.subr.bf16.mxu0 0
        %1696 = vmatpush1.bf16.msra.mxu0 0
        %1697 = vmatprep.subr.bf16.mxu0 0
        %1698 = vmatpush1.bf16.msra.mxu0 0
        %1699 = vmatprep.subr.bf16.mxu0 0
        %1700 = vmatpush1.bf16.msra.mxu0 0
        %1701 = vmatprep.subr.bf16.mxu0 0
        %1702 = vmatpush1.bf16.msra.mxu0 0
        %1703 = vmatprep.subr.bf16.mxu0 0
        %1704 = vmatpush1.bf16.msra.mxu0 %v1596
        %1705 = vmatprep.subr.bf16.mxu0 0
        %1706 = vmatpush1.bf16.msra.mxu0 %v1595
        %1707 = vmatprep.subr.bf16.mxu0 0
        %1708 = vmatpush2.bf16.msra.mxu0 0
        %1709 = vmatprep.subr.bf16.mxu0 0
        %1710 = vmatpush2.bf16.msra.mxu0 0
        %1711 = vmatprep.subr.bf16.mxu0 0
        %1712 = vmatpush2.bf16.msra.mxu0 0
        %1713 = vmatprep.subr.bf16.mxu0 0
        %1714 = vmatpush2.bf16.msra.mxu0 0
        %1715 = vmatprep.subr.bf16.mxu0 0
        %1716 = vmatpush2.bf16.msra.mxu0 0
        %1717 = vmatprep.subr.bf16.mxu0 0
        %1718 = vmatpush2.bf16.msra.mxu0 0
        %1719 = vmatprep.subr.bf16.mxu0 0
        %1720 = vmatpush2.bf16.msra.mxu0 0
        %1721 = vmatprep.subr.bf16.mxu0 0
        %1722 = vmatpush2.bf16.msra.mxu0 0
        %1723 = vmatprep.mubr.bf16.mxu0 0
        %1724 = vmatmul.mubr.bf16.gmra.mxu0 %v1689
        %v1725 = vpop.f32.mrf.mxu0
        %v1726 = vadd.f32 0.0, %v1725
        %v1727 = vpop.f32.mrf.mxu0
        %v1728 = vpop.f32.mrf.mxu0
        %v1729 = vpop.f32.mrf.mxu0
        %1730 = vdwg.mxu0
        %v1731 = vadd.f32 %v1683, %v1726
        %v1732 = vxor.u32 %v1731, 2147483648
        %v1733 = vmul.f32 %v1732, 1.442695
        %v1734 = vpow.pop %v1733
        %v1735 = vadd.f32 %v1734, 1.0
        %v1736 = vrcp.pop %v1735
        %v1737 = vmul.f32 1.0, %v1736
        %v1738 = vtanh.pop %v1731
        %v1739 = vmul.f32 %v1737, %v1676
        %1741 = vrot.lane.b32.xlu0 %v1738, 64
        %v1742 = vpop.permute.xlu0 %1741
        %v1744 = vmul.f32 %v1737, %v1742
        %1746 = vrot.lane.b32.xlu0 %v1744, 32
        %v1747 = vpop.permute.xlu0 %1746
        %v1749 = vadd.f32 %v1739, %v1747
        %v1750 = vtanh.pop %v1749
        %1752 = vrot.lane.b32.xlu0 %v1750, 64
        %v1753 = vpop.permute.xlu0 %1752
        %v1755 = vmul.f32 %v1737, %v1753
        %v1756 = vsel %vm882, %v1755, %v1675
        %v1757 = vsel %vm882, %v1749, %v1676
        %1759 = vrot.lane.b32.xlu0 %v1756, 32
        %v1760 = vpop.permute.xlu0 %1759
        %s1762 = scalar_lea.vmem %s524, 8 [#allocation18]
        %1763 = vst.msk [vmem:[%s1762] sm:$0xff] %vm600, %v1760
        %v1764 = vld [vmem:[%s894] sm:$0xf]
        %v1765 = vunpack.c.l.bf16 %v1764
        %v1766 = vpack.c.bf16 %v1756, %v1756
        %1768 = vrot.lane.b32.xlu0 %v1766, 32
        %v1769 = vpop.permute.xlu0 %1768
        %v1771 = vsel %vm600, %v1769, 0
        %1773 = vmatprep.subr.bf16.mxu0 0
        %1774 = vmatpush1.bf16.msra.mxu0 0
        %1775 = vmatprep.subr.bf16.mxu0 0
        %1776 = vmatpush1.bf16.msra.mxu0 0
        %1777 = vmatprep.subr.bf16.mxu0 0
        %1778 = vmatpush1.bf16.msra.mxu0 0
        %1779 = vmatprep.subr.bf16.mxu0 0
        %1780 = vmatpush1.bf16.msra.mxu0 0
        %1781 = vmatprep.subr.bf16.mxu0 0
        %1782 = vmatpush1.bf16.msra.mxu0 0
        %1783 = vmatprep.subr.bf16.mxu0 0
        %1784 = vmatpush1.bf16.msra.mxu0 0
        %1785 = vmatprep.subr.bf16.mxu0 0
        %1786 = vmatpush1.bf16.msra.mxu0 %v1596
        %1787 = vmatprep.subr.bf16.mxu0 0
        %1788 = vmatpush1.bf16.msra.mxu0 %v1595
        %1789 = vmatprep.subr.bf16.mxu0 0
        %1790 = vmatpush2.bf16.msra.mxu0 0
        %1791 = vmatprep.subr.bf16.mxu0 0
        %1792 = vmatpush2.bf16.msra.mxu0 0
        %1793 = vmatprep.subr.bf16.mxu0 0
        %1794 = vmatpush2.bf16.msra.mxu0 0
        %1795 = vmatprep.subr.bf16.mxu0 0
        %1796 = vmatpush2.bf16.msra.mxu0 0
        %1797 = vmatprep.subr.bf16.mxu0 0
        %1798 = vmatpush2.bf16.msra.mxu0 0
        %1799 = vmatprep.subr.bf16.mxu0 0
        %1800 = vmatpush2.bf16.msra.mxu0 0
        %1801 = vmatprep.subr.bf16.mxu0 0
        %1802 = vmatpush2.bf16.msra.mxu0 0
        %1803 = vmatprep.subr.bf16.mxu0 0
        %1804 = vmatpush2.bf16.msra.mxu0 0
        %1805 = vmatprep.mubr.bf16.mxu0 0
        %1806 = vmatmul.mubr.bf16.gmra.mxu0 %v1771
        %v1807 = vpop.f32.mrf.mxu0
        %v1808 = vadd.f32 0.0, %v1807
        %v1809 = vpop.f32.mrf.mxu0
        %v1810 = vpop.f32.mrf.mxu0
        %v1811 = vpop.f32.mrf.mxu0
        %1812 = vdwg.mxu0
        %v1813 = vadd.f32 %v1765, %v1808
        %v1814 = vxor.u32 %v1813, 2147483648
        %v1815 = vmul.f32 %v1814, 1.442695
        %v1816 = vpow.pop %v1815
        %v1817 = vadd.f32 %v1816, 1.0
        %v1818 = vrcp.pop %v1817
        %v1819 = vmul.f32 1.0, %v1818
        %v1820 = vtanh.pop %v1813
        %v1821 = vmul.f32 %v1819, %v1757
        %1823 = vrot.lane.b32.xlu0 %v1820, 64
        %v1824 = vpop.permute.xlu0 %1823
        %v1826 = vmul.f32 %v1819, %v1824
        %1828 = vrot.lane.b32.xlu0 %v1826, 32
        %v1829 = vpop.permute.xlu0 %1828
        %v1831 = vadd.f32 %v1821, %v1829
        %v1832 = vtanh.pop %v1831
        %1834 = vrot.lane.b32.xlu0 %v1832, 64
        %v1835 = vpop.permute.xlu0 %1834
        %v1837 = vmul.f32 %v1819, %v1835
        %v1838 = vsel %vm970, %v1837, %v1756
        %v1839 = vsel %vm970, %v1831, %v1757
        %1841 = vrot.lane.b32.xlu0 %v1838, 32
        %v1842 = vpop.permute.xlu0 %1841
        %s1844 = scalar_lea.vmem %s524, 16 [#allocation18]
        %1845 = vst.msk [vmem:[%s1844] sm:$0xff] %vm600, %v1842
        %v1846 = vld [vmem:[%s982] sm:$0xf]
        %v1847 = vunpack.c.l.bf16 %v1846
        %v1848 = vpack.c.bf16 %v1838, %v1838
        %1850 = vrot.lane.b32.xlu0 %v1848, 32
        %v1851 = vpop.permute.xlu0 %1850
        %v1853 = vsel %vm600, %v1851, 0
        %1855 = vmatprep.subr.bf16.mxu0 0
        %1856 = vmatpush1.bf16.msra.mxu0 0
        %1857 = vmatprep.subr.bf16.mxu0 0
        %1858 = vmatpush1.bf16.msra.mxu0 0
        %1859 = vmatprep.subr.bf16.mxu0 0
        %1860 = vmatpush1.bf16.msra.mxu0 0
        %1861 = vmatprep.subr.bf16.mxu0 0
        %1862 = vmatpush1.bf16.msra.mxu0 0
        %1863 = vmatprep.subr.bf16.mxu0 0
        %1864 = vmatpush1.bf16.msra.mxu0 0
        %1865 = vmatprep.subr.bf16.mxu0 0
        %1866 = vmatpush1.bf16.msra.mxu0 0
        %1867 = vmatprep.subr.bf16.mxu0 0
        %1868 = vmatpush1.bf16.msra.mxu0 %v1596
        %1869 = vmatprep.subr.bf16.mxu0 0
        %1870 = vmatpush1.bf16.msra.mxu0 %v1595
        %1871 = vmatprep.subr.bf16.mxu0 0
        %1872 = vmatpush2.bf16.msra.mxu0 0
        %1873 = vmatprep.subr.bf16.mxu0 0
        %1874 = vmatpush2.bf16.msra.mxu0 0
        %1875 = vmatprep.subr.bf16.mxu0 0
        %1876 = vmatpush2.bf16.msra.mxu0 0
        %1877 = vmatprep.subr.bf16.mxu0 0
        %1878 = vmatpush2.bf16.msra.mxu0 0
        %1879 = vmatprep.subr.bf16.mxu0 0
        %1880 = vmatpush2.bf16.msra.mxu0 0
        %1881 = vmatprep.subr.bf16.mxu0 0
        %1882 = vmatpush2.bf16.msra.mxu0 0
        %1883 = vmatprep.subr.bf16.mxu0 0
        %1884 = vmatpush2.bf16.msra.mxu0 0
        %1885 = vmatprep.subr.bf16.mxu0 0
        %1886 = vmatpush2.bf16.msra.mxu0 0
        %1887 = vmatprep.mubr.bf16.mxu0 0
        %1888 = vmatmul.mubr.bf16.gmra.mxu0 %v1853
        %v1889 = vpop.f32.mrf.mxu0
        %v1890 = vadd.f32 0.0, %v1889
        %v1891 = vpop.f32.mrf.mxu0
        %v1892 = vpop.f32.mrf.mxu0
        %v1893 = vpop.f32.mrf.mxu0
        %1894 = vdwg.mxu0
        %v1895 = vadd.f32 %v1847, %v1890
        %v1896 = vxor.u32 %v1895, 2147483648
        %v1897 = vmul.f32 %v1896, 1.442695
        %v1898 = vpow.pop %v1897
        %v1899 = vadd.f32 %v1898, 1.0
        %v1900 = vrcp.pop %v1899
        %v1901 = vmul.f32 1.0, %v1900
        %v1902 = vtanh.pop %v1895
        %v1903 = vmul.f32 %v1901, %v1839
        %1905 = vrot.lane.b32.xlu0 %v1902, 64
        %v1906 = vpop.permute.xlu0 %1905
        %v1908 = vmul.f32 %v1901, %v1906
        %1910 = vrot.lane.b32.xlu0 %v1908, 32
        %v1911 = vpop.permute.xlu0 %1910
        %v1913 = vadd.f32 %v1903, %v1911
        %v1914 = vtanh.pop %v1913
        %1916 = vrot.lane.b32.xlu0 %v1914, 64
        %v1917 = vpop.permute.xlu0 %1916
        %v1919 = vmul.f32 %v1901, %v1917
        %v1920 = vsel %vm1058, %v1919, %v1838
        %v1921 = vsel %vm1058, %v1913, %v1839
        %1923 = vrot.lane.b32.xlu0 %v1920, 32
        %v1924 = vpop.permute.xlu0 %1923
        %s1926 = scalar_lea.vmem %s524, 24 [#allocation18]
        %1927 = vst.msk [vmem:[%s1926] sm:$0xff] %vm600, %v1924
        %v1928 = vld [vmem:[%s1070] sm:$0xf]
        %v1929 = vunpack.c.l.bf16 %v1928
        %v1930 = vpack.c.bf16 %v1920, %v1920
        %1932 = vrot.lane.b32.xlu0 %v1930, 32
        %v1933 = vpop.permute.xlu0 %1932
        %v1935 = vsel %vm600, %v1933, 0
        %1937 = vmatprep.subr.bf16.mxu0 0
        %1938 = vmatpush1.bf16.msra.mxu0 0
        %1939 = vmatprep.subr.bf16.mxu0 0
        %1940 = vmatpush1.bf16.msra.mxu0 0
        %1941 = vmatprep.subr.bf16.mxu0 0
        %1942 = vmatpush1.bf16.msra.mxu0 0
        %1943 = vmatprep.subr.bf16.mxu0 0
        %1944 = vmatpush1.bf16.msra.mxu0 0
        %1945 = vmatprep.subr.bf16.mxu0 0
        %1946 = vmatpush1.bf16.msra.mxu0 0
        %1947 = vmatprep.subr.bf16.mxu0 0
        %1948 = vmatpush1.bf16.msra.mxu0 0
        %1949 = vmatprep.subr.bf16.mxu0 0
        %1950 = vmatpush1.bf16.msra.mxu0 %v1596
        %1951 = vmatprep.subr.bf16.mxu0 0
        %1952 = vmatpush1.bf16.msra.mxu0 %v1595
        %1953 = vmatprep.subr.bf16.mxu0 0
        %1954 = vmatpush2.bf16.msra.mxu0 0
        %1955 = vmatprep.subr.bf16.mxu0 0
        %1956 = vmatpush2.bf16.msra.mxu0 0
        %1957 = vmatprep.subr.bf16.mxu0 0
        %1958 = vmatpush2.bf16.msra.mxu0 0
        %1959 = vmatprep.subr.bf16.mxu0 0
        %1960 = vmatpush2.bf16.msra.mxu0 0
        %1961 = vmatprep.subr.bf16.mxu0 0
        %1962 = vmatpush2.bf16.msra.mxu0 0
        %1963 = vmatprep.subr.bf16.mxu0 0
        %1964 = vmatpush2.bf16.msra.mxu0 0
        %1965 = vmatprep.subr.bf16.mxu0 0
        %1966 = vmatpush2.bf16.msra.mxu0 0
        %1967 = vmatprep.subr.bf16.mxu0 0
        %1968 = vmatpush2.bf16.msra.mxu0 0
        %1969 = vmatprep.mubr.bf16.mxu0 0
        %1970 = vmatmul.mubr.bf16.gmra.mxu0 %v1935
        %v1971 = vpop.f32.mrf.mxu0
        %v1972 = vadd.f32 0.0, %v1971
        %v1973 = vpop.f32.mrf.mxu0
        %v1974 = vpop.f32.mrf.mxu0
        %v1975 = vpop.f32.mrf.mxu0
        %1976 = vdwg.mxu0
        %v1977 = vadd.f32 %v1929, %v1972
        %v1978 = vxor.u32 %v1977, 2147483648
        %v1979 = vmul.f32 %v1978, 1.442695
        %v1980 = vpow.pop %v1979
        %v1981 = vadd.f32 %v1980, 1.0
        %v1982 = vrcp.pop %v1981
        %v1983 = vmul.f32 1.0, %v1982
        %v1984 = vtanh.pop %v1977
        %v1985 = vmul.f32 %v1983, %v1921
        %1987 = vrot.lane.b32.xlu0 %v1984, 64
        %v1988 = vpop.permute.xlu0 %1987
        %v1990 = vmul.f32 %v1983, %v1988
        %1992 = vrot.lane.b32.xlu0 %v1990, 32
        %v1993 = vpop.permute.xlu0 %1992
        %v1995 = vadd.f32 %v1985, %v1993
        %v1996 = vtanh.pop %v1995
        %1998 = vrot.lane.b32.xlu0 %v1996, 64
        %v1999 = vpop.permute.xlu0 %1998
        %v2001 = vmul.f32 %v1983, %v1999
        %v2002 = vsel %vm1146, %v2001, %v1920
        %v2003 = vsel %vm1146, %v1995, %v1921
        %2005 = vrot.lane.b32.xlu0 %v2002, 32
        %v2006 = vpop.permute.xlu0 %2005
        %s2008 = scalar_lea.vmem %s524, 32 [#allocation18]
        %2009 = vst.msk [vmem:[%s2008] sm:$0xff] %vm600, %v2006
        %v2010 = vld [vmem:[%s1158] sm:$0xf]
        %v2011 = vunpack.c.l.bf16 %v2010
        %v2012 = vpack.c.bf16 %v2002, %v2002
        %2014 = vrot.lane.b32.xlu0 %v2012, 32
        %v2015 = vpop.permute.xlu0 %2014
        %v2017 = vsel %vm600, %v2015, 0
        %2019 = vmatprep.subr.bf16.mxu0 0
        %2020 = vmatpush1.bf16.msra.mxu0 0
        %2021 = vmatprep.subr.bf16.mxu0 0
        %2022 = vmatpush1.bf16.msra.mxu0 0
        %2023 = vmatprep.subr.bf16.mxu0 0
        %2024 = vmatpush1.bf16.msra.mxu0 0
        %2025 = vmatprep.subr.bf16.mxu0 0
        %2026 = vmatpush1.bf16.msra.mxu0 0
        %2027 = vmatprep.subr.bf16.mxu0 0
        %2028 = vmatpush1.bf16.msra.mxu0 0
        %2029 = vmatprep.subr.bf16.mxu0 0
        %2030 = vmatpush1.bf16.msra.mxu0 0
        %2031 = vmatprep.subr.bf16.mxu0 0
        %2032 = vmatpush1.bf16.msra.mxu0 %v1596
        %2033 = vmatprep.subr.bf16.mxu0 0
        %2034 = vmatpush1.bf16.msra.mxu0 %v1595
        %2035 = vmatprep.subr.bf16.mxu0 0
        %2036 = vmatpush2.bf16.msra.mxu0 0
        %2037 = vmatprep.subr.bf16.mxu0 0
        %2038 = vmatpush2.bf16.msra.mxu0 0
        %2039 = vmatprep.subr.bf16.mxu0 0
        %2040 = vmatpush2.bf16.msra.mxu0 0
        %2041 = vmatprep.subr.bf16.mxu0 0
        %2042 = vmatpush2.bf16.msra.mxu0 0
        %2043 = vmatprep.subr.bf16.mxu0 0
        %2044 = vmatpush2.bf16.msra.mxu0 0
        %2045 = vmatprep.subr.bf16.mxu0 0
        %2046 = vmatpush2.bf16.msra.mxu0 0
        %2047 = vmatprep.subr.bf16.mxu0 0
        %2048 = vmatpush2.bf16.msra.mxu0 0
        %2049 = vmatprep.subr.bf16.mxu0 0
        %2050 = vmatpush2.bf16.msra.mxu0 0
        %2051 = vmatprep.mubr.bf16.mxu0 0
        %2052 = vmatmul.mubr.bf16.gmra.mxu0 %v2017
        %v2053 = vpop.f32.mrf.mxu0
        %v2054 = vadd.f32 0.0, %v2053
        %v2055 = vpop.f32.mrf.mxu0
        %v2056 = vpop.f32.mrf.mxu0
        %v2057 = vpop.f32.mrf.mxu0
        %2058 = vdwg.mxu0
        %v2059 = vadd.f32 %v2011, %v2054
        %v2060 = vxor.u32 %v2059, 2147483648
        %v2061 = vmul.f32 %v2060, 1.442695
        %v2062 = vpow.pop %v2061
        %v2063 = vadd.f32 %v2062, 1.0
        %v2064 = vrcp.pop %v2063
        %v2065 = vmul.f32 1.0, %v2064
        %v2066 = vtanh.pop %v2059
        %v2067 = vmul.f32 %v2065, %v2003
        %2069 = vrot.lane.b32.xlu0 %v2066, 64
        %v2070 = vpop.permute.xlu0 %2069
        %v2072 = vmul.f32 %v2065, %v2070
        %2074 = vrot.lane.b32.xlu0 %v2072, 32
        %v2075 = vpop.permute.xlu0 %2074
        %v2077 = vadd.f32 %v2067, %v2075
        %v2078 = vtanh.pop %v2077
        %2080 = vrot.lane.b32.xlu0 %v2078, 64
        %v2081 = vpop.permute.xlu0 %2080
        %v2083 = vmul.f32 %v2065, %v2081
        %v2084 = vsel %vm1234, %v2083, %v2002
        %v2085 = vsel %vm1234, %v2077, %v2003
        %2087 = vrot.lane.b32.xlu0 %v2084, 32
        %v2088 = vpop.permute.xlu0 %2087
        %s2090 = scalar_lea.vmem %s524, 40 [#allocation18]
        %2091 = vst.msk [vmem:[%s2090] sm:$0xff] %vm600, %v2088
        %v2092 = vld [vmem:[%s1246] sm:$0xf]
        %v2093 = vunpack.c.l.bf16 %v2092
        %v2094 = vpack.c.bf16 %v2084, %v2084
        %2096 = vrot.lane.b32.xlu0 %v2094, 32
        %v2097 = vpop.permute.xlu0 %2096
        %v2099 = vsel %vm600, %v2097, 0
        %2101 = vmatprep.subr.bf16.mxu0 0
        %2102 = vmatpush1.bf16.msra.mxu0 0
        %2103 = vmatprep.subr.bf16.mxu0 0
        %2104 = vmatpush1.bf16.msra.mxu0 0
        %2105 = vmatprep.subr.bf16.mxu0 0
        %2106 = vmatpush1.bf16.msra.mxu0 0
        %2107 = vmatprep.subr.bf16.mxu0 0
        %2108 = vmatpush1.bf16.msra.mxu0 0
        %2109 = vmatprep.subr.bf16.mxu0 0
        %2110 = vmatpush1.bf16.msra.mxu0 0
        %2111 = vmatprep.subr.bf16.mxu0 0
        %2112 = vmatpush1.bf16.msra.mxu0 0
        %2113 = vmatprep.subr.bf16.mxu0 0
        %2114 = vmatpush1.bf16.msra.mxu0 %v1596
        %2115 = vmatprep.subr.bf16.mxu0 0
        %2116 = vmatpush1.bf16.msra.mxu0 %v1595
        %2117 = vmatprep.subr.bf16.mxu0 0
        %2118 = vmatpush2.bf16.msra.mxu0 0
        %2119 = vmatprep.subr.bf16.mxu0 0
        %2120 = vmatpush2.bf16.msra.mxu0 0
        %2121 = vmatprep.subr.bf16.mxu0 0
        %2122 = vmatpush2.bf16.msra.mxu0 0
        %2123 = vmatprep.subr.bf16.mxu0 0
        %2124 = vmatpush2.bf16.msra.mxu0 0
        %2125 = vmatprep.subr.bf16.mxu0 0
        %2126 = vmatpush2.bf16.msra.mxu0 0
        %2127 = vmatprep.subr.bf16.mxu0 0
        %2128 = vmatpush2.bf16.msra.mxu0 0
        %2129 = vmatprep.subr.bf16.mxu0 0
        %2130 = vmatpush2.bf16.msra.mxu0 0
        %2131 = vmatprep.subr.bf16.mxu0 0
        %2132 = vmatpush2.bf16.msra.mxu0 0
        %2133 = vmatprep.mubr.bf16.mxu0 0
        %2134 = vmatmul.mubr.bf16.gmra.mxu0 %v2099
        %v2135 = vpop.f32.mrf.mxu0
        %v2136 = vadd.f32 0.0, %v2135
        %v2137 = vpop.f32.mrf.mxu0
        %v2138 = vpop.f32.mrf.mxu0
        %v2139 = vpop.f32.mrf.mxu0
        %2140 = vdwg.mxu0
        %v2141 = vadd.f32 %v2093, %v2136
        %v2142 = vxor.u32 %v2141, 2147483648
        %v2143 = vmul.f32 %v2142, 1.442695
        %v2144 = vpow.pop %v2143
        %v2145 = vadd.f32 %v2144, 1.0
        %v2146 = vrcp.pop %v2145
        %v2147 = vmul.f32 1.0, %v2146
        %v2148 = vtanh.pop %v2141
        %v2149 = vmul.f32 %v2147, %v2085
        %2151 = vrot.lane.b32.xlu0 %v2148, 64
        %v2152 = vpop.permute.xlu0 %2151
        %v2154 = vmul.f32 %v2147, %v2152
        %2156 = vrot.lane.b32.xlu0 %v2154, 32
        %v2157 = vpop.permute.xlu0 %2156
        %v2159 = vadd.f32 %v2149, %v2157
        %v2160 = vtanh.pop %v2159
        %2162 = vrot.lane.b32.xlu0 %v2160, 64
        %v2163 = vpop.permute.xlu0 %2162
        %v2165 = vmul.f32 %v2147, %v2163
        %v2166 = vsel %vm1322, %v2165, %v2084
        %v2167 = vsel %vm1322, %v2159, %v2085
        %2169 = vrot.lane.b32.xlu0 %v2166, 32
        %v2170 = vpop.permute.xlu0 %2169
        %s2172 = scalar_lea.vmem %s524, 48 [#allocation18]
        %2173 = vst.msk [vmem:[%s2172] sm:$0xff] %vm600, %v2170
        %v2174 = vld [vmem:[%s1334] sm:$0xf]
        %v2175 = vunpack.c.l.bf16 %v2174
        %v2176 = vpack.c.bf16 %v2166, %v2166
        %2178 = vrot.lane.b32.xlu0 %v2176, 32
        %v2179 = vpop.permute.xlu0 %2178
        %v2181 = vsel %vm600, %v2179, 0
        %2183 = vmatprep.subr.bf16.mxu0 0
        %2184 = vmatpush1.bf16.msra.mxu0 0
        %2185 = vmatprep.subr.bf16.mxu0 0
        %2186 = vmatpush1.bf16.msra.mxu0 0
        %2187 = vmatprep.subr.bf16.mxu0 0
        %2188 = vmatpush1.bf16.msra.mxu0 0
        %2189 = vmatprep.subr.bf16.mxu0 0
        %2190 = vmatpush1.bf16.msra.mxu0 0
        %2191 = vmatprep.subr.bf16.mxu0 0
        %2192 = vmatpush1.bf16.msra.mxu0 0
        %2193 = vmatprep.subr.bf16.mxu0 0
        %2194 = vmatpush1.bf16.msra.mxu0 0
        %2195 = vmatprep.subr.bf16.mxu0 0
        %2196 = vmatpush1.bf16.msra.mxu0 %v1596
        %2197 = vmatprep.subr.bf16.mxu0 0
        %2198 = vmatpush1.bf16.msra.mxu0 %v1595
        %2199 = vmatprep.subr.bf16.mxu0 0
        %2200 = vmatpush2.bf16.msra.mxu0 0
        %2201 = vmatprep.subr.bf16.mxu0 0
        %2202 = vmatpush2.bf16.msra.mxu0 0
        %2203 = vmatprep.subr.bf16.mxu0 0
        %2204 = vmatpush2.bf16.msra.mxu0 0
        %2205 = vmatprep.subr.bf16.mxu0 0
        %2206 = vmatpush2.bf16.msra.mxu0 0
        %2207 = vmatprep.subr.bf16.mxu0 0
        %2208 = vmatpush2.bf16.msra.mxu0 0
        %2209 = vmatprep.subr.bf16.mxu0 0
        %2210 = vmatpush2.bf16.msra.mxu0 0
        %2211 = vmatprep.subr.bf16.mxu0 0
        %2212 = vmatpush2.bf16.msra.mxu0 0
        %2213 = vmatprep.subr.bf16.mxu0 0
        %2214 = vmatpush2.bf16.msra.mxu0 0
        %2215 = vmatprep.mubr.bf16.mxu0 0
        %2216 = vmatmul.mubr.bf16.gmra.mxu0 %v2181
        %v2217 = vpop.f32.mrf.mxu0
        %v2218 = vadd.f32 0.0, %v2217
        %v2219 = vpop.f32.mrf.mxu0
        %v2220 = vpop.f32.mrf.mxu0
        %v2221 = vpop.f32.mrf.mxu0
        %2222 = vdwg.mxu0
        %v2223 = vadd.f32 %v2175, %v2218
        %v2224 = vxor.u32 %v2223, 2147483648
        %v2225 = vmul.f32 %v2224, 1.442695
        %v2226 = vpow.pop %v2225
        %v2227 = vadd.f32 %v2226, 1.0
        %v2228 = vrcp.pop %v2227
        %v2229 = vmul.f32 1.0, %v2228
        %v2230 = vtanh.pop %v2223
        %v2231 = vmul.f32 %v2229, %v2167
        %2233 = vrot.lane.b32.xlu0 %v2230, 64
        %v2234 = vpop.permute.xlu0 %2233
        %v2236 = vmul.f32 %v2229, %v2234
        %2238 = vrot.lane.b32.xlu0 %v2236, 32
        %v2239 = vpop.permute.xlu0 %2238
        %v2241 = vadd.f32 %v2231, %v2239
        %v2242 = vtanh.pop %v2241
        %2244 = vrot.lane.b32.xlu0 %v2242, 64
        %v2245 = vpop.permute.xlu0 %2244
        %v2247 = vmul.f32 %v2229, %v2245
        %v2248 = vsel %vm1410, %v2247, %v2166
        %v2249 = vsel %vm1410, %v2241, %v2167
        %2251 = vrot.lane.b32.xlu0 %v2248, 32
        %v2252 = vpop.permute.xlu0 %2251
        %s2254 = scalar_lea.vmem %s524, 56 [#allocation18]
        %2255 = vst.msk [vmem:[%s2254] sm:$0xff] %vm600, %v2252
        %2256 = vst.msk [vmem:[%s1580] sm:$0xff] %vm600, %v2252
        %2258 = vrot.lane.b32.xlu0 %v2249, 96
        %v2259 = vpop.permute.xlu0 %2258
        %2261 = vst.msk [vmem:[%s1582] sm:$0xff] %vm600, %v2259
        %p2262 = scmp.eq.s32.totalorder %s38, 2
        // Predicated region
        $region89: #{tpu_custom_call.1} parent=55 // pred_check
          %p2263 = pneg %p2262
        $region90: #{tpu_custom_call.1} parent=55 // pred_check_branch
          %2265 = sbr.rel (%p2263) target = $region92
        $region91: #{tpu_custom_call.1} parent=55 // pred_region
          %v2266 = vld [vmem:[#allocation4] sm:$0xff]
          %v2267 = vld [vmem:[#allocation4 + $0x8] sm:$0xff]
          %2268 = vst.msk [vmem:[#allocation19] sm:$0xff] %vm600, %v2266
          %2269 = vst.msk [vmem:[#allocation19 + $0x8] sm:$0xff] %vm600, %v2267
          %v2270 = vld [vmem:[#allocation5] sm:$0xff]
          %v2271 = vld [vmem:[#allocation5 + $0x8] sm:$0xff]
          %2272 = vst.msk [vmem:[#allocation21] sm:$0xff] %vm600, %v2270
          %2273 = vst.msk [vmem:[#allocation21 + $0x8] sm:$0xff] %vm600, %v2271
        $region92: #{tpu_custom_call.1} parent=55 // pred_fallthru
          _
        %s2274 = sand.u32 %s261, 1
        %s2275 = scalar_lea.sflag [#allocation8], %s2274
        %s2276 = sand.u32 %s261, 1
        %s2277 = smul.addr %s2276, 64
        %s2278 = scalar_lea.vmem [#allocation18], %s2277
        // Predicated region
        $region93: #{tpu_custom_call.1} parent=55 // pred_check
          %p2279 = pneg %p271
        $region94: #{tpu_custom_call.1} parent=55 // pred_check_branch
          %2281 = sbr.rel (%p2279) target = $region96
        $region95: #{tpu_custom_call.1} parent=55 // pred_region
          %s2282 = smul.u32 8, %s38
          %s2284 = ssub.s32 1024, 1024
          %2285 = vsyncadd %s2275, %s2284
          %s2286 = sadd.s32 %s37, %s2282
          %s2287 = smul.addr %s2286, 128
          %s2288 = scalar_lea.hbm %s9, %s2287
          %s2289 = sshll.u32 %s2278, 4
          %s2290 = int_to_ptr.vmem [resolvable:$true] %s2289
          %2295 = dma.vmem_to_hbm [thread:$0]  %s2290, 1024, %s2288, %s2275, 128, 128, 8
        $region96: #{tpu_custom_call.1} parent=55 // pred_fallthru
          _
        // Predicated region
        $region97: #{tpu_custom_call.1} parent=55 // pred_check
          %p2296 = pneg %p297
        $region98: #{tpu_custom_call.1} parent=55 // pred_check_branch
          %2298 = sbr.rel (%p2296) target = $region100
        $region99: #{tpu_custom_call.1} parent=55 // pred_region
          %s2300 = ssub.s32 256, 256
          %2301 = vsyncadd [#allocation20], %s2300
          %s2302 = smul.addr %s37, 128
          %s2303 = scalar_lea.hbm %s10, %s2302
          %s2304 = sshll.u32 [#allocation19], 4
          %s2305 = int_to_ptr.vmem [resolvable:$true] %s2304
          %2310 = dma.vmem_to_hbm [thread:$0]  %s2305, 256, %s2303, [#allocation20], 128, 128, 8
        $region100: #{tpu_custom_call.1} parent=55 // pred_fallthru
          _
        // Predicated region
        $region101: #{tpu_custom_call.1} parent=55 // pred_check
          %p2311 = pneg %p323
        $region102: #{tpu_custom_call.1} parent=55 // pred_check_branch
          %2313 = sbr.rel (%p2311) target = $region104
        $region103: #{tpu_custom_call.1} parent=55 // pred_region
          %s2315 = ssub.s32 256, 256
          %2316 = vsyncadd [#allocation20], %s2315
          %s2317 = smul.addr %s37, 128
          %s2318 = scalar_lea.hbm %s11, %s2317
          %s2319 = sshll.u32 [#allocation21], 4
          %s2320 = int_to_ptr.vmem [resolvable:$true] %s2319
          %2325 = dma.vmem_to_hbm [thread:$0]  %s2320, 256, %s2318, [#allocation20], 128, 128, 8
        $region104: #{tpu_custom_call.1} parent=55 // pred_fallthru
          _
        // Predicated region
        $region105: #{tpu_custom_call.1} parent=55 // pred_check
          %p2326 = pneg %p297
        $region106: #{tpu_custom_call.1} parent=55 // pred_check_branch
          %2328 = sbr.rel (%p2326) target = $region108
        $region107: #{tpu_custom_call.1} parent=55 // pred_region
          %2329 = dma.done [#allocation20], 256
        $region108: #{tpu_custom_call.1} parent=55 // pred_fallthru
          _
        // Predicated region
        $region109: #{tpu_custom_call.1} parent=55 // pred_check
          %p2330 = pneg %p323
        $region110: #{tpu_custom_call.1} parent=55 // pred_check_branch
          %2332 = sbr.rel (%p2330) target = $region112
        $region111: #{tpu_custom_call.1} parent=55 // pred_region
          %2333 = dma.done [#allocation20], 256
        $region112: #{tpu_custom_call.1} parent=55 // pred_fallthru
          _
      $region56: #{tpu_custom_call.1} parent=5 // pred_fallthru
        _
      %p2334 = scmp.le.s32.totalorder 2, %s28
      // Predicated region
      $region113: #{tpu_custom_call.1} parent=5 // pred_check
        %p2335 = pneg %p2334
      $region114: #{tpu_custom_call.1} parent=5 // pred_check_branch
        %2337 = sbr.rel (%p2335) target = $region116
      $region115: #{tpu_custom_call.1} parent=5 // pred_region
        %s2338 = ssub.s32 %s28, 2
        // Predicated region
        $region117: #{tpu_custom_call.1} parent=115 // pred_check
          %p2339 = pneg %p277
        $region118: #{tpu_custom_call.1} parent=115 // pred_check_branch
          %2341 = sbr.rel (%p2339) target = $region120
        $region119: #{tpu_custom_call.1} parent=115 // pred_region
          %s2342 = sand.u32 %s262, 1
          %s2343 = scalar_lea.sflag [#allocation8], %s2342
          %s2344 = sand.u32 %s262, 1
          %s2345 = smul.addr %s2344, 64
          %s2346 = scalar_lea.vmem [#allocation18], %s2345
          %2347 = dma.done %s2343, 1024
        $region120: #{tpu_custom_call.1} parent=115 // pred_fallthru
          _
      $region116: #{tpu_custom_call.1} parent=5 // pred_fallthru
        _
    $region6: #{tpu_custom_call.1} parent=1 // loop_footer
      %s32 = sadd.s32 1, %s28
    $region7: #{tpu_custom_call.1} parent=1 // loop_footer_branch
      %27 = sbr.rel target = $region3
    $region8: #{tpu_custom_call.1} parent=1 // loop_exit
      _
    %2348 = vsyncpa [#allocation7], 1
    %s2349 = scalar_lea.sflag [#allocation7], 1
    %2350 = vsyncpa %s2349, 1
    %2351 = vsyncpa [#allocation10], 1
    %2352 = vsyncpa [#allocation13], 1
    %2353 = vsyncpa [#allocation16], 1
    %2354 = vsyncpa [#allocation8], 1
    %s2355 = scalar_lea.sflag [#allocation8], 1
    %2356 = vsyncpa %s2355, 1
    %2357 = vsyncpa [#allocation20], 1

</llo_original>
